<compile_context>
chip_gen: v5e
topology: v5e:2x2
jax: 0.10.0
libtpu: 0.0.40
codegen_flags: <defaults>
</compile_context>

<pallas_src>
import functools

import jax
import jax.numpy as jnp
from jax import lax
from jax.experimental import pallas as pl
from jax.experimental.pallas import tpu as pltpu


# --------------------------------- kernel ---------------------------------- #

def _resblock_kernel(s, Hs, Ho, Wo, Nb, has_proj, *args):
    """Nb batch images per grid step; the entire residual block is fused.

    s        : conv1 / shortcut stride (static)
    Hs       : per-phase padded height (static); x_ref rows hold s*s phase blocks
    Ho, Wo   : output spatial dims (static)
    Nb       : images processed per grid step (static)
    has_proj : whether the shortcut is a 1x1 conv + BN (static)
    """
    if has_proj:
        (x_ref, w1_ref, b1_ref, w2_ref, b2_ref, ws_ref, bs_ref,
         o_ref, im1_ref, y1p_ref, im2_ref) = args
    else:
        (x_ref, w1_ref, b1_ref, w2_ref, b2_ref,
         o_ref, im1_ref, y1p_ref, im2_ref) = args
        ws_ref = bs_ref = None

    Cin = x_ref.shape[-1]
    Cout = w1_ref.shape[-1]
    M = Nb * Ho * Wo

    def x_patch(di, dj):
        # Tap (di, dj) of the 3x3 stencil on the padded, phase-split input.
        a, oi = di % s, di // s
        b, oj = dj % s, dj // s
        r0 = (a * s + b) * Hs + oi            # row offset of phase (a, b)
        return x_ref[:, r0:r0 + Ho, oj:oj + Wo, :].reshape(M, Cin)

    # ---- conv1: K-packed im2col (M, 9*Cin) built in VMEM -> ONE GEMM ---------
    for t in range(9):
        im1_ref[:, t * Cin:(t + 1) * Cin] = x_patch(t // 3, t % 3)
    acc1 = jnp.dot(im1_ref[...], w1_ref[...], preferred_element_type=jnp.float32)
    y1 = jnp.maximum(acc1 + b1_ref[...], 0.0)          # folded-BN bias + ReLU

    # ---- stash ReLU(conv1) as conv2's padded input; zero ONLY the halo -------
    zrow = jnp.zeros((Nb, Wo + 2, Cout), y1p_ref.dtype)
    zcol = jnp.zeros((Nb, Ho + 2, Cout), y1p_ref.dtype)
    y1p_ref[:, 0, :, :] = zrow
    y1p_ref[:, Ho + 1, :, :] = zrow
    y1p_ref[:, :, 0, :] = zcol
    y1p_ref[:, :, Wo + 1, :] = zcol
    y1p_ref[:, 1:1 + Ho, 1:1 + Wo, :] = (
        y1.reshape(Nb, Ho, Wo, Cout).astype(y1p_ref.dtype))

    # ---- conv2 (3x3, stride 1): K-packed im2col from VMEM -> ONE GEMM --------
    for t in range(9):
        di, dj = t // 3, t % 3
        im2_ref[:, t * Cout:(t + 1) * Cout] = (
            y1p_ref[:, di:di + Ho, dj:dj + Wo, :].reshape(M, Cout))
    acc2 = jnp.dot(im2_ref[...], w2_ref[...], preferred_element_type=jnp.float32)

    # ---- shortcut AFTER conv2 (short live range); center tap is VMEM-resident -
    center = x_patch(1, 1)
    if has_proj:
        sc = jnp.dot(center, ws_ref[...],
                     preferred_element_type=jnp.float32) + bs_ref[...]
    else:
        sc = center.astype(jnp.float32)

    out = jnp.maximum(acc2 + b2_ref[...] + sc, 0.0)     # (M, Cout) f32
    o_ref[...] = out.reshape(Nb, Ho * Wo, Cout)


# -------------------------------- wrapper ----------------------------------- #

def _pick_batch_tile(N, Ho, Wo):
    """Images per grid step: fill MXU rows (M >= 256) but keep >= 2 grid steps."""
    target = max(1, -(-256 // (Ho * Wo)))               # ceil(256 / (Ho*Wo))
    best = 1
    for nb in range(1, N + 1):
        if N % nb == 0 and nb <= target:
            best = nb
    if N // best < 2:                                    # megacore / pipelining
        for nb in range(best, 0, -1):
            if N % nb == 0 and N // nb >= 2:
                best = nb
                break
    return best


@functools.partial(jax.jit, static_argnums=2)
def residual_block_forward(x_nchw, params, stride):
    """PyTorch-equivalent ResidualBlock forward. x: [N, Cin, H, W] f32 -> NCHW f32."""
    N, Cin, H, W = x_nchw.shape
    Cout = params["conv1"]["w"].shape[-1]
    s = stride
    # TODO(synk): the phase split assumes H, W, H+2, W+2 all divisible by s
    #             (holds for stride 1/2 on even dims); odd spatial dims need a pad.
    assert H % s == 0 and W % s == 0 and (H + 2) % s == 0 and (W + 2) % s == 0
    Ho, Wo = (H + 2 - 3) // s + 1, (W + 2 - 3) // s + 1
    Hp, Wp = H + 2, W + 2
    Hs, Ws = Hp // s, Wp // s
    has_proj = "shortcut" in params

    # NCHW -> NHWC (PyTorch interface), cast to bf16 BEFORE pad/phase-split so
    # the layout passes move half the bytes.  Stride 1 skips the phase split.
    # TODO(synk): an NHWC end-to-end model would drop both interface transposes.
    x = jnp.transpose(x_nchw, (0, 2, 3, 1)).astype(jnp.bfloat16)
    xp = jnp.pad(x, ((0, 0), (1, 1), (1, 1), (0, 0)))
    if s == 1:
        xph = xp
    else:
        xph = (xp.reshape(N, Hs, s, Ws, s, Cin)
                 .transpose(0, 2, 4, 1, 3, 5)           # (N, a, b, i, j, c)
                 .reshape(N, s * s * Hs, Ws, Cin))

    # Fold BN scale into conv weights; reshape to K-packed (9*C, Cout) GEMM form.
    def fold(p):
        return (p["w"] * p["scale"]).astype(jnp.bfloat16)

    w1f = fold(params["conv1"]).reshape(9 * Cin, Cout)
    w2f = fold(params["conv2"]).reshape(9 * Cout, Cout)
    b1 = params["conv1"]["bias"].reshape(1, Cout).astype(jnp.float32)
    b2 = params["conv2"]["bias"].reshape(1, Cout).astype(jnp.float32)

    Nb = _pick_batch_tile(N, Ho, Wo)
    M = Nb * Ho * Wo

    in_specs = [
        pl.BlockSpec((Nb, s * s * Hs, Ws, Cin), lambda i: (i, 0, 0, 0)),
        pl.BlockSpec((9 * Cin, Cout), lambda i: (0, 0)),     # constant index maps:
        pl.BlockSpec((1, Cout), lambda i: (0, 0)),            # weights stay resident
        pl.BlockSpec((9 * Cout, Cout), lambda i: (0, 0)),
        pl.BlockSpec((1, Cout), lambda i: (0, 0)),
    ]
    operands = [xph, w1f, b1, w2f, b2]
    if has_proj:
        wsf = fold(params["shortcut"]).reshape(Cin, Cout)
        bs = params["shortcut"]["bias"].reshape(1, Cout).astype(jnp.float32)
        in_specs += [pl.BlockSpec((Cin, Cout), lambda i: (0, 0)),
                     pl.BlockSpec((1, Cout), lambda i: (0, 0))]
        operands += [wsf, bs]

    out3 = pl.pallas_call(
        functools.partial(_resblock_kernel, s, Hs, Ho, Wo, Nb, has_proj),
        out_shape=jax.ShapeDtypeStruct((N, Ho * Wo, Cout), jnp.float32),
        grid=(N // Nb,),
        in_specs=in_specs,
        out_specs=pl.BlockSpec((Nb, Ho * Wo, Cout), lambda i: (i, 0, 0)),
        scratch_shapes=[
            pltpu.VMEM((M, 9 * Cin), jnp.bfloat16),                  # conv1 im2col
            pltpu.VMEM((Nb, Ho + 2, Wo + 2, Cout), jnp.bfloat16),    # padded ReLU(conv1)
            pltpu.VMEM((M, 9 * Cout), jnp.bfloat16),                 # conv2 im2col
        ],
        compiler_params=pltpu.CompilerParams(
            dimension_semantics=("parallel",),
            vmem_limit_bytes=48 * 1024 * 1024),
    )(*operands)

    out = out3.reshape(N, Ho, Wo, Cout)
    return jnp.transpose(out, (0, 3, 1, 2))              # NHWC -> NCHW


# ---------------------- deterministic parameters ----------------------------- #

def make_convbn_params(key, cin, cout, k):
    k1, k2, k3, k4, k5 = jax.random.split(key, 5)
    fan_in = k * k * cin
    w = jax.random.normal(k1, (k, k, cin, cout), jnp.float32) / jnp.sqrt(float(fan_in))
    gamma = 1.0 + 0.1 * jax.random.normal(k2, (cout,), jnp.float32)
    beta = 0.1 * jax.random.normal(k3, (cout,), jnp.float32)
    mean = 0.1 * jax.random.normal(k4, (cout,), jnp.float32)
    var = 1.0 + 0.1 * jnp.abs(jax.random.normal(k5, (cout,), jnp.float32))
    scale = gamma / jnp.sqrt(var + 1e-5)
    bias = beta - mean * scale
    return dict(w=w, scale=scale, bias=bias)


def make_block_params(key, cin, cout, stride):
    k1, k2, k3 = jax.random.split(key, 3)
    p = {"conv1": make_convbn_params(k1, cin, cout, 3),
         "conv2": make_convbn_params(k2, cout, cout, 3)}
    if stride != 1 or cin != cout:
        p["shortcut"] = make_convbn_params(k3, cin, cout, 1)
    return p


# ----------------------------- pure-JAX reference ---------------------------- #

def _ref_convbn(x, p, stride, pad):
    y = lax.conv_general_dilated(
        x, p["w"], (stride, stride), ((pad, pad), (pad, pad)),
        dimension_numbers=("NHWC", "HWIO", "NHWC"),
        precision=lax.Precision.HIGHEST)
    return y * p["scale"].reshape(1, 1, 1, -1) + p["bias"].reshape(1, 1, 1, -1)


def residual_block_reference(x_nchw, params, stride):
    x = jnp.transpose(x_nchw, (0, 2, 3, 1))
    o = jnp.maximum(_ref_convbn(x, params["conv1"], stride, 1), 0.0)
    o = _ref_convbn(o, params["conv2"], 1, 1)
    sc = _ref_convbn(x, params["shortcut"], stride, 0) if "shortcut" in params else x
    out = jnp.maximum(o + sc, 0.0)
    return jnp.transpose(out, (0, 3, 1, 2))


# ------------------------------------ main ----------------------------------- #

if __name__ == "__main__":
    key = jax.random.PRNGKey(0)
    kp1, kp2, kx1, kx2 = jax.random.split(key, 4)

    # Inputs in PyTorch's NCHW convention: [batch, in_channels, H, W]
    # Case 1: identity shortcut (16 -> 16, stride 1), batch 2 -> Nb=1, grid=2.
    x1 = jax.random.normal(kx1, (2, 16, 16, 16), jnp.float32)
    p_id = make_block_params(kp1, 16, 16, 1)
    out_id = jax.block_until_ready(residual_block_forward(x1, p_id, 1))
    ref_id = jax.block_until_ready(residual_block_reference(x1, p_id, 1))

    # Case 2: projection shortcut (16 -> 32, stride 2), batch 4 -> Nb=2, grid=2.
    x2 = jax.random.normal(kx2, (4, 16, 16, 16), jnp.float32)
    p_pr = make_block_params(kp2, 16, 32, 2)
    out_pr = jax.block_until_ready(residual_block_forward(x2, p_pr, 2))
    ref_pr = jax.block_until_ready(residual_block_reference(x2, p_pr, 2))

    assert out_id.shape == (2, 16, 16, 16), f"bad shape {out_id.shape}"
    assert out_pr.shape == (4, 32, 8, 8), f"bad shape {out_pr.shape}"
    for o, r in ((out_id, ref_id), (out_pr, ref_pr)):
        assert bool(jnp.all(jnp.isfinite(o))), "non-finite output"
        err = float(jnp.max(jnp.abs(o - r)))
        assert bool(jnp.allclose(o, r, rtol=3e-2, atol=3e-2)), f"mismatch vs ref: {err}"

    print("KERNEL_OK")
</pallas_src>

<mosaic_0001>
module attributes {stable_mosaic.version = 11 : i64} {
  func.func @_resblock_kernel(%arg0: i32, %arg1: memref<1x18x18x16xbf16, #tpu.memory_space<vmem>>, %arg2: memref<144x16xbf16, #tpu.memory_space<vmem>>, %arg3: memref<1x16xf32, #tpu.memory_space<vmem>>, %arg4: memref<144x16xbf16, #tpu.memory_space<vmem>>, %arg5: memref<1x16xf32, #tpu.memory_space<vmem>>, %arg6: memref<1x256x16xf32, #tpu.memory_space<vmem>>, %arg7: memref<256x144xbf16, #tpu.memory_space<vmem>>, %arg8: memref<1x18x18x16xbf16, #tpu.memory_space<vmem>>, %arg9: memref<256x144xbf16, #tpu.memory_space<vmem>>) attributes {dimension_semantics = [#tpu.dimension_semantics<parallel>], iteration_bounds = array<i64: 2>, scalar_prefetch = 0 : i64, scratch_operands = 3 : i64, tpu.core_type = #tpu.core_type<tc>, window_params = [{transform_indices = @transform_0, window_bounds = array<i64: 1, 18, 18, 16>}, {pipeline_mode = #tpu.pipeline_mode<synchronous>, transform_indices = @transform_1, window_bounds = array<i64: 144, 16>}, {pipeline_mode = #tpu.pipeline_mode<synchronous>, transform_indices = @transform_2, window_bounds = array<i64: 1, 16>}, {pipeline_mode = #tpu.pipeline_mode<synchronous>, transform_indices = @transform_3, window_bounds = array<i64: 144, 16>}, {pipeline_mode = #tpu.pipeline_mode<synchronous>, transform_indices = @transform_4, window_bounds = array<i64: 1, 16>}, {transform_indices = @transform_5, window_bounds = array<i64: 1, 256, 16>}]} {
    %c0 = arith.constant 0 : index
    %c0_0 = arith.constant 0 : index
    %c0_1 = arith.constant 0 : index
    %c0_2 = arith.constant 0 : index
    %0 = vector.load %arg1[%c0, %c0_0, %c0_1, %c0_2] : memref<1x18x18x16xbf16, #tpu.memory_space<vmem>>, vector<1x16x16x16xbf16>
    %1 = vector.shape_cast %0 : vector<1x16x16x16xbf16> to vector<256x16xbf16>
    %c0_3 = arith.constant 0 : index
    %c0_4 = arith.constant 0 : index
    %2 = vector.load %arg7[%c0_3, %c0_4] : memref<256x144xbf16, #tpu.memory_space<vmem>>, vector<256x16xbf16>
    tpu.vector_store %arg7[%c0_3, %c0_4], %1 {strides = array<i32>} : memref<256x144xbf16, #tpu.memory_space<vmem>>, vector<256x16xbf16>,
    %c0_5 = arith.constant 0 : index
    %c0_6 = arith.constant 0 : index
    %c1 = arith.constant 1 : index
    %c0_7 = arith.constant 0 : index
    %3 = vector.load %arg1[%c0_5, %c0_6, %c1, %c0_7] : memref<1x18x18x16xbf16, #tpu.memory_space<vmem>>, vector<1x16x16x16xbf16>
    %4 = vector.shape_cast %3 : vector<1x16x16x16xbf16> to vector<256x16xbf16>
    %c0_8 = arith.constant 0 : index
    %c16 = arith.constant 16 : index
    %5 = vector.load %arg7[%c0_8, %c16] : memref<256x144xbf16, #tpu.memory_space<vmem>>, vector<256x16xbf16>
    tpu.vector_store %arg7[%c0_8, %c16], %4 {strides = array<i32>} : memref<256x144xbf16, #tpu.memory_space<vmem>>, vector<256x16xbf16>,
    %c0_9 = arith.constant 0 : index
    %c0_10 = arith.constant 0 : index
    %c2 = arith.constant 2 : index
    %c0_11 = arith.constant 0 : index
    %6 = vector.load %arg1[%c0_9, %c0_10, %c2, %c0_11] : memref<1x18x18x16xbf16, #tpu.memory_space<vmem>>, vector<1x16x16x16xbf16>
    %7 = vector.shape_cast %6 : vector<1x16x16x16xbf16> to vector<256x16xbf16>
    %c0_12 = arith.constant 0 : index
    %c32 = arith.constant 32 : index
    %8 = vector.load %arg7[%c0_12, %c32] : memref<256x144xbf16, #tpu.memory_space<vmem>>, vector<256x16xbf16>
    tpu.vector_store %arg7[%c0_12, %c32], %7 {strides = array<i32>} : memref<256x144xbf16, #tpu.memory_space<vmem>>, vector<256x16xbf16>,
    %c0_13 = arith.constant 0 : index
    %c1_14 = arith.constant 1 : index
    %c0_15 = arith.constant 0 : index
    %c0_16 = arith.constant 0 : index
    %9 = vector.load %arg1[%c0_13, %c1_14, %c0_15, %c0_16] : memref<1x18x18x16xbf16, #tpu.memory_space<vmem>>, vector<1x16x16x16xbf16>
    %10 = vector.shape_cast %9 : vector<1x16x16x16xbf16> to vector<256x16xbf16>
    %c0_17 = arith.constant 0 : index
    %c48 = arith.constant 48 : index
    %11 = vector.load %arg7[%c0_17, %c48] : memref<256x144xbf16, #tpu.memory_space<vmem>>, vector<256x16xbf16>
    tpu.vector_store %arg7[%c0_17, %c48], %10 {strides = array<i32>} : memref<256x144xbf16, #tpu.memory_space<vmem>>, vector<256x16xbf16>,
    %c0_18 = arith.constant 0 : index
    %c1_19 = arith.constant 1 : index
    %c1_20 = arith.constant 1 : index
    %c0_21 = arith.constant 0 : index
    %12 = vector.load %arg1[%c0_18, %c1_19, %c1_20, %c0_21] : memref<1x18x18x16xbf16, #tpu.memory_space<vmem>>, vector<1x16x16x16xbf16>
    %13 = vector.shape_cast %12 : vector<1x16x16x16xbf16> to vector<256x16xbf16>
    %c0_22 = arith.constant 0 : index
    %c64 = arith.constant 64 : index
    %14 = vector.load %arg7[%c0_22, %c64] : memref<256x144xbf16, #tpu.memory_space<vmem>>, vector<256x16xbf16>
    tpu.vector_store %arg7[%c0_22, %c64], %13 {strides = array<i32>} : memref<256x144xbf16, #tpu.memory_space<vmem>>, vector<256x16xbf16>,
    %c0_23 = arith.constant 0 : index
    %c1_24 = arith.constant 1 : index
    %c2_25 = arith.constant 2 : index
    %c0_26 = arith.constant 0 : index
    %15 = vector.load %arg1[%c0_23, %c1_24, %c2_25, %c0_26] : memref<1x18x18x16xbf16, #tpu.memory_space<vmem>>, vector<1x16x16x16xbf16>
    %16 = vector.shape_cast %15 : vector<1x16x16x16xbf16> to vector<256x16xbf16>
    %c0_27 = arith.constant 0 : index
    %c80 = arith.constant 80 : index
    %17 = vector.load %arg7[%c0_27, %c80] : memref<256x144xbf16, #tpu.memory_space<vmem>>, vector<256x16xbf16>
    tpu.vector_store %arg7[%c0_27, %c80], %16 {strides = array<i32>} : memref<256x144xbf16, #tpu.memory_space<vmem>>, vector<256x16xbf16>,
    %c0_28 = arith.constant 0 : index
    %c2_29 = arith.constant 2 : index
    %c0_30 = arith.constant 0 : index
    %c0_31 = arith.constant 0 : index
    %18 = vector.load %arg1[%c0_28, %c2_29, %c0_30, %c0_31] : memref<1x18x18x16xbf16, #tpu.memory_space<vmem>>, vector<1x16x16x16xbf16>
    %19 = vector.shape_cast %18 : vector<1x16x16x16xbf16> to vector<256x16xbf16>
    %c0_32 = arith.constant 0 : index
    %c96 = arith.constant 96 : index
    %20 = vector.load %arg7[%c0_32, %c96] : memref<256x144xbf16, #tpu.memory_space<vmem>>, vector<256x16xbf16>
    tpu.vector_store %arg7[%c0_32, %c96], %19 {strides = array<i32>} : memref<256x144xbf16, #tpu.memory_space<vmem>>, vector<256x16xbf16>,
    %c0_33 = arith.constant 0 : index
    %c2_34 = arith.constant 2 : index
    %c1_35 = arith.constant 1 : index
    %c0_36 = arith.constant 0 : index
    %21 = vector.load %arg1[%c0_33, %c2_34, %c1_35, %c0_36] : memref<1x18x18x16xbf16, #tpu.memory_space<vmem>>, vector<1x16x16x16xbf16>
    %22 = vector.shape_cast %21 : vector<1x16x16x16xbf16> to vector<256x16xbf16>
    %c0_37 = arith.constant 0 : index
    %c112 = arith.constant 112 : index
    %23 = vector.load %arg7[%c0_37, %c112] : memref<256x144xbf16, #tpu.memory_space<vmem>>, vector<256x16xbf16>
    tpu.vector_store %arg7[%c0_37, %c112], %22 {strides = array<i32>} : memref<256x144xbf16, #tpu.memory_space<vmem>>, vector<256x16xbf16>,
    %c0_38 = arith.constant 0 : index
    %c2_39 = arith.constant 2 : index
    %c2_40 = arith.constant 2 : index
    %c0_41 = arith.constant 0 : index
    %24 = vector.load %arg1[%c0_38, %c2_39, %c2_40, %c0_41] : memref<1x18x18x16xbf16, #tpu.memory_space<vmem>>, vector<1x16x16x16xbf16>
    %25 = vector.shape_cast %24 : vector<1x16x16x16xbf16> to vector<256x16xbf16>
    %c0_42 = arith.constant 0 : index
    %c128 = arith.constant 128 : index
    %26 = vector.load %arg7[%c0_42, %c128] : memref<256x144xbf16, #tpu.memory_space<vmem>>, vector<256x16xbf16>
    tpu.vector_store %arg7[%c0_42, %c128], %25 {strides = array<i32>} : memref<256x144xbf16, #tpu.memory_space<vmem>>, vector<256x16xbf16>,
    %c0_43 = arith.constant 0 : index
    %c0_44 = arith.constant 0 : index
    %27 = vector.load %arg7[%c0_43, %c0_44] : memref<256x144xbf16, #tpu.memory_space<vmem>>, vector<256x144xbf16>
    %c0_45 = arith.constant 0 : index
    %c0_46 = arith.constant 0 : index
    %28 = vector.load %arg2[%c0_45, %c0_46] : memref<144x16xbf16, #tpu.memory_space<vmem>>, vector<144x16xbf16>
    %cst = arith.constant dense<0.000000e+00> : vector<256x16xf32>
    %29 = tpu.matmul %27, %28, %cst {dimension_numbers = #tpu.dot_dimension_numbers<[1], [0], [0], [1], [0, 0, 1, 1], [], []>} : vector<256x144xbf16>, vector<144x16xbf16>, vector<256x16xf32> -> vector<256x16xf32>
    %c0_47 = arith.constant 0 : index
    %c0_48 = arith.constant 0 : index
    %30 = vector.load %arg3[%c0_47, %c0_48] : memref<1x16xf32, #tpu.memory_space<vmem>>, vector<1x16xf32>
    %31 = vector.broadcast %30 : vector<1x16xf32> to vector<256x16xf32>
    %32 = arith.addf %29, %31 : vector<256x16xf32>
    %cst_49 = arith.constant 0.000000e+00 : f32
    %33 = vector.broadcast %cst_49 : f32 to vector<256x16xf32>
    %34 = arith.maximumf %32, %33 : vector<256x16xf32>
    %cst_50 = arith.constant 0.000000e+00 : bf16
    %35 = vector.broadcast %cst_50 : bf16 to vector<1x18x16xbf16>
    %cst_51 = arith.constant 0.000000e+00 : bf16
    %36 = vector.broadcast %cst_51 : bf16 to vector<1x18x16xbf16>
    %c0_52 = arith.constant 0 : index
    %c0_53 = arith.constant 0 : index
    %c0_54 = arith.constant 0 : index
    %c0_55 = arith.constant 0 : index
    %37 = vector.load %arg8[%c0_52, %c0_53, %c0_54, %c0_55] : memref<1x18x18x16xbf16, #tpu.memory_space<vmem>>, vector<1x1x18x16xbf16>
    %38 = vector.shape_cast %37 : vector<1x1x18x16xbf16> to vector<1x18x16xbf16>
    %39 = vector.shape_cast %35 : vector<1x18x16xbf16> to vector<1x1x18x16xbf16>
    tpu.vector_store %arg8[%c0_52, %c0_53, %c0_54, %c0_55], %39 {strides = array<i32>} : memref<1x18x18x16xbf16, #tpu.memory_space<vmem>>, vector<1x1x18x16xbf16>,
    %c0_56 = arith.constant 0 : index
    %c17 = arith.constant 17 : index
    %c0_57 = arith.constant 0 : index
    %c0_58 = arith.constant 0 : index
    %40 = vector.load %arg8[%c0_56, %c17, %c0_57, %c0_58] : memref<1x18x18x16xbf16, #tpu.memory_space<vmem>>, vector<1x1x18x16xbf16>
    %41 = vector.shape_cast %40 : vector<1x1x18x16xbf16> to vector<1x18x16xbf16>
    %42 = vector.shape_cast %35 : vector<1x18x16xbf16> to vector<1x1x18x16xbf16>
    tpu.vector_store %arg8[%c0_56, %c17, %c0_57, %c0_58], %42 {strides = array<i32>} : memref<1x18x18x16xbf16, #tpu.memory_space<vmem>>, vector<1x1x18x16xbf16>,
    %c0_59 = arith.constant 0 : index
    %c0_60 = arith.constant 0 : index
    %c0_61 = arith.constant 0 : index
    %c0_62 = arith.constant 0 : index
    %43 = vector.load %arg8[%c0_59, %c0_60, %c0_61, %c0_62] : memref<1x18x18x16xbf16, #tpu.memory_space<vmem>>, vector<1x18x1x16xbf16>
    %44 = vector.shape_cast %43 : vector<1x18x1x16xbf16> to vector<1x18x16xbf16>
    %45 = vector.shape_cast %36 : vector<1x18x16xbf16> to vector<1x18x1x16xbf16>
    tpu.vector_store %arg8[%c0_59, %c0_60, %c0_61, %c0_62], %45 {strides = array<i32>} : memref<1x18x18x16xbf16, #tpu.memory_space<vmem>>, vector<1x18x1x16xbf16>,
    %c0_63 = arith.constant 0 : index
    %c0_64 = arith.constant 0 : index
    %c17_65 = arith.constant 17 : index
    %c0_66 = arith.constant 0 : index
    %46 = vector.load %arg8[%c0_63, %c0_64, %c17_65, %c0_66] : memref<1x18x18x16xbf16, #tpu.memory_space<vmem>>, vector<1x18x1x16xbf16>
    %47 = vector.shape_cast %46 : vector<1x18x1x16xbf16> to vector<1x18x16xbf16>
    %48 = vector.shape_cast %36 : vector<1x18x16xbf16> to vector<1x18x1x16xbf16>
    tpu.vector_store %arg8[%c0_63, %c0_64, %c17_65, %c0_66], %48 {strides = array<i32>} : memref<1x18x18x16xbf16, #tpu.memory_space<vmem>>, vector<1x18x1x16xbf16>,
    %49 = vector.shape_cast %34 : vector<256x16xf32> to vector<1x16x16x16xf32>
    %50 = arith.truncf %49 : vector<1x16x16x16xf32> to vector<1x16x16x16xbf16>
    %c0_67 = arith.constant 0 : index
    %c1_68 = arith.constant 1 : index
    %c1_69 = arith.constant 1 : index
    %c0_70 = arith.constant 0 : index
    %51 = vector.load %arg8[%c0_67, %c1_68, %c1_69, %c0_70] : memref<1x18x18x16xbf16, #tpu.memory_space<vmem>>, vector<1x16x16x16xbf16>
    tpu.vector_store %arg8[%c0_67, %c1_68, %c1_69, %c0_70], %50 {strides = array<i32>} : memref<1x18x18x16xbf16, #tpu.memory_space<vmem>>, vector<1x16x16x16xbf16>,
    %c0_71 = arith.constant 0 : index
    %c0_72 = arith.constant 0 : index
    %c0_73 = arith.constant 0 : index
    %c0_74 = arith.constant 0 : index
    %52 = vector.load %arg8[%c0_71, %c0_72, %c0_73, %c0_74] : memref<1x18x18x16xbf16, #tpu.memory_space<vmem>>, vector<1x16x16x16xbf16>
    %53 = vector.shape_cast %52 : vector<1x16x16x16xbf16> to vector<256x16xbf16>
    %c0_75 = arith.constant 0 : index
    %c0_76 = arith.constant 0 : index
    %54 = vector.load %arg9[%c0_75, %c0_76] : memref<256x144xbf16, #tpu.memory_space<vmem>>, vector<256x16xbf16>
    tpu.vector_store %arg9[%c0_75, %c0_76], %53 {strides = array<i32>} : memref<256x144xbf16, #tpu.memory_space<vmem>>, vector<256x16xbf16>,
    %c0_77 = arith.constant 0 : index
    %c0_78 = arith.constant 0 : index
    %c1_79 = arith.constant 1 : index
    %c0_80 = arith.constant 0 : index
    %55 = vector.load %arg8[%c0_77, %c0_78, %c1_79, %c0_80] : memref<1x18x18x16xbf16, #tpu.memory_space<vmem>>, vector<1x16x16x16xbf16>
    %56 = vector.shape_cast %55 : vector<1x16x16x16xbf16> to vector<256x16xbf16>
    %c0_81 = arith.constant 0 : index
    %c16_82 = arith.constant 16 : index
    %57 = vector.load %arg9[%c0_81, %c16_82] : memref<256x144xbf16, #tpu.memory_space<vmem>>, vector<256x16xbf16>
    tpu.vector_store %arg9[%c0_81, %c16_82], %56 {strides = array<i32>} : memref<256x144xbf16, #tpu.memory_space<vmem>>, vector<256x16xbf16>,
    %c0_83 = arith.constant 0 : index
    %c0_84 = arith.constant 0 : index
    %c2_85 = arith.constant 2 : index
    %c0_86 = arith.constant 0 : index
    %58 = vector.load %arg8[%c0_83, %c0_84, %c2_85, %c0_86] : memref<1x18x18x16xbf16, #tpu.memory_space<vmem>>, vector<1x16x16x16xbf16>
    %59 = vector.shape_cast %58 : vector<1x16x16x16xbf16> to vector<256x16xbf16>
    %c0_87 = arith.constant 0 : index
    %c32_88 = arith.constant 32 : index
    %60 = vector.load %arg9[%c0_87, %c32_88] : memref<256x144xbf16, #tpu.memory_space<vmem>>, vector<256x16xbf16>
    tpu.vector_store %arg9[%c0_87, %c32_88], %59 {strides = array<i32>} : memref<256x144xbf16, #tpu.memory_space<vmem>>, vector<256x16xbf16>,
    %c0_89 = arith.constant 0 : index
    %c1_90 = arith.constant 1 : index
    %c0_91 = arith.constant 0 : index
    %c0_92 = arith.constant 0 : index
    %61 = vector.load %arg8[%c0_89, %c1_90, %c0_91, %c0_92] : memref<1x18x18x16xbf16, #tpu.memory_space<vmem>>, vector<1x16x16x16xbf16>
    %62 = vector.shape_cast %61 : vector<1x16x16x16xbf16> to vector<256x16xbf16>
    %c0_93 = arith.constant 0 : index
    %c48_94 = arith.constant 48 : index
    %63 = vector.load %arg9[%c0_93, %c48_94] : memref<256x144xbf16, #tpu.memory_space<vmem>>, vector<256x16xbf16>
    tpu.vector_store %arg9[%c0_93, %c48_94], %62 {strides = array<i32>} : memref<256x144xbf16, #tpu.memory_space<vmem>>, vector<256x16xbf16>,
    %c0_95 = arith.constant 0 : index
    %c1_96 = arith.constant 1 : index
    %c1_97 = arith.constant 1 : index
    %c0_98 = arith.constant 0 : index
    %64 = vector.load %arg8[%c0_95, %c1_96, %c1_97, %c0_98] : memref<1x18x18x16xbf16, #tpu.memory_space<vmem>>, vector<1x16x16x16xbf16>
    %65 = vector.shape_cast %64 : vector<1x16x16x16xbf16> to vector<256x16xbf16>
    %c0_99 = arith.constant 0 : index
    %c64_100 = arith.constant 64 : index
    %66 = vector.load %arg9[%c0_99, %c64_100] : memref<256x144xbf16, #tpu.memory_space<vmem>>, vector<256x16xbf16>
    tpu.vector_store %arg9[%c0_99, %c64_100], %65 {strides = array<i32>} : memref<256x144xbf16, #tpu.memory_space<vmem>>, vector<256x16xbf16>,
    %c0_101 = arith.constant 0 : index
    %c1_102 = arith.constant 1 : index
    %c2_103 = arith.constant 2 : index
    %c0_104 = arith.constant 0 : index
    %67 = vector.load %arg8[%c0_101, %c1_102, %c2_103, %c0_104] : memref<1x18x18x16xbf16, #tpu.memory_space<vmem>>, vector<1x16x16x16xbf16>
    %68 = vector.shape_cast %67 : vector<1x16x16x16xbf16> to vector<256x16xbf16>
    %c0_105 = arith.constant 0 : index
    %c80_106 = arith.constant 80 : index
    %69 = vector.load %arg9[%c0_105, %c80_106] : memref<256x144xbf16, #tpu.memory_space<vmem>>, vector<256x16xbf16>
    tpu.vector_store %arg9[%c0_105, %c80_106], %68 {strides = array<i32>} : memref<256x144xbf16, #tpu.memory_space<vmem>>, vector<256x16xbf16>,
    %c0_107 = arith.constant 0 : index
    %c2_108 = arith.constant 2 : index
    %c0_109 = arith.constant 0 : index
    %c0_110 = arith.constant 0 : index
    %70 = vector.load %arg8[%c0_107, %c2_108, %c0_109, %c0_110] : memref<1x18x18x16xbf16, #tpu.memory_space<vmem>>, vector<1x16x16x16xbf16>
    %71 = vector.shape_cast %70 : vector<1x16x16x16xbf16> to vector<256x16xbf16>
    %c0_111 = arith.constant 0 : index
    %c96_112 = arith.constant 96 : index
    %72 = vector.load %arg9[%c0_111, %c96_112] : memref<256x144xbf16, #tpu.memory_space<vmem>>, vector<256x16xbf16>
    tpu.vector_store %arg9[%c0_111, %c96_112], %71 {strides = array<i32>} : memref<256x144xbf16, #tpu.memory_space<vmem>>, vector<256x16xbf16>,
    %c0_113 = arith.constant 0 : index
    %c2_114 = arith.constant 2 : index
    %c1_115 = arith.constant 1 : index
    %c0_116 = arith.constant 0 : index
    %73 = vector.load %arg8[%c0_113, %c2_114, %c1_115, %c0_116] : memref<1x18x18x16xbf16, #tpu.memory_space<vmem>>, vector<1x16x16x16xbf16>
    %74 = vector.shape_cast %73 : vector<1x16x16x16xbf16> to vector<256x16xbf16>
    %c0_117 = arith.constant 0 : index
    %c112_118 = arith.constant 112 : index
    %75 = vector.load %arg9[%c0_117, %c112_118] : memref<256x144xbf16, #tpu.memory_space<vmem>>, vector<256x16xbf16>
    tpu.vector_store %arg9[%c0_117, %c112_118], %74 {strides = array<i32>} : memref<256x144xbf16, #tpu.memory_space<vmem>>, vector<256x16xbf16>,
    %c0_119 = arith.constant 0 : index
    %c2_120 = arith.constant 2 : index
    %c2_121 = arith.constant 2 : index
    %c0_122 = arith.constant 0 : index
    %76 = vector.load %arg8[%c0_119, %c2_120, %c2_121, %c0_122] : memref<1x18x18x16xbf16, #tpu.memory_space<vmem>>, vector<1x16x16x16xbf16>
    %77 = vector.shape_cast %76 : vector<1x16x16x16xbf16> to vector<256x16xbf16>
    %c0_123 = arith.constant 0 : index
    %c128_124 = arith.constant 128 : index
    %78 = vector.load %arg9[%c0_123, %c128_124] : memref<256x144xbf16, #tpu.memory_space<vmem>>, vector<256x16xbf16>
    tpu.vector_store %arg9[%c0_123, %c128_124], %77 {strides = array<i32>} : memref<256x144xbf16, #tpu.memory_space<vmem>>, vector<256x16xbf16>,
    %c0_125 = arith.constant 0 : index
    %c0_126 = arith.constant 0 : index
    %79 = vector.load %arg9[%c0_125, %c0_126] : memref<256x144xbf16, #tpu.memory_space<vmem>>, vector<256x144xbf16>
    %c0_127 = arith.constant 0 : index
    %c0_128 = arith.constant 0 : index
    %80 = vector.load %arg4[%c0_127, %c0_128] : memref<144x16xbf16, #tpu.memory_space<vmem>>, vector<144x16xbf16>
    %cst_129 = arith.constant dense<0.000000e+00> : vector<256x16xf32>
    %81 = tpu.matmul %79, %80, %cst_129 {dimension_numbers = #tpu.dot_dimension_numbers<[1], [0], [0], [1], [0, 0, 1, 1], [], []>} : vector<256x144xbf16>, vector<144x16xbf16>, vector<256x16xf32> -> vector<256x16xf32>
    %c0_130 = arith.constant 0 : index
    %c1_131 = arith.constant 1 : index
    %c1_132 = arith.constant 1 : index
    %c0_133 = arith.constant 0 : index
    %82 = vector.load %arg1[%c0_130, %c1_131, %c1_132, %c0_133] : memref<1x18x18x16xbf16, #tpu.memory_space<vmem>>, vector<1x16x16x16xbf16>
    %83 = vector.shape_cast %82 : vector<1x16x16x16xbf16> to vector<256x16xbf16>
    %84 = arith.extf %83 : vector<256x16xbf16> to vector<256x16xf32>
    %c0_134 = arith.constant 0 : index
    %c0_135 = arith.constant 0 : index
    %85 = vector.load %arg5[%c0_134, %c0_135] : memref<1x16xf32, #tpu.memory_space<vmem>>, vector<1x16xf32>
    %86 = vector.broadcast %85 : vector<1x16xf32> to vector<256x16xf32>
    %87 = arith.addf %81, %86 : vector<256x16xf32>
    %88 = arith.addf %87, %84 : vector<256x16xf32>
    %cst_136 = arith.constant 0.000000e+00 : f32
    %89 = vector.broadcast %cst_136 : f32 to vector<256x16xf32>
    %90 = arith.maximumf %88, %89 : vector<256x16xf32>
    %91 = vector.shape_cast %90 : vector<256x16xf32> to vector<1x256x16xf32>
    %c0_137 = arith.constant 0 : index
    %c0_138 = arith.constant 0 : index
    %c0_139 = arith.constant 0 : index
    %92 = vector.load %arg6[%c0_137, %c0_138, %c0_139] : memref<1x256x16xf32, #tpu.memory_space<vmem>>, vector<1x256x16xf32>
    tpu.vector_store %arg6[%c0_137, %c0_138, %c0_139], %91 {strides = array<i32>} : memref<1x256x16xf32, #tpu.memory_space<vmem>>, vector<1x256x16xf32>,
    return
  }
  func.func @transform_0(%arg0: i32) -> (i32, i32, i32, i32) {
    %c0_i32 = arith.constant 0 : i32
    %c0_i32_0 = arith.constant 0 : i32
    %c0_i32_1 = arith.constant 0 : i32
    %c0_i32_2 = arith.constant 0 : i32
    return %arg0, %c0_i32, %c0_i32_0, %c0_i32_1 : i32, i32, i32, i32
  }
  func.func @transform_1(%arg0: i32) -> (i32, i32) {
    %c0_i32 = arith.constant 0 : i32
    %c0_i32_0 = arith.constant 0 : i32
    %c0_i32_1 = arith.constant 0 : i32
    return %c0_i32, %c0_i32_0 : i32, i32
  }
  func.func @transform_2(%arg0: i32) -> (i32, i32) {
    %c0_i32 = arith.constant 0 : i32
    %c0_i32_0 = arith.constant 0 : i32
    %c0_i32_1 = arith.constant 0 : i32
    return %c0_i32, %c0_i32_0 : i32, i32
  }
  func.func @transform_3(%arg0: i32) -> (i32, i32) {
    %c0_i32 = arith.constant 0 : i32
    %c0_i32_0 = arith.constant 0 : i32
    %c0_i32_1 = arith.constant 0 : i32
    return %c0_i32, %c0_i32_0 : i32, i32
  }
  func.func @transform_4(%arg0: i32) -> (i32, i32) {
    %c0_i32 = arith.constant 0 : i32
    %c0_i32_0 = arith.constant 0 : i32
    %c0_i32_1 = arith.constant 0 : i32
    return %c0_i32, %c0_i32_0 : i32, i32
  }
  func.func @transform_5(%arg0: i32) -> (i32, i32, i32) {
    %c0_i32 = arith.constant 0 : i32
    %c0_i32_0 = arith.constant 0 : i32
    %c0_i32_1 = arith.constant 0 : i32
    return %arg0, %c0_i32, %c0_i32_0 : i32, i32, i32
  }
}

</mosaic_0001>

<llo_original>
// kernel: residual_block_forward.1
$region0: #{residual_block_forward.1}
  #allocation0 [shape = 'u32[]', space=smem, size = 0x4, offset = 0x4, fixed_abs, tag = 'smem constant byte address 0x4 - core index']
  #allocation1 [shape = 'u32[72,128]{1,0:T(1,128)}', space=vmem, size = 0x9000, scoped, tag = 'internal scratch']
  #allocation2 [shape = 'bf16[256,144]{1,0:T(8,128)(2,1)}', space=vmem, size = 0x20000, scoped, tag = 'scratch operand']
  #allocation3 [shape = 'bf16[1,18,18,16]{3,2,1,0:T(8,128)(2,1)}', space=vmem, size = 0x1b000, scoped, tag = 'scratch operand']
  #allocation4 [shape = 'bf16[256,144]{1,0:T(8,128)(2,1)}', space=vmem, size = 0x20000, scoped, tag = 'scratch operand']
  %s0 = inlined_call_operand.vmem [shape: bf16[2,18,18,16], index: 0, kind: input, shape index: {}]
  %s1 = inlined_call_operand.vmem [shape: bf16[144,16], index: 1, kind: input, shape index: {}]
  %s2 = inlined_call_operand.vmem [shape: f32[1,16], index: 2, kind: input, shape index: {}]
  %s3 = inlined_call_operand.vmem [shape: bf16[144,16], index: 3, kind: input, shape index: {}]
  %s4 = inlined_call_operand.vmem [shape: f32[1,16], index: 4, kind: input, shape index: {}]
  %s5 = inlined_call_operand.vmem [shape: f32[2,256,16], index: 5, kind: output, shape index: {}]
  %s6 = sld [smem:[#allocation0]]
  $region53: #{residual_block_forward.1} parent=0
    _
  %s8 = ssub.s32 1, %s6
  %s9 = scalar_select 0, %s8, %s6
  loop: start=0, step=1, limit=4
  $region2: #{residual_block_forward.1} parent=0 // loop_pre_header
    _
  $region3: #{residual_block_forward.1} parent=0 // loop_header
    %s11 = sphi 0, %s15
    %p12 = scmp.ge.s32.totalorder %s11, 4
    %s21 = sphi 0, %s23
    %s24 = sphi 0, %s21
    %s25 = sphi 0, %s24
    %s41 = sphi 0, %s25
    %s45 = sphi 0, %s45
    %s47 = sphi 0, %s45
    %s48 = sphi 0, %s47
    %s62 = sphi 0, %s48
    %s66 = sphi 0, %s66
    %s68 = sphi 0, %s66
    %s69 = sphi 0, %s68
    %s83 = sphi 0, %s69
    %s87 = sphi 0, %s87
    %s89 = sphi 0, %s87
    %s90 = sphi 0, %s89
    %s104 = sphi 0, %s90
    %s108 = sphi 0, %s108
    %s110 = sphi 0, %s108
    %s111 = sphi 0, %s110
    %s125 = sphi 0, %s111
    %s131 = sphi 0, %s133
    %s134 = sphi 0, %s131
    %s135 = sphi 0, %s134
    %s151 = sphi 0, %s135
  $region4: #{residual_block_forward.1} parent=0 // loop_header_branch
    %14 = sbr.rel (%p12) target = $region8
  $region5: #{residual_block_forward.1} parent=0 // loop_body
    %s16 = ssub.s32 %s11, 1
    %s17 = ssub.s32 %s11, 2
    %s18 = sadd.s32 %s11, 1
    %s19 = ssub.s32 %s11, %s18
    %p20 = scmp.eq.s32.totalorder %s19, 0
    %s22 = sadd.s32 %s21, 1
    %s23 = scalar_select %p20, %s21, %s22
    %p26 = pneg %p20
    %p27 = scmp.eq.s32.totalorder %s11, 1
    %p28 = por %p26, %p27
    %p29 = scmp.ne.s32.totalorder %s21, %s24
    %p30 = scmp.eq.s32.totalorder %s11, 0
    %p31 = por %p29, %p30
    %p32 = scmp.ne.s32.totalorder %s21, %s24
    %p33 = scmp.eq.s32.totalorder %s16, 1
    %p34 = por %p32, %p33
    %p35 = scmp.ne.s32.totalorder %s24, %s25
    %p36 = scmp.eq.s32.totalorder %s16, 0
    %p37 = por %p35, %p36
    %p38 = scmp.ne.s32.totalorder %s24, %s25
    %p39 = scmp.eq.s32.totalorder %s17, 1
    %p40 = por %p38, %p39
    %p42 = scmp.ne.s32.totalorder %s25, %s41
    %p43 = scmp.eq.s32.totalorder %s17, 0
    %p44 = por %p42, %p43
    %s46 = sadd.s32 %s45, 1
    %p49 = scmp.eq.s32.totalorder %s11, 1
    %p50 = scmp.ne.s32.totalorder %s45, %s47
    %p51 = scmp.eq.s32.totalorder %s11, 0
    %p52 = por %p50, %p51
    %p53 = scmp.ne.s32.totalorder %s45, %s47
    %p54 = scmp.eq.s32.totalorder %s16, 1
    %p55 = por %p53, %p54
    %p56 = scmp.ne.s32.totalorder %s47, %s48
    %p57 = scmp.eq.s32.totalorder %s16, 0
    %p58 = por %p56, %p57
    %p59 = scmp.ne.s32.totalorder %s47, %s48
    %p60 = scmp.eq.s32.totalorder %s17, 1
    %p61 = por %p59, %p60
    %p63 = scmp.ne.s32.totalorder %s48, %s62
    %p64 = scmp.eq.s32.totalorder %s17, 0
    %p65 = por %p63, %p64
    %s67 = sadd.s32 %s66, 1
    %p70 = scmp.eq.s32.totalorder %s11, 1
    %p71 = scmp.ne.s32.totalorder %s66, %s68
    %p72 = scmp.eq.s32.totalorder %s11, 0
    %p73 = por %p71, %p72
    %p74 = scmp.ne.s32.totalorder %s66, %s68
    %p75 = scmp.eq.s32.totalorder %s16, 1
    %p76 = por %p74, %p75
    %p77 = scmp.ne.s32.totalorder %s68, %s69
    %p78 = scmp.eq.s32.totalorder %s16, 0
    %p79 = por %p77, %p78
    %p80 = scmp.ne.s32.totalorder %s68, %s69
    %p81 = scmp.eq.s32.totalorder %s17, 1
    %p82 = por %p80, %p81
    %p84 = scmp.ne.s32.totalorder %s69, %s83
    %p85 = scmp.eq.s32.totalorder %s17, 0
    %p86 = por %p84, %p85
    %s88 = sadd.s32 %s87, 1
    %p91 = scmp.eq.s32.totalorder %s11, 1
    %p92 = scmp.ne.s32.totalorder %s87, %s89
    %p93 = scmp.eq.s32.totalorder %s11, 0
    %p94 = por %p92, %p93
    %p95 = scmp.ne.s32.totalorder %s87, %s89
    %p96 = scmp.eq.s32.totalorder %s16, 1
    %p97 = por %p95, %p96
    %p98 = scmp.ne.s32.totalorder %s89, %s90
    %p99 = scmp.eq.s32.totalorder %s16, 0
    %p100 = por %p98, %p99
    %p101 = scmp.ne.s32.totalorder %s89, %s90
    %p102 = scmp.eq.s32.totalorder %s17, 1
    %p103 = por %p101, %p102
    %p105 = scmp.ne.s32.totalorder %s90, %s104
    %p106 = scmp.eq.s32.totalorder %s17, 0
    %p107 = por %p105, %p106
    %s109 = sadd.s32 %s108, 1
    %p112 = scmp.eq.s32.totalorder %s11, 1
    %p113 = scmp.ne.s32.totalorder %s108, %s110
    %p114 = scmp.eq.s32.totalorder %s11, 0
    %p115 = por %p113, %p114
    %p116 = scmp.ne.s32.totalorder %s108, %s110
    %p117 = scmp.eq.s32.totalorder %s16, 1
    %p118 = por %p116, %p117
    %p119 = scmp.ne.s32.totalorder %s110, %s111
    %p120 = scmp.eq.s32.totalorder %s16, 0
    %p121 = por %p119, %p120
    %p122 = scmp.ne.s32.totalorder %s110, %s111
    %p123 = scmp.eq.s32.totalorder %s17, 1
    %p124 = por %p122, %p123
    %p126 = scmp.ne.s32.totalorder %s111, %s125
    %p127 = scmp.eq.s32.totalorder %s17, 0
    %p128 = por %p126, %p127
    %s129 = ssub.s32 %s11, %s18
    %p130 = scmp.eq.s32.totalorder %s129, 0
    %s132 = sadd.s32 %s131, 1
    %s133 = scalar_select %p130, %s131, %s132
    %p136 = pneg %p130
    %p137 = scmp.eq.s32.totalorder %s11, 1
    %p138 = por %p136, %p137
    %p139 = scmp.ne.s32.totalorder %s131, %s134
    %p140 = scmp.eq.s32.totalorder %s11, 0
    %p141 = por %p139, %p140
    %p142 = scmp.ne.s32.totalorder %s131, %s134
    %p143 = scmp.eq.s32.totalorder %s16, 1
    %p144 = por %p142, %p143
    %p145 = scmp.ne.s32.totalorder %s134, %s135
    %p146 = scmp.eq.s32.totalorder %s16, 0
    %p147 = por %p145, %p146
    %p148 = scmp.ne.s32.totalorder %s134, %s135
    %p149 = scmp.eq.s32.totalorder %s17, 1
    %p150 = por %p148, %p149
    %p152 = scmp.ne.s32.totalorder %s135, %s151
    %p153 = scmp.eq.s32.totalorder %s17, 0
    %p154 = por %p152, %p153
    %p155 = scmp.le.s32.totalorder 1, %s11
    %p156 = scmp.lt.s32.totalorder %s11, 3
    %p157 = pnand %p155, %p156
    %p158 = pneg %p157
    // Predicated region
    $region9: #{residual_block_forward.1} parent=5 // pred_check
      _
    $region10: #{residual_block_forward.1} parent=5 // pred_check_branch
      %160 = sbr.rel (%p157) target = $region12
    $region11: #{residual_block_forward.1} parent=5 // pred_region
      %s161 = ssub.s32 %s11, 1
      // Predicated region
      $region13: #{residual_block_forward.1} parent=11 // pred_check
        %p162 = pneg %p58
      $region14: #{residual_block_forward.1} parent=11 // pred_check_branch
        %164 = sbr.rel (%p162) target = $region16
      $region15: #{residual_block_forward.1} parent=11 // pred_region
        _
      $region16: #{residual_block_forward.1} parent=11 // pred_fallthru
        _
      // Predicated region
      $region17: #{residual_block_forward.1} parent=11 // pred_check
        %p165 = pneg %p79
      $region18: #{residual_block_forward.1} parent=11 // pred_check_branch
        %167 = sbr.rel (%p165) target = $region20
      $region19: #{residual_block_forward.1} parent=11 // pred_region
        _
      $region20: #{residual_block_forward.1} parent=11 // pred_fallthru
        _
      // Predicated region
      $region21: #{residual_block_forward.1} parent=11 // pred_check
        %p168 = pneg %p100
      $region22: #{residual_block_forward.1} parent=11 // pred_check_branch
        %170 = sbr.rel (%p168) target = $region24
      $region23: #{residual_block_forward.1} parent=11 // pred_region
        _
      $region24: #{residual_block_forward.1} parent=11 // pred_fallthru
        _
      // Predicated region
      $region25: #{residual_block_forward.1} parent=11 // pred_check
        %p171 = pneg %p121
      $region26: #{residual_block_forward.1} parent=11 // pred_check_branch
        %173 = sbr.rel (%p171) target = $region28
      $region27: #{residual_block_forward.1} parent=11 // pred_region
        _
      $region28: #{residual_block_forward.1} parent=11 // pred_fallthru
        _
    $region12: #{residual_block_forward.1} parent=5 // pred_fallthru
      _
    %p174 = scmp.lt.s32.totalorder %s11, 2
    // Predicated region
    $region29: #{residual_block_forward.1} parent=5 // pred_check
      %p175 = pneg %p174
    $region30: #{residual_block_forward.1} parent=5 // pred_check_branch
      %177 = sbr.rel (%p175) target = $region32
    $region31: #{residual_block_forward.1} parent=5 // pred_region
      // Predicated region
      $region33: #{residual_block_forward.1} parent=31 // pred_check
        %p178 = pneg %p31
      $region34: #{residual_block_forward.1} parent=31 // pred_check_branch
        %180 = sbr.rel (%p178) target = $region36
      $region35: #{residual_block_forward.1} parent=31 // pred_region
        %p181 = scmp.lt.s32.totalorder %s11, 1
        %s182 = scalar_select %p181, %s11, 1
        %s183 = smul.addr %s182, 54
        %s184 = smul.addr %s183, 4
        %s185 = scalar_lea.vmem %s0, %s184
      $region36: #{residual_block_forward.1} parent=31 // pred_fallthru
        _
    $region32: #{residual_block_forward.1} parent=5 // pred_fallthru
      _
    %p186 = scmp.le.s32.totalorder 1, %s11
    %p187 = scmp.lt.s32.totalorder %s11, 3
    %p188 = pnand %p186, %p187
    %p189 = pneg %p188
    // Predicated region
    $region37: #{residual_block_forward.1} parent=5 // pred_check
      _
    $region38: #{residual_block_forward.1} parent=5 // pred_check_branch
      %191 = sbr.rel (%p188) target = $region40
    $region39: #{residual_block_forward.1} parent=5 // pred_region
      %s192 = ssub.s32 %s11, 1
      %p193 = scmp.lt.s32.totalorder %s16, 1
      %s194 = scalar_select %p193, %s16, 1
      %s195 = smul.addr %s194, 54
      %s196 = smul.addr %s195, 4
      %s197 = scalar_lea.vmem %s0, %s196
      %p198 = pneg %p37
      %p199 = pneg %p34
      %p200 = pneg %p58
      %p201 = pneg %p55
      %p202 = pneg %p79
      %p203 = pneg %p76
      %p204 = pneg %p100
      %p205 = pneg %p97
      %p206 = pneg %p121
      %p207 = pneg %p118
      %p208 = pneg %p147
      %p209 = pneg %p144
      %p210 = scmp.lt.s32.totalorder %s16, 1
      %s211 = scalar_select %p210, %s16, 1
      %s212 = smul.addr %s211, 32
      %s213 = smul.addr %s212, 8
      %s214 = scalar_lea.vmem %s5, %s213
      %p215 = scmp.lt.s32.totalorder %s16, 1
      %s216 = scalar_select %p215, %s16, 1
      %s217 = smul.addr %s216, 54
      %s218 = smul.addr %s217, 4
      %s219 = scalar_lea.vmem %s0, %s218
      %p220 = scmp.lt.s32.totalorder %s16, 1
      %s221 = scalar_select %p220, %s16, 1
      %s222 = smul.addr %s221, 32
      %s223 = smul.addr %s222, 8
      %s224 = scalar_lea.vmem %s5, %s223
      %v226 = vld [vmem:[%s219] sm:$0xf]
      %v227 = vld [vmem:[%s219 + $0x4] sm:$0xf]
      %v228 = vld [vmem:[%s219 + $0xc] sm:$0xf]
      %v229 = vld [vmem:[%s219 + $0x10] sm:$0xf]
      %v230 = vld [vmem:[%s219 + $0x18] sm:$0xf]
      %v231 = vld [vmem:[%s219 + $0x1c] sm:$0xf]
      %v232 = vld [vmem:[%s219 + $0x24] sm:$0xf]
      %v233 = vld [vmem:[%s219 + $0x28] sm:$0xf]
      %v234 = vld [vmem:[%s219 + $0x30] sm:$0xf]
      %v235 = vld [vmem:[%s219 + $0x34] sm:$0xf]
      %v236 = vld [vmem:[%s219 + $0x3c] sm:$0xf]
      %v237 = vld [vmem:[%s219 + $0x40] sm:$0xf]
      %v238 = vld [vmem:[%s219 + $0x48] sm:$0xf]
      %v239 = vld [vmem:[%s219 + $0x4c] sm:$0xf]
      %v240 = vld [vmem:[%s219 + $0x54] sm:$0xf]
      %v241 = vld [vmem:[%s219 + $0x58] sm:$0xf]
      %v242 = vld [vmem:[%s219 + $0x60] sm:$0xf]
      %v243 = vld [vmem:[%s219 + $0x64] sm:$0xf]
      %v244 = vld [vmem:[%s219 + $0x6c] sm:$0xf]
      %v245 = vld [vmem:[%s219 + $0x70] sm:$0xf]
      %v246 = vld [vmem:[%s219 + $0x78] sm:$0xf]
      %v247 = vld [vmem:[%s219 + $0x7c] sm:$0xf]
      %v248 = vld [vmem:[%s219 + $0x84] sm:$0xf]
      %v249 = vld [vmem:[%s219 + $0x88] sm:$0xf]
      %v250 = vld [vmem:[%s219 + $0x90] sm:$0xf]
      %v251 = vld [vmem:[%s219 + $0x94] sm:$0xf]
      %v252 = vld [vmem:[%s219 + $0x9c] sm:$0xf]
      %v253 = vld [vmem:[%s219 + $0xa0] sm:$0xf]
      %v254 = vld [vmem:[%s219 + $0xa8] sm:$0xf]
      %v255 = vld [vmem:[%s219 + $0xac] sm:$0xf]
      %v256 = vld [vmem:[%s219 + $0xb4] sm:$0xf]
      %v257 = vld [vmem:[%s219 + $0xb8] sm:$0xf]
      %vm258 = vcmask 125952
      %259 = vst.msk [vmem:[#allocation2] sm:$0xf] %vm258, %v226
      %260 = vst.msk [vmem:[#allocation2 + $0x8] sm:$0xf] %vm258, %v227
      %261 = vst.msk [vmem:[#allocation2 + $0x10] sm:$0xf] %vm258, %v228
      %262 = vst.msk [vmem:[#allocation2 + $0x18] sm:$0xf] %vm258, %v229
      %263 = vst.msk [vmem:[#allocation2 + $0x20] sm:$0xf] %vm258, %v230
      %264 = vst.msk [vmem:[#allocation2 + $0x28] sm:$0xf] %vm258, %v231
      %265 = vst.msk [vmem:[#allocation2 + $0x30] sm:$0xf] %vm258, %v232
      %266 = vst.msk [vmem:[#allocation2 + $0x38] sm:$0xf] %vm258, %v233
      %267 = vst.msk [vmem:[#allocation2 + $0x40] sm:$0xf] %vm258, %v234
      %268 = vst.msk [vmem:[#allocation2 + $0x48] sm:$0xf] %vm258, %v235
      %269 = vst.msk [vmem:[#allocation2 + $0x50] sm:$0xf] %vm258, %v236
      %270 = vst.msk [vmem:[#allocation2 + $0x58] sm:$0xf] %vm258, %v237
      %271 = vst.msk [vmem:[#allocation2 + $0x60] sm:$0xf] %vm258, %v238
      %272 = vst.msk [vmem:[#allocation2 + $0x68] sm:$0xf] %vm258, %v239
      %273 = vst.msk [vmem:[#allocation2 + $0x70] sm:$0xf] %vm258, %v240
      %274 = vst.msk [vmem:[#allocation2 + $0x78] sm:$0xf] %vm258, %v241
      %275 = vst.msk [vmem:[#allocation2 + $0x80] sm:$0xf] %vm258, %v242
      %276 = vst.msk [vmem:[#allocation2 + $0x88] sm:$0xf] %vm258, %v243
      %277 = vst.msk [vmem:[#allocation2 + $0x90] sm:$0xf] %vm258, %v244
      %278 = vst.msk [vmem:[#allocation2 + $0x98] sm:$0xf] %vm258, %v245
      %279 = vst.msk [vmem:[#allocation2 + $0xa0] sm:$0xf] %vm258, %v246
      %280 = vst.msk [vmem:[#allocation2 + $0xa8] sm:$0xf] %vm258, %v247
      %281 = vst.msk [vmem:[#allocation2 + $0xb0] sm:$0xf] %vm258, %v248
      %282 = vst.msk [vmem:[#allocation2 + $0xb8] sm:$0xf] %vm258, %v249
      %283 = vst.msk [vmem:[#allocation2 + $0xc0] sm:$0xf] %vm258, %v250
      %284 = vst.msk [vmem:[#allocation2 + $0xc8] sm:$0xf] %vm258, %v251
      %285 = vst.msk [vmem:[#allocation2 + $0xd0] sm:$0xf] %vm258, %v252
      %286 = vst.msk [vmem:[#allocation2 + $0xd8] sm:$0xf] %vm258, %v253
      %287 = vst.msk [vmem:[#allocation2 + $0xe0] sm:$0xf] %vm258, %v254
      %288 = vst.msk [vmem:[#allocation2 + $0xe8] sm:$0xf] %vm258, %v255
      %289 = vst.msk [vmem:[#allocation2 + $0xf0] sm:$0xf] %vm258, %v256
      %290 = vst.msk [vmem:[#allocation2 + $0xf8] sm:$0xf] %vm258, %v257
      %v291 = vld [vmem:[%s219] sm:$0xf]
      %v292 = vld [vmem:[%s219 + $0x4] sm:$0xf]
      %v293 = vld [vmem:[%s219 + $0x8] sm:$0x1]
      %v294 = vld [vmem:[%s219 + $0xc] sm:$0xf]
      %v295 = vld [vmem:[%s219 + $0x10] sm:$0xf]
      %v296 = vld [vmem:[%s219 + $0x14] sm:$0x1]
      %v297 = vld [vmem:[%s219 + $0x18] sm:$0xf]
      %v298 = vld [vmem:[%s219 + $0x1c] sm:$0xf]
      %v299 = vld [vmem:[%s219 + $0x20] sm:$0x1]
      %v300 = vld [vmem:[%s219 + $0x24] sm:$0xf]
      %v301 = vld [vmem:[%s219 + $0x28] sm:$0xf]
      %v302 = vld [vmem:[%s219 + $0x2c] sm:$0x1]
      %v303 = vld [vmem:[%s219 + $0x30] sm:$0xf]
      %v304 = vld [vmem:[%s219 + $0x34] sm:$0xf]
      %v305 = vld [vmem:[%s219 + $0x38] sm:$0x1]
      %v306 = vld [vmem:[%s219 + $0x3c] sm:$0xf]
      %v307 = vld [vmem:[%s219 + $0x40] sm:$0xf]
      %v308 = vld [vmem:[%s219 + $0x44] sm:$0x1]
      %v309 = vld [vmem:[%s219 + $0x48] sm:$0xf]
      %v310 = vld [vmem:[%s219 + $0x4c] sm:$0xf]
      %v311 = vld [vmem:[%s219 + $0x50] sm:$0x1]
      %v312 = vld [vmem:[%s219 + $0x54] sm:$0xf]
      %v313 = vld [vmem:[%s219 + $0x58] sm:$0xf]
      %v314 = vld [vmem:[%s219 + $0x5c] sm:$0x1]
      %v315 = vld [vmem:[%s219 + $0x60] sm:$0xf]
      %v316 = vld [vmem:[%s219 + $0x64] sm:$0xf]
      %v317 = vld [vmem:[%s219 + $0x68] sm:$0x1]
      %v318 = vld [vmem:[%s219 + $0x6c] sm:$0xf]
      %v319 = vld [vmem:[%s219 + $0x70] sm:$0xf]
      %v320 = vld [vmem:[%s219 + $0x74] sm:$0x1]
      %v321 = vld [vmem:[%s219 + $0x78] sm:$0xf]
      %v322 = vld [vmem:[%s219 + $0x7c] sm:$0xf]
      %v323 = vld [vmem:[%s219 + $0x80] sm:$0x1]
      %v324 = vld [vmem:[%s219 + $0x84] sm:$0xf]
      %v325 = vld [vmem:[%s219 + $0x88] sm:$0xf]
      %v326 = vld [vmem:[%s219 + $0x8c] sm:$0x1]
      %v327 = vld [vmem:[%s219 + $0x90] sm:$0xf]
      %v328 = vld [vmem:[%s219 + $0x94] sm:$0xf]
      %v329 = vld [vmem:[%s219 + $0x98] sm:$0x1]
      %v330 = vld [vmem:[%s219 + $0x9c] sm:$0xf]
      %v331 = vld [vmem:[%s219 + $0xa0] sm:$0xf]
      %v332 = vld [vmem:[%s219 + $0xa4] sm:$0x1]
      %v333 = vld [vmem:[%s219 + $0xa8] sm:$0xf]
      %v334 = vld [vmem:[%s219 + $0xac] sm:$0xf]
      %v335 = vld [vmem:[%s219 + $0xb0] sm:$0x1]
      %v336 = vld [vmem:[%s219 + $0xb4] sm:$0xf]
      %v337 = vld [vmem:[%s219 + $0xb8] sm:$0xf]
      %v338 = vld [vmem:[%s219 + $0xbc] sm:$0x1]
      %vm339 = vsmask.f32 3328
      %vm340 = vsmask.f32 7440
      %vm341 = vmor %vm339, %vm340
      %v343 = vshrl.u32 %v291, 16
      %v345 = vrot.slane %v343, 4
      %v346 = vshll.u32 %v291, 16
      %v348 = vrot.slane %v346, 5
      %v349 = vor.u32 %v345, %v348
      %v350 = vrot.slane %v349, 4
      %v352 = vshll.u32 %v292, 16
      %v354 = vrot.slane %v352, 5
      %v355 = vsel %vm341, %v350, %v354
      %v356 = vshrl.u32 %v292, 16
      %v358 = vrot.slane %v356, 4
      %v359 = vor.u32 %v358, %v354
      %v360 = vrot.slane %v359, 4
      %v362 = vshll.u32 %v293, 16
      %v364 = vrot.slane %v362, 5
      %v365 = vsel %vm341, %v360, %v364
      %v367 = vshrl.u32 %v294, 16
      %v369 = vrot.slane %v367, 4
      %v370 = vshll.u32 %v294, 16
      %v372 = vrot.slane %v370, 5
      %v373 = vor.u32 %v369, %v372
      %v374 = vrot.slane %v373, 4
      %v376 = vshll.u32 %v295, 16
      %v378 = vrot.slane %v376, 5
      %v379 = vsel %vm341, %v374, %v378
      %v380 = vshrl.u32 %v295, 16
      %v382 = vrot.slane %v380, 4
      %v383 = vor.u32 %v382, %v378
      %v384 = vrot.slane %v383, 4
      %v386 = vshll.u32 %v296, 16
      %v388 = vrot.slane %v386, 5
      %v389 = vsel %vm341, %v384, %v388
      %v391 = vshrl.u32 %v297, 16
      %v393 = vrot.slane %v391, 4
      %v394 = vshll.u32 %v297, 16
      %v396 = vrot.slane %v394, 5
      %v397 = vor.u32 %v393, %v396
      %v398 = vrot.slane %v397, 4
      %v400 = vshll.u32 %v298, 16
      %v402 = vrot.slane %v400, 5
      %v403 = vsel %vm341, %v398, %v402
      %v404 = vshrl.u32 %v298, 16
      %v406 = vrot.slane %v404, 4
      %v407 = vor.u32 %v406, %v402
      %v408 = vrot.slane %v407, 4
      %v410 = vshll.u32 %v299, 16
      %v412 = vrot.slane %v410, 5
      %v413 = vsel %vm341, %v408, %v412
      %v415 = vshrl.u32 %v300, 16
      %v417 = vrot.slane %v415, 4
      %v418 = vshll.u32 %v300, 16
      %v420 = vrot.slane %v418, 5
      %v421 = vor.u32 %v417, %v420
      %v422 = vrot.slane %v421, 4
      %v424 = vshll.u32 %v301, 16
      %v426 = vrot.slane %v424, 5
      %v427 = vsel %vm341, %v422, %v426
      %v428 = vshrl.u32 %v301, 16
      %v430 = vrot.slane %v428, 4
      %v431 = vor.u32 %v430, %v426
      %v432 = vrot.slane %v431, 4
      %v434 = vshll.u32 %v302, 16
      %v436 = vrot.slane %v434, 5
      %v437 = vsel %vm341, %v432, %v436
      %v439 = vshrl.u32 %v303, 16
      %v441 = vrot.slane %v439, 4
      %v442 = vshll.u32 %v303, 16
      %v444 = vrot.slane %v442, 5
      %v445 = vor.u32 %v441, %v444
      %v446 = vrot.slane %v445, 4
      %v448 = vshll.u32 %v304, 16
      %v450 = vrot.slane %v448, 5
      %v451 = vsel %vm341, %v446, %v450
      %v452 = vshrl.u32 %v304, 16
      %v454 = vrot.slane %v452, 4
      %v455 = vor.u32 %v454, %v450
      %v456 = vrot.slane %v455, 4
      %v458 = vshll.u32 %v305, 16
      %v460 = vrot.slane %v458, 5
      %v461 = vsel %vm341, %v456, %v460
      %v463 = vshrl.u32 %v306, 16
      %v465 = vrot.slane %v463, 4
      %v466 = vshll.u32 %v306, 16
      %v468 = vrot.slane %v466, 5
      %v469 = vor.u32 %v465, %v468
      %v470 = vrot.slane %v469, 4
      %v472 = vshll.u32 %v307, 16
      %v474 = vrot.slane %v472, 5
      %v475 = vsel %vm341, %v470, %v474
      %v476 = vshrl.u32 %v307, 16
      %v478 = vrot.slane %v476, 4
      %v479 = vor.u32 %v478, %v474
      %v480 = vrot.slane %v479, 4
      %v482 = vshll.u32 %v308, 16
      %v484 = vrot.slane %v482, 5
      %v485 = vsel %vm341, %v480, %v484
      %v487 = vshrl.u32 %v309, 16
      %v489 = vrot.slane %v487, 4
      %v490 = vshll.u32 %v309, 16
      %v492 = vrot.slane %v490, 5
      %v493 = vor.u32 %v489, %v492
      %v494 = vrot.slane %v493, 4
      %v496 = vshll.u32 %v310, 16
      %v498 = vrot.slane %v496, 5
      %v499 = vsel %vm341, %v494, %v498
      %v500 = vshrl.u32 %v310, 16
      %v502 = vrot.slane %v500, 4
      %v503 = vor.u32 %v502, %v498
      %v504 = vrot.slane %v503, 4
      %v506 = vshll.u32 %v311, 16
      %v508 = vrot.slane %v506, 5
      %v509 = vsel %vm341, %v504, %v508
      %v511 = vshrl.u32 %v312, 16
      %v513 = vrot.slane %v511, 4
      %v514 = vshll.u32 %v312, 16
      %v516 = vrot.slane %v514, 5
      %v517 = vor.u32 %v513, %v516
      %v518 = vrot.slane %v517, 4
      %v520 = vshll.u32 %v313, 16
      %v522 = vrot.slane %v520, 5
      %v523 = vsel %vm341, %v518, %v522
      %v524 = vshrl.u32 %v313, 16
      %v526 = vrot.slane %v524, 4
      %v527 = vor.u32 %v526, %v522
      %v528 = vrot.slane %v527, 4
      %v530 = vshll.u32 %v314, 16
      %v532 = vrot.slane %v530, 5
      %v533 = vsel %vm341, %v528, %v532
      %v535 = vshrl.u32 %v315, 16
      %v537 = vrot.slane %v535, 4
      %v538 = vshll.u32 %v315, 16
      %v540 = vrot.slane %v538, 5
      %v541 = vor.u32 %v537, %v540
      %v542 = vrot.slane %v541, 4
      %v544 = vshll.u32 %v316, 16
      %v546 = vrot.slane %v544, 5
      %v547 = vsel %vm341, %v542, %v546
      %v548 = vshrl.u32 %v316, 16
      %v550 = vrot.slane %v548, 4
      %v551 = vor.u32 %v550, %v546
      %v552 = vrot.slane %v551, 4
      %v554 = vshll.u32 %v317, 16
      %v556 = vrot.slane %v554, 5
      %v557 = vsel %vm341, %v552, %v556
      %v559 = vshrl.u32 %v318, 16
      %v561 = vrot.slane %v559, 4
      %v562 = vshll.u32 %v318, 16
      %v564 = vrot.slane %v562, 5
      %v565 = vor.u32 %v561, %v564
      %v566 = vrot.slane %v565, 4
      %v568 = vshll.u32 %v319, 16
      %v570 = vrot.slane %v568, 5
      %v571 = vsel %vm341, %v566, %v570
      %v572 = vshrl.u32 %v319, 16
      %v574 = vrot.slane %v572, 4
      %v575 = vor.u32 %v574, %v570
      %v576 = vrot.slane %v575, 4
      %v578 = vshll.u32 %v320, 16
      %v580 = vrot.slane %v578, 5
      %v581 = vsel %vm341, %v576, %v580
      %v583 = vshrl.u32 %v321, 16
      %v585 = vrot.slane %v583, 4
      %v586 = vshll.u32 %v321, 16
      %v588 = vrot.slane %v586, 5
      %v589 = vor.u32 %v585, %v588
      %v590 = vrot.slane %v589, 4
      %v592 = vshll.u32 %v322, 16
      %v594 = vrot.slane %v592, 5
      %v595 = vsel %vm341, %v590, %v594
      %v596 = vshrl.u32 %v322, 16
      %v598 = vrot.slane %v596, 4
      %v599 = vor.u32 %v598, %v594
      %v600 = vrot.slane %v599, 4
      %v602 = vshll.u32 %v323, 16
      %v604 = vrot.slane %v602, 5
      %v605 = vsel %vm341, %v600, %v604
      %v607 = vshrl.u32 %v324, 16
      %v609 = vrot.slane %v607, 4
      %v610 = vshll.u32 %v324, 16
      %v612 = vrot.slane %v610, 5
      %v613 = vor.u32 %v609, %v612
      %v614 = vrot.slane %v613, 4
      %v616 = vshll.u32 %v325, 16
      %v618 = vrot.slane %v616, 5
      %v619 = vsel %vm341, %v614, %v618
      %v620 = vshrl.u32 %v325, 16
      %v622 = vrot.slane %v620, 4
      %v623 = vor.u32 %v622, %v618
      %v624 = vrot.slane %v623, 4
      %v626 = vshll.u32 %v326, 16
      %v628 = vrot.slane %v626, 5
      %v629 = vsel %vm341, %v624, %v628
      %v631 = vshrl.u32 %v327, 16
      %v633 = vrot.slane %v631, 4
      %v634 = vshll.u32 %v327, 16
      %v636 = vrot.slane %v634, 5
      %v637 = vor.u32 %v633, %v636
      %v638 = vrot.slane %v637, 4
      %v640 = vshll.u32 %v328, 16
      %v642 = vrot.slane %v640, 5
      %v643 = vsel %vm341, %v638, %v642
      %v644 = vshrl.u32 %v328, 16
      %v646 = vrot.slane %v644, 4
      %v647 = vor.u32 %v646, %v642
      %v648 = vrot.slane %v647, 4
      %v650 = vshll.u32 %v329, 16
      %v652 = vrot.slane %v650, 5
      %v653 = vsel %vm341, %v648, %v652
      %v655 = vshrl.u32 %v330, 16
      %v657 = vrot.slane %v655, 4
      %v658 = vshll.u32 %v330, 16
      %v660 = vrot.slane %v658, 5
      %v661 = vor.u32 %v657, %v660
      %v662 = vrot.slane %v661, 4
      %v664 = vshll.u32 %v331, 16
      %v666 = vrot.slane %v664, 5
      %v667 = vsel %vm341, %v662, %v666
      %v668 = vshrl.u32 %v331, 16
      %v670 = vrot.slane %v668, 4
      %v671 = vor.u32 %v670, %v666
      %v672 = vrot.slane %v671, 4
      %v674 = vshll.u32 %v332, 16
      %v676 = vrot.slane %v674, 5
      %v677 = vsel %vm341, %v672, %v676
      %v679 = vshrl.u32 %v333, 16
      %v681 = vrot.slane %v679, 4
      %v682 = vshll.u32 %v333, 16
      %v684 = vrot.slane %v682, 5
      %v685 = vor.u32 %v681, %v684
      %v686 = vrot.slane %v685, 4
      %v688 = vshll.u32 %v334, 16
      %v690 = vrot.slane %v688, 5
      %v691 = vsel %vm341, %v686, %v690
      %v692 = vshrl.u32 %v334, 16
      %v694 = vrot.slane %v692, 4
      %v695 = vor.u32 %v694, %v690
      %v696 = vrot.slane %v695, 4
      %v698 = vshll.u32 %v335, 16
      %v700 = vrot.slane %v698, 5
      %v701 = vsel %vm341, %v696, %v700
      %v703 = vshrl.u32 %v336, 16
      %v705 = vrot.slane %v703, 4
      %v706 = vshll.u32 %v336, 16
      %v708 = vrot.slane %v706, 5
      %v709 = vor.u32 %v705, %v708
      %v710 = vrot.slane %v709, 4
      %v712 = vshll.u32 %v337, 16
      %v714 = vrot.slane %v712, 5
      %v715 = vsel %vm341, %v710, %v714
      %v716 = vshrl.u32 %v337, 16
      %v718 = vrot.slane %v716, 4
      %v719 = vor.u32 %v718, %v714
      %v720 = vrot.slane %v719, 4
      %v722 = vshll.u32 %v338, 16
      %v724 = vrot.slane %v722, 5
      %v725 = vsel %vm341, %v720, %v724
      %726 = vrot.lane.b32.xlu0 %v355, 16
      %v727 = vpop.permute.xlu0 %726
      %728 = vrot.lane.b32.xlu0 %v365, 16
      %v729 = vpop.permute.xlu0 %728
      %730 = vrot.lane.b32.xlu0 %v379, 16
      %v731 = vpop.permute.xlu0 %730
      %732 = vrot.lane.b32.xlu0 %v389, 16
      %v733 = vpop.permute.xlu0 %732
      %734 = vrot.lane.b32.xlu0 %v403, 16
      %v735 = vpop.permute.xlu0 %734
      %736 = vrot.lane.b32.xlu0 %v413, 16
      %v737 = vpop.permute.xlu0 %736
      %738 = vrot.lane.b32.xlu0 %v427, 16
      %v739 = vpop.permute.xlu0 %738
      %740 = vrot.lane.b32.xlu0 %v437, 16
      %v741 = vpop.permute.xlu0 %740
      %742 = vrot.lane.b32.xlu0 %v451, 16
      %v743 = vpop.permute.xlu0 %742
      %744 = vrot.lane.b32.xlu0 %v461, 16
      %v745 = vpop.permute.xlu0 %744
      %746 = vrot.lane.b32.xlu0 %v475, 16
      %v747 = vpop.permute.xlu0 %746
      %748 = vrot.lane.b32.xlu0 %v485, 16
      %v749 = vpop.permute.xlu0 %748
      %750 = vrot.lane.b32.xlu0 %v499, 16
      %v751 = vpop.permute.xlu0 %750
      %752 = vrot.lane.b32.xlu0 %v509, 16
      %v753 = vpop.permute.xlu0 %752
      %754 = vrot.lane.b32.xlu0 %v523, 16
      %v755 = vpop.permute.xlu0 %754
      %756 = vrot.lane.b32.xlu0 %v533, 16
      %v757 = vpop.permute.xlu0 %756
      %758 = vrot.lane.b32.xlu0 %v547, 16
      %v759 = vpop.permute.xlu0 %758
      %760 = vrot.lane.b32.xlu0 %v557, 16
      %v761 = vpop.permute.xlu0 %760
      %762 = vrot.lane.b32.xlu0 %v571, 16
      %v763 = vpop.permute.xlu0 %762
      %764 = vrot.lane.b32.xlu0 %v581, 16
      %v765 = vpop.permute.xlu0 %764
      %766 = vrot.lane.b32.xlu0 %v595, 16
      %v767 = vpop.permute.xlu0 %766
      %768 = vrot.lane.b32.xlu0 %v605, 16
      %v769 = vpop.permute.xlu0 %768
      %770 = vrot.lane.b32.xlu0 %v619, 16
      %v771 = vpop.permute.xlu0 %770
      %772 = vrot.lane.b32.xlu0 %v629, 16
      %v773 = vpop.permute.xlu0 %772
      %774 = vrot.lane.b32.xlu0 %v643, 16
      %v775 = vpop.permute.xlu0 %774
      %776 = vrot.lane.b32.xlu0 %v653, 16
      %v777 = vpop.permute.xlu0 %776
      %778 = vrot.lane.b32.xlu0 %v667, 16
      %v779 = vpop.permute.xlu0 %778
      %780 = vrot.lane.b32.xlu0 %v677, 16
      %v781 = vpop.permute.xlu0 %780
      %782 = vrot.lane.b32.xlu0 %v691, 16
      %v783 = vpop.permute.xlu0 %782
      %784 = vrot.lane.b32.xlu0 %v701, 16
      %v785 = vpop.permute.xlu0 %784
      %786 = vrot.lane.b32.xlu0 %v715, 16
      %v787 = vpop.permute.xlu0 %786
      %788 = vrot.lane.b32.xlu0 %v725, 16
      %v789 = vpop.permute.xlu0 %788
      %vm822 = vcmask 257152
      %823 = vst.msk [vmem:[#allocation2] sm:$0xf] %vm822, %v727
      %824 = vst.msk [vmem:[#allocation2 + $0x8] sm:$0xf] %vm822, %v729
      %825 = vst.msk [vmem:[#allocation2 + $0x10] sm:$0xf] %vm822, %v731
      %826 = vst.msk [vmem:[#allocation2 + $0x18] sm:$0xf] %vm822, %v733
      %827 = vst.msk [vmem:[#allocation2 + $0x20] sm:$0xf] %vm822, %v735
      %828 = vst.msk [vmem:[#allocation2 + $0x28] sm:$0xf] %vm822, %v737
      %829 = vst.msk [vmem:[#allocation2 + $0x30] sm:$0xf] %vm822, %v739
      %830 = vst.msk [vmem:[#allocation2 + $0x38] sm:$0xf] %vm822, %v741
      %831 = vst.msk [vmem:[#allocation2 + $0x40] sm:$0xf] %vm822, %v743
      %832 = vst.msk [vmem:[#allocation2 + $0x48] sm:$0xf] %vm822, %v745
      %833 = vst.msk [vmem:[#allocation2 + $0x50] sm:$0xf] %vm822, %v747
      %834 = vst.msk [vmem:[#allocation2 + $0x58] sm:$0xf] %vm822, %v749
      %835 = vst.msk [vmem:[#allocation2 + $0x60] sm:$0xf] %vm822, %v751
      %836 = vst.msk [vmem:[#allocation2 + $0x68] sm:$0xf] %vm822, %v753
      %837 = vst.msk [vmem:[#allocation2 + $0x70] sm:$0xf] %vm822, %v755
      %838 = vst.msk [vmem:[#allocation2 + $0x78] sm:$0xf] %vm822, %v757
      %839 = vst.msk [vmem:[#allocation2 + $0x80] sm:$0xf] %vm822, %v759
      %840 = vst.msk [vmem:[#allocation2 + $0x88] sm:$0xf] %vm822, %v761
      %841 = vst.msk [vmem:[#allocation2 + $0x90] sm:$0xf] %vm822, %v763
      %842 = vst.msk [vmem:[#allocation2 + $0x98] sm:$0xf] %vm822, %v765
      %843 = vst.msk [vmem:[#allocation2 + $0xa0] sm:$0xf] %vm822, %v767
      %844 = vst.msk [vmem:[#allocation2 + $0xa8] sm:$0xf] %vm822, %v769
      %845 = vst.msk [vmem:[#allocation2 + $0xb0] sm:$0xf] %vm822, %v771
      %846 = vst.msk [vmem:[#allocation2 + $0xb8] sm:$0xf] %vm822, %v773
      %847 = vst.msk [vmem:[#allocation2 + $0xc0] sm:$0xf] %vm822, %v775
      %848 = vst.msk [vmem:[#allocation2 + $0xc8] sm:$0xf] %vm822, %v777
      %849 = vst.msk [vmem:[#allocation2 + $0xd0] sm:$0xf] %vm822, %v779
      %850 = vst.msk [vmem:[#allocation2 + $0xd8] sm:$0xf] %vm822, %v781
      %851 = vst.msk [vmem:[#allocation2 + $0xe0] sm:$0xf] %vm822, %v783
      %852 = vst.msk [vmem:[#allocation2 + $0xe8] sm:$0xf] %vm822, %v785
      %853 = vst.msk [vmem:[#allocation2 + $0xf0] sm:$0xf] %vm822, %v787
      %854 = vst.msk [vmem:[#allocation2 + $0xf8] sm:$0xf] %vm822, %v789
      %v855 = vld [vmem:[%s219] sm:$0xe]
      %v856 = vld [vmem:[%s219 + $0x4] sm:$0xf]
      %v857 = vld [vmem:[%s219 + $0x8] sm:$0x1]
      %v858 = vld [vmem:[%s219 + $0xc] sm:$0xe]
      %v859 = vld [vmem:[%s219 + $0x10] sm:$0xf]
      %v860 = vld [vmem:[%s219 + $0x14] sm:$0x1]
      %v861 = vld [vmem:[%s219 + $0x18] sm:$0xe]
      %v862 = vld [vmem:[%s219 + $0x1c] sm:$0xf]
      %v863 = vld [vmem:[%s219 + $0x20] sm:$0x1]
      %v864 = vld [vmem:[%s219 + $0x24] sm:$0xe]
      %v865 = vld [vmem:[%s219 + $0x28] sm:$0xf]
      %v866 = vld [vmem:[%s219 + $0x2c] sm:$0x1]
      %v867 = vld [vmem:[%s219 + $0x30] sm:$0xe]
      %v868 = vld [vmem:[%s219 + $0x34] sm:$0xf]
      %v869 = vld [vmem:[%s219 + $0x38] sm:$0x1]
      %v870 = vld [vmem:[%s219 + $0x3c] sm:$0xe]
      %v871 = vld [vmem:[%s219 + $0x40] sm:$0xf]
      %v872 = vld [vmem:[%s219 + $0x44] sm:$0x1]
      %v873 = vld [vmem:[%s219 + $0x48] sm:$0xe]
      %v874 = vld [vmem:[%s219 + $0x4c] sm:$0xf]
      %v875 = vld [vmem:[%s219 + $0x50] sm:$0x1]
      %v876 = vld [vmem:[%s219 + $0x54] sm:$0xe]
      %v877 = vld [vmem:[%s219 + $0x58] sm:$0xf]
      %v878 = vld [vmem:[%s219 + $0x5c] sm:$0x1]
      %v879 = vld [vmem:[%s219 + $0x60] sm:$0xe]
      %v880 = vld [vmem:[%s219 + $0x64] sm:$0xf]
      %v881 = vld [vmem:[%s219 + $0x68] sm:$0x1]
      %v882 = vld [vmem:[%s219 + $0x6c] sm:$0xe]
      %v883 = vld [vmem:[%s219 + $0x70] sm:$0xf]
      %v884 = vld [vmem:[%s219 + $0x74] sm:$0x1]
      %v885 = vld [vmem:[%s219 + $0x78] sm:$0xe]
      %v886 = vld [vmem:[%s219 + $0x7c] sm:$0xf]
      %v887 = vld [vmem:[%s219 + $0x80] sm:$0x1]
      %v888 = vld [vmem:[%s219 + $0x84] sm:$0xe]
      %v889 = vld [vmem:[%s219 + $0x88] sm:$0xf]
      %v890 = vld [vmem:[%s219 + $0x8c] sm:$0x1]
      %v891 = vld [vmem:[%s219 + $0x90] sm:$0xe]
      %v892 = vld [vmem:[%s219 + $0x94] sm:$0xf]
      %v893 = vld [vmem:[%s219 + $0x98] sm:$0x1]
      %v894 = vld [vmem:[%s219 + $0x9c] sm:$0xe]
      %v895 = vld [vmem:[%s219 + $0xa0] sm:$0xf]
      %v896 = vld [vmem:[%s219 + $0xa4] sm:$0x1]
      %v897 = vld [vmem:[%s219 + $0xa8] sm:$0xe]
      %v898 = vld [vmem:[%s219 + $0xac] sm:$0xf]
      %v899 = vld [vmem:[%s219 + $0xb0] sm:$0x1]
      %v900 = vld [vmem:[%s219 + $0xb4] sm:$0xe]
      %v901 = vld [vmem:[%s219 + $0xb8] sm:$0xf]
      %v902 = vld [vmem:[%s219 + $0xbc] sm:$0x1]
      %vm951 = vcmask 1042432
      %vm952 = vcmask 1046532
      %vm953 = vmor %vm951, %vm952
      %v954 = vrot.slane %v855, 5
      %v955 = vrot.slane %v954, 4
      %v956 = vrot.slane %v856, 5
      %v957 = vsel %vm953, %v955, %v956
      %v958 = vrot.slane %v956, 4
      %v959 = vrot.slane %v857, 5
      %v960 = vsel %vm953, %v958, %v959
      %v961 = vrot.slane %v858, 5
      %v962 = vrot.slane %v961, 4
      %v963 = vrot.slane %v859, 5
      %v964 = vsel %vm953, %v962, %v963
      %v965 = vrot.slane %v963, 4
      %v966 = vrot.slane %v860, 5
      %v967 = vsel %vm953, %v965, %v966
      %v968 = vrot.slane %v861, 5
      %v969 = vrot.slane %v968, 4
      %v970 = vrot.slane %v862, 5
      %v971 = vsel %vm953, %v969, %v970
      %v972 = vrot.slane %v970, 4
      %v973 = vrot.slane %v863, 5
      %v974 = vsel %vm953, %v972, %v973
      %v975 = vrot.slane %v864, 5
      %v976 = vrot.slane %v975, 4
      %v977 = vrot.slane %v865, 5
      %v978 = vsel %vm953, %v976, %v977
      %v979 = vrot.slane %v977, 4
      %v980 = vrot.slane %v866, 5
      %v981 = vsel %vm953, %v979, %v980
      %v982 = vrot.slane %v867, 5
      %v983 = vrot.slane %v982, 4
      %v984 = vrot.slane %v868, 5
      %v985 = vsel %vm953, %v983, %v984
      %v986 = vrot.slane %v984, 4
      %v987 = vrot.slane %v869, 5
      %v988 = vsel %vm953, %v986, %v987
      %v989 = vrot.slane %v870, 5
      %v990 = vrot.slane %v989, 4
      %v991 = vrot.slane %v871, 5
      %v992 = vsel %vm953, %v990, %v991
      %v993 = vrot.slane %v991, 4
      %v994 = vrot.slane %v872, 5
      %v995 = vsel %vm953, %v993, %v994
      %v996 = vrot.slane %v873, 5
      %v997 = vrot.slane %v996, 4
      %v998 = vrot.slane %v874, 5
      %v999 = vsel %vm953, %v997, %v998
      %v1000 = vrot.slane %v998, 4
      %v1001 = vrot.slane %v875, 5
      %v1002 = vsel %vm953, %v1000, %v1001
      %v1003 = vrot.slane %v876, 5
      %v1004 = vrot.slane %v1003, 4
      %v1005 = vrot.slane %v877, 5
      %v1006 = vsel %vm953, %v1004, %v1005
      %v1007 = vrot.slane %v1005, 4
      %v1008 = vrot.slane %v878, 5
      %v1009 = vsel %vm953, %v1007, %v1008
      %v1010 = vrot.slane %v879, 5
      %v1011 = vrot.slane %v1010, 4
      %v1012 = vrot.slane %v880, 5
      %v1013 = vsel %vm953, %v1011, %v1012
      %v1014 = vrot.slane %v1012, 4
      %v1015 = vrot.slane %v881, 5
      %v1016 = vsel %vm953, %v1014, %v1015
      %v1017 = vrot.slane %v882, 5
      %v1018 = vrot.slane %v1017, 4
      %v1019 = vrot.slane %v883, 5
      %v1020 = vsel %vm953, %v1018, %v1019
      %v1021 = vrot.slane %v1019, 4
      %v1022 = vrot.slane %v884, 5
      %v1023 = vsel %vm953, %v1021, %v1022
      %v1024 = vrot.slane %v885, 5
      %v1025 = vrot.slane %v1024, 4
      %v1026 = vrot.slane %v886, 5
      %v1027 = vsel %vm953, %v1025, %v1026
      %v1028 = vrot.slane %v1026, 4
      %v1029 = vrot.slane %v887, 5
      %v1030 = vsel %vm953, %v1028, %v1029
      %v1031 = vrot.slane %v888, 5
      %v1032 = vrot.slane %v1031, 4
      %v1033 = vrot.slane %v889, 5
      %v1034 = vsel %vm953, %v1032, %v1033
      %v1035 = vrot.slane %v1033, 4
      %v1036 = vrot.slane %v890, 5
      %v1037 = vsel %vm953, %v1035, %v1036
      %v1038 = vrot.slane %v891, 5
      %v1039 = vrot.slane %v1038, 4
      %v1040 = vrot.slane %v892, 5
      %v1041 = vsel %vm953, %v1039, %v1040
      %v1042 = vrot.slane %v1040, 4
      %v1043 = vrot.slane %v893, 5
      %v1044 = vsel %vm953, %v1042, %v1043
      %v1045 = vrot.slane %v894, 5
      %v1046 = vrot.slane %v1045, 4
      %v1047 = vrot.slane %v895, 5
      %v1048 = vsel %vm953, %v1046, %v1047
      %v1049 = vrot.slane %v1047, 4
      %v1050 = vrot.slane %v896, 5
      %v1051 = vsel %vm953, %v1049, %v1050
      %v1052 = vrot.slane %v897, 5
      %v1053 = vrot.slane %v1052, 4
      %v1054 = vrot.slane %v898, 5
      %v1055 = vsel %vm953, %v1053, %v1054
      %v1056 = vrot.slane %v1054, 4
      %v1057 = vrot.slane %v899, 5
      %v1058 = vsel %vm953, %v1056, %v1057
      %v1059 = vrot.slane %v900, 5
      %v1060 = vrot.slane %v1059, 4
      %v1061 = vrot.slane %v901, 5
      %v1062 = vsel %vm953, %v1060, %v1061
      %v1063 = vrot.slane %v1061, 4
      %v1064 = vrot.slane %v902, 5
      %v1065 = vsel %vm953, %v1063, %v1064
      %1066 = vrot.lane.b32.xlu0 %v957, 32
      %v1067 = vpop.permute.xlu0 %1066
      %1068 = vrot.lane.b32.xlu0 %v960, 32
      %v1069 = vpop.permute.xlu0 %1068
      %1070 = vrot.lane.b32.xlu0 %v964, 32
      %v1071 = vpop.permute.xlu0 %1070
      %1072 = vrot.lane.b32.xlu0 %v967, 32
      %v1073 = vpop.permute.xlu0 %1072
      %1074 = vrot.lane.b32.xlu0 %v971, 32
      %v1075 = vpop.permute.xlu0 %1074
      %1076 = vrot.lane.b32.xlu0 %v974, 32
      %v1077 = vpop.permute.xlu0 %1076
      %1078 = vrot.lane.b32.xlu0 %v978, 32
      %v1079 = vpop.permute.xlu0 %1078
      %1080 = vrot.lane.b32.xlu0 %v981, 32
      %v1081 = vpop.permute.xlu0 %1080
      %1082 = vrot.lane.b32.xlu0 %v985, 32
      %v1083 = vpop.permute.xlu0 %1082
      %1084 = vrot.lane.b32.xlu0 %v988, 32
      %v1085 = vpop.permute.xlu0 %1084
      %1086 = vrot.lane.b32.xlu0 %v992, 32
      %v1087 = vpop.permute.xlu0 %1086
      %1088 = vrot.lane.b32.xlu0 %v995, 32
      %v1089 = vpop.permute.xlu0 %1088
      %1090 = vrot.lane.b32.xlu0 %v999, 32
      %v1091 = vpop.permute.xlu0 %1090
      %1092 = vrot.lane.b32.xlu0 %v1002, 32
      %v1093 = vpop.permute.xlu0 %1092
      %1094 = vrot.lane.b32.xlu0 %v1006, 32
      %v1095 = vpop.permute.xlu0 %1094
      %1096 = vrot.lane.b32.xlu0 %v1009, 32
      %v1097 = vpop.permute.xlu0 %1096
      %1098 = vrot.lane.b32.xlu0 %v1013, 32
      %v1099 = vpop.permute.xlu0 %1098
      %1100 = vrot.lane.b32.xlu0 %v1016, 32
      %v1101 = vpop.permute.xlu0 %1100
      %1102 = vrot.lane.b32.xlu0 %v1020, 32
      %v1103 = vpop.permute.xlu0 %1102
      %1104 = vrot.lane.b32.xlu0 %v1023, 32
      %v1105 = vpop.permute.xlu0 %1104
      %1106 = vrot.lane.b32.xlu0 %v1027, 32
      %v1107 = vpop.permute.xlu0 %1106
      %1108 = vrot.lane.b32.xlu0 %v1030, 32
      %v1109 = vpop.permute.xlu0 %1108
      %1110 = vrot.lane.b32.xlu0 %v1034, 32
      %v1111 = vpop.permute.xlu0 %1110
      %1112 = vrot.lane.b32.xlu0 %v1037, 32
      %v1113 = vpop.permute.xlu0 %1112
      %1114 = vrot.lane.b32.xlu0 %v1041, 32
      %v1115 = vpop.permute.xlu0 %1114
      %1116 = vrot.lane.b32.xlu0 %v1044, 32
      %v1117 = vpop.permute.xlu0 %1116
      %1118 = vrot.lane.b32.xlu0 %v1048, 32
      %v1119 = vpop.permute.xlu0 %1118
      %1120 = vrot.lane.b32.xlu0 %v1051, 32
      %v1121 = vpop.permute.xlu0 %1120
      %1122 = vrot.lane.b32.xlu0 %v1055, 32
      %v1123 = vpop.permute.xlu0 %1122
      %1124 = vrot.lane.b32.xlu0 %v1058, 32
      %v1125 = vpop.permute.xlu0 %1124
      %1126 = vrot.lane.b32.xlu0 %v1062, 32
      %v1127 = vpop.permute.xlu0 %1126
      %1128 = vrot.lane.b32.xlu0 %v1065, 32
      %v1129 = vpop.permute.xlu0 %1128
      %vm1162 = vcmask 388352
      %1163 = vst.msk [vmem:[#allocation2] sm:$0xf] %vm1162, %v1067
      %1164 = vst.msk [vmem:[#allocation2 + $0x8] sm:$0xf] %vm1162, %v1069
      %1165 = vst.msk [vmem:[#allocation2 + $0x10] sm:$0xf] %vm1162, %v1071
      %1166 = vst.msk [vmem:[#allocation2 + $0x18] sm:$0xf] %vm1162, %v1073
      %1167 = vst.msk [vmem:[#allocation2 + $0x20] sm:$0xf] %vm1162, %v1075
      %1168 = vst.msk [vmem:[#allocation2 + $0x28] sm:$0xf] %vm1162, %v1077
      %1169 = vst.msk [vmem:[#allocation2 + $0x30] sm:$0xf] %vm1162, %v1079
      %1170 = vst.msk [vmem:[#allocation2 + $0x38] sm:$0xf] %vm1162, %v1081
      %1171 = vst.msk [vmem:[#allocation2 + $0x40] sm:$0xf] %vm1162, %v1083
      %1172 = vst.msk [vmem:[#allocation2 + $0x48] sm:$0xf] %vm1162, %v1085
      %1173 = vst.msk [vmem:[#allocation2 + $0x50] sm:$0xf] %vm1162, %v1087
      %1174 = vst.msk [vmem:[#allocation2 + $0x58] sm:$0xf] %vm1162, %v1089
      %1175 = vst.msk [vmem:[#allocation2 + $0x60] sm:$0xf] %vm1162, %v1091
      %1176 = vst.msk [vmem:[#allocation2 + $0x68] sm:$0xf] %vm1162, %v1093
      %1177 = vst.msk [vmem:[#allocation2 + $0x70] sm:$0xf] %vm1162, %v1095
      %1178 = vst.msk [vmem:[#allocation2 + $0x78] sm:$0xf] %vm1162, %v1097
      %1179 = vst.msk [vmem:[#allocation2 + $0x80] sm:$0xf] %vm1162, %v1099
      %1180 = vst.msk [vmem:[#allocation2 + $0x88] sm:$0xf] %vm1162, %v1101
      %1181 = vst.msk [vmem:[#allocation2 + $0x90] sm:$0xf] %vm1162, %v1103
      %1182 = vst.msk [vmem:[#allocation2 + $0x98] sm:$0xf] %vm1162, %v1105
      %1183 = vst.msk [vmem:[#allocation2 + $0xa0] sm:$0xf] %vm1162, %v1107
      %1184 = vst.msk [vmem:[#allocation2 + $0xa8] sm:$0xf] %vm1162, %v1109
      %1185 = vst.msk [vmem:[#allocation2 + $0xb0] sm:$0xf] %vm1162, %v1111
      %1186 = vst.msk [vmem:[#allocation2 + $0xb8] sm:$0xf] %vm1162, %v1113
      %1187 = vst.msk [vmem:[#allocation2 + $0xc0] sm:$0xf] %vm1162, %v1115
      %1188 = vst.msk [vmem:[#allocation2 + $0xc8] sm:$0xf] %vm1162, %v1117
      %1189 = vst.msk [vmem:[#allocation2 + $0xd0] sm:$0xf] %vm1162, %v1119
      %1190 = vst.msk [vmem:[#allocation2 + $0xd8] sm:$0xf] %vm1162, %v1121
      %1191 = vst.msk [vmem:[#allocation2 + $0xe0] sm:$0xf] %vm1162, %v1123
      %1192 = vst.msk [vmem:[#allocation2 + $0xe8] sm:$0xf] %vm1162, %v1125
      %1193 = vst.msk [vmem:[#allocation2 + $0xf0] sm:$0xf] %vm1162, %v1127
      %1194 = vst.msk [vmem:[#allocation2 + $0xf8] sm:$0xf] %vm1162, %v1129
      %s1195 = scalar_lea.vmem %s219, 12
      %v1196 = vld [vmem:[%s1195] sm:$0xf]
      %v1197 = vld [vmem:[%s1195 + $0x4] sm:$0xf]
      %v1198 = vld [vmem:[%s1195 + $0xc] sm:$0xf]
      %v1199 = vld [vmem:[%s1195 + $0x10] sm:$0xf]
      %v1200 = vld [vmem:[%s1195 + $0x18] sm:$0xf]
      %v1201 = vld [vmem:[%s1195 + $0x1c] sm:$0xf]
      %v1202 = vld [vmem:[%s1195 + $0x24] sm:$0xf]
      %v1203 = vld [vmem:[%s1195 + $0x28] sm:$0xf]
      %v1204 = vld [vmem:[%s1195 + $0x30] sm:$0xf]
      %v1205 = vld [vmem:[%s1195 + $0x34] sm:$0xf]
      %v1206 = vld [vmem:[%s1195 + $0x3c] sm:$0xf]
      %v1207 = vld [vmem:[%s1195 + $0x40] sm:$0xf]
      %v1208 = vld [vmem:[%s1195 + $0x48] sm:$0xf]
      %v1209 = vld [vmem:[%s1195 + $0x4c] sm:$0xf]
      %v1210 = vld [vmem:[%s1195 + $0x54] sm:$0xf]
      %v1211 = vld [vmem:[%s1195 + $0x58] sm:$0xf]
      %v1212 = vld [vmem:[%s1195 + $0x60] sm:$0xf]
      %v1213 = vld [vmem:[%s1195 + $0x64] sm:$0xf]
      %v1214 = vld [vmem:[%s1195 + $0x6c] sm:$0xf]
      %v1215 = vld [vmem:[%s1195 + $0x70] sm:$0xf]
      %v1216 = vld [vmem:[%s1195 + $0x78] sm:$0xf]
      %v1217 = vld [vmem:[%s1195 + $0x7c] sm:$0xf]
      %v1218 = vld [vmem:[%s1195 + $0x84] sm:$0xf]
      %v1219 = vld [vmem:[%s1195 + $0x88] sm:$0xf]
      %v1220 = vld [vmem:[%s1195 + $0x90] sm:$0xf]
      %v1221 = vld [vmem:[%s1195 + $0x94] sm:$0xf]
      %v1222 = vld [vmem:[%s1195 + $0x9c] sm:$0xf]
      %v1223 = vld [vmem:[%s1195 + $0xa0] sm:$0xf]
      %v1224 = vld [vmem:[%s1195 + $0xa8] sm:$0xf]
      %v1225 = vld [vmem:[%s1195 + $0xac] sm:$0xf]
      %v1226 = vld [vmem:[%s1195 + $0xb4] sm:$0xf]
      %v1227 = vld [vmem:[%s1195 + $0xb8] sm:$0xf]
      %1260 = vrot.lane.b32.xlu0 %v1196, 48
      %v1261 = vpop.permute.xlu0 %1260
      %1262 = vrot.lane.b32.xlu0 %v1197, 48
      %v1263 = vpop.permute.xlu0 %1262
      %1264 = vrot.lane.b32.xlu0 %v1198, 48
      %v1265 = vpop.permute.xlu0 %1264
      %1266 = vrot.lane.b32.xlu0 %v1199, 48
      %v1267 = vpop.permute.xlu0 %1266
      %1268 = vrot.lane.b32.xlu0 %v1200, 48
      %v1269 = vpop.permute.xlu0 %1268
      %1270 = vrot.lane.b32.xlu0 %v1201, 48
      %v1271 = vpop.permute.xlu0 %1270
      %1272 = vrot.lane.b32.xlu0 %v1202, 48
      %v1273 = vpop.permute.xlu0 %1272
      %1274 = vrot.lane.b32.xlu0 %v1203, 48
      %v1275 = vpop.permute.xlu0 %1274
      %1276 = vrot.lane.b32.xlu0 %v1204, 48
      %v1277 = vpop.permute.xlu0 %1276
      %1278 = vrot.lane.b32.xlu0 %v1205, 48
      %v1279 = vpop.permute.xlu0 %1278
      %1280 = vrot.lane.b32.xlu0 %v1206, 48
      %v1281 = vpop.permute.xlu0 %1280
      %1282 = vrot.lane.b32.xlu0 %v1207, 48
      %v1283 = vpop.permute.xlu0 %1282
      %1284 = vrot.lane.b32.xlu0 %v1208, 48
      %v1285 = vpop.permute.xlu0 %1284
      %1286 = vrot.lane.b32.xlu0 %v1209, 48
      %v1287 = vpop.permute.xlu0 %1286
      %1288 = vrot.lane.b32.xlu0 %v1210, 48
      %v1289 = vpop.permute.xlu0 %1288
      %1290 = vrot.lane.b32.xlu0 %v1211, 48
      %v1291 = vpop.permute.xlu0 %1290
      %1292 = vrot.lane.b32.xlu0 %v1212, 48
      %v1293 = vpop.permute.xlu0 %1292
      %1294 = vrot.lane.b32.xlu0 %v1213, 48
      %v1295 = vpop.permute.xlu0 %1294
      %1296 = vrot.lane.b32.xlu0 %v1214, 48
      %v1297 = vpop.permute.xlu0 %1296
      %1298 = vrot.lane.b32.xlu0 %v1215, 48
      %v1299 = vpop.permute.xlu0 %1298
      %1300 = vrot.lane.b32.xlu0 %v1216, 48
      %v1301 = vpop.permute.xlu0 %1300
      %1302 = vrot.lane.b32.xlu0 %v1217, 48
      %v1303 = vpop.permute.xlu0 %1302
      %1304 = vrot.lane.b32.xlu0 %v1218, 48
      %v1305 = vpop.permute.xlu0 %1304
      %1306 = vrot.lane.b32.xlu0 %v1219, 48
      %v1307 = vpop.permute.xlu0 %1306
      %1308 = vrot.lane.b32.xlu0 %v1220, 48
      %v1309 = vpop.permute.xlu0 %1308
      %1310 = vrot.lane.b32.xlu0 %v1221, 48
      %v1311 = vpop.permute.xlu0 %1310
      %1312 = vrot.lane.b32.xlu0 %v1222, 48
      %v1313 = vpop.permute.xlu0 %1312
      %1314 = vrot.lane.b32.xlu0 %v1223, 48
      %v1315 = vpop.permute.xlu0 %1314
      %1316 = vrot.lane.b32.xlu0 %v1224, 48
      %v1317 = vpop.permute.xlu0 %1316
      %1318 = vrot.lane.b32.xlu0 %v1225, 48
      %v1319 = vpop.permute.xlu0 %1318
      %1320 = vrot.lane.b32.xlu0 %v1226, 48
      %v1321 = vpop.permute.xlu0 %1320
      %1322 = vrot.lane.b32.xlu0 %v1227, 48
      %v1323 = vpop.permute.xlu0 %1322
      %vm1356 = vcmask 519552
      %1357 = vst.msk [vmem:[#allocation2] sm:$0xf] %vm1356, %v1261
      %1358 = vst.msk [vmem:[#allocation2 + $0x8] sm:$0xf] %vm1356, %v1263
      %1359 = vst.msk [vmem:[#allocation2 + $0x10] sm:$0xf] %vm1356, %v1265
      %1360 = vst.msk [vmem:[#allocation2 + $0x18] sm:$0xf] %vm1356, %v1267
      %1361 = vst.msk [vmem:[#allocation2 + $0x20] sm:$0xf] %vm1356, %v1269
      %1362 = vst.msk [vmem:[#allocation2 + $0x28] sm:$0xf] %vm1356, %v1271
      %1363 = vst.msk [vmem:[#allocation2 + $0x30] sm:$0xf] %vm1356, %v1273
      %1364 = vst.msk [vmem:[#allocation2 + $0x38] sm:$0xf] %vm1356, %v1275
      %1365 = vst.msk [vmem:[#allocation2 + $0x40] sm:$0xf] %vm1356, %v1277
      %1366 = vst.msk [vmem:[#allocation2 + $0x48] sm:$0xf] %vm1356, %v1279
      %1367 = vst.msk [vmem:[#allocation2 + $0x50] sm:$0xf] %vm1356, %v1281
      %1368 = vst.msk [vmem:[#allocation2 + $0x58] sm:$0xf] %vm1356, %v1283
      %1369 = vst.msk [vmem:[#allocation2 + $0x60] sm:$0xf] %vm1356, %v1285
      %1370 = vst.msk [vmem:[#allocation2 + $0x68] sm:$0xf] %vm1356, %v1287
      %1371 = vst.msk [vmem:[#allocation2 + $0x70] sm:$0xf] %vm1356, %v1289
      %1372 = vst.msk [vmem:[#allocation2 + $0x78] sm:$0xf] %vm1356, %v1291
      %1373 = vst.msk [vmem:[#allocation2 + $0x80] sm:$0xf] %vm1356, %v1293
      %1374 = vst.msk [vmem:[#allocation2 + $0x88] sm:$0xf] %vm1356, %v1295
      %1375 = vst.msk [vmem:[#allocation2 + $0x90] sm:$0xf] %vm1356, %v1297
      %1376 = vst.msk [vmem:[#allocation2 + $0x98] sm:$0xf] %vm1356, %v1299
      %1377 = vst.msk [vmem:[#allocation2 + $0xa0] sm:$0xf] %vm1356, %v1301
      %1378 = vst.msk [vmem:[#allocation2 + $0xa8] sm:$0xf] %vm1356, %v1303
      %1379 = vst.msk [vmem:[#allocation2 + $0xb0] sm:$0xf] %vm1356, %v1305
      %1380 = vst.msk [vmem:[#allocation2 + $0xb8] sm:$0xf] %vm1356, %v1307
      %1381 = vst.msk [vmem:[#allocation2 + $0xc0] sm:$0xf] %vm1356, %v1309
      %1382 = vst.msk [vmem:[#allocation2 + $0xc8] sm:$0xf] %vm1356, %v1311
      %1383 = vst.msk [vmem:[#allocation2 + $0xd0] sm:$0xf] %vm1356, %v1313
      %1384 = vst.msk [vmem:[#allocation2 + $0xd8] sm:$0xf] %vm1356, %v1315
      %1385 = vst.msk [vmem:[#allocation2 + $0xe0] sm:$0xf] %vm1356, %v1317
      %1386 = vst.msk [vmem:[#allocation2 + $0xe8] sm:$0xf] %vm1356, %v1319
      %1387 = vst.msk [vmem:[#allocation2 + $0xf0] sm:$0xf] %vm1356, %v1321
      %1388 = vst.msk [vmem:[#allocation2 + $0xf8] sm:$0xf] %vm1356, %v1323
      %v1389 = vld [vmem:[%s1195] sm:$0xf]
      %v1390 = vld [vmem:[%s1195 + $0x4] sm:$0xf]
      %v1391 = vld [vmem:[%s1195 + $0x8] sm:$0x1]
      %v1392 = vld [vmem:[%s1195 + $0xc] sm:$0xf]
      %v1393 = vld [vmem:[%s1195 + $0x10] sm:$0xf]
      %v1394 = vld [vmem:[%s1195 + $0x14] sm:$0x1]
      %v1395 = vld [vmem:[%s1195 + $0x18] sm:$0xf]
      %v1396 = vld [vmem:[%s1195 + $0x1c] sm:$0xf]
      %v1397 = vld [vmem:[%s1195 + $0x20] sm:$0x1]
      %v1398 = vld [vmem:[%s1195 + $0x24] sm:$0xf]
      %v1399 = vld [vmem:[%s1195 + $0x28] sm:$0xf]
      %v1400 = vld [vmem:[%s1195 + $0x2c] sm:$0x1]
      %v1401 = vld [vmem:[%s1195 + $0x30] sm:$0xf]
      %v1402 = vld [vmem:[%s1195 + $0x34] sm:$0xf]
      %v1403 = vld [vmem:[%s1195 + $0x38] sm:$0x1]
      %v1404 = vld [vmem:[%s1195 + $0x3c] sm:$0xf]
      %v1405 = vld [vmem:[%s1195 + $0x40] sm:$0xf]
      %v1406 = vld [vmem:[%s1195 + $0x44] sm:$0x1]
      %v1407 = vld [vmem:[%s1195 + $0x48] sm:$0xf]
      %v1408 = vld [vmem:[%s1195 + $0x4c] sm:$0xf]
      %v1409 = vld [vmem:[%s1195 + $0x50] sm:$0x1]
      %v1410 = vld [vmem:[%s1195 + $0x54] sm:$0xf]
      %v1411 = vld [vmem:[%s1195 + $0x58] sm:$0xf]
      %v1412 = vld [vmem:[%s1195 + $0x5c] sm:$0x1]
      %v1413 = vld [vmem:[%s1195 + $0x60] sm:$0xf]
      %v1414 = vld [vmem:[%s1195 + $0x64] sm:$0xf]
      %v1415 = vld [vmem:[%s1195 + $0x68] sm:$0x1]
      %v1416 = vld [vmem:[%s1195 + $0x6c] sm:$0xf]
      %v1417 = vld [vmem:[%s1195 + $0x70] sm:$0xf]
      %v1418 = vld [vmem:[%s1195 + $0x74] sm:$0x1]
      %v1419 = vld [vmem:[%s1195 + $0x78] sm:$0xf]
      %v1420 = vld [vmem:[%s1195 + $0x7c] sm:$0xf]
      %v1421 = vld [vmem:[%s1195 + $0x80] sm:$0x1]
      %v1422 = vld [vmem:[%s1195 + $0x84] sm:$0xf]
      %v1423 = vld [vmem:[%s1195 + $0x88] sm:$0xf]
      %v1424 = vld [vmem:[%s1195 + $0x8c] sm:$0x1]
      %v1425 = vld [vmem:[%s1195 + $0x90] sm:$0xf]
      %v1426 = vld [vmem:[%s1195 + $0x94] sm:$0xf]
      %v1427 = vld [vmem:[%s1195 + $0x98] sm:$0x1]
      %v1428 = vld [vmem:[%s1195 + $0x9c] sm:$0xf]
      %v1429 = vld [vmem:[%s1195 + $0xa0] sm:$0xf]
      %v1430 = vld [vmem:[%s1195 + $0xa4] sm:$0x1]
      %v1431 = vld [vmem:[%s1195 + $0xa8] sm:$0xf]
      %v1432 = vld [vmem:[%s1195 + $0xac] sm:$0xf]
      %v1433 = vld [vmem:[%s1195 + $0xb0] sm:$0x1]
      %v1434 = vld [vmem:[%s1195 + $0xb4] sm:$0xf]
      %v1435 = vld [vmem:[%s1195 + $0xb8] sm:$0xf]
      %v1436 = vld [vmem:[%s1195 + $0xbc] sm:$0x1]
      %v1438 = vshrl.u32 %v1389, 16
      %v1440 = vrot.slane %v1438, 4
      %v1441 = vshll.u32 %v1389, 16
      %v1443 = vrot.slane %v1441, 5
      %v1444 = vor.u32 %v1440, %v1443
      %v1445 = vrot.slane %v1444, 4
      %v1447 = vshll.u32 %v1390, 16
      %v1449 = vrot.slane %v1447, 5
      %v1450 = vsel %vm341, %v1445, %v1449
      %v1451 = vshrl.u32 %v1390, 16
      %v1453 = vrot.slane %v1451, 4
      %v1454 = vor.u32 %v1453, %v1449
      %v1455 = vrot.slane %v1454, 4
      %v1457 = vshll.u32 %v1391, 16
      %v1459 = vrot.slane %v1457, 5
      %v1460 = vsel %vm341, %v1455, %v1459
      %v1462 = vshrl.u32 %v1392, 16
      %v1464 = vrot.slane %v1462, 4
      %v1465 = vshll.u32 %v1392, 16
      %v1467 = vrot.slane %v1465, 5
      %v1468 = vor.u32 %v1464, %v1467
      %v1469 = vrot.slane %v1468, 4
      %v1471 = vshll.u32 %v1393, 16
      %v1473 = vrot.slane %v1471, 5
      %v1474 = vsel %vm341, %v1469, %v1473
      %v1475 = vshrl.u32 %v1393, 16
      %v1477 = vrot.slane %v1475, 4
      %v1478 = vor.u32 %v1477, %v1473
      %v1479 = vrot.slane %v1478, 4
      %v1481 = vshll.u32 %v1394, 16
      %v1483 = vrot.slane %v1481, 5
      %v1484 = vsel %vm341, %v1479, %v1483
      %v1486 = vshrl.u32 %v1395, 16
      %v1488 = vrot.slane %v1486, 4
      %v1489 = vshll.u32 %v1395, 16
      %v1491 = vrot.slane %v1489, 5
      %v1492 = vor.u32 %v1488, %v1491
      %v1493 = vrot.slane %v1492, 4
      %v1495 = vshll.u32 %v1396, 16
      %v1497 = vrot.slane %v1495, 5
      %v1498 = vsel %vm341, %v1493, %v1497
      %v1499 = vshrl.u32 %v1396, 16
      %v1501 = vrot.slane %v1499, 4
      %v1502 = vor.u32 %v1501, %v1497
      %v1503 = vrot.slane %v1502, 4
      %v1505 = vshll.u32 %v1397, 16
      %v1507 = vrot.slane %v1505, 5
      %v1508 = vsel %vm341, %v1503, %v1507
      %v1510 = vshrl.u32 %v1398, 16
      %v1512 = vrot.slane %v1510, 4
      %v1513 = vshll.u32 %v1398, 16
      %v1515 = vrot.slane %v1513, 5
      %v1516 = vor.u32 %v1512, %v1515
      %v1517 = vrot.slane %v1516, 4
      %v1519 = vshll.u32 %v1399, 16
      %v1521 = vrot.slane %v1519, 5
      %v1522 = vsel %vm341, %v1517, %v1521
      %v1523 = vshrl.u32 %v1399, 16
      %v1525 = vrot.slane %v1523, 4
      %v1526 = vor.u32 %v1525, %v1521
      %v1527 = vrot.slane %v1526, 4
      %v1529 = vshll.u32 %v1400, 16
      %v1531 = vrot.slane %v1529, 5
      %v1532 = vsel %vm341, %v1527, %v1531
      %v1534 = vshrl.u32 %v1401, 16
      %v1536 = vrot.slane %v1534, 4
      %v1537 = vshll.u32 %v1401, 16
      %v1539 = vrot.slane %v1537, 5
      %v1540 = vor.u32 %v1536, %v1539
      %v1541 = vrot.slane %v1540, 4
      %v1543 = vshll.u32 %v1402, 16
      %v1545 = vrot.slane %v1543, 5
      %v1546 = vsel %vm341, %v1541, %v1545
      %v1547 = vshrl.u32 %v1402, 16
      %v1549 = vrot.slane %v1547, 4
      %v1550 = vor.u32 %v1549, %v1545
      %v1551 = vrot.slane %v1550, 4
      %v1553 = vshll.u32 %v1403, 16
      %v1555 = vrot.slane %v1553, 5
      %v1556 = vsel %vm341, %v1551, %v1555
      %v1558 = vshrl.u32 %v1404, 16
      %v1560 = vrot.slane %v1558, 4
      %v1561 = vshll.u32 %v1404, 16
      %v1563 = vrot.slane %v1561, 5
      %v1564 = vor.u32 %v1560, %v1563
      %v1565 = vrot.slane %v1564, 4
      %v1567 = vshll.u32 %v1405, 16
      %v1569 = vrot.slane %v1567, 5
      %v1570 = vsel %vm341, %v1565, %v1569
      %v1571 = vshrl.u32 %v1405, 16
      %v1573 = vrot.slane %v1571, 4
      %v1574 = vor.u32 %v1573, %v1569
      %v1575 = vrot.slane %v1574, 4
      %v1577 = vshll.u32 %v1406, 16
      %v1579 = vrot.slane %v1577, 5
      %v1580 = vsel %vm341, %v1575, %v1579
      %v1582 = vshrl.u32 %v1407, 16
      %v1584 = vrot.slane %v1582, 4
      %v1585 = vshll.u32 %v1407, 16
      %v1587 = vrot.slane %v1585, 5
      %v1588 = vor.u32 %v1584, %v1587
      %v1589 = vrot.slane %v1588, 4
      %v1591 = vshll.u32 %v1408, 16
      %v1593 = vrot.slane %v1591, 5
      %v1594 = vsel %vm341, %v1589, %v1593
      %v1595 = vshrl.u32 %v1408, 16
      %v1597 = vrot.slane %v1595, 4
      %v1598 = vor.u32 %v1597, %v1593
      %v1599 = vrot.slane %v1598, 4
      %v1601 = vshll.u32 %v1409, 16
      %v1603 = vrot.slane %v1601, 5
      %v1604 = vsel %vm341, %v1599, %v1603
      %v1606 = vshrl.u32 %v1410, 16
      %v1608 = vrot.slane %v1606, 4
      %v1609 = vshll.u32 %v1410, 16
      %v1611 = vrot.slane %v1609, 5
      %v1612 = vor.u32 %v1608, %v1611
      %v1613 = vrot.slane %v1612, 4
      %v1615 = vshll.u32 %v1411, 16
      %v1617 = vrot.slane %v1615, 5
      %v1618 = vsel %vm341, %v1613, %v1617
      %v1619 = vshrl.u32 %v1411, 16
      %v1621 = vrot.slane %v1619, 4
      %v1622 = vor.u32 %v1621, %v1617
      %v1623 = vrot.slane %v1622, 4
      %v1625 = vshll.u32 %v1412, 16
      %v1627 = vrot.slane %v1625, 5
      %v1628 = vsel %vm341, %v1623, %v1627
      %v1630 = vshrl.u32 %v1413, 16
      %v1632 = vrot.slane %v1630, 4
      %v1633 = vshll.u32 %v1413, 16
      %v1635 = vrot.slane %v1633, 5
      %v1636 = vor.u32 %v1632, %v1635
      %v1637 = vrot.slane %v1636, 4
      %v1639 = vshll.u32 %v1414, 16
      %v1641 = vrot.slane %v1639, 5
      %v1642 = vsel %vm341, %v1637, %v1641
      %v1643 = vshrl.u32 %v1414, 16
      %v1645 = vrot.slane %v1643, 4
      %v1646 = vor.u32 %v1645, %v1641
      %v1647 = vrot.slane %v1646, 4
      %v1649 = vshll.u32 %v1415, 16
      %v1651 = vrot.slane %v1649, 5
      %v1652 = vsel %vm341, %v1647, %v1651
      %v1654 = vshrl.u32 %v1416, 16
      %v1656 = vrot.slane %v1654, 4
      %v1657 = vshll.u32 %v1416, 16
      %v1659 = vrot.slane %v1657, 5
      %v1660 = vor.u32 %v1656, %v1659
      %v1661 = vrot.slane %v1660, 4
      %v1663 = vshll.u32 %v1417, 16
      %v1665 = vrot.slane %v1663, 5
      %v1666 = vsel %vm341, %v1661, %v1665
      %v1667 = vshrl.u32 %v1417, 16
      %v1669 = vrot.slane %v1667, 4
      %v1670 = vor.u32 %v1669, %v1665
      %v1671 = vrot.slane %v1670, 4
      %v1673 = vshll.u32 %v1418, 16
      %v1675 = vrot.slane %v1673, 5
      %v1676 = vsel %vm341, %v1671, %v1675
      %v1678 = vshrl.u32 %v1419, 16
      %v1680 = vrot.slane %v1678, 4
      %v1681 = vshll.u32 %v1419, 16
      %v1683 = vrot.slane %v1681, 5
      %v1684 = vor.u32 %v1680, %v1683
      %v1685 = vrot.slane %v1684, 4
      %v1687 = vshll.u32 %v1420, 16
      %v1689 = vrot.slane %v1687, 5
      %v1690 = vsel %vm341, %v1685, %v1689
      %v1691 = vshrl.u32 %v1420, 16
      %v1693 = vrot.slane %v1691, 4
      %v1694 = vor.u32 %v1693, %v1689
      %v1695 = vrot.slane %v1694, 4
      %v1697 = vshll.u32 %v1421, 16
      %v1699 = vrot.slane %v1697, 5
      %v1700 = vsel %vm341, %v1695, %v1699
      %v1702 = vshrl.u32 %v1422, 16
      %v1704 = vrot.slane %v1702, 4
      %v1705 = vshll.u32 %v1422, 16
      %v1707 = vrot.slane %v1705, 5
      %v1708 = vor.u32 %v1704, %v1707
      %v1709 = vrot.slane %v1708, 4
      %v1711 = vshll.u32 %v1423, 16
      %v1713 = vrot.slane %v1711, 5
      %v1714 = vsel %vm341, %v1709, %v1713
      %v1715 = vshrl.u32 %v1423, 16
      %v1717 = vrot.slane %v1715, 4
      %v1718 = vor.u32 %v1717, %v1713
      %v1719 = vrot.slane %v1718, 4
      %v1721 = vshll.u32 %v1424, 16
      %v1723 = vrot.slane %v1721, 5
      %v1724 = vsel %vm341, %v1719, %v1723
      %v1726 = vshrl.u32 %v1425, 16
      %v1728 = vrot.slane %v1726, 4
      %v1729 = vshll.u32 %v1425, 16
      %v1731 = vrot.slane %v1729, 5
      %v1732 = vor.u32 %v1728, %v1731
      %v1733 = vrot.slane %v1732, 4
      %v1735 = vshll.u32 %v1426, 16
      %v1737 = vrot.slane %v1735, 5
      %v1738 = vsel %vm341, %v1733, %v1737
      %v1739 = vshrl.u32 %v1426, 16
      %v1741 = vrot.slane %v1739, 4
      %v1742 = vor.u32 %v1741, %v1737
      %v1743 = vrot.slane %v1742, 4
      %v1745 = vshll.u32 %v1427, 16
      %v1747 = vrot.slane %v1745, 5
      %v1748 = vsel %vm341, %v1743, %v1747
      %v1750 = vshrl.u32 %v1428, 16
      %v1752 = vrot.slane %v1750, 4
      %v1753 = vshll.u32 %v1428, 16
      %v1755 = vrot.slane %v1753, 5
      %v1756 = vor.u32 %v1752, %v1755
      %v1757 = vrot.slane %v1756, 4
      %v1759 = vshll.u32 %v1429, 16
      %v1761 = vrot.slane %v1759, 5
      %v1762 = vsel %vm341, %v1757, %v1761
      %v1763 = vshrl.u32 %v1429, 16
      %v1765 = vrot.slane %v1763, 4
      %v1766 = vor.u32 %v1765, %v1761
      %v1767 = vrot.slane %v1766, 4
      %v1769 = vshll.u32 %v1430, 16
      %v1771 = vrot.slane %v1769, 5
      %v1772 = vsel %vm341, %v1767, %v1771
      %v1774 = vshrl.u32 %v1431, 16
      %v1776 = vrot.slane %v1774, 4
      %v1777 = vshll.u32 %v1431, 16
      %v1779 = vrot.slane %v1777, 5
      %v1780 = vor.u32 %v1776, %v1779
      %v1781 = vrot.slane %v1780, 4
      %v1783 = vshll.u32 %v1432, 16
      %v1785 = vrot.slane %v1783, 5
      %v1786 = vsel %vm341, %v1781, %v1785
      %v1787 = vshrl.u32 %v1432, 16
      %v1789 = vrot.slane %v1787, 4
      %v1790 = vor.u32 %v1789, %v1785
      %v1791 = vrot.slane %v1790, 4
      %v1793 = vshll.u32 %v1433, 16
      %v1795 = vrot.slane %v1793, 5
      %v1796 = vsel %vm341, %v1791, %v1795
      %v1798 = vshrl.u32 %v1434, 16
      %v1800 = vrot.slane %v1798, 4
      %v1801 = vshll.u32 %v1434, 16
      %v1803 = vrot.slane %v1801, 5
      %v1804 = vor.u32 %v1800, %v1803
      %v1805 = vrot.slane %v1804, 4
      %v1807 = vshll.u32 %v1435, 16
      %v1809 = vrot.slane %v1807, 5
      %v1810 = vsel %vm341, %v1805, %v1809
      %v1811 = vshrl.u32 %v1435, 16
      %v1813 = vrot.slane %v1811, 4
      %v1814 = vor.u32 %v1813, %v1809
      %v1815 = vrot.slane %v1814, 4
      %v1817 = vshll.u32 %v1436, 16
      %v1819 = vrot.slane %v1817, 5
      %v1820 = vsel %vm341, %v1815, %v1819
      %1821 = vrot.lane.b32.xlu0 %v1450, 64
      %v1822 = vpop.permute.xlu0 %1821
      %1823 = vrot.lane.b32.xlu0 %v1460, 64
      %v1824 = vpop.permute.xlu0 %1823
      %1825 = vrot.lane.b32.xlu0 %v1474, 64
      %v1826 = vpop.permute.xlu0 %1825
      %1827 = vrot.lane.b32.xlu0 %v1484, 64
      %v1828 = vpop.permute.xlu0 %1827
      %1829 = vrot.lane.b32.xlu0 %v1498, 64
      %v1830 = vpop.permute.xlu0 %1829
      %1831 = vrot.lane.b32.xlu0 %v1508, 64
      %v1832 = vpop.permute.xlu0 %1831
      %1833 = vrot.lane.b32.xlu0 %v1522, 64
      %v1834 = vpop.permute.xlu0 %1833
      %1835 = vrot.lane.b32.xlu0 %v1532, 64
      %v1836 = vpop.permute.xlu0 %1835
      %1837 = vrot.lane.b32.xlu0 %v1546, 64
      %v1838 = vpop.permute.xlu0 %1837
      %1839 = vrot.lane.b32.xlu0 %v1556, 64
      %v1840 = vpop.permute.xlu0 %1839
      %1841 = vrot.lane.b32.xlu0 %v1570, 64
      %v1842 = vpop.permute.xlu0 %1841
      %1843 = vrot.lane.b32.xlu0 %v1580, 64
      %v1844 = vpop.permute.xlu0 %1843
      %1845 = vrot.lane.b32.xlu0 %v1594, 64
      %v1846 = vpop.permute.xlu0 %1845
      %1847 = vrot.lane.b32.xlu0 %v1604, 64
      %v1848 = vpop.permute.xlu0 %1847
      %1849 = vrot.lane.b32.xlu0 %v1618, 64
      %v1850 = vpop.permute.xlu0 %1849
      %1851 = vrot.lane.b32.xlu0 %v1628, 64
      %v1852 = vpop.permute.xlu0 %1851
      %1853 = vrot.lane.b32.xlu0 %v1642, 64
      %v1854 = vpop.permute.xlu0 %1853
      %1855 = vrot.lane.b32.xlu0 %v1652, 64
      %v1856 = vpop.permute.xlu0 %1855
      %1857 = vrot.lane.b32.xlu0 %v1666, 64
      %v1858 = vpop.permute.xlu0 %1857
      %1859 = vrot.lane.b32.xlu0 %v1676, 64
      %v1860 = vpop.permute.xlu0 %1859
      %1861 = vrot.lane.b32.xlu0 %v1690, 64
      %v1862 = vpop.permute.xlu0 %1861
      %1863 = vrot.lane.b32.xlu0 %v1700, 64
      %v1864 = vpop.permute.xlu0 %1863
      %1865 = vrot.lane.b32.xlu0 %v1714, 64
      %v1866 = vpop.permute.xlu0 %1865
      %1867 = vrot.lane.b32.xlu0 %v1724, 64
      %v1868 = vpop.permute.xlu0 %1867
      %1869 = vrot.lane.b32.xlu0 %v1738, 64
      %v1870 = vpop.permute.xlu0 %1869
      %1871 = vrot.lane.b32.xlu0 %v1748, 64
      %v1872 = vpop.permute.xlu0 %1871
      %1873 = vrot.lane.b32.xlu0 %v1762, 64
      %v1874 = vpop.permute.xlu0 %1873
      %1875 = vrot.lane.b32.xlu0 %v1772, 64
      %v1876 = vpop.permute.xlu0 %1875
      %1877 = vrot.lane.b32.xlu0 %v1786, 64
      %v1878 = vpop.permute.xlu0 %1877
      %1879 = vrot.lane.b32.xlu0 %v1796, 64
      %v1880 = vpop.permute.xlu0 %1879
      %1881 = vrot.lane.b32.xlu0 %v1810, 64
      %v1882 = vpop.permute.xlu0 %1881
      %1883 = vrot.lane.b32.xlu0 %v1820, 64
      %v1884 = vpop.permute.xlu0 %1883
      %vm1917 = vcmask 650752
      %1918 = vst.msk [vmem:[#allocation2] sm:$0xf] %vm1917, %v1822
      %1919 = vst.msk [vmem:[#allocation2 + $0x8] sm:$0xf] %vm1917, %v1824
      %1920 = vst.msk [vmem:[#allocation2 + $0x10] sm:$0xf] %vm1917, %v1826
      %1921 = vst.msk [vmem:[#allocation2 + $0x18] sm:$0xf] %vm1917, %v1828
      %1922 = vst.msk [vmem:[#allocation2 + $0x20] sm:$0xf] %vm1917, %v1830
      %1923 = vst.msk [vmem:[#allocation2 + $0x28] sm:$0xf] %vm1917, %v1832
      %1924 = vst.msk [vmem:[#allocation2 + $0x30] sm:$0xf] %vm1917, %v1834
      %1925 = vst.msk [vmem:[#allocation2 + $0x38] sm:$0xf] %vm1917, %v1836
      %1926 = vst.msk [vmem:[#allocation2 + $0x40] sm:$0xf] %vm1917, %v1838
      %1927 = vst.msk [vmem:[#allocation2 + $0x48] sm:$0xf] %vm1917, %v1840
      %1928 = vst.msk [vmem:[#allocation2 + $0x50] sm:$0xf] %vm1917, %v1842
      %1929 = vst.msk [vmem:[#allocation2 + $0x58] sm:$0xf] %vm1917, %v1844
      %1930 = vst.msk [vmem:[#allocation2 + $0x60] sm:$0xf] %vm1917, %v1846
      %1931 = vst.msk [vmem:[#allocation2 + $0x68] sm:$0xf] %vm1917, %v1848
      %1932 = vst.msk [vmem:[#allocation2 + $0x70] sm:$0xf] %vm1917, %v1850
      %1933 = vst.msk [vmem:[#allocation2 + $0x78] sm:$0xf] %vm1917, %v1852
      %1934 = vst.msk [vmem:[#allocation2 + $0x80] sm:$0xf] %vm1917, %v1854
      %1935 = vst.msk [vmem:[#allocation2 + $0x88] sm:$0xf] %vm1917, %v1856
      %1936 = vst.msk [vmem:[#allocation2 + $0x90] sm:$0xf] %vm1917, %v1858
      %1937 = vst.msk [vmem:[#allocation2 + $0x98] sm:$0xf] %vm1917, %v1860
      %1938 = vst.msk [vmem:[#allocation2 + $0xa0] sm:$0xf] %vm1917, %v1862
      %1939 = vst.msk [vmem:[#allocation2 + $0xa8] sm:$0xf] %vm1917, %v1864
      %1940 = vst.msk [vmem:[#allocation2 + $0xb0] sm:$0xf] %vm1917, %v1866
      %1941 = vst.msk [vmem:[#allocation2 + $0xb8] sm:$0xf] %vm1917, %v1868
      %1942 = vst.msk [vmem:[#allocation2 + $0xc0] sm:$0xf] %vm1917, %v1870
      %1943 = vst.msk [vmem:[#allocation2 + $0xc8] sm:$0xf] %vm1917, %v1872
      %1944 = vst.msk [vmem:[#allocation2 + $0xd0] sm:$0xf] %vm1917, %v1874
      %1945 = vst.msk [vmem:[#allocation2 + $0xd8] sm:$0xf] %vm1917, %v1876
      %1946 = vst.msk [vmem:[#allocation2 + $0xe0] sm:$0xf] %vm1917, %v1878
      %1947 = vst.msk [vmem:[#allocation2 + $0xe8] sm:$0xf] %vm1917, %v1880
      %1948 = vst.msk [vmem:[#allocation2 + $0xf0] sm:$0xf] %vm1917, %v1882
      %1949 = vst.msk [vmem:[#allocation2 + $0xf8] sm:$0xf] %vm1917, %v1884
      %v1950 = vld [vmem:[%s1195] sm:$0xe]
      %v1951 = vld [vmem:[%s1195 + $0x4] sm:$0xf]
      %v1952 = vld [vmem:[%s1195 + $0x8] sm:$0x1]
      %v1953 = vld [vmem:[%s1195 + $0xc] sm:$0xe]
      %v1954 = vld [vmem:[%s1195 + $0x10] sm:$0xf]
      %v1955 = vld [vmem:[%s1195 + $0x14] sm:$0x1]
      %v1956 = vld [vmem:[%s1195 + $0x18] sm:$0xe]
      %v1957 = vld [vmem:[%s1195 + $0x1c] sm:$0xf]
      %v1958 = vld [vmem:[%s1195 + $0x20] sm:$0x1]
      %v1959 = vld [vmem:[%s1195 + $0x24] sm:$0xe]
      %v1960 = vld [vmem:[%s1195 + $0x28] sm:$0xf]
      %v1961 = vld [vmem:[%s1195 + $0x2c] sm:$0x1]
      %v1962 = vld [vmem:[%s1195 + $0x30] sm:$0xe]
      %v1963 = vld [vmem:[%s1195 + $0x34] sm:$0xf]
      %v1964 = vld [vmem:[%s1195 + $0x38] sm:$0x1]
      %v1965 = vld [vmem:[%s1195 + $0x3c] sm:$0xe]
      %v1966 = vld [vmem:[%s1195 + $0x40] sm:$0xf]
      %v1967 = vld [vmem:[%s1195 + $0x44] sm:$0x1]
      %v1968 = vld [vmem:[%s1195 + $0x48] sm:$0xe]
      %v1969 = vld [vmem:[%s1195 + $0x4c] sm:$0xf]
      %v1970 = vld [vmem:[%s1195 + $0x50] sm:$0x1]
      %v1971 = vld [vmem:[%s1195 + $0x54] sm:$0xe]
      %v1972 = vld [vmem:[%s1195 + $0x58] sm:$0xf]
      %v1973 = vld [vmem:[%s1195 + $0x5c] sm:$0x1]
      %v1974 = vld [vmem:[%s1195 + $0x60] sm:$0xe]
      %v1975 = vld [vmem:[%s1195 + $0x64] sm:$0xf]
      %v1976 = vld [vmem:[%s1195 + $0x68] sm:$0x1]
      %v1977 = vld [vmem:[%s1195 + $0x6c] sm:$0xe]
      %v1978 = vld [vmem:[%s1195 + $0x70] sm:$0xf]
      %v1979 = vld [vmem:[%s1195 + $0x74] sm:$0x1]
      %v1980 = vld [vmem:[%s1195 + $0x78] sm:$0xe]
      %v1981 = vld [vmem:[%s1195 + $0x7c] sm:$0xf]
      %v1982 = vld [vmem:[%s1195 + $0x80] sm:$0x1]
      %v1983 = vld [vmem:[%s1195 + $0x84] sm:$0xe]
      %v1984 = vld [vmem:[%s1195 + $0x88] sm:$0xf]
      %v1985 = vld [vmem:[%s1195 + $0x8c] sm:$0x1]
      %v1986 = vld [vmem:[%s1195 + $0x90] sm:$0xe]
      %v1987 = vld [vmem:[%s1195 + $0x94] sm:$0xf]
      %v1988 = vld [vmem:[%s1195 + $0x98] sm:$0x1]
      %v1989 = vld [vmem:[%s1195 + $0x9c] sm:$0xe]
      %v1990 = vld [vmem:[%s1195 + $0xa0] sm:$0xf]
      %v1991 = vld [vmem:[%s1195 + $0xa4] sm:$0x1]
      %v1992 = vld [vmem:[%s1195 + $0xa8] sm:$0xe]
      %v1993 = vld [vmem:[%s1195 + $0xac] sm:$0xf]
      %v1994 = vld [vmem:[%s1195 + $0xb0] sm:$0x1]
      %v1995 = vld [vmem:[%s1195 + $0xb4] sm:$0xe]
      %v1996 = vld [vmem:[%s1195 + $0xb8] sm:$0xf]
      %v1997 = vld [vmem:[%s1195 + $0xbc] sm:$0x1]
      %v2046 = vrot.slane %v1950, 5
      %v2047 = vrot.slane %v2046, 4
      %v2048 = vrot.slane %v1951, 5
      %v2049 = vsel %vm953, %v2047, %v2048
      %v2050 = vrot.slane %v2048, 4
      %v2051 = vrot.slane %v1952, 5
      %v2052 = vsel %vm953, %v2050, %v2051
      %v2053 = vrot.slane %v1953, 5
      %v2054 = vrot.slane %v2053, 4
      %v2055 = vrot.slane %v1954, 5
      %v2056 = vsel %vm953, %v2054, %v2055
      %v2057 = vrot.slane %v2055, 4
      %v2058 = vrot.slane %v1955, 5
      %v2059 = vsel %vm953, %v2057, %v2058
      %v2060 = vrot.slane %v1956, 5
      %v2061 = vrot.slane %v2060, 4
      %v2062 = vrot.slane %v1957, 5
      %v2063 = vsel %vm953, %v2061, %v2062
      %v2064 = vrot.slane %v2062, 4
      %v2065 = vrot.slane %v1958, 5
      %v2066 = vsel %vm953, %v2064, %v2065
      %v2067 = vrot.slane %v1959, 5
      %v2068 = vrot.slane %v2067, 4
      %v2069 = vrot.slane %v1960, 5
      %v2070 = vsel %vm953, %v2068, %v2069
      %v2071 = vrot.slane %v2069, 4
      %v2072 = vrot.slane %v1961, 5
      %v2073 = vsel %vm953, %v2071, %v2072
      %v2074 = vrot.slane %v1962, 5
      %v2075 = vrot.slane %v2074, 4
      %v2076 = vrot.slane %v1963, 5
      %v2077 = vsel %vm953, %v2075, %v2076
      %v2078 = vrot.slane %v2076, 4
      %v2079 = vrot.slane %v1964, 5
      %v2080 = vsel %vm953, %v2078, %v2079
      %v2081 = vrot.slane %v1965, 5
      %v2082 = vrot.slane %v2081, 4
      %v2083 = vrot.slane %v1966, 5
      %v2084 = vsel %vm953, %v2082, %v2083
      %v2085 = vrot.slane %v2083, 4
      %v2086 = vrot.slane %v1967, 5
      %v2087 = vsel %vm953, %v2085, %v2086
      %v2088 = vrot.slane %v1968, 5
      %v2089 = vrot.slane %v2088, 4
      %v2090 = vrot.slane %v1969, 5
      %v2091 = vsel %vm953, %v2089, %v2090
      %v2092 = vrot.slane %v2090, 4
      %v2093 = vrot.slane %v1970, 5
      %v2094 = vsel %vm953, %v2092, %v2093
      %v2095 = vrot.slane %v1971, 5
      %v2096 = vrot.slane %v2095, 4
      %v2097 = vrot.slane %v1972, 5
      %v2098 = vsel %vm953, %v2096, %v2097
      %v2099 = vrot.slane %v2097, 4
      %v2100 = vrot.slane %v1973, 5
      %v2101 = vsel %vm953, %v2099, %v2100
      %v2102 = vrot.slane %v1974, 5
      %v2103 = vrot.slane %v2102, 4
      %v2104 = vrot.slane %v1975, 5
      %v2105 = vsel %vm953, %v2103, %v2104
      %v2106 = vrot.slane %v2104, 4
      %v2107 = vrot.slane %v1976, 5
      %v2108 = vsel %vm953, %v2106, %v2107
      %v2109 = vrot.slane %v1977, 5
      %v2110 = vrot.slane %v2109, 4
      %v2111 = vrot.slane %v1978, 5
      %v2112 = vsel %vm953, %v2110, %v2111
      %v2113 = vrot.slane %v2111, 4
      %v2114 = vrot.slane %v1979, 5
      %v2115 = vsel %vm953, %v2113, %v2114
      %v2116 = vrot.slane %v1980, 5
      %v2117 = vrot.slane %v2116, 4
      %v2118 = vrot.slane %v1981, 5
      %v2119 = vsel %vm953, %v2117, %v2118
      %v2120 = vrot.slane %v2118, 4
      %v2121 = vrot.slane %v1982, 5
      %v2122 = vsel %vm953, %v2120, %v2121
      %v2123 = vrot.slane %v1983, 5
      %v2124 = vrot.slane %v2123, 4
      %v2125 = vrot.slane %v1984, 5
      %v2126 = vsel %vm953, %v2124, %v2125
      %v2127 = vrot.slane %v2125, 4
      %v2128 = vrot.slane %v1985, 5
      %v2129 = vsel %vm953, %v2127, %v2128
      %v2130 = vrot.slane %v1986, 5
      %v2131 = vrot.slane %v2130, 4
      %v2132 = vrot.slane %v1987, 5
      %v2133 = vsel %vm953, %v2131, %v2132
      %v2134 = vrot.slane %v2132, 4
      %v2135 = vrot.slane %v1988, 5
      %v2136 = vsel %vm953, %v2134, %v2135
      %v2137 = vrot.slane %v1989, 5
      %v2138 = vrot.slane %v2137, 4
      %v2139 = vrot.slane %v1990, 5
      %v2140 = vsel %vm953, %v2138, %v2139
      %v2141 = vrot.slane %v2139, 4
      %v2142 = vrot.slane %v1991, 5
      %v2143 = vsel %vm953, %v2141, %v2142
      %v2144 = vrot.slane %v1992, 5
      %v2145 = vrot.slane %v2144, 4
      %v2146 = vrot.slane %v1993, 5
      %v2147 = vsel %vm953, %v2145, %v2146
      %v2148 = vrot.slane %v2146, 4
      %v2149 = vrot.slane %v1994, 5
      %v2150 = vsel %vm953, %v2148, %v2149
      %v2151 = vrot.slane %v1995, 5
      %v2152 = vrot.slane %v2151, 4
      %v2153 = vrot.slane %v1996, 5
      %v2154 = vsel %vm953, %v2152, %v2153
      %v2155 = vrot.slane %v2153, 4
      %v2156 = vrot.slane %v1997, 5
      %v2157 = vsel %vm953, %v2155, %v2156
      %2158 = vrot.lane.b32.xlu0 %v2049, 80
      %v2159 = vpop.permute.xlu0 %2158
      %2160 = vrot.lane.b32.xlu0 %v2052, 80
      %v2161 = vpop.permute.xlu0 %2160
      %2162 = vrot.lane.b32.xlu0 %v2056, 80
      %v2163 = vpop.permute.xlu0 %2162
      %2164 = vrot.lane.b32.xlu0 %v2059, 80
      %v2165 = vpop.permute.xlu0 %2164
      %2166 = vrot.lane.b32.xlu0 %v2063, 80
      %v2167 = vpop.permute.xlu0 %2166
      %2168 = vrot.lane.b32.xlu0 %v2066, 80
      %v2169 = vpop.permute.xlu0 %2168
      %2170 = vrot.lane.b32.xlu0 %v2070, 80
      %v2171 = vpop.permute.xlu0 %2170
      %2172 = vrot.lane.b32.xlu0 %v2073, 80
      %v2173 = vpop.permute.xlu0 %2172
      %2174 = vrot.lane.b32.xlu0 %v2077, 80
      %v2175 = vpop.permute.xlu0 %2174
      %2176 = vrot.lane.b32.xlu0 %v2080, 80
      %v2177 = vpop.permute.xlu0 %2176
      %2178 = vrot.lane.b32.xlu0 %v2084, 80
      %v2179 = vpop.permute.xlu0 %2178
      %2180 = vrot.lane.b32.xlu0 %v2087, 80
      %v2181 = vpop.permute.xlu0 %2180
      %2182 = vrot.lane.b32.xlu0 %v2091, 80
      %v2183 = vpop.permute.xlu0 %2182
      %2184 = vrot.lane.b32.xlu0 %v2094, 80
      %v2185 = vpop.permute.xlu0 %2184
      %2186 = vrot.lane.b32.xlu0 %v2098, 80
      %v2187 = vpop.permute.xlu0 %2186
      %2188 = vrot.lane.b32.xlu0 %v2101, 80
      %v2189 = vpop.permute.xlu0 %2188
      %2190 = vrot.lane.b32.xlu0 %v2105, 80
      %v2191 = vpop.permute.xlu0 %2190
      %2192 = vrot.lane.b32.xlu0 %v2108, 80
      %v2193 = vpop.permute.xlu0 %2192
      %2194 = vrot.lane.b32.xlu0 %v2112, 80
      %v2195 = vpop.permute.xlu0 %2194
      %2196 = vrot.lane.b32.xlu0 %v2115, 80
      %v2197 = vpop.permute.xlu0 %2196
      %2198 = vrot.lane.b32.xlu0 %v2119, 80
      %v2199 = vpop.permute.xlu0 %2198
      %2200 = vrot.lane.b32.xlu0 %v2122, 80
      %v2201 = vpop.permute.xlu0 %2200
      %2202 = vrot.lane.b32.xlu0 %v2126, 80
      %v2203 = vpop.permute.xlu0 %2202
      %2204 = vrot.lane.b32.xlu0 %v2129, 80
      %v2205 = vpop.permute.xlu0 %2204
      %2206 = vrot.lane.b32.xlu0 %v2133, 80
      %v2207 = vpop.permute.xlu0 %2206
      %2208 = vrot.lane.b32.xlu0 %v2136, 80
      %v2209 = vpop.permute.xlu0 %2208
      %2210 = vrot.lane.b32.xlu0 %v2140, 80
      %v2211 = vpop.permute.xlu0 %2210
      %2212 = vrot.lane.b32.xlu0 %v2143, 80
      %v2213 = vpop.permute.xlu0 %2212
      %2214 = vrot.lane.b32.xlu0 %v2147, 80
      %v2215 = vpop.permute.xlu0 %2214
      %2216 = vrot.lane.b32.xlu0 %v2150, 80
      %v2217 = vpop.permute.xlu0 %2216
      %2218 = vrot.lane.b32.xlu0 %v2154, 80
      %v2219 = vpop.permute.xlu0 %2218
      %2220 = vrot.lane.b32.xlu0 %v2157, 80
      %v2221 = vpop.permute.xlu0 %2220
      %vm2254 = vcmask 781952
      %2255 = vst.msk [vmem:[#allocation2] sm:$0xf] %vm2254, %v2159
      %2256 = vst.msk [vmem:[#allocation2 + $0x8] sm:$0xf] %vm2254, %v2161
      %2257 = vst.msk [vmem:[#allocation2 + $0x10] sm:$0xf] %vm2254, %v2163
      %2258 = vst.msk [vmem:[#allocation2 + $0x18] sm:$0xf] %vm2254, %v2165
      %2259 = vst.msk [vmem:[#allocation2 + $0x20] sm:$0xf] %vm2254, %v2167
      %2260 = vst.msk [vmem:[#allocation2 + $0x28] sm:$0xf] %vm2254, %v2169
      %2261 = vst.msk [vmem:[#allocation2 + $0x30] sm:$0xf] %vm2254, %v2171
      %2262 = vst.msk [vmem:[#allocation2 + $0x38] sm:$0xf] %vm2254, %v2173
      %2263 = vst.msk [vmem:[#allocation2 + $0x40] sm:$0xf] %vm2254, %v2175
      %2264 = vst.msk [vmem:[#allocation2 + $0x48] sm:$0xf] %vm2254, %v2177
      %2265 = vst.msk [vmem:[#allocation2 + $0x50] sm:$0xf] %vm2254, %v2179
      %2266 = vst.msk [vmem:[#allocation2 + $0x58] sm:$0xf] %vm2254, %v2181
      %2267 = vst.msk [vmem:[#allocation2 + $0x60] sm:$0xf] %vm2254, %v2183
      %2268 = vst.msk [vmem:[#allocation2 + $0x68] sm:$0xf] %vm2254, %v2185
      %2269 = vst.msk [vmem:[#allocation2 + $0x70] sm:$0xf] %vm2254, %v2187
      %2270 = vst.msk [vmem:[#allocation2 + $0x78] sm:$0xf] %vm2254, %v2189
      %2271 = vst.msk [vmem:[#allocation2 + $0x80] sm:$0xf] %vm2254, %v2191
      %2272 = vst.msk [vmem:[#allocation2 + $0x88] sm:$0xf] %vm2254, %v2193
      %2273 = vst.msk [vmem:[#allocation2 + $0x90] sm:$0xf] %vm2254, %v2195
      %2274 = vst.msk [vmem:[#allocation2 + $0x98] sm:$0xf] %vm2254, %v2197
      %2275 = vst.msk [vmem:[#allocation2 + $0xa0] sm:$0xf] %vm2254, %v2199
      %2276 = vst.msk [vmem:[#allocation2 + $0xa8] sm:$0xf] %vm2254, %v2201
      %2277 = vst.msk [vmem:[#allocation2 + $0xb0] sm:$0xf] %vm2254, %v2203
      %2278 = vst.msk [vmem:[#allocation2 + $0xb8] sm:$0xf] %vm2254, %v2205
      %2279 = vst.msk [vmem:[#allocation2 + $0xc0] sm:$0xf] %vm2254, %v2207
      %2280 = vst.msk [vmem:[#allocation2 + $0xc8] sm:$0xf] %vm2254, %v2209
      %2281 = vst.msk [vmem:[#allocation2 + $0xd0] sm:$0xf] %vm2254, %v2211
      %2282 = vst.msk [vmem:[#allocation2 + $0xd8] sm:$0xf] %vm2254, %v2213
      %2283 = vst.msk [vmem:[#allocation2 + $0xe0] sm:$0xf] %vm2254, %v2215
      %2284 = vst.msk [vmem:[#allocation2 + $0xe8] sm:$0xf] %vm2254, %v2217
      %2285 = vst.msk [vmem:[#allocation2 + $0xf0] sm:$0xf] %vm2254, %v2219
      %2286 = vst.msk [vmem:[#allocation2 + $0xf8] sm:$0xf] %vm2254, %v2221
      %s2287 = scalar_lea.vmem %s219, 24
      %v2288 = vld [vmem:[%s2287] sm:$0xf]
      %v2289 = vld [vmem:[%s2287 + $0x4] sm:$0xf]
      %v2290 = vld [vmem:[%s2287 + $0xc] sm:$0xf]
      %v2291 = vld [vmem:[%s2287 + $0x10] sm:$0xf]
      %v2292 = vld [vmem:[%s2287 + $0x18] sm:$0xf]
      %v2293 = vld [vmem:[%s2287 + $0x1c] sm:$0xf]
      %v2294 = vld [vmem:[%s2287 + $0x24] sm:$0xf]
      %v2295 = vld [vmem:[%s2287 + $0x28] sm:$0xf]
      %v2296 = vld [vmem:[%s2287 + $0x30] sm:$0xf]
      %v2297 = vld [vmem:[%s2287 + $0x34] sm:$0xf]
      %v2298 = vld [vmem:[%s2287 + $0x3c] sm:$0xf]
      %v2299 = vld [vmem:[%s2287 + $0x40] sm:$0xf]
      %v2300 = vld [vmem:[%s2287 + $0x48] sm:$0xf]
      %v2301 = vld [vmem:[%s2287 + $0x4c] sm:$0xf]
      %v2302 = vld [vmem:[%s2287 + $0x54] sm:$0xf]
      %v2303 = vld [vmem:[%s2287 + $0x58] sm:$0xf]
      %v2304 = vld [vmem:[%s2287 + $0x60] sm:$0xf]
      %v2305 = vld [vmem:[%s2287 + $0x64] sm:$0xf]
      %v2306 = vld [vmem:[%s2287 + $0x6c] sm:$0xf]
      %v2307 = vld [vmem:[%s2287 + $0x70] sm:$0xf]
      %v2308 = vld [vmem:[%s2287 + $0x78] sm:$0xf]
      %v2309 = vld [vmem:[%s2287 + $0x7c] sm:$0xf]
      %v2310 = vld [vmem:[%s2287 + $0x84] sm:$0xf]
      %v2311 = vld [vmem:[%s2287 + $0x88] sm:$0xf]
      %v2312 = vld [vmem:[%s2287 + $0x90] sm:$0xf]
      %v2313 = vld [vmem:[%s2287 + $0x94] sm:$0xf]
      %v2314 = vld [vmem:[%s2287 + $0x9c] sm:$0xf]
      %v2315 = vld [vmem:[%s2287 + $0xa0] sm:$0xf]
      %v2316 = vld [vmem:[%s2287 + $0xa8] sm:$0xf]
      %v2317 = vld [vmem:[%s2287 + $0xac] sm:$0xf]
      %v2318 = vld [vmem:[%s2287 + $0xb4] sm:$0xf]
      %v2319 = vld [vmem:[%s2287 + $0xb8] sm:$0xf]
      %2352 = vrot.lane.b32.xlu0 %v2288, 96
      %v2353 = vpop.permute.xlu0 %2352
      %2354 = vrot.lane.b32.xlu0 %v2289, 96
      %v2355 = vpop.permute.xlu0 %2354
      %2356 = vrot.lane.b32.xlu0 %v2290, 96
      %v2357 = vpop.permute.xlu0 %2356
      %2358 = vrot.lane.b32.xlu0 %v2291, 96
      %v2359 = vpop.permute.xlu0 %2358
      %2360 = vrot.lane.b32.xlu0 %v2292, 96
      %v2361 = vpop.permute.xlu0 %2360
      %2362 = vrot.lane.b32.xlu0 %v2293, 96
      %v2363 = vpop.permute.xlu0 %2362
      %2364 = vrot.lane.b32.xlu0 %v2294, 96
      %v2365 = vpop.permute.xlu0 %2364
      %2366 = vrot.lane.b32.xlu0 %v2295, 96
      %v2367 = vpop.permute.xlu0 %2366
      %2368 = vrot.lane.b32.xlu0 %v2296, 96
      %v2369 = vpop.permute.xlu0 %2368
      %2370 = vrot.lane.b32.xlu0 %v2297, 96
      %v2371 = vpop.permute.xlu0 %2370
      %2372 = vrot.lane.b32.xlu0 %v2298, 96
      %v2373 = vpop.permute.xlu0 %2372
      %2374 = vrot.lane.b32.xlu0 %v2299, 96
      %v2375 = vpop.permute.xlu0 %2374
      %2376 = vrot.lane.b32.xlu0 %v2300, 96
      %v2377 = vpop.permute.xlu0 %2376
      %2378 = vrot.lane.b32.xlu0 %v2301, 96
      %v2379 = vpop.permute.xlu0 %2378
      %2380 = vrot.lane.b32.xlu0 %v2302, 96
      %v2381 = vpop.permute.xlu0 %2380
      %2382 = vrot.lane.b32.xlu0 %v2303, 96
      %v2383 = vpop.permute.xlu0 %2382
      %2384 = vrot.lane.b32.xlu0 %v2304, 96
      %v2385 = vpop.permute.xlu0 %2384
      %2386 = vrot.lane.b32.xlu0 %v2305, 96
      %v2387 = vpop.permute.xlu0 %2386
      %2388 = vrot.lane.b32.xlu0 %v2306, 96
      %v2389 = vpop.permute.xlu0 %2388
      %2390 = vrot.lane.b32.xlu0 %v2307, 96
      %v2391 = vpop.permute.xlu0 %2390
      %2392 = vrot.lane.b32.xlu0 %v2308, 96
      %v2393 = vpop.permute.xlu0 %2392
      %2394 = vrot.lane.b32.xlu0 %v2309, 96
      %v2395 = vpop.permute.xlu0 %2394
      %2396 = vrot.lane.b32.xlu0 %v2310, 96
      %v2397 = vpop.permute.xlu0 %2396
      %2398 = vrot.lane.b32.xlu0 %v2311, 96
      %v2399 = vpop.permute.xlu0 %2398
      %2400 = vrot.lane.b32.xlu0 %v2312, 96
      %v2401 = vpop.permute.xlu0 %2400
      %2402 = vrot.lane.b32.xlu0 %v2313, 96
      %v2403 = vpop.permute.xlu0 %2402
      %2404 = vrot.lane.b32.xlu0 %v2314, 96
      %v2405 = vpop.permute.xlu0 %2404
      %2406 = vrot.lane.b32.xlu0 %v2315, 96
      %v2407 = vpop.permute.xlu0 %2406
      %2408 = vrot.lane.b32.xlu0 %v2316, 96
      %v2409 = vpop.permute.xlu0 %2408
      %2410 = vrot.lane.b32.xlu0 %v2317, 96
      %v2411 = vpop.permute.xlu0 %2410
      %2412 = vrot.lane.b32.xlu0 %v2318, 96
      %v2413 = vpop.permute.xlu0 %2412
      %2414 = vrot.lane.b32.xlu0 %v2319, 96
      %v2415 = vpop.permute.xlu0 %2414
      %vm2448 = vcmask 913152
      %2449 = vst.msk [vmem:[#allocation2] sm:$0xf] %vm2448, %v2353
      %2450 = vst.msk [vmem:[#allocation2 + $0x8] sm:$0xf] %vm2448, %v2355
      %2451 = vst.msk [vmem:[#allocation2 + $0x10] sm:$0xf] %vm2448, %v2357
      %2452 = vst.msk [vmem:[#allocation2 + $0x18] sm:$0xf] %vm2448, %v2359
      %2453 = vst.msk [vmem:[#allocation2 + $0x20] sm:$0xf] %vm2448, %v2361
      %2454 = vst.msk [vmem:[#allocation2 + $0x28] sm:$0xf] %vm2448, %v2363
      %2455 = vst.msk [vmem:[#allocation2 + $0x30] sm:$0xf] %vm2448, %v2365
      %2456 = vst.msk [vmem:[#allocation2 + $0x38] sm:$0xf] %vm2448, %v2367
      %2457 = vst.msk [vmem:[#allocation2 + $0x40] sm:$0xf] %vm2448, %v2369
      %2458 = vst.msk [vmem:[#allocation2 + $0x48] sm:$0xf] %vm2448, %v2371
      %2459 = vst.msk [vmem:[#allocation2 + $0x50] sm:$0xf] %vm2448, %v2373
      %2460 = vst.msk [vmem:[#allocation2 + $0x58] sm:$0xf] %vm2448, %v2375
      %2461 = vst.msk [vmem:[#allocation2 + $0x60] sm:$0xf] %vm2448, %v2377
      %2462 = vst.msk [vmem:[#allocation2 + $0x68] sm:$0xf] %vm2448, %v2379
      %2463 = vst.msk [vmem:[#allocation2 + $0x70] sm:$0xf] %vm2448, %v2381
      %2464 = vst.msk [vmem:[#allocation2 + $0x78] sm:$0xf] %vm2448, %v2383
      %2465 = vst.msk [vmem:[#allocation2 + $0x80] sm:$0xf] %vm2448, %v2385
      %2466 = vst.msk [vmem:[#allocation2 + $0x88] sm:$0xf] %vm2448, %v2387
      %2467 = vst.msk [vmem:[#allocation2 + $0x90] sm:$0xf] %vm2448, %v2389
      %2468 = vst.msk [vmem:[#allocation2 + $0x98] sm:$0xf] %vm2448, %v2391
      %2469 = vst.msk [vmem:[#allocation2 + $0xa0] sm:$0xf] %vm2448, %v2393
      %2470 = vst.msk [vmem:[#allocation2 + $0xa8] sm:$0xf] %vm2448, %v2395
      %2471 = vst.msk [vmem:[#allocation2 + $0xb0] sm:$0xf] %vm2448, %v2397
      %2472 = vst.msk [vmem:[#allocation2 + $0xb8] sm:$0xf] %vm2448, %v2399
      %2473 = vst.msk [vmem:[#allocation2 + $0xc0] sm:$0xf] %vm2448, %v2401
      %2474 = vst.msk [vmem:[#allocation2 + $0xc8] sm:$0xf] %vm2448, %v2403
      %2475 = vst.msk [vmem:[#allocation2 + $0xd0] sm:$0xf] %vm2448, %v2405
      %2476 = vst.msk [vmem:[#allocation2 + $0xd8] sm:$0xf] %vm2448, %v2407
      %2477 = vst.msk [vmem:[#allocation2 + $0xe0] sm:$0xf] %vm2448, %v2409
      %2478 = vst.msk [vmem:[#allocation2 + $0xe8] sm:$0xf] %vm2448, %v2411
      %2479 = vst.msk [vmem:[#allocation2 + $0xf0] sm:$0xf] %vm2448, %v2413
      %2480 = vst.msk [vmem:[#allocation2 + $0xf8] sm:$0xf] %vm2448, %v2415
      %v2481 = vld [vmem:[%s2287] sm:$0xf]
      %v2482 = vld [vmem:[%s2287 + $0x4] sm:$0xf]
      %v2483 = vld [vmem:[%s2287 + $0x8] sm:$0x1]
      %v2484 = vld [vmem:[%s2287 + $0xc] sm:$0xf]
      %v2485 = vld [vmem:[%s2287 + $0x10] sm:$0xf]
      %v2486 = vld [vmem:[%s2287 + $0x14] sm:$0x1]
      %v2487 = vld [vmem:[%s2287 + $0x18] sm:$0xf]
      %v2488 = vld [vmem:[%s2287 + $0x1c] sm:$0xf]
      %v2489 = vld [vmem:[%s2287 + $0x20] sm:$0x1]
      %v2490 = vld [vmem:[%s2287 + $0x24] sm:$0xf]
      %v2491 = vld [vmem:[%s2287 + $0x28] sm:$0xf]
      %v2492 = vld [vmem:[%s2287 + $0x2c] sm:$0x1]
      %v2493 = vld [vmem:[%s2287 + $0x30] sm:$0xf]
      %v2494 = vld [vmem:[%s2287 + $0x34] sm:$0xf]
      %v2495 = vld [vmem:[%s2287 + $0x38] sm:$0x1]
      %v2496 = vld [vmem:[%s2287 + $0x3c] sm:$0xf]
      %v2497 = vld [vmem:[%s2287 + $0x40] sm:$0xf]
      %v2498 = vld [vmem:[%s2287 + $0x44] sm:$0x1]
      %v2499 = vld [vmem:[%s2287 + $0x48] sm:$0xf]
      %v2500 = vld [vmem:[%s2287 + $0x4c] sm:$0xf]
      %v2501 = vld [vmem:[%s2287 + $0x50] sm:$0x1]
      %v2502 = vld [vmem:[%s2287 + $0x54] sm:$0xf]
      %v2503 = vld [vmem:[%s2287 + $0x58] sm:$0xf]
      %v2504 = vld [vmem:[%s2287 + $0x5c] sm:$0x1]
      %v2505 = vld [vmem:[%s2287 + $0x60] sm:$0xf]
      %v2506 = vld [vmem:[%s2287 + $0x64] sm:$0xf]
      %v2507 = vld [vmem:[%s2287 + $0x68] sm:$0x1]
      %v2508 = vld [vmem:[%s2287 + $0x6c] sm:$0xf]
      %v2509 = vld [vmem:[%s2287 + $0x70] sm:$0xf]
      %v2510 = vld [vmem:[%s2287 + $0x74] sm:$0x1]
      %v2511 = vld [vmem:[%s2287 + $0x78] sm:$0xf]
      %v2512 = vld [vmem:[%s2287 + $0x7c] sm:$0xf]
      %v2513 = vld [vmem:[%s2287 + $0x80] sm:$0x1]
      %v2514 = vld [vmem:[%s2287 + $0x84] sm:$0xf]
      %v2515 = vld [vmem:[%s2287 + $0x88] sm:$0xf]
      %v2516 = vld [vmem:[%s2287 + $0x8c] sm:$0x1]
      %v2517 = vld [vmem:[%s2287 + $0x90] sm:$0xf]
      %v2518 = vld [vmem:[%s2287 + $0x94] sm:$0xf]
      %v2519 = vld [vmem:[%s2287 + $0x98] sm:$0x1]
      %v2520 = vld [vmem:[%s2287 + $0x9c] sm:$0xf]
      %v2521 = vld [vmem:[%s2287 + $0xa0] sm:$0xf]
      %v2522 = vld [vmem:[%s2287 + $0xa4] sm:$0x1]
      %v2523 = vld [vmem:[%s2287 + $0xa8] sm:$0xf]
      %v2524 = vld [vmem:[%s2287 + $0xac] sm:$0xf]
      %v2525 = vld [vmem:[%s2287 + $0xb0] sm:$0x1]
      %v2526 = vld [vmem:[%s2287 + $0xb4] sm:$0xf]
      %v2527 = vld [vmem:[%s2287 + $0xb8] sm:$0xf]
      %v2528 = vld [vmem:[%s2287 + $0xbc] sm:$0x1]
      %v2530 = vshrl.u32 %v2481, 16
      %v2532 = vrot.slane %v2530, 4
      %v2533 = vshll.u32 %v2481, 16
      %v2535 = vrot.slane %v2533, 5
      %v2536 = vor.u32 %v2532, %v2535
      %v2537 = vrot.slane %v2536, 4
      %v2539 = vshll.u32 %v2482, 16
      %v2541 = vrot.slane %v2539, 5
      %v2542 = vsel %vm341, %v2537, %v2541
      %v2543 = vshrl.u32 %v2482, 16
      %v2545 = vrot.slane %v2543, 4
      %v2546 = vor.u32 %v2545, %v2541
      %v2547 = vrot.slane %v2546, 4
      %v2549 = vshll.u32 %v2483, 16
      %v2551 = vrot.slane %v2549, 5
      %v2552 = vsel %vm341, %v2547, %v2551
      %v2554 = vshrl.u32 %v2484, 16
      %v2556 = vrot.slane %v2554, 4
      %v2557 = vshll.u32 %v2484, 16
      %v2559 = vrot.slane %v2557, 5
      %v2560 = vor.u32 %v2556, %v2559
      %v2561 = vrot.slane %v2560, 4
      %v2563 = vshll.u32 %v2485, 16
      %v2565 = vrot.slane %v2563, 5
      %v2566 = vsel %vm341, %v2561, %v2565
      %v2567 = vshrl.u32 %v2485, 16
      %v2569 = vrot.slane %v2567, 4
      %v2570 = vor.u32 %v2569, %v2565
      %v2571 = vrot.slane %v2570, 4
      %v2573 = vshll.u32 %v2486, 16
      %v2575 = vrot.slane %v2573, 5
      %v2576 = vsel %vm341, %v2571, %v2575
      %v2578 = vshrl.u32 %v2487, 16
      %v2580 = vrot.slane %v2578, 4
      %v2581 = vshll.u32 %v2487, 16
      %v2583 = vrot.slane %v2581, 5
      %v2584 = vor.u32 %v2580, %v2583
      %v2585 = vrot.slane %v2584, 4
      %v2587 = vshll.u32 %v2488, 16
      %v2589 = vrot.slane %v2587, 5
      %v2590 = vsel %vm341, %v2585, %v2589
      %v2591 = vshrl.u32 %v2488, 16
      %v2593 = vrot.slane %v2591, 4
      %v2594 = vor.u32 %v2593, %v2589
      %v2595 = vrot.slane %v2594, 4
      %v2597 = vshll.u32 %v2489, 16
      %v2599 = vrot.slane %v2597, 5
      %v2600 = vsel %vm341, %v2595, %v2599
      %v2602 = vshrl.u32 %v2490, 16
      %v2604 = vrot.slane %v2602, 4
      %v2605 = vshll.u32 %v2490, 16
      %v2607 = vrot.slane %v2605, 5
      %v2608 = vor.u32 %v2604, %v2607
      %v2609 = vrot.slane %v2608, 4
      %v2611 = vshll.u32 %v2491, 16
      %v2613 = vrot.slane %v2611, 5
      %v2614 = vsel %vm341, %v2609, %v2613
      %v2615 = vshrl.u32 %v2491, 16
      %v2617 = vrot.slane %v2615, 4
      %v2618 = vor.u32 %v2617, %v2613
      %v2619 = vrot.slane %v2618, 4
      %v2621 = vshll.u32 %v2492, 16
      %v2623 = vrot.slane %v2621, 5
      %v2624 = vsel %vm341, %v2619, %v2623
      %v2626 = vshrl.u32 %v2493, 16
      %v2628 = vrot.slane %v2626, 4
      %v2629 = vshll.u32 %v2493, 16
      %v2631 = vrot.slane %v2629, 5
      %v2632 = vor.u32 %v2628, %v2631
      %v2633 = vrot.slane %v2632, 4
      %v2635 = vshll.u32 %v2494, 16
      %v2637 = vrot.slane %v2635, 5
      %v2638 = vsel %vm341, %v2633, %v2637
      %v2639 = vshrl.u32 %v2494, 16
      %v2641 = vrot.slane %v2639, 4
      %v2642 = vor.u32 %v2641, %v2637
      %v2643 = vrot.slane %v2642, 4
      %v2645 = vshll.u32 %v2495, 16
      %v2647 = vrot.slane %v2645, 5
      %v2648 = vsel %vm341, %v2643, %v2647
      %v2650 = vshrl.u32 %v2496, 16
      %v2652 = vrot.slane %v2650, 4
      %v2653 = vshll.u32 %v2496, 16
      %v2655 = vrot.slane %v2653, 5
      %v2656 = vor.u32 %v2652, %v2655
      %v2657 = vrot.slane %v2656, 4
      %v2659 = vshll.u32 %v2497, 16
      %v2661 = vrot.slane %v2659, 5
      %v2662 = vsel %vm341, %v2657, %v2661
      %v2663 = vshrl.u32 %v2497, 16
      %v2665 = vrot.slane %v2663, 4
      %v2666 = vor.u32 %v2665, %v2661
      %v2667 = vrot.slane %v2666, 4
      %v2669 = vshll.u32 %v2498, 16
      %v2671 = vrot.slane %v2669, 5
      %v2672 = vsel %vm341, %v2667, %v2671
      %v2674 = vshrl.u32 %v2499, 16
      %v2676 = vrot.slane %v2674, 4
      %v2677 = vshll.u32 %v2499, 16
      %v2679 = vrot.slane %v2677, 5
      %v2680 = vor.u32 %v2676, %v2679
      %v2681 = vrot.slane %v2680, 4
      %v2683 = vshll.u32 %v2500, 16
      %v2685 = vrot.slane %v2683, 5
      %v2686 = vsel %vm341, %v2681, %v2685
      %v2687 = vshrl.u32 %v2500, 16
      %v2689 = vrot.slane %v2687, 4
      %v2690 = vor.u32 %v2689, %v2685
      %v2691 = vrot.slane %v2690, 4
      %v2693 = vshll.u32 %v2501, 16
      %v2695 = vrot.slane %v2693, 5
      %v2696 = vsel %vm341, %v2691, %v2695
      %v2698 = vshrl.u32 %v2502, 16
      %v2700 = vrot.slane %v2698, 4
      %v2701 = vshll.u32 %v2502, 16
      %v2703 = vrot.slane %v2701, 5
      %v2704 = vor.u32 %v2700, %v2703
      %v2705 = vrot.slane %v2704, 4
      %v2707 = vshll.u32 %v2503, 16
      %v2709 = vrot.slane %v2707, 5
      %v2710 = vsel %vm341, %v2705, %v2709
      %v2711 = vshrl.u32 %v2503, 16
      %v2713 = vrot.slane %v2711, 4
      %v2714 = vor.u32 %v2713, %v2709
      %v2715 = vrot.slane %v2714, 4
      %v2717 = vshll.u32 %v2504, 16
      %v2719 = vrot.slane %v2717, 5
      %v2720 = vsel %vm341, %v2715, %v2719
      %v2722 = vshrl.u32 %v2505, 16
      %v2724 = vrot.slane %v2722, 4
      %v2725 = vshll.u32 %v2505, 16
      %v2727 = vrot.slane %v2725, 5
      %v2728 = vor.u32 %v2724, %v2727
      %v2729 = vrot.slane %v2728, 4
      %v2731 = vshll.u32 %v2506, 16
      %v2733 = vrot.slane %v2731, 5
      %v2734 = vsel %vm341, %v2729, %v2733
      %v2735 = vshrl.u32 %v2506, 16
      %v2737 = vrot.slane %v2735, 4
      %v2738 = vor.u32 %v2737, %v2733
      %v2739 = vrot.slane %v2738, 4
      %v2741 = vshll.u32 %v2507, 16
      %v2743 = vrot.slane %v2741, 5
      %v2744 = vsel %vm341, %v2739, %v2743
      %v2746 = vshrl.u32 %v2508, 16
      %v2748 = vrot.slane %v2746, 4
      %v2749 = vshll.u32 %v2508, 16
      %v2751 = vrot.slane %v2749, 5
      %v2752 = vor.u32 %v2748, %v2751
      %v2753 = vrot.slane %v2752, 4
      %v2755 = vshll.u32 %v2509, 16
      %v2757 = vrot.slane %v2755, 5
      %v2758 = vsel %vm341, %v2753, %v2757
      %v2759 = vshrl.u32 %v2509, 16
      %v2761 = vrot.slane %v2759, 4
      %v2762 = vor.u32 %v2761, %v2757
      %v2763 = vrot.slane %v2762, 4
      %v2765 = vshll.u32 %v2510, 16
      %v2767 = vrot.slane %v2765, 5
      %v2768 = vsel %vm341, %v2763, %v2767
      %v2770 = vshrl.u32 %v2511, 16
      %v2772 = vrot.slane %v2770, 4
      %v2773 = vshll.u32 %v2511, 16
      %v2775 = vrot.slane %v2773, 5
      %v2776 = vor.u32 %v2772, %v2775
      %v2777 = vrot.slane %v2776, 4
      %v2779 = vshll.u32 %v2512, 16
      %v2781 = vrot.slane %v2779, 5
      %v2782 = vsel %vm341, %v2777, %v2781
      %v2783 = vshrl.u32 %v2512, 16
      %v2785 = vrot.slane %v2783, 4
      %v2786 = vor.u32 %v2785, %v2781
      %v2787 = vrot.slane %v2786, 4
      %v2789 = vshll.u32 %v2513, 16
      %v2791 = vrot.slane %v2789, 5
      %v2792 = vsel %vm341, %v2787, %v2791
      %v2794 = vshrl.u32 %v2514, 16
      %v2796 = vrot.slane %v2794, 4
      %v2797 = vshll.u32 %v2514, 16
      %v2799 = vrot.slane %v2797, 5
      %v2800 = vor.u32 %v2796, %v2799
      %v2801 = vrot.slane %v2800, 4
      %v2803 = vshll.u32 %v2515, 16
      %v2805 = vrot.slane %v2803, 5
      %v2806 = vsel %vm341, %v2801, %v2805
      %v2807 = vshrl.u32 %v2515, 16
      %v2809 = vrot.slane %v2807, 4
      %v2810 = vor.u32 %v2809, %v2805
      %v2811 = vrot.slane %v2810, 4
      %v2813 = vshll.u32 %v2516, 16
      %v2815 = vrot.slane %v2813, 5
      %v2816 = vsel %vm341, %v2811, %v2815
      %v2818 = vshrl.u32 %v2517, 16
      %v2820 = vrot.slane %v2818, 4
      %v2821 = vshll.u32 %v2517, 16
      %v2823 = vrot.slane %v2821, 5
      %v2824 = vor.u32 %v2820, %v2823
      %v2825 = vrot.slane %v2824, 4
      %v2827 = vshll.u32 %v2518, 16
      %v2829 = vrot.slane %v2827, 5
      %v2830 = vsel %vm341, %v2825, %v2829
      %v2831 = vshrl.u32 %v2518, 16
      %v2833 = vrot.slane %v2831, 4
      %v2834 = vor.u32 %v2833, %v2829
      %v2835 = vrot.slane %v2834, 4
      %v2837 = vshll.u32 %v2519, 16
      %v2839 = vrot.slane %v2837, 5
      %v2840 = vsel %vm341, %v2835, %v2839
      %v2842 = vshrl.u32 %v2520, 16
      %v2844 = vrot.slane %v2842, 4
      %v2845 = vshll.u32 %v2520, 16
      %v2847 = vrot.slane %v2845, 5
      %v2848 = vor.u32 %v2844, %v2847
      %v2849 = vrot.slane %v2848, 4
      %v2851 = vshll.u32 %v2521, 16
      %v2853 = vrot.slane %v2851, 5
      %v2854 = vsel %vm341, %v2849, %v2853
      %v2855 = vshrl.u32 %v2521, 16
      %v2857 = vrot.slane %v2855, 4
      %v2858 = vor.u32 %v2857, %v2853
      %v2859 = vrot.slane %v2858, 4
      %v2861 = vshll.u32 %v2522, 16
      %v2863 = vrot.slane %v2861, 5
      %v2864 = vsel %vm341, %v2859, %v2863
      %v2866 = vshrl.u32 %v2523, 16
      %v2868 = vrot.slane %v2866, 4
      %v2869 = vshll.u32 %v2523, 16
      %v2871 = vrot.slane %v2869, 5
      %v2872 = vor.u32 %v2868, %v2871
      %v2873 = vrot.slane %v2872, 4
      %v2875 = vshll.u32 %v2524, 16
      %v2877 = vrot.slane %v2875, 5
      %v2878 = vsel %vm341, %v2873, %v2877
      %v2879 = vshrl.u32 %v2524, 16
      %v2881 = vrot.slane %v2879, 4
      %v2882 = vor.u32 %v2881, %v2877
      %v2883 = vrot.slane %v2882, 4
      %v2885 = vshll.u32 %v2525, 16
      %v2887 = vrot.slane %v2885, 5
      %v2888 = vsel %vm341, %v2883, %v2887
      %v2890 = vshrl.u32 %v2526, 16
      %v2892 = vrot.slane %v2890, 4
      %v2893 = vshll.u32 %v2526, 16
      %v2895 = vrot.slane %v2893, 5
      %v2896 = vor.u32 %v2892, %v2895
      %v2897 = vrot.slane %v2896, 4
      %v2899 = vshll.u32 %v2527, 16
      %v2901 = vrot.slane %v2899, 5
      %v2902 = vsel %vm341, %v2897, %v2901
      %v2903 = vshrl.u32 %v2527, 16
      %v2905 = vrot.slane %v2903, 4
      %v2906 = vor.u32 %v2905, %v2901
      %v2907 = vrot.slane %v2906, 4
      %v2909 = vshll.u32 %v2528, 16
      %v2911 = vrot.slane %v2909, 5
      %v2912 = vsel %vm341, %v2907, %v2911
      %2913 = vrot.lane.b32.xlu0 %v2542, 112
      %v2914 = vpop.permute.xlu0 %2913
      %2915 = vrot.lane.b32.xlu0 %v2552, 112
      %v2916 = vpop.permute.xlu0 %2915
      %2917 = vrot.lane.b32.xlu0 %v2566, 112
      %v2918 = vpop.permute.xlu0 %2917
      %2919 = vrot.lane.b32.xlu0 %v2576, 112
      %v2920 = vpop.permute.xlu0 %2919
      %2921 = vrot.lane.b32.xlu0 %v2590, 112
      %v2922 = vpop.permute.xlu0 %2921
      %2923 = vrot.lane.b32.xlu0 %v2600, 112
      %v2924 = vpop.permute.xlu0 %2923
      %2925 = vrot.lane.b32.xlu0 %v2614, 112
      %v2926 = vpop.permute.xlu0 %2925
      %2927 = vrot.lane.b32.xlu0 %v2624, 112
      %v2928 = vpop.permute.xlu0 %2927
      %2929 = vrot.lane.b32.xlu0 %v2638, 112
      %v2930 = vpop.permute.xlu0 %2929
      %2931 = vrot.lane.b32.xlu0 %v2648, 112
      %v2932 = vpop.permute.xlu0 %2931
      %2933 = vrot.lane.b32.xlu0 %v2662, 112
      %v2934 = vpop.permute.xlu0 %2933
      %2935 = vrot.lane.b32.xlu0 %v2672, 112
      %v2936 = vpop.permute.xlu0 %2935
      %2937 = vrot.lane.b32.xlu0 %v2686, 112
      %v2938 = vpop.permute.xlu0 %2937
      %2939 = vrot.lane.b32.xlu0 %v2696, 112
      %v2940 = vpop.permute.xlu0 %2939
      %2941 = vrot.lane.b32.xlu0 %v2710, 112
      %v2942 = vpop.permute.xlu0 %2941
      %2943 = vrot.lane.b32.xlu0 %v2720, 112
      %v2944 = vpop.permute.xlu0 %2943
      %2945 = vrot.lane.b32.xlu0 %v2734, 112
      %v2946 = vpop.permute.xlu0 %2945
      %2947 = vrot.lane.b32.xlu0 %v2744, 112
      %v2948 = vpop.permute.xlu0 %2947
      %2949 = vrot.lane.b32.xlu0 %v2758, 112
      %v2950 = vpop.permute.xlu0 %2949
      %2951 = vrot.lane.b32.xlu0 %v2768, 112
      %v2952 = vpop.permute.xlu0 %2951
      %2953 = vrot.lane.b32.xlu0 %v2782, 112
      %v2954 = vpop.permute.xlu0 %2953
      %2955 = vrot.lane.b32.xlu0 %v2792, 112
      %v2956 = vpop.permute.xlu0 %2955
      %2957 = vrot.lane.b32.xlu0 %v2806, 112
      %v2958 = vpop.permute.xlu0 %2957
      %2959 = vrot.lane.b32.xlu0 %v2816, 112
      %v2960 = vpop.permute.xlu0 %2959
      %2961 = vrot.lane.b32.xlu0 %v2830, 112
      %v2962 = vpop.permute.xlu0 %2961
      %2963 = vrot.lane.b32.xlu0 %v2840, 112
      %v2964 = vpop.permute.xlu0 %2963
      %2965 = vrot.lane.b32.xlu0 %v2854, 112
      %v2966 = vpop.permute.xlu0 %2965
      %2967 = vrot.lane.b32.xlu0 %v2864, 112
      %v2968 = vpop.permute.xlu0 %2967
      %2969 = vrot.lane.b32.xlu0 %v2878, 112
      %v2970 = vpop.permute.xlu0 %2969
      %2971 = vrot.lane.b32.xlu0 %v2888, 112
      %v2972 = vpop.permute.xlu0 %2971
      %2973 = vrot.lane.b32.xlu0 %v2902, 112
      %v2974 = vpop.permute.xlu0 %2973
      %2975 = vrot.lane.b32.xlu0 %v2912, 112
      %v2976 = vpop.permute.xlu0 %2975
      %vm3009 = vcmask 1044352
      %3010 = vst.msk [vmem:[#allocation2] sm:$0xf] %vm3009, %v2914
      %3011 = vst.msk [vmem:[#allocation2 + $0x8] sm:$0xf] %vm3009, %v2916
      %3012 = vst.msk [vmem:[#allocation2 + $0x10] sm:$0xf] %vm3009, %v2918
      %3013 = vst.msk [vmem:[#allocation2 + $0x18] sm:$0xf] %vm3009, %v2920
      %3014 = vst.msk [vmem:[#allocation2 + $0x20] sm:$0xf] %vm3009, %v2922
      %3015 = vst.msk [vmem:[#allocation2 + $0x28] sm:$0xf] %vm3009, %v2924
      %3016 = vst.msk [vmem:[#allocation2 + $0x30] sm:$0xf] %vm3009, %v2926
      %3017 = vst.msk [vmem:[#allocation2 + $0x38] sm:$0xf] %vm3009, %v2928
      %3018 = vst.msk [vmem:[#allocation2 + $0x40] sm:$0xf] %vm3009, %v2930
      %3019 = vst.msk [vmem:[#allocation2 + $0x48] sm:$0xf] %vm3009, %v2932
      %3020 = vst.msk [vmem:[#allocation2 + $0x50] sm:$0xf] %vm3009, %v2934
      %3021 = vst.msk [vmem:[#allocation2 + $0x58] sm:$0xf] %vm3009, %v2936
      %3022 = vst.msk [vmem:[#allocation2 + $0x60] sm:$0xf] %vm3009, %v2938
      %3023 = vst.msk [vmem:[#allocation2 + $0x68] sm:$0xf] %vm3009, %v2940
      %3024 = vst.msk [vmem:[#allocation2 + $0x70] sm:$0xf] %vm3009, %v2942
      %3025 = vst.msk [vmem:[#allocation2 + $0x78] sm:$0xf] %vm3009, %v2944
      %3026 = vst.msk [vmem:[#allocation2 + $0x80] sm:$0xf] %vm3009, %v2946
      %3027 = vst.msk [vmem:[#allocation2 + $0x88] sm:$0xf] %vm3009, %v2948
      %3028 = vst.msk [vmem:[#allocation2 + $0x90] sm:$0xf] %vm3009, %v2950
      %3029 = vst.msk [vmem:[#allocation2 + $0x98] sm:$0xf] %vm3009, %v2952
      %3030 = vst.msk [vmem:[#allocation2 + $0xa0] sm:$0xf] %vm3009, %v2954
      %3031 = vst.msk [vmem:[#allocation2 + $0xa8] sm:$0xf] %vm3009, %v2956
      %3032 = vst.msk [vmem:[#allocation2 + $0xb0] sm:$0xf] %vm3009, %v2958
      %3033 = vst.msk [vmem:[#allocation2 + $0xb8] sm:$0xf] %vm3009, %v2960
      %3034 = vst.msk [vmem:[#allocation2 + $0xc0] sm:$0xf] %vm3009, %v2962
      %3035 = vst.msk [vmem:[#allocation2 + $0xc8] sm:$0xf] %vm3009, %v2964
      %3036 = vst.msk [vmem:[#allocation2 + $0xd0] sm:$0xf] %vm3009, %v2966
      %3037 = vst.msk [vmem:[#allocation2 + $0xd8] sm:$0xf] %vm3009, %v2968
      %3038 = vst.msk [vmem:[#allocation2 + $0xe0] sm:$0xf] %vm3009, %v2970
      %3039 = vst.msk [vmem:[#allocation2 + $0xe8] sm:$0xf] %vm3009, %v2972
      %3040 = vst.msk [vmem:[#allocation2 + $0xf0] sm:$0xf] %vm3009, %v2974
      %3041 = vst.msk [vmem:[#allocation2 + $0xf8] sm:$0xf] %vm3009, %v2976
      %v3042 = vld [vmem:[%s2287] sm:$0xe]
      %v3043 = vld [vmem:[%s2287 + $0x4] sm:$0xf]
      %v3044 = vld [vmem:[%s2287 + $0x8] sm:$0x1]
      %v3045 = vld [vmem:[%s2287 + $0xc] sm:$0xe]
      %v3046 = vld [vmem:[%s2287 + $0x10] sm:$0xf]
      %v3047 = vld [vmem:[%s2287 + $0x14] sm:$0x1]
      %v3048 = vld [vmem:[%s2287 + $0x18] sm:$0xe]
      %v3049 = vld [vmem:[%s2287 + $0x1c] sm:$0xf]
      %v3050 = vld [vmem:[%s2287 + $0x20] sm:$0x1]
      %v3051 = vld [vmem:[%s2287 + $0x24] sm:$0xe]
      %v3052 = vld [vmem:[%s2287 + $0x28] sm:$0xf]
      %v3053 = vld [vmem:[%s2287 + $0x2c] sm:$0x1]
      %v3054 = vld [vmem:[%s2287 + $0x30] sm:$0xe]
      %v3055 = vld [vmem:[%s2287 + $0x34] sm:$0xf]
      %v3056 = vld [vmem:[%s2287 + $0x38] sm:$0x1]
      %v3057 = vld [vmem:[%s2287 + $0x3c] sm:$0xe]
      %v3058 = vld [vmem:[%s2287 + $0x40] sm:$0xf]
      %v3059 = vld [vmem:[%s2287 + $0x44] sm:$0x1]
      %v3060 = vld [vmem:[%s2287 + $0x48] sm:$0xe]
      %v3061 = vld [vmem:[%s2287 + $0x4c] sm:$0xf]
      %v3062 = vld [vmem:[%s2287 + $0x50] sm:$0x1]
      %v3063 = vld [vmem:[%s2287 + $0x54] sm:$0xe]
      %v3064 = vld [vmem:[%s2287 + $0x58] sm:$0xf]
      %v3065 = vld [vmem:[%s2287 + $0x5c] sm:$0x1]
      %v3066 = vld [vmem:[%s2287 + $0x60] sm:$0xe]
      %v3067 = vld [vmem:[%s2287 + $0x64] sm:$0xf]
      %v3068 = vld [vmem:[%s2287 + $0x68] sm:$0x1]
      %v3069 = vld [vmem:[%s2287 + $0x6c] sm:$0xe]
      %v3070 = vld [vmem:[%s2287 + $0x70] sm:$0xf]
      %v3071 = vld [vmem:[%s2287 + $0x74] sm:$0x1]
      %v3072 = vld [vmem:[%s2287 + $0x78] sm:$0xe]
      %v3073 = vld [vmem:[%s2287 + $0x7c] sm:$0xf]
      %v3074 = vld [vmem:[%s2287 + $0x80] sm:$0x1]
      %v3075 = vld [vmem:[%s2287 + $0x84] sm:$0xe]
      %v3076 = vld [vmem:[%s2287 + $0x88] sm:$0xf]
      %v3077 = vld [vmem:[%s2287 + $0x8c] sm:$0x1]
      %v3078 = vld [vmem:[%s2287 + $0x90] sm:$0xe]
      %v3079 = vld [vmem:[%s2287 + $0x94] sm:$0xf]
      %v3080 = vld [vmem:[%s2287 + $0x98] sm:$0x1]
      %v3081 = vld [vmem:[%s2287 + $0x9c] sm:$0xe]
      %v3082 = vld [vmem:[%s2287 + $0xa0] sm:$0xf]
      %v3083 = vld [vmem:[%s2287 + $0xa4] sm:$0x1]
      %v3084 = vld [vmem:[%s2287 + $0xa8] sm:$0xe]
      %v3085 = vld [vmem:[%s2287 + $0xac] sm:$0xf]
      %v3086 = vld [vmem:[%s2287 + $0xb0] sm:$0x1]
      %v3087 = vld [vmem:[%s2287 + $0xb4] sm:$0xe]
      %v3088 = vld [vmem:[%s2287 + $0xb8] sm:$0xf]
      %v3089 = vld [vmem:[%s2287 + $0xbc] sm:$0x1]
      %v3138 = vrot.slane %v3042, 5
      %v3139 = vrot.slane %v3138, 4
      %v3140 = vrot.slane %v3043, 5
      %v3141 = vsel %vm953, %v3139, %v3140
      %v3142 = vrot.slane %v3140, 4
      %v3143 = vrot.slane %v3044, 5
      %v3144 = vsel %vm953, %v3142, %v3143
      %v3145 = vrot.slane %v3045, 5
      %v3146 = vrot.slane %v3145, 4
      %v3147 = vrot.slane %v3046, 5
      %v3148 = vsel %vm953, %v3146, %v3147
      %v3149 = vrot.slane %v3147, 4
      %v3150 = vrot.slane %v3047, 5
      %v3151 = vsel %vm953, %v3149, %v3150
      %v3152 = vrot.slane %v3048, 5
      %v3153 = vrot.slane %v3152, 4
      %v3154 = vrot.slane %v3049, 5
      %v3155 = vsel %vm953, %v3153, %v3154
      %v3156 = vrot.slane %v3154, 4
      %v3157 = vrot.slane %v3050, 5
      %v3158 = vsel %vm953, %v3156, %v3157
      %v3159 = vrot.slane %v3051, 5
      %v3160 = vrot.slane %v3159, 4
      %v3161 = vrot.slane %v3052, 5
      %v3162 = vsel %vm953, %v3160, %v3161
      %v3163 = vrot.slane %v3161, 4
      %v3164 = vrot.slane %v3053, 5
      %v3165 = vsel %vm953, %v3163, %v3164
      %v3166 = vrot.slane %v3054, 5
      %v3167 = vrot.slane %v3166, 4
      %v3168 = vrot.slane %v3055, 5
      %v3169 = vsel %vm953, %v3167, %v3168
      %v3170 = vrot.slane %v3168, 4
      %v3171 = vrot.slane %v3056, 5
      %v3172 = vsel %vm953, %v3170, %v3171
      %v3173 = vrot.slane %v3057, 5
      %v3174 = vrot.slane %v3173, 4
      %v3175 = vrot.slane %v3058, 5
      %v3176 = vsel %vm953, %v3174, %v3175
      %v3177 = vrot.slane %v3175, 4
      %v3178 = vrot.slane %v3059, 5
      %v3179 = vsel %vm953, %v3177, %v3178
      %v3180 = vrot.slane %v3060, 5
      %v3181 = vrot.slane %v3180, 4
      %v3182 = vrot.slane %v3061, 5
      %v3183 = vsel %vm953, %v3181, %v3182
      %v3184 = vrot.slane %v3182, 4
      %v3185 = vrot.slane %v3062, 5
      %v3186 = vsel %vm953, %v3184, %v3185
      %v3187 = vrot.slane %v3063, 5
      %v3188 = vrot.slane %v3187, 4
      %v3189 = vrot.slane %v3064, 5
      %v3190 = vsel %vm953, %v3188, %v3189
      %v3191 = vrot.slane %v3189, 4
      %v3192 = vrot.slane %v3065, 5
      %v3193 = vsel %vm953, %v3191, %v3192
      %v3194 = vrot.slane %v3066, 5
      %v3195 = vrot.slane %v3194, 4
      %v3196 = vrot.slane %v3067, 5
      %v3197 = vsel %vm953, %v3195, %v3196
      %v3198 = vrot.slane %v3196, 4
      %v3199 = vrot.slane %v3068, 5
      %v3200 = vsel %vm953, %v3198, %v3199
      %v3201 = vrot.slane %v3069, 5
      %v3202 = vrot.slane %v3201, 4
      %v3203 = vrot.slane %v3070, 5
      %v3204 = vsel %vm953, %v3202, %v3203
      %v3205 = vrot.slane %v3203, 4
      %v3206 = vrot.slane %v3071, 5
      %v3207 = vsel %vm953, %v3205, %v3206
      %v3208 = vrot.slane %v3072, 5
      %v3209 = vrot.slane %v3208, 4
      %v3210 = vrot.slane %v3073, 5
      %v3211 = vsel %vm953, %v3209, %v3210
      %v3212 = vrot.slane %v3210, 4
      %v3213 = vrot.slane %v3074, 5
      %v3214 = vsel %vm953, %v3212, %v3213
      %v3215 = vrot.slane %v3075, 5
      %v3216 = vrot.slane %v3215, 4
      %v3217 = vrot.slane %v3076, 5
      %v3218 = vsel %vm953, %v3216, %v3217
      %v3219 = vrot.slane %v3217, 4
      %v3220 = vrot.slane %v3077, 5
      %v3221 = vsel %vm953, %v3219, %v3220
      %v3222 = vrot.slane %v3078, 5
      %v3223 = vrot.slane %v3222, 4
      %v3224 = vrot.slane %v3079, 5
      %v3225 = vsel %vm953, %v3223, %v3224
      %v3226 = vrot.slane %v3224, 4
      %v3227 = vrot.slane %v3080, 5
      %v3228 = vsel %vm953, %v3226, %v3227
      %v3229 = vrot.slane %v3081, 5
      %v3230 = vrot.slane %v3229, 4
      %v3231 = vrot.slane %v3082, 5
      %v3232 = vsel %vm953, %v3230, %v3231
      %v3233 = vrot.slane %v3231, 4
      %v3234 = vrot.slane %v3083, 5
      %v3235 = vsel %vm953, %v3233, %v3234
      %v3236 = vrot.slane %v3084, 5
      %v3237 = vrot.slane %v3236, 4
      %v3238 = vrot.slane %v3085, 5
      %v3239 = vsel %vm953, %v3237, %v3238
      %v3240 = vrot.slane %v3238, 4
      %v3241 = vrot.slane %v3086, 5
      %v3242 = vsel %vm953, %v3240, %v3241
      %v3243 = vrot.slane %v3087, 5
      %v3244 = vrot.slane %v3243, 4
      %v3245 = vrot.slane %v3088, 5
      %v3246 = vsel %vm953, %v3244, %v3245
      %v3247 = vrot.slane %v3245, 4
      %v3248 = vrot.slane %v3089, 5
      %v3249 = vsel %vm953, %v3247, %v3248
      %3282 = vst.msk [vmem:[#allocation2 + $0x4] sm:$0xf] %vm258, %v3141
      %3283 = vst.msk [vmem:[#allocation2 + $0xc] sm:$0xf] %vm258, %v3144
      %3284 = vst.msk [vmem:[#allocation2 + $0x14] sm:$0xf] %vm258, %v3148
      %3285 = vst.msk [vmem:[#allocation2 + $0x1c] sm:$0xf] %vm258, %v3151
      %3286 = vst.msk [vmem:[#allocation2 + $0x24] sm:$0xf] %vm258, %v3155
      %3287 = vst.msk [vmem:[#allocation2 + $0x2c] sm:$0xf] %vm258, %v3158
      %3288 = vst.msk [vmem:[#allocation2 + $0x34] sm:$0xf] %vm258, %v3162
      %3289 = vst.msk [vmem:[#allocation2 + $0x3c] sm:$0xf] %vm258, %v3165
      %3290 = vst.msk [vmem:[#allocation2 + $0x44] sm:$0xf] %vm258, %v3169
      %3291 = vst.msk [vmem:[#allocation2 + $0x4c] sm:$0xf] %vm258, %v3172
      %3292 = vst.msk [vmem:[#allocation2 + $0x54] sm:$0xf] %vm258, %v3176
      %3293 = vst.msk [vmem:[#allocation2 + $0x5c] sm:$0xf] %vm258, %v3179
      %3294 = vst.msk [vmem:[#allocation2 + $0x64] sm:$0xf] %vm258, %v3183
      %3295 = vst.msk [vmem:[#allocation2 + $0x6c] sm:$0xf] %vm258, %v3186
      %3296 = vst.msk [vmem:[#allocation2 + $0x74] sm:$0xf] %vm258, %v3190
      %3297 = vst.msk [vmem:[#allocation2 + $0x7c] sm:$0xf] %vm258, %v3193
      %3298 = vst.msk [vmem:[#allocation2 + $0x84] sm:$0xf] %vm258, %v3197
      %3299 = vst.msk [vmem:[#allocation2 + $0x8c] sm:$0xf] %vm258, %v3200
      %3300 = vst.msk [vmem:[#allocation2 + $0x94] sm:$0xf] %vm258, %v3204
      %3301 = vst.msk [vmem:[#allocation2 + $0x9c] sm:$0xf] %vm258, %v3207
      %3302 = vst.msk [vmem:[#allocation2 + $0xa4] sm:$0xf] %vm258, %v3211
      %3303 = vst.msk [vmem:[#allocation2 + $0xac] sm:$0xf] %vm258, %v3214
      %3304 = vst.msk [vmem:[#allocation2 + $0xb4] sm:$0xf] %vm258, %v3218
      %3305 = vst.msk [vmem:[#allocation2 + $0xbc] sm:$0xf] %vm258, %v3221
      %3306 = vst.msk [vmem:[#allocation2 + $0xc4] sm:$0xf] %vm258, %v3225
      %3307 = vst.msk [vmem:[#allocation2 + $0xcc] sm:$0xf] %vm258, %v3228
      %3308 = vst.msk [vmem:[#allocation2 + $0xd4] sm:$0xf] %vm258, %v3232
      %3309 = vst.msk [vmem:[#allocation2 + $0xdc] sm:$0xf] %vm258, %v3235
      %3310 = vst.msk [vmem:[#allocation2 + $0xe4] sm:$0xf] %vm258, %v3239
      %3311 = vst.msk [vmem:[#allocation2 + $0xec] sm:$0xf] %vm258, %v3242
      %3312 = vst.msk [vmem:[#allocation2 + $0xf4] sm:$0xf] %vm258, %v3246
      %3313 = vst.msk [vmem:[#allocation2 + $0xfc] sm:$0xf] %vm258, %v3249
      %v3314 = vld [vmem:[#allocation2] sm:$0xff]
      %v3315 = vld [vmem:[#allocation2 + $0x8] sm:$0xff]
      %v3316 = vld [vmem:[#allocation2 + $0x10] sm:$0xff]
      %v3317 = vld [vmem:[#allocation2 + $0x18] sm:$0xff]
      %v3318 = vld [vmem:[#allocation2 + $0x20] sm:$0xff]
      %v3319 = vld [vmem:[#allocation2 + $0x28] sm:$0xff]
      %v3320 = vld [vmem:[#allocation2 + $0x30] sm:$0xff]
      %v3321 = vld [vmem:[#allocation2 + $0x38] sm:$0xff]
      %v3322 = vld [vmem:[#allocation2 + $0x40] sm:$0xff]
      %v3323 = vld [vmem:[#allocation2 + $0x48] sm:$0xff]
      %v3324 = vld [vmem:[#allocation2 + $0x50] sm:$0xff]
      %v3325 = vld [vmem:[#allocation2 + $0x58] sm:$0xff]
      %v3326 = vld [vmem:[#allocation2 + $0x60] sm:$0xff]
      %v3327 = vld [vmem:[#allocation2 + $0x68] sm:$0xff]
      %v3328 = vld [vmem:[#allocation2 + $0x70] sm:$0xff]
      %v3329 = vld [vmem:[#allocation2 + $0x78] sm:$0xff]
      %v3330 = vld [vmem:[#allocation2 + $0x80] sm:$0xff]
      %v3331 = vld [vmem:[#allocation2 + $0x88] sm:$0xff]
      %v3332 = vld [vmem:[#allocation2 + $0x90] sm:$0xff]
      %v3333 = vld [vmem:[#allocation2 + $0x98] sm:$0xff]
      %v3334 = vld [vmem:[#allocation2 + $0xa0] sm:$0xff]
      %v3335 = vld [vmem:[#allocation2 + $0xa8] sm:$0xff]
      %v3336 = vld [vmem:[#allocation2 + $0xb0] sm:$0xff]
      %v3337 = vld [vmem:[#allocation2 + $0xb8] sm:$0xff]
      %v3338 = vld [vmem:[#allocation2 + $0xc0] sm:$0xff]
      %v3339 = vld [vmem:[#allocation2 + $0xc8] sm:$0xff]
      %v3340 = vld [vmem:[#allocation2 + $0xd0] sm:$0xff]
      %v3341 = vld [vmem:[#allocation2 + $0xd8] sm:$0xff]
      %v3342 = vld [vmem:[#allocation2 + $0xe0] sm:$0xff]
      %v3343 = vld [vmem:[#allocation2 + $0xe8] sm:$0xff]
      %v3344 = vld [vmem:[#allocation2 + $0xf0] sm:$0xff]
      %v3345 = vld [vmem:[#allocation2 + $0xf8] sm:$0xff]
      %v3346 = vld [vmem:[%s1] sm:$0xf]
      %v3347 = vld [vmem:[%s1 + $0x4] sm:$0xf]
      %v3348 = vld [vmem:[%s1 + $0x8] sm:$0xf]
      %v3349 = vld [vmem:[%s1 + $0xc] sm:$0xf]
      %v3350 = vld [vmem:[%s1 + $0x10] sm:$0xf]
      %v3351 = vld [vmem:[%s1 + $0x14] sm:$0xf]
      %v3352 = vld [vmem:[%s1 + $0x18] sm:$0xf]
      %v3353 = vld [vmem:[%s1 + $0x1c] sm:$0xf]
      %v3354 = vld [vmem:[%s1 + $0x20] sm:$0xf]
      %v3355 = vld [vmem:[%s1 + $0x24] sm:$0xf]
      %v3356 = vld [vmem:[%s1 + $0x28] sm:$0xf]
      %v3357 = vld [vmem:[%s1 + $0x2c] sm:$0xf]
      %v3358 = vld [vmem:[%s1 + $0x30] sm:$0xf]
      %v3359 = vld [vmem:[%s1 + $0x34] sm:$0xf]
      %v3360 = vld [vmem:[%s1 + $0x38] sm:$0xf]
      %v3361 = vld [vmem:[%s1 + $0x3c] sm:$0xf]
      %v3362 = vld [vmem:[%s1 + $0x40] sm:$0xf]
      %v3363 = vld [vmem:[%s1 + $0x44] sm:$0xf]
      %v3364 = vld [vmem:[%s2] sm:$0x1]
      %v3366 = vperm.slane %v3364, 0
      %v3400 = vunpack.c.l.b16 %v3314
      %v3401 = vunpack.c.h.b16 %v3314
      %v3402 = vunpack.c.l.b16 %v3315
      %v3403 = vunpack.c.h.b16 %v3315
      %v3404 = vunpack.c.l.b16 %v3316
      %v3405 = vunpack.c.h.b16 %v3316
      %v3406 = vunpack.c.l.b16 %v3317
      %v3407 = vunpack.c.h.b16 %v3317
      %v3408 = vunpack.c.l.b16 %v3318
      %v3409 = vunpack.c.h.b16 %v3318
      %v3410 = vunpack.c.l.b16 %v3319
      %v3411 = vunpack.c.h.b16 %v3319
      %v3412 = vunpack.c.l.b16 %v3320
      %v3413 = vunpack.c.h.b16 %v3320
      %v3414 = vunpack.c.l.b16 %v3321
      %v3415 = vunpack.c.h.b16 %v3321
      %v3416 = vunpack.c.l.b16 %v3322
      %v3417 = vunpack.c.h.b16 %v3322
      %v3418 = vunpack.c.l.b16 %v3323
      %v3419 = vunpack.c.h.b16 %v3323
      %v3420 = vunpack.c.l.b16 %v3324
      %v3421 = vunpack.c.h.b16 %v3324
      %v3422 = vunpack.c.l.b16 %v3325
      %v3423 = vunpack.c.h.b16 %v3325
      %v3424 = vunpack.c.l.b16 %v3326
      %v3425 = vunpack.c.h.b16 %v3326
      %v3426 = vunpack.c.l.b16 %v3327
      %v3427 = vunpack.c.h.b16 %v3327
      %v3428 = vunpack.c.l.b16 %v3328
      %v3429 = vunpack.c.h.b16 %v3328
      %v3430 = vunpack.c.l.b16 %v3329
      %v3431 = vunpack.c.h.b16 %v3329
      %v3432 = vunpack.c.l.b16 %v3330
      %v3433 = vunpack.c.h.b16 %v3330
      %v3434 = vunpack.c.l.b16 %v3331
      %v3435 = vunpack.c.h.b16 %v3331
      %v3436 = vunpack.c.l.b16 %v3332
      %v3437 = vunpack.c.h.b16 %v3332
      %v3438 = vunpack.c.l.b16 %v3333
      %v3439 = vunpack.c.h.b16 %v3333
      %v3440 = vunpack.c.l.b16 %v3334
      %v3441 = vunpack.c.h.b16 %v3334
      %v3442 = vunpack.c.l.b16 %v3335
      %v3443 = vunpack.c.h.b16 %v3335
      %v3444 = vunpack.c.l.b16 %v3336
      %v3445 = vunpack.c.h.b16 %v3336
      %v3446 = vunpack.c.l.b16 %v3337
      %v3447 = vunpack.c.h.b16 %v3337
      %v3448 = vunpack.c.l.b16 %v3338
      %v3449 = vunpack.c.h.b16 %v3338
      %v3450 = vunpack.c.l.b16 %v3339
      %v3451 = vunpack.c.h.b16 %v3339
      %v3452 = vunpack.c.l.b16 %v3340
      %v3453 = vunpack.c.h.b16 %v3340
      %v3454 = vunpack.c.l.b16 %v3341
      %v3455 = vunpack.c.h.b16 %v3341
      %v3456 = vunpack.c.l.b16 %v3342
      %v3457 = vunpack.c.h.b16 %v3342
      %v3458 = vunpack.c.l.b16 %v3343
      %v3459 = vunpack.c.h.b16 %v3343
      %v3460 = vunpack.c.l.b16 %v3344
      %v3461 = vunpack.c.h.b16 %v3344
      %v3462 = vunpack.c.l.b16 %v3345
      %v3463 = vunpack.c.h.b16 %v3345
      %v3464 = vpack.c.b16 %v3402, %v3400
      %v3465 = vpack.c.b16 %v3403, %v3401
      %v3466 = vpack.c.b16 %v3406, %v3404
      %v3467 = vpack.c.b16 %v3407, %v3405
      %v3468 = vpack.c.b16 %v3410, %v3408
      %v3469 = vpack.c.b16 %v3411, %v3409
      %v3470 = vpack.c.b16 %v3414, %v3412
      %v3471 = vpack.c.b16 %v3415, %v3413
      %v3472 = vpack.c.b16 %v3418, %v3416
      %v3473 = vpack.c.b16 %v3419, %v3417
      %v3474 = vpack.c.b16 %v3422, %v3420
      %v3475 = vpack.c.b16 %v3423, %v3421
      %v3476 = vpack.c.b16 %v3426, %v3424
      %v3477 = vpack.c.b16 %v3427, %v3425
      %v3478 = vpack.c.b16 %v3430, %v3428
      %v3479 = vpack.c.b16 %v3431, %v3429
      %v3480 = vpack.c.b16 %v3434, %v3432
      %v3481 = vpack.c.b16 %v3435, %v3433
      %v3482 = vpack.c.b16 %v3438, %v3436
      %v3483 = vpack.c.b16 %v3439, %v3437
      %v3484 = vpack.c.b16 %v3442, %v3440
      %v3485 = vpack.c.b16 %v3443, %v3441
      %v3486 = vpack.c.b16 %v3446, %v3444
      %v3487 = vpack.c.b16 %v3447, %v3445
      %v3488 = vpack.c.b16 %v3450, %v3448
      %v3489 = vpack.c.b16 %v3451, %v3449
      %v3490 = vpack.c.b16 %v3454, %v3452
      %v3491 = vpack.c.b16 %v3455, %v3453
      %v3492 = vpack.c.b16 %v3458, %v3456
      %v3493 = vpack.c.b16 %v3459, %v3457
      %v3494 = vpack.c.b16 %v3462, %v3460
      %v3495 = vpack.c.b16 %v3463, %v3461
      %v3530 = vunpack.c.l.b16 %v3346
      %v3531 = vunpack.c.l.b16 %v3347
      %v3532 = vunpack.c.l.b16 %v3348
      %v3533 = vunpack.c.l.b16 %v3349
      %v3534 = vunpack.c.l.b16 %v3350
      %v3535 = vunpack.c.l.b16 %v3351
      %v3536 = vunpack.c.l.b16 %v3352
      %v3537 = vunpack.c.l.b16 %v3353
      %v3538 = vunpack.c.l.b16 %v3354
      %v3539 = vunpack.c.l.b16 %v3355
      %v3540 = vunpack.c.l.b16 %v3356
      %v3541 = vunpack.c.l.b16 %v3357
      %v3542 = vunpack.c.l.b16 %v3358
      %v3543 = vunpack.c.l.b16 %v3359
      %v3544 = vunpack.c.l.b16 %v3360
      %v3545 = vunpack.c.l.b16 %v3361
      %v3546 = vunpack.c.l.b16 %v3362
      %v3547 = vunpack.c.l.b16 %v3363
      %v3548 = vpack.c.b16 %v3531, %v3530
      %v3549 = vpack.c.b16 %v3533, %v3532
      %v3550 = vpack.c.b16 %v3535, %v3534
      %v3551 = vpack.c.b16 %v3537, %v3536
      %v3552 = vpack.c.b16 %v3539, %v3538
      %v3553 = vpack.c.b16 %v3541, %v3540
      %v3554 = vpack.c.b16 %v3543, %v3542
      %v3555 = vpack.c.b16 %v3545, %v3544
      %v3556 = vpack.c.b16 %v3547, %v3546
      %vm3566 = vcmask 130048
      %v3568 = vsel %vm3566, %v3465, 0
      %v3571 = vsel %vm3566, %v3467, 0
      %v3574 = vsel %vm3566, %v3469, 0
      %v3577 = vsel %vm3566, %v3471, 0
      %v3580 = vsel %vm3566, %v3473, 0
      %v3583 = vsel %vm3566, %v3475, 0
      %v3586 = vsel %vm3566, %v3477, 0
      %v3589 = vsel %vm3566, %v3479, 0
      %v3592 = vsel %vm3566, %v3481, 0
      %v3595 = vsel %vm3566, %v3483, 0
      %v3598 = vsel %vm3566, %v3485, 0
      %v3601 = vsel %vm3566, %v3487, 0
      %v3604 = vsel %vm3566, %v3489, 0
      %v3607 = vsel %vm3566, %v3491, 0
      %v3610 = vsel %vm3566, %v3493, 0
      %v3613 = vsel %vm3566, %v3495, 0
      %3615 = vmatpush.bf16.msra.mxu0 %v3555
      %3616 = vmatpush.bf16.msra.mxu0 %v3554
      %3617 = vmatpush.bf16.msra.mxu0 %v3553
      %3618 = vmatpush.bf16.msra.mxu0 %v3552
      %3619 = vmatpush.bf16.msra.mxu0 %v3551
      %3620 = vmatpush.bf16.msra.mxu0 %v3550
      %3621 = vmatpush.bf16.msra.mxu0 %v3549
      %3622 = vmatpush.bf16.msra.mxu0 %v3548
      %3623 = vmatmul.bf16.gmra.mxu0 %v3464
      %v3624 = vpop.f32.mrf.mxu0
      %v3625 = vadd.f32 %v3366, %v3624
      %v3626 = vpop.f32.mrf.mxu0
      %v3627 = vadd.f32 %v3366, %v3626
      %3628 = vmatmul.bf16.gmra.mxu0 %v3466
      %v3629 = vpop.f32.mrf.mxu0
      %v3630 = vadd.f32 %v3366, %v3629
      %v3631 = vpop.f32.mrf.mxu0
      %v3632 = vadd.f32 %v3366, %v3631
      %3633 = vmatmul.bf16.gmra.mxu0 %v3468
      %v3634 = vpop.f32.mrf.mxu0
      %v3635 = vadd.f32 %v3366, %v3634
      %v3636 = vpop.f32.mrf.mxu0
      %v3637 = vadd.f32 %v3366, %v3636
      %3638 = vmatmul.bf16.gmra.mxu0 %v3470
      %v3639 = vpop.f32.mrf.mxu0
      %v3640 = vadd.f32 %v3366, %v3639
      %v3641 = vpop.f32.mrf.mxu0
      %v3642 = vadd.f32 %v3366, %v3641
      %3643 = vmatmul.bf16.gmra.mxu0 %v3472
      %v3644 = vpop.f32.mrf.mxu0
      %v3645 = vadd.f32 %v3366, %v3644
      %v3646 = vpop.f32.mrf.mxu0
      %v3647 = vadd.f32 %v3366, %v3646
      %3648 = vmatmul.bf16.gmra.mxu0 %v3474
      %v3649 = vpop.f32.mrf.mxu0
      %v3650 = vadd.f32 %v3366, %v3649
      %v3651 = vpop.f32.mrf.mxu0
      %v3652 = vadd.f32 %v3366, %v3651
      %3653 = vmatmul.bf16.gmra.mxu0 %v3476
      %v3654 = vpop.f32.mrf.mxu0
      %v3655 = vadd.f32 %v3366, %v3654
      %v3656 = vpop.f32.mrf.mxu0
      %v3657 = vadd.f32 %v3366, %v3656
      %3658 = vmatmul.bf16.gmra.mxu0 %v3478
      %v3659 = vpop.f32.mrf.mxu0
      %v3660 = vadd.f32 %v3366, %v3659
      %v3661 = vpop.f32.mrf.mxu0
      %v3662 = vadd.f32 %v3366, %v3661
      %3663 = vmatmul.bf16.gmra.mxu0 %v3480
      %v3664 = vpop.f32.mrf.mxu0
      %v3665 = vadd.f32 %v3366, %v3664
      %v3666 = vpop.f32.mrf.mxu0
      %v3667 = vadd.f32 %v3366, %v3666
      %3668 = vmatmul.bf16.gmra.mxu0 %v3482
      %v3669 = vpop.f32.mrf.mxu0
      %v3670 = vadd.f32 %v3366, %v3669
      %v3671 = vpop.f32.mrf.mxu0
      %v3672 = vadd.f32 %v3366, %v3671
      %3673 = vmatmul.bf16.gmra.mxu0 %v3484
      %v3674 = vpop.f32.mrf.mxu0
      %v3675 = vadd.f32 %v3366, %v3674
      %v3676 = vpop.f32.mrf.mxu0
      %v3677 = vadd.f32 %v3366, %v3676
      %3678 = vmatmul.bf16.gmra.mxu0 %v3486
      %v3679 = vpop.f32.mrf.mxu0
      %v3680 = vadd.f32 %v3366, %v3679
      %v3681 = vpop.f32.mrf.mxu0
      %v3682 = vadd.f32 %v3366, %v3681
      %3683 = vmatmul.bf16.gmra.mxu0 %v3488
      %v3684 = vpop.f32.mrf.mxu0
      %v3685 = vadd.f32 %v3366, %v3684
      %v3686 = vpop.f32.mrf.mxu0
      %v3687 = vadd.f32 %v3366, %v3686
      %3688 = vmatmul.bf16.gmra.mxu0 %v3490
      %v3689 = vpop.f32.mrf.mxu0
      %v3690 = vadd.f32 %v3366, %v3689
      %v3691 = vpop.f32.mrf.mxu0
      %v3692 = vadd.f32 %v3366, %v3691
      %3693 = vmatmul.bf16.gmra.mxu0 %v3492
      %v3694 = vpop.f32.mrf.mxu0
      %v3695 = vadd.f32 %v3366, %v3694
      %v3696 = vpop.f32.mrf.mxu0
      %v3697 = vadd.f32 %v3366, %v3696
      %3698 = vmatmul.bf16.gmra.mxu0 %v3494
      %v3699 = vpop.f32.mrf.mxu0
      %v3700 = vadd.f32 %v3366, %v3699
      %v3701 = vpop.f32.mrf.mxu0
      %v3702 = vadd.f32 %v3366, %v3701
      %3703 = vdwg.mxu0
      %3704 = vmatpush.bf16.msra.mxu0 0
      %3705 = vmatpush.bf16.msra.mxu0 0
      %3706 = vmatpush.bf16.msra.mxu0 0
      %3707 = vmatpush.bf16.msra.mxu0 0
      %3708 = vmatpush.bf16.msra.mxu0 0
      %3709 = vmatpush.bf16.msra.mxu0 0
      %3710 = vmatpush.bf16.msra.mxu0 0
      %3711 = vmatpush.bf16.msra.mxu0 %v3556
      %3712 = vmatmul.bf16.gmra.mxu0 %v3568
      %v3713 = vpop.f32.mrf.mxu0
      %v3714 = vadd.f32 %v3625, %v3713
      %v3715 = vpop.f32.mrf.mxu0
      %v3716 = vadd.f32 %v3627, %v3715
      %3717 = vmatmul.bf16.gmra.mxu0 %v3571
      %v3718 = vpop.f32.mrf.mxu0
      %v3719 = vadd.f32 %v3630, %v3718
      %v3720 = vpop.f32.mrf.mxu0
      %v3721 = vadd.f32 %v3632, %v3720
      %3722 = vmatmul.bf16.gmra.mxu0 %v3574
      %v3723 = vpop.f32.mrf.mxu0
      %v3724 = vadd.f32 %v3635, %v3723
      %v3725 = vpop.f32.mrf.mxu0
      %v3726 = vadd.f32 %v3637, %v3725
      %3727 = vmatmul.bf16.gmra.mxu0 %v3577
      %v3728 = vpop.f32.mrf.mxu0
      %v3729 = vadd.f32 %v3640, %v3728
      %v3730 = vpop.f32.mrf.mxu0
      %v3731 = vadd.f32 %v3642, %v3730
      %3732 = vmatmul.bf16.gmra.mxu0 %v3580
      %v3733 = vpop.f32.mrf.mxu0
      %v3734 = vadd.f32 %v3645, %v3733
      %v3735 = vpop.f32.mrf.mxu0
      %v3736 = vadd.f32 %v3647, %v3735
      %3737 = vmatmul.bf16.gmra.mxu0 %v3583
      %v3738 = vpop.f32.mrf.mxu0
      %v3739 = vadd.f32 %v3650, %v3738
      %v3740 = vpop.f32.mrf.mxu0
      %v3741 = vadd.f32 %v3652, %v3740
      %3742 = vmatmul.bf16.gmra.mxu0 %v3586
      %v3743 = vpop.f32.mrf.mxu0
      %v3744 = vadd.f32 %v3655, %v3743
      %v3745 = vpop.f32.mrf.mxu0
      %v3746 = vadd.f32 %v3657, %v3745
      %3747 = vmatmul.bf16.gmra.mxu0 %v3589
      %v3748 = vpop.f32.mrf.mxu0
      %v3749 = vadd.f32 %v3660, %v3748
      %v3750 = vpop.f32.mrf.mxu0
      %v3751 = vadd.f32 %v3662, %v3750
      %3752 = vmatmul.bf16.gmra.mxu0 %v3592
      %v3753 = vpop.f32.mrf.mxu0
      %v3754 = vadd.f32 %v3665, %v3753
      %v3755 = vpop.f32.mrf.mxu0
      %v3756 = vadd.f32 %v3667, %v3755
      %3757 = vmatmul.bf16.gmra.mxu0 %v3595
      %v3758 = vpop.f32.mrf.mxu0
      %v3759 = vadd.f32 %v3670, %v3758
      %v3760 = vpop.f32.mrf.mxu0
      %v3761 = vadd.f32 %v3672, %v3760
      %3762 = vmatmul.bf16.gmra.mxu0 %v3598
      %v3763 = vpop.f32.mrf.mxu0
      %v3764 = vadd.f32 %v3675, %v3763
      %v3765 = vpop.f32.mrf.mxu0
      %v3766 = vadd.f32 %v3677, %v3765
      %3767 = vmatmul.bf16.gmra.mxu0 %v3601
      %v3768 = vpop.f32.mrf.mxu0
      %v3769 = vadd.f32 %v3680, %v3768
      %v3770 = vpop.f32.mrf.mxu0
      %v3771 = vadd.f32 %v3682, %v3770
      %3772 = vmatmul.bf16.gmra.mxu0 %v3604
      %v3773 = vpop.f32.mrf.mxu0
      %v3774 = vadd.f32 %v3685, %v3773
      %v3775 = vpop.f32.mrf.mxu0
      %v3776 = vadd.f32 %v3687, %v3775
      %3777 = vmatmul.bf16.gmra.mxu0 %v3607
      %v3778 = vpop.f32.mrf.mxu0
      %v3779 = vadd.f32 %v3690, %v3778
      %v3780 = vpop.f32.mrf.mxu0
      %v3781 = vadd.f32 %v3692, %v3780
      %3782 = vmatmul.bf16.gmra.mxu0 %v3610
      %v3783 = vpop.f32.mrf.mxu0
      %v3784 = vadd.f32 %v3695, %v3783
      %v3785 = vpop.f32.mrf.mxu0
      %v3786 = vadd.f32 %v3697, %v3785
      %3787 = vmatmul.bf16.gmra.mxu0 %v3613
      %v3788 = vpop.f32.mrf.mxu0
      %v3789 = vadd.f32 %v3700, %v3788
      %v3790 = vpop.f32.mrf.mxu0
      %v3791 = vadd.f32 %v3702, %v3790
      %3792 = vdwg.mxu0
      %v3793 = vmax.f32 %v3714, 0.0
      %v3794 = vmax.f32 %v3716, 0.0
      %v3795 = vmax.f32 %v3719, 0.0
      %v3796 = vmax.f32 %v3721, 0.0
      %v3797 = vmax.f32 %v3724, 0.0
      %v3798 = vmax.f32 %v3726, 0.0
      %v3799 = vmax.f32 %v3729, 0.0
      %v3800 = vmax.f32 %v3731, 0.0
      %v3801 = vmax.f32 %v3734, 0.0
      %v3802 = vmax.f32 %v3736, 0.0
      %v3803 = vmax.f32 %v3739, 0.0
      %v3804 = vmax.f32 %v3741, 0.0
      %v3805 = vmax.f32 %v3744, 0.0
      %v3806 = vmax.f32 %v3746, 0.0
      %v3807 = vmax.f32 %v3749, 0.0
      %v3808 = vmax.f32 %v3751, 0.0
      %v3809 = vmax.f32 %v3754, 0.0
      %v3810 = vmax.f32 %v3756, 0.0
      %v3811 = vmax.f32 %v3759, 0.0
      %v3812 = vmax.f32 %v3761, 0.0
      %v3813 = vmax.f32 %v3764, 0.0
      %v3814 = vmax.f32 %v3766, 0.0
      %v3815 = vmax.f32 %v3769, 0.0
      %v3816 = vmax.f32 %v3771, 0.0
      %v3817 = vmax.f32 %v3774, 0.0
      %v3818 = vmax.f32 %v3776, 0.0
      %v3819 = vmax.f32 %v3779, 0.0
      %v3820 = vmax.f32 %v3781, 0.0
      %v3821 = vmax.f32 %v3784, 0.0
      %v3822 = vmax.f32 %v3786, 0.0
      %v3823 = vmax.f32 %v3789, 0.0
      %v3824 = vmax.f32 %v3791, 0.0
      %3825 = vst.msk [vmem:[#allocation3] sm:$0xf] %vm258, 0
      %3826 = vst.msk [vmem:[#allocation3 + $0x4] sm:$0xf] %vm258, 0
      %vm3827 = vcmask 122880
      %3828 = vst.msk [vmem:[#allocation3 + $0x8] sm:$0x1] %vm3827, 0
      %s3829 = scalar_lea.vmem [#allocation3], 204
      %3830 = vst.msk [vmem:[%s3829] sm:$0xf] %vm258, 0
      %3831 = vst.msk [vmem:[%s3829 + $0x4] sm:$0xf] %vm258, 0
      %3832 = vst.msk [vmem:[%s3829 + $0x8] sm:$0x1] %vm3827, 0
      %vm3833 = vcmask 122880
      %vm3834 = vsmask.f32 256
      %vm3835 = vmand %vm3833, %vm3834
      %v3836 = vld [vmem:[#allocation3] sm:$0x1]
      %v3837 = vsel %vm3835, 0, %v3836
      %3838 = vst [vmem:[#allocation3] sm:$0x1] %v3837
      %v3839 = vld [vmem:[#allocation3 + $0xc] sm:$0x1]
      %v3840 = vsel %vm3835, 0, %v3839
      %3841 = vst [vmem:[#allocation3 + $0xc] sm:$0x1] %v3840
      %v3842 = vld [vmem:[#allocation3 + $0x18] sm:$0x1]
      %v3843 = vsel %vm3835, 0, %v3842
      %3844 = vst [vmem:[#allocation3 + $0x18] sm:$0x1] %v3843
      %v3845 = vld [vmem:[#allocation3 + $0x24] sm:$0x1]
      %v3846 = vsel %vm3835, 0, %v3845
      %3847 = vst [vmem:[#allocation3 + $0x24] sm:$0x1] %v3846
      %v3848 = vld [vmem:[#allocation3 + $0x30] sm:$0x1]
      %v3849 = vsel %vm3835, 0, %v3848
      %3850 = vst [vmem:[#allocation3 + $0x30] sm:$0x1] %v3849
      %v3851 = vld [vmem:[#allocation3 + $0x3c] sm:$0x1]
      %v3852 = vsel %vm3835, 0, %v3851
      %3853 = vst [vmem:[#allocation3 + $0x3c] sm:$0x1] %v3852
      %v3854 = vld [vmem:[#allocation3 + $0x48] sm:$0x1]
      %v3855 = vsel %vm3835, 0, %v3854
      %3856 = vst [vmem:[#allocation3 + $0x48] sm:$0x1] %v3855
      %v3857 = vld [vmem:[#allocation3 + $0x54] sm:$0x1]
      %v3858 = vsel %vm3835, 0, %v3857
      %3859 = vst [vmem:[#allocation3 + $0x54] sm:$0x1] %v3858
      %v3860 = vld [vmem:[#allocation3 + $0x60] sm:$0x1]
      %v3861 = vsel %vm3835, 0, %v3860
      %3862 = vst [vmem:[#allocation3 + $0x60] sm:$0x1] %v3861
      %v3863 = vld [vmem:[#allocation3 + $0x6c] sm:$0x1]
      %v3864 = vsel %vm3835, 0, %v3863
      %3865 = vst [vmem:[#allocation3 + $0x6c] sm:$0x1] %v3864
      %v3866 = vld [vmem:[#allocation3 + $0x78] sm:$0x1]
      %v3867 = vsel %vm3835, 0, %v3866
      %3868 = vst [vmem:[#allocation3 + $0x78] sm:$0x1] %v3867
      %v3869 = vld [vmem:[#allocation3 + $0x84] sm:$0x1]
      %v3870 = vsel %vm3835, 0, %v3869
      %3871 = vst [vmem:[#allocation3 + $0x84] sm:$0x1] %v3870
      %v3872 = vld [vmem:[#allocation3 + $0x90] sm:$0x1]
      %v3873 = vsel %vm3835, 0, %v3872
      %3874 = vst [vmem:[#allocation3 + $0x90] sm:$0x1] %v3873
      %v3875 = vld [vmem:[#allocation3 + $0x9c] sm:$0x1]
      %v3876 = vsel %vm3835, 0, %v3875
      %3877 = vst [vmem:[#allocation3 + $0x9c] sm:$0x1] %v3876
      %v3878 = vld [vmem:[#allocation3 + $0xa8] sm:$0x1]
      %v3879 = vsel %vm3835, 0, %v3878
      %3880 = vst [vmem:[#allocation3 + $0xa8] sm:$0x1] %v3879
      %v3881 = vld [vmem:[#allocation3 + $0xb4] sm:$0x1]
      %v3882 = vsel %vm3835, 0, %v3881
      %3883 = vst [vmem:[#allocation3 + $0xb4] sm:$0x1] %v3882
      %v3884 = vld [vmem:[#allocation3 + $0xc0] sm:$0x1]
      %v3885 = vsel %vm3835, 0, %v3884
      %3886 = vst [vmem:[#allocation3 + $0xc0] sm:$0x1] %v3885
      %v3887 = vld [vmem:[#allocation3 + $0xcc] sm:$0x1]
      %v3888 = vsel %vm3835, 0, %v3887
      %3889 = vst [vmem:[#allocation3 + $0xcc] sm:$0x1] %v3888
      %vm3890 = vsmask.f32 7938
      %vm3891 = vmand %vm3833, %vm3890
      %v3892 = vld [vmem:[#allocation3 + $0x8] sm:$0x1]
      %v3893 = vsel %vm3891, 0, %v3892
      %3894 = vst [vmem:[#allocation3 + $0x8] sm:$0x1] %v3893
      %v3895 = vld [vmem:[#allocation3 + $0x14] sm:$0x1]
      %v3896 = vsel %vm3891, 0, %v3895
      %3897 = vst [vmem:[#allocation3 + $0x14] sm:$0x1] %v3896
      %v3898 = vld [vmem:[#allocation3 + $0x20] sm:$0x1]
      %v3899 = vsel %vm3891, 0, %v3898
      %3900 = vst [vmem:[#allocation3 + $0x20] sm:$0x1] %v3899
      %v3901 = vld [vmem:[#allocation3 + $0x2c] sm:$0x1]
      %v3902 = vsel %vm3891, 0, %v3901
      %3903 = vst [vmem:[#allocation3 + $0x2c] sm:$0x1] %v3902
      %v3904 = vld [vmem:[#allocation3 + $0x38] sm:$0x1]
      %v3905 = vsel %vm3891, 0, %v3904
      %3906 = vst [vmem:[#allocation3 + $0x38] sm:$0x1] %v3905
      %v3907 = vld [vmem:[#allocation3 + $0x44] sm:$0x1]
      %v3908 = vsel %vm3891, 0, %v3907
      %3909 = vst [vmem:[#allocation3 + $0x44] sm:$0x1] %v3908
      %v3910 = vld [vmem:[#allocation3 + $0x50] sm:$0x1]
      %v3911 = vsel %vm3891, 0, %v3910
      %3912 = vst [vmem:[#allocation3 + $0x50] sm:$0x1] %v3911
      %v3913 = vld [vmem:[#allocation3 + $0x5c] sm:$0x1]
      %v3914 = vsel %vm3891, 0, %v3913
      %3915 = vst [vmem:[#allocation3 + $0x5c] sm:$0x1] %v3914
      %v3916 = vld [vmem:[#allocation3 + $0x68] sm:$0x1]
      %v3917 = vsel %vm3891, 0, %v3916
      %3918 = vst [vmem:[#allocation3 + $0x68] sm:$0x1] %v3917
      %v3919 = vld [vmem:[#allocation3 + $0x74] sm:$0x1]
      %v3920 = vsel %vm3891, 0, %v3919
      %3921 = vst [vmem:[#allocation3 + $0x74] sm:$0x1] %v3920
      %v3922 = vld [vmem:[#allocation3 + $0x80] sm:$0x1]
      %v3923 = vsel %vm3891, 0, %v3922
      %3924 = vst [vmem:[#allocation3 + $0x80] sm:$0x1] %v3923
      %v3925 = vld [vmem:[#allocation3 + $0x8c] sm:$0x1]
      %v3926 = vsel %vm3891, 0, %v3925
      %3927 = vst [vmem:[#allocation3 + $0x8c] sm:$0x1] %v3926
      %v3928 = vld [vmem:[#allocation3 + $0x98] sm:$0x1]
      %v3929 = vsel %vm3891, 0, %v3928
      %3930 = vst [vmem:[#allocation3 + $0x98] sm:$0x1] %v3929
      %v3931 = vld [vmem:[#allocation3 + $0xa4] sm:$0x1]
      %v3932 = vsel %vm3891, 0, %v3931
      %3933 = vst [vmem:[#allocation3 + $0xa4] sm:$0x1] %v3932
      %v3934 = vld [vmem:[#allocation3 + $0xb0] sm:$0x1]
      %v3935 = vsel %vm3891, 0, %v3934
      %3936 = vst [vmem:[#allocation3 + $0xb0] sm:$0x1] %v3935
      %v3937 = vld [vmem:[#allocation3 + $0xbc] sm:$0x1]
      %v3938 = vsel %vm3891, 0, %v3937
      %3939 = vst [vmem:[#allocation3 + $0xbc] sm:$0x1] %v3938
      %v3940 = vld [vmem:[#allocation3 + $0xc8] sm:$0x1]
      %v3941 = vsel %vm3891, 0, %v3940
      %3942 = vst [vmem:[#allocation3 + $0xc8] sm:$0x1] %v3941
      %v3943 = vld [vmem:[#allocation3 + $0xd4] sm:$0x1]
      %v3944 = vsel %vm3891, 0, %v3943
      %3945 = vst [vmem:[#allocation3 + $0xd4] sm:$0x1] %v3944
      %v3946 = vpack.c.bf16 %v3793, %v3793
      %v3947 = vpack.c.bf16 %v3794, %v3794
      %v3948 = vpack.c.bf16 %v3795, %v3795
      %v3949 = vpack.c.bf16 %v3796, %v3796
      %v3950 = vpack.c.bf16 %v3797, %v3797
      %v3951 = vpack.c.bf16 %v3798, %v3798
      %v3952 = vpack.c.bf16 %v3799, %v3799
      %v3953 = vpack.c.bf16 %v3800, %v3800
      %v3954 = vpack.c.bf16 %v3801, %v3801
      %v3955 = vpack.c.bf16 %v3802, %v3802
      %v3956 = vpack.c.bf16 %v3803, %v3803
      %v3957 = vpack.c.bf16 %v3804, %v3804
      %v3958 = vpack.c.bf16 %v3805, %v3805
      %v3959 = vpack.c.bf16 %v3806, %v3806
      %v3960 = vpack.c.bf16 %v3807, %v3807
      %v3961 = vpack.c.bf16 %v3808, %v3808
      %v3962 = vpack.c.bf16 %v3809, %v3809
      %v3963 = vpack.c.bf16 %v3810, %v3810
      %v3964 = vpack.c.bf16 %v3811, %v3811
      %v3965 = vpack.c.bf16 %v3812, %v3812
      %v3966 = vpack.c.bf16 %v3813, %v3813
      %v3967 = vpack.c.bf16 %v3814, %v3814
      %v3968 = vpack.c.bf16 %v3815, %v3815
      %v3969 = vpack.c.bf16 %v3816, %v3816
      %v3970 = vpack.c.bf16 %v3817, %v3817
      %v3971 = vpack.c.bf16 %v3818, %v3818
      %v3972 = vpack.c.bf16 %v3819, %v3819
      %v3973 = vpack.c.bf16 %v3820, %v3820
      %v3974 = vpack.c.bf16 %v3821, %v3821
      %v3975 = vpack.c.bf16 %v3822, %v3822
      %v3976 = vpack.c.bf16 %v3823, %v3823
      %v3977 = vpack.c.bf16 %v3824, %v3824
      %vm3978 = vsmask.f32 4368
      %vm3979 = vmor %vm3834, %vm3978
      %v3981 = vshrl.u32 %v3946, 16
      %v3983 = vrot.slane %v3981, 7
      %v3984 = vshll.u32 %v3946, 16
      %v3986 = vor.u32 %v3983, %v3984
      %v3987 = vrot.slane %v3983, 4
      %v3989 = vshrl.u32 %v3947, 16
      %v3991 = vrot.slane %v3989, 7
      %v3992 = vshll.u32 %v3947, 16
      %v3994 = vor.u32 %v3991, %v3992
      %v3995 = vsel %vm3979, %v3987, %v3994
      %v3996 = vrot.slane %v3991, 4
      %v3998 = vshrl.u32 %v3948, 16
      %v4000 = vrot.slane %v3998, 7
      %v4001 = vshll.u32 %v3948, 16
      %v4003 = vor.u32 %v4000, %v4001
      %v4004 = vrot.slane %v4000, 4
      %v4006 = vshrl.u32 %v3949, 16
      %v4008 = vrot.slane %v4006, 7
      %v4009 = vshll.u32 %v3949, 16
      %v4011 = vor.u32 %v4008, %v4009
      %v4012 = vsel %vm3979, %v4004, %v4011
      %v4013 = vrot.slane %v4008, 4
      %v4015 = vshrl.u32 %v3950, 16
      %v4017 = vrot.slane %v4015, 7
      %v4018 = vshll.u32 %v3950, 16
      %v4020 = vor.u32 %v4017, %v4018
      %v4021 = vrot.slane %v4017, 4
      %v4023 = vshrl.u32 %v3951, 16
      %v4025 = vrot.slane %v4023, 7
      %v4026 = vshll.u32 %v3951, 16
      %v4028 = vor.u32 %v4025, %v4026
      %v4029 = vsel %vm3979, %v4021, %v4028
      %v4030 = vrot.slane %v4025, 4
      %v4032 = vshrl.u32 %v3952, 16
      %v4034 = vrot.slane %v4032, 7
      %v4035 = vshll.u32 %v3952, 16
      %v4037 = vor.u32 %v4034, %v4035
      %v4038 = vrot.slane %v4034, 4
      %v4040 = vshrl.u32 %v3953, 16
      %v4042 = vrot.slane %v4040, 7
      %v4043 = vshll.u32 %v3953, 16
      %v4045 = vor.u32 %v4042, %v4043
      %v4046 = vsel %vm3979, %v4038, %v4045
      %v4047 = vrot.slane %v4042, 4
      %v4049 = vshrl.u32 %v3954, 16
      %v4051 = vrot.slane %v4049, 7
      %v4052 = vshll.u32 %v3954, 16
      %v4054 = vor.u32 %v4051, %v4052
      %v4055 = vrot.slane %v4051, 4
      %v4057 = vshrl.u32 %v3955, 16
      %v4059 = vrot.slane %v4057, 7
      %v4060 = vshll.u32 %v3955, 16
      %v4062 = vor.u32 %v4059, %v4060
      %v4063 = vsel %vm3979, %v4055, %v4062
      %v4064 = vrot.slane %v4059, 4
      %v4066 = vshrl.u32 %v3956, 16
      %v4068 = vrot.slane %v4066, 7
      %v4069 = vshll.u32 %v3956, 16
      %v4071 = vor.u32 %v4068, %v4069
      %v4072 = vrot.slane %v4068, 4
      %v4074 = vshrl.u32 %v3957, 16
      %v4076 = vrot.slane %v4074, 7
      %v4077 = vshll.u32 %v3957, 16
      %v4079 = vor.u32 %v4076, %v4077
      %v4080 = vsel %vm3979, %v4072, %v4079
      %v4081 = vrot.slane %v4076, 4
      %v4083 = vshrl.u32 %v3958, 16
      %v4085 = vrot.slane %v4083, 7
      %v4086 = vshll.u32 %v3958, 16
      %v4088 = vor.u32 %v4085, %v4086
      %v4089 = vrot.slane %v4085, 4
      %v4091 = vshrl.u32 %v3959, 16
      %v4093 = vrot.slane %v4091, 7
      %v4094 = vshll.u32 %v3959, 16
      %v4096 = vor.u32 %v4093, %v4094
      %v4097 = vsel %vm3979, %v4089, %v4096
      %v4098 = vrot.slane %v4093, 4
      %v4100 = vshrl.u32 %v3960, 16
      %v4102 = vrot.slane %v4100, 7
      %v4103 = vshll.u32 %v3960, 16
      %v4105 = vor.u32 %v4102, %v4103
      %v4106 = vrot.slane %v4102, 4
      %v4108 = vshrl.u32 %v3961, 16
      %v4110 = vrot.slane %v4108, 7
      %v4111 = vshll.u32 %v3961, 16
      %v4113 = vor.u32 %v4110, %v4111
      %v4114 = vsel %vm3979, %v4106, %v4113
      %v4115 = vrot.slane %v4110, 4
      %v4117 = vshrl.u32 %v3962, 16
      %v4119 = vrot.slane %v4117, 7
      %v4120 = vshll.u32 %v3962, 16
      %v4122 = vor.u32 %v4119, %v4120
      %v4123 = vrot.slane %v4119, 4
      %v4125 = vshrl.u32 %v3963, 16
      %v4127 = vrot.slane %v4125, 7
      %v4128 = vshll.u32 %v3963, 16
      %v4130 = vor.u32 %v4127, %v4128
      %v4131 = vsel %vm3979, %v4123, %v4130
      %v4132 = vrot.slane %v4127, 4
      %v4134 = vshrl.u32 %v3964, 16
      %v4136 = vrot.slane %v4134, 7
      %v4137 = vshll.u32 %v3964, 16
      %v4139 = vor.u32 %v4136, %v4137
      %v4140 = vrot.slane %v4136, 4
      %v4142 = vshrl.u32 %v3965, 16
      %v4144 = vrot.slane %v4142, 7
      %v4145 = vshll.u32 %v3965, 16
      %v4147 = vor.u32 %v4144, %v4145
      %v4148 = vsel %vm3979, %v4140, %v4147
      %v4149 = vrot.slane %v4144, 4
      %v4151 = vshrl.u32 %v3966, 16
      %v4153 = vrot.slane %v4151, 7
      %v4154 = vshll.u32 %v3966, 16
      %v4156 = vor.u32 %v4153, %v4154
      %v4157 = vrot.slane %v4153, 4
      %v4159 = vshrl.u32 %v3967, 16
      %v4161 = vrot.slane %v4159, 7
      %v4162 = vshll.u32 %v3967, 16
      %v4164 = vor.u32 %v4161, %v4162
      %v4165 = vsel %vm3979, %v4157, %v4164
      %v4166 = vrot.slane %v4161, 4
      %v4168 = vshrl.u32 %v3968, 16
      %v4170 = vrot.slane %v4168, 7
      %v4171 = vshll.u32 %v3968, 16
      %v4173 = vor.u32 %v4170, %v4171
      %v4174 = vrot.slane %v4170, 4
      %v4176 = vshrl.u32 %v3969, 16
      %v4178 = vrot.slane %v4176, 7
      %v4179 = vshll.u32 %v3969, 16
      %v4181 = vor.u32 %v4178, %v4179
      %v4182 = vsel %vm3979, %v4174, %v4181
      %v4183 = vrot.slane %v4178, 4
      %v4185 = vshrl.u32 %v3970, 16
      %v4187 = vrot.slane %v4185, 7
      %v4188 = vshll.u32 %v3970, 16
      %v4190 = vor.u32 %v4187, %v4188
      %v4191 = vrot.slane %v4187, 4
      %v4193 = vshrl.u32 %v3971, 16
      %v4195 = vrot.slane %v4193, 7
      %v4196 = vshll.u32 %v3971, 16
      %v4198 = vor.u32 %v4195, %v4196
      %v4199 = vsel %vm3979, %v4191, %v4198
      %v4200 = vrot.slane %v4195, 4
      %v4202 = vshrl.u32 %v3972, 16
      %v4204 = vrot.slane %v4202, 7
      %v4205 = vshll.u32 %v3972, 16
      %v4207 = vor.u32 %v4204, %v4205
      %v4208 = vrot.slane %v4204, 4
      %v4210 = vshrl.u32 %v3973, 16
      %v4212 = vrot.slane %v4210, 7
      %v4213 = vshll.u32 %v3973, 16
      %v4215 = vor.u32 %v4212, %v4213
      %v4216 = vsel %vm3979, %v4208, %v4215
      %v4217 = vrot.slane %v4212, 4
      %v4219 = vshrl.u32 %v3974, 16
      %v4221 = vrot.slane %v4219, 7
      %v4222 = vshll.u32 %v3974, 16
      %v4224 = vor.u32 %v4221, %v4222
      %v4225 = vrot.slane %v4221, 4
      %v4227 = vshrl.u32 %v3975, 16
      %v4229 = vrot.slane %v4227, 7
      %v4230 = vshll.u32 %v3975, 16
      %v4232 = vor.u32 %v4229, %v4230
      %v4233 = vsel %vm3979, %v4225, %v4232
      %v4234 = vrot.slane %v4229, 4
      %v4236 = vshrl.u32 %v3976, 16
      %v4238 = vrot.slane %v4236, 7
      %v4239 = vshll.u32 %v3976, 16
      %v4241 = vor.u32 %v4238, %v4239
      %v4242 = vrot.slane %v4238, 4
      %v4244 = vshrl.u32 %v3977, 16
      %v4246 = vrot.slane %v4244, 7
      %v4247 = vshll.u32 %v3977, 16
      %v4249 = vor.u32 %v4246, %v4247
      %v4250 = vsel %vm3979, %v4242, %v4249
      %v4251 = vrot.slane %v4246, 4
      %s4300 = scalar_lea.vmem [#allocation3], 12
      %vm4301 = vcmask 125952
      %vm4302 = vmand %vm4301, %vm3890
      %v4303 = vld [vmem:[%s4300] sm:$0xf]
      %v4304 = vsel %vm4302, %v3986, %v4303
      %4305 = vst [vmem:[%s4300] sm:$0xf] %v4304
      %4306 = vst.msk [vmem:[%s4300 + $0x4] sm:$0xf] %vm258, %v3995
      %v4307 = vld [vmem:[%s4300 + $0x8] sm:$0x1]
      %v4308 = vsel %vm3835, %v3996, %v4307
      %4309 = vst [vmem:[%s4300 + $0x8] sm:$0x1] %v4308
      %v4310 = vld [vmem:[%s4300 + $0xc] sm:$0xf]
      %v4311 = vsel %vm4302, %v4003, %v4310
      %4312 = vst [vmem:[%s4300 + $0xc] sm:$0xf] %v4311
      %4313 = vst.msk [vmem:[%s4300 + $0x10] sm:$0xf] %vm258, %v4012
      %v4314 = vld [vmem:[%s4300 + $0x14] sm:$0x1]
      %v4315 = vsel %vm3835, %v4013, %v4314
      %4316 = vst [vmem:[%s4300 + $0x14] sm:$0x1] %v4315
      %v4317 = vld [vmem:[%s4300 + $0x18] sm:$0xf]
      %v4318 = vsel %vm4302, %v4020, %v4317
      %4319 = vst [vmem:[%s4300 + $0x18] sm:$0xf] %v4318
      %4320 = vst.msk [vmem:[%s4300 + $0x1c] sm:$0xf] %vm258, %v4029
      %v4321 = vld [vmem:[%s4300 + $0x20] sm:$0x1]
      %v4322 = vsel %vm3835, %v4030, %v4321
      %4323 = vst [vmem:[%s4300 + $0x20] sm:$0x1] %v4322
      %v4324 = vld [vmem:[%s4300 + $0x24] sm:$0xf]
      %v4325 = vsel %vm4302, %v4037, %v4324
      %4326 = vst [vmem:[%s4300 + $0x24] sm:$0xf] %v4325
      %4327 = vst.msk [vmem:[%s4300 + $0x28] sm:$0xf] %vm258, %v4046
      %v4328 = vld [vmem:[%s4300 + $0x2c] sm:$0x1]
      %v4329 = vsel %vm3835, %v4047, %v4328
      %4330 = vst [vmem:[%s4300 + $0x2c] sm:$0x1] %v4329
      %v4331 = vld [vmem:[%s4300 + $0x30] sm:$0xf]
      %v4332 = vsel %vm4302, %v4054, %v4331
      %4333 = vst [vmem:[%s4300 + $0x30] sm:$0xf] %v4332
      %4334 = vst.msk [vmem:[%s4300 + $0x34] sm:$0xf] %vm258, %v4063
      %v4335 = vld [vmem:[%s4300 + $0x38] sm:$0x1]
      %v4336 = vsel %vm3835, %v4064, %v4335
      %4337 = vst [vmem:[%s4300 + $0x38] sm:$0x1] %v4336
      %v4338 = vld [vmem:[%s4300 + $0x3c] sm:$0xf]
      %v4339 = vsel %vm4302, %v4071, %v4338
      %4340 = vst [vmem:[%s4300 + $0x3c] sm:$0xf] %v4339
      %4341 = vst.msk [vmem:[%s4300 + $0x40] sm:$0xf] %vm258, %v4080
      %v4342 = vld [vmem:[%s4300 + $0x44] sm:$0x1]
      %v4343 = vsel %vm3835, %v4081, %v4342
      %4344 = vst [vmem:[%s4300 + $0x44] sm:$0x1] %v4343
      %v4345 = vld [vmem:[%s4300 + $0x48] sm:$0xf]
      %v4346 = vsel %vm4302, %v4088, %v4345
      %4347 = vst [vmem:[%s4300 + $0x48] sm:$0xf] %v4346
      %4348 = vst.msk [vmem:[%s4300 + $0x4c] sm:$0xf] %vm258, %v4097
      %v4349 = vld [vmem:[%s4300 + $0x50] sm:$0x1]
      %v4350 = vsel %vm3835, %v4098, %v4349
      %4351 = vst [vmem:[%s4300 + $0x50] sm:$0x1] %v4350
      %v4352 = vld [vmem:[%s4300 + $0x54] sm:$0xf]
      %v4353 = vsel %vm4302, %v4105, %v4352
      %4354 = vst [vmem:[%s4300 + $0x54] sm:$0xf] %v4353
      %4355 = vst.msk [vmem:[%s4300 + $0x58] sm:$0xf] %vm258, %v4114
      %v4356 = vld [vmem:[%s4300 + $0x5c] sm:$0x1]
      %v4357 = vsel %vm3835, %v4115, %v4356
      %4358 = vst [vmem:[%s4300 + $0x5c] sm:$0x1] %v4357
      %v4359 = vld [vmem:[%s4300 + $0x60] sm:$0xf]
      %v4360 = vsel %vm4302, %v4122, %v4359
      %4361 = vst [vmem:[%s4300 + $0x60] sm:$0xf] %v4360
      %4362 = vst.msk [vmem:[%s4300 + $0x64] sm:$0xf] %vm258, %v4131
      %v4363 = vld [vmem:[%s4300 + $0x68] sm:$0x1]
      %v4364 = vsel %vm3835, %v4132, %v4363
      %4365 = vst [vmem:[%s4300 + $0x68] sm:$0x1] %v4364
      %v4366 = vld [vmem:[%s4300 + $0x6c] sm:$0xf]
      %v4367 = vsel %vm4302, %v4139, %v4366
      %4368 = vst [vmem:[%s4300 + $0x6c] sm:$0xf] %v4367
      %4369 = vst.msk [vmem:[%s4300 + $0x70] sm:$0xf] %vm258, %v4148
      %v4370 = vld [vmem:[%s4300 + $0x74] sm:$0x1]
      %v4371 = vsel %vm3835, %v4149, %v4370
      %4372 = vst [vmem:[%s4300 + $0x74] sm:$0x1] %v4371
      %v4373 = vld [vmem:[%s4300 + $0x78] sm:$0xf]
      %v4374 = vsel %vm4302, %v4156, %v4373
      %4375 = vst [vmem:[%s4300 + $0x78] sm:$0xf] %v4374
      %4376 = vst.msk [vmem:[%s4300 + $0x7c] sm:$0xf] %vm258, %v4165
      %v4377 = vld [vmem:[%s4300 + $0x80] sm:$0x1]
      %v4378 = vsel %vm3835, %v4166, %v4377
      %4379 = vst [vmem:[%s4300 + $0x80] sm:$0x1] %v4378
      %v4380 = vld [vmem:[%s4300 + $0x84] sm:$0xf]
      %v4381 = vsel %vm4302, %v4173, %v4380
      %4382 = vst [vmem:[%s4300 + $0x84] sm:$0xf] %v4381
      %4383 = vst.msk [vmem:[%s4300 + $0x88] sm:$0xf] %vm258, %v4182
      %v4384 = vld [vmem:[%s4300 + $0x8c] sm:$0x1]
      %v4385 = vsel %vm3835, %v4183, %v4384
      %4386 = vst [vmem:[%s4300 + $0x8c] sm:$0x1] %v4385
      %v4387 = vld [vmem:[%s4300 + $0x90] sm:$0xf]
      %v4388 = vsel %vm4302, %v4190, %v4387
      %4389 = vst [vmem:[%s4300 + $0x90] sm:$0xf] %v4388
      %4390 = vst.msk [vmem:[%s4300 + $0x94] sm:$0xf] %vm258, %v4199
      %v4391 = vld [vmem:[%s4300 + $0x98] sm:$0x1]
      %v4392 = vsel %vm3835, %v4200, %v4391
      %4393 = vst [vmem:[%s4300 + $0x98] sm:$0x1] %v4392
      %v4394 = vld [vmem:[%s4300 + $0x9c] sm:$0xf]
      %v4395 = vsel %vm4302, %v4207, %v4394
      %4396 = vst [vmem:[%s4300 + $0x9c] sm:$0xf] %v4395
      %4397 = vst.msk [vmem:[%s4300 + $0xa0] sm:$0xf] %vm258, %v4216
      %v4398 = vld [vmem:[%s4300 + $0xa4] sm:$0x1]
      %v4399 = vsel %vm3835, %v4217, %v4398
      %4400 = vst [vmem:[%s4300 + $0xa4] sm:$0x1] %v4399
      %v4401 = vld [vmem:[%s4300 + $0xa8] sm:$0xf]
      %v4402 = vsel %vm4302, %v4224, %v4401
      %4403 = vst [vmem:[%s4300 + $0xa8] sm:$0xf] %v4402
      %4404 = vst.msk [vmem:[%s4300 + $0xac] sm:$0xf] %vm258, %v4233
      %v4405 = vld [vmem:[%s4300 + $0xb0] sm:$0x1]
      %v4406 = vsel %vm3835, %v4234, %v4405
      %4407 = vst [vmem:[%s4300 + $0xb0] sm:$0x1] %v4406
      %v4408 = vld [vmem:[%s4300 + $0xb4] sm:$0xf]
      %v4409 = vsel %vm4302, %v4241, %v4408
      %4410 = vst [vmem:[%s4300 + $0xb4] sm:$0xf] %v4409
      %4411 = vst.msk [vmem:[%s4300 + $0xb8] sm:$0xf] %vm258, %v4250
      %v4412 = vld [vmem:[%s4300 + $0xbc] sm:$0x1]
      %v4413 = vsel %vm3835, %v4251, %v4412
      %4414 = vst [vmem:[%s4300 + $0xbc] sm:$0x1] %v4413
      %v4415 = vld [vmem:[#allocation3] sm:$0xf]
      %v4416 = vld [vmem:[#allocation3 + $0x4] sm:$0xf]
      %v4417 = vld [vmem:[#allocation3 + $0xc] sm:$0xf]
      %v4418 = vld [vmem:[#allocation3 + $0x10] sm:$0xf]
      %v4419 = vld [vmem:[#allocation3 + $0x18] sm:$0xf]
      %v4420 = vld [vmem:[#allocation3 + $0x1c] sm:$0xf]
      %v4421 = vld [vmem:[#allocation3 + $0x24] sm:$0xf]
      %v4422 = vld [vmem:[#allocation3 + $0x28] sm:$0xf]
      %v4423 = vld [vmem:[#allocation3 + $0x30] sm:$0xf]
      %v4424 = vld [vmem:[#allocation3 + $0x34] sm:$0xf]
      %v4425 = vld [vmem:[#allocation3 + $0x3c] sm:$0xf]
      %v4426 = vld [vmem:[#allocation3 + $0x40] sm:$0xf]
      %v4427 = vld [vmem:[#allocation3 + $0x48] sm:$0xf]
      %v4428 = vld [vmem:[#allocation3 + $0x4c] sm:$0xf]
      %v4429 = vld [vmem:[#allocation3 + $0x54] sm:$0xf]
      %v4430 = vld [vmem:[#allocation3 + $0x58] sm:$0xf]
      %v4431 = vld [vmem:[#allocation3 + $0x60] sm:$0xf]
      %v4432 = vld [vmem:[#allocation3 + $0x64] sm:$0xf]
      %v4433 = vld [vmem:[#allocation3 + $0x6c] sm:$0xf]
      %v4434 = vld [vmem:[#allocation3 + $0x70] sm:$0xf]
      %v4435 = vld [vmem:[#allocation3 + $0x78] sm:$0xf]
      %v4436 = vld [vmem:[#allocation3 + $0x7c] sm:$0xf]
      %v4437 = vld [vmem:[#allocation3 + $0x84] sm:$0xf]
      %v4438 = vld [vmem:[#allocation3 + $0x88] sm:$0xf]
      %v4439 = vld [vmem:[#allocation3 + $0x90] sm:$0xf]
      %v4440 = vld [vmem:[#allocation3 + $0x94] sm:$0xf]
      %v4441 = vld [vmem:[#allocation3 + $0x9c] sm:$0xf]
      %v4442 = vld [vmem:[#allocation3 + $0xa0] sm:$0xf]
      %v4443 = vld [vmem:[#allocation3 + $0xa8] sm:$0xf]
      %v4444 = vld [vmem:[#allocation3 + $0xac] sm:$0xf]
      %v4445 = vld [vmem:[#allocation3 + $0xb4] sm:$0xf]
      %v4446 = vld [vmem:[#allocation3 + $0xb8] sm:$0xf]
      %4447 = vst.msk [vmem:[#allocation4] sm:$0xf] %vm258, %v4415
      %4448 = vst.msk [vmem:[#allocation4 + $0x8] sm:$0xf] %vm258, %v4416
      %4449 = vst.msk [vmem:[#allocation4 + $0x10] sm:$0xf] %vm258, %v4417
      %4450 = vst.msk [vmem:[#allocation4 + $0x18] sm:$0xf] %vm258, %v4418
      %4451 = vst.msk [vmem:[#allocation4 + $0x20] sm:$0xf] %vm258, %v4419
      %4452 = vst.msk [vmem:[#allocation4 + $0x28] sm:$0xf] %vm258, %v4420
      %4453 = vst.msk [vmem:[#allocation4 + $0x30] sm:$0xf] %vm258, %v4421
      %4454 = vst.msk [vmem:[#allocation4 + $0x38] sm:$0xf] %vm258, %v4422
      %4455 = vst.msk [vmem:[#allocation4 + $0x40] sm:$0xf] %vm258, %v4423
      %4456 = vst.msk [vmem:[#allocation4 + $0x48] sm:$0xf] %vm258, %v4424
      %4457 = vst.msk [vmem:[#allocation4 + $0x50] sm:$0xf] %vm258, %v4425
      %4458 = vst.msk [vmem:[#allocation4 + $0x58] sm:$0xf] %vm258, %v4426
      %4459 = vst.msk [vmem:[#allocation4 + $0x60] sm:$0xf] %vm258, %v4427
      %4460 = vst.msk [vmem:[#allocation4 + $0x68] sm:$0xf] %vm258, %v4428
      %4461 = vst.msk [vmem:[#allocation4 + $0x70] sm:$0xf] %vm258, %v4429
      %4462 = vst.msk [vmem:[#allocation4 + $0x78] sm:$0xf] %vm258, %v4430
      %4463 = vst.msk [vmem:[#allocation4 + $0x80] sm:$0xf] %vm258, %v4431
      %4464 = vst.msk [vmem:[#allocation4 + $0x88] sm:$0xf] %vm258, %v4432
      %4465 = vst.msk [vmem:[#allocation4 + $0x90] sm:$0xf] %vm258, %v4433
      %4466 = vst.msk [vmem:[#allocation4 + $0x98] sm:$0xf] %vm258, %v4434
      %4467 = vst.msk [vmem:[#allocation4 + $0xa0] sm:$0xf] %vm258, %v4435
      %4468 = vst.msk [vmem:[#allocation4 + $0xa8] sm:$0xf] %vm258, %v4436
      %4469 = vst.msk [vmem:[#allocation4 + $0xb0] sm:$0xf] %vm258, %v4437
      %4470 = vst.msk [vmem:[#allocation4 + $0xb8] sm:$0xf] %vm258, %v4438
      %4471 = vst.msk [vmem:[#allocation4 + $0xc0] sm:$0xf] %vm258, %v4439
      %4472 = vst.msk [vmem:[#allocation4 + $0xc8] sm:$0xf] %vm258, %v4440
      %4473 = vst.msk [vmem:[#allocation4 + $0xd0] sm:$0xf] %vm258, %v4441
      %4474 = vst.msk [vmem:[#allocation4 + $0xd8] sm:$0xf] %vm258, %v4442
      %4475 = vst.msk [vmem:[#allocation4 + $0xe0] sm:$0xf] %vm258, %v4443
      %4476 = vst.msk [vmem:[#allocation4 + $0xe8] sm:$0xf] %vm258, %v4444
      %4477 = vst.msk [vmem:[#allocation4 + $0xf0] sm:$0xf] %vm258, %v4445
      %4478 = vst.msk [vmem:[#allocation4 + $0xf8] sm:$0xf] %vm258, %v4446
      %v4479 = vld [vmem:[#allocation3] sm:$0xf]
      %v4480 = vld [vmem:[#allocation3 + $0x4] sm:$0xf]
      %v4481 = vld [vmem:[#allocation3 + $0x8] sm:$0x1]
      %v4482 = vld [vmem:[#allocation3 + $0xc] sm:$0xf]
      %v4483 = vld [vmem:[#allocation3 + $0x10] sm:$0xf]
      %v4484 = vld [vmem:[#allocation3 + $0x14] sm:$0x1]
      %v4485 = vld [vmem:[#allocation3 + $0x18] sm:$0xf]
      %v4486 = vld [vmem:[#allocation3 + $0x1c] sm:$0xf]
      %v4487 = vld [vmem:[#allocation3 + $0x20] sm:$0x1]
      %v4488 = vld [vmem:[#allocation3 + $0x24] sm:$0xf]
      %v4489 = vld [vmem:[#allocation3 + $0x28] sm:$0xf]
      %v4490 = vld [vmem:[#allocation3 + $0x2c] sm:$0x1]
      %v4491 = vld [vmem:[#allocation3 + $0x30] sm:$0xf]
      %v4492 = vld [vmem:[#allocation3 + $0x34] sm:$0xf]
      %v4493 = vld [vmem:[#allocation3 + $0x38] sm:$0x1]
      %v4494 = vld [vmem:[#allocation3 + $0x3c] sm:$0xf]
      %v4495 = vld [vmem:[#allocation3 + $0x40] sm:$0xf]
      %v4496 = vld [vmem:[#allocation3 + $0x44] sm:$0x1]
      %v4497 = vld [vmem:[#allocation3 + $0x48] sm:$0xf]
      %v4498 = vld [vmem:[#allocation3 + $0x4c] sm:$0xf]
      %v4499 = vld [vmem:[#allocation3 + $0x50] sm:$0x1]
      %v4500 = vld [vmem:[#allocation3 + $0x54] sm:$0xf]
      %v4501 = vld [vmem:[#allocation3 + $0x58] sm:$0xf]
      %v4502 = vld [vmem:[#allocation3 + $0x5c] sm:$0x1]
      %v4503 = vld [vmem:[#allocation3 + $0x60] sm:$0xf]
      %v4504 = vld [vmem:[#allocation3 + $0x64] sm:$0xf]
      %v4505 = vld [vmem:[#allocation3 + $0x68] sm:$0x1]
      %v4506 = vld [vmem:[#allocation3 + $0x6c] sm:$0xf]
      %v4507 = vld [vmem:[#allocation3 + $0x70] sm:$0xf]
      %v4508 = vld [vmem:[#allocation3 + $0x74] sm:$0x1]
      %v4509 = vld [vmem:[#allocation3 + $0x78] sm:$0xf]
      %v4510 = vld [vmem:[#allocation3 + $0x7c] sm:$0xf]
      %v4511 = vld [vmem:[#allocation3 + $0x80] sm:$0x1]
      %v4512 = vld [vmem:[#allocation3 + $0x84] sm:$0xf]
      %v4513 = vld [vmem:[#allocation3 + $0x88] sm:$0xf]
      %v4514 = vld [vmem:[#allocation3 + $0x8c] sm:$0x1]
      %v4515 = vld [vmem:[#allocation3 + $0x90] sm:$0xf]
      %v4516 = vld [vmem:[#allocation3 + $0x94] sm:$0xf]
      %v4517 = vld [vmem:[#allocation3 + $0x98] sm:$0x1]
      %v4518 = vld [vmem:[#allocation3 + $0x9c] sm:$0xf]
      %v4519 = vld [vmem:[#allocation3 + $0xa0] sm:$0xf]
      %v4520 = vld [vmem:[#allocation3 + $0xa4] sm:$0x1]
      %v4521 = vld [vmem:[#allocation3 + $0xa8] sm:$0xf]
      %v4522 = vld [vmem:[#allocation3 + $0xac] sm:$0xf]
      %v4523 = vld [vmem:[#allocation3 + $0xb0] sm:$0x1]
      %v4524 = vld [vmem:[#allocation3 + $0xb4] sm:$0xf]
      %v4525 = vld [vmem:[#allocation3 + $0xb8] sm:$0xf]
      %v4526 = vld [vmem:[#allocation3 + $0xbc] sm:$0x1]
      %v4528 = vshrl.u32 %v4479, 16
      %v4530 = vrot.slane %v4528, 4
      %v4531 = vshll.u32 %v4479, 16
      %v4533 = vrot.slane %v4531, 5
      %v4534 = vor.u32 %v4530, %v4533
      %v4535 = vrot.slane %v4534, 4
      %v4537 = vshll.u32 %v4480, 16
      %v4539 = vrot.slane %v4537, 5
      %v4540 = vsel %vm341, %v4535, %v4539
      %v4541 = vshrl.u32 %v4480, 16
      %v4543 = vrot.slane %v4541, 4
      %v4544 = vor.u32 %v4543, %v4539
      %v4545 = vrot.slane %v4544, 4
      %v4547 = vshll.u32 %v4481, 16
      %v4549 = vrot.slane %v4547, 5
      %v4550 = vsel %vm341, %v4545, %v4549
      %v4552 = vshrl.u32 %v4482, 16
      %v4554 = vrot.slane %v4552, 4
      %v4555 = vshll.u32 %v4482, 16
      %v4557 = vrot.slane %v4555, 5
      %v4558 = vor.u32 %v4554, %v4557
      %v4559 = vrot.slane %v4558, 4
      %v4561 = vshll.u32 %v4483, 16
      %v4563 = vrot.slane %v4561, 5
      %v4564 = vsel %vm341, %v4559, %v4563
      %v4565 = vshrl.u32 %v4483, 16
      %v4567 = vrot.slane %v4565, 4
      %v4568 = vor.u32 %v4567, %v4563
      %v4569 = vrot.slane %v4568, 4
      %v4571 = vshll.u32 %v4484, 16
      %v4573 = vrot.slane %v4571, 5
      %v4574 = vsel %vm341, %v4569, %v4573
      %v4576 = vshrl.u32 %v4485, 16
      %v4578 = vrot.slane %v4576, 4
      %v4579 = vshll.u32 %v4485, 16
      %v4581 = vrot.slane %v4579, 5
      %v4582 = vor.u32 %v4578, %v4581
      %v4583 = vrot.slane %v4582, 4
      %v4585 = vshll.u32 %v4486, 16
      %v4587 = vrot.slane %v4585, 5
      %v4588 = vsel %vm341, %v4583, %v4587
      %v4589 = vshrl.u32 %v4486, 16
      %v4591 = vrot.slane %v4589, 4
      %v4592 = vor.u32 %v4591, %v4587
      %v4593 = vrot.slane %v4592, 4
      %v4595 = vshll.u32 %v4487, 16
      %v4597 = vrot.slane %v4595, 5
      %v4598 = vsel %vm341, %v4593, %v4597
      %v4600 = vshrl.u32 %v4488, 16
      %v4602 = vrot.slane %v4600, 4
      %v4603 = vshll.u32 %v4488, 16
      %v4605 = vrot.slane %v4603, 5
      %v4606 = vor.u32 %v4602, %v4605
      %v4607 = vrot.slane %v4606, 4
      %v4609 = vshll.u32 %v4489, 16
      %v4611 = vrot.slane %v4609, 5
      %v4612 = vsel %vm341, %v4607, %v4611
      %v4613 = vshrl.u32 %v4489, 16
      %v4615 = vrot.slane %v4613, 4
      %v4616 = vor.u32 %v4615, %v4611
      %v4617 = vrot.slane %v4616, 4
      %v4619 = vshll.u32 %v4490, 16
      %v4621 = vrot.slane %v4619, 5
      %v4622 = vsel %vm341, %v4617, %v4621
      %v4624 = vshrl.u32 %v4491, 16
      %v4626 = vrot.slane %v4624, 4
      %v4627 = vshll.u32 %v4491, 16
      %v4629 = vrot.slane %v4627, 5
      %v4630 = vor.u32 %v4626, %v4629
      %v4631 = vrot.slane %v4630, 4
      %v4633 = vshll.u32 %v4492, 16
      %v4635 = vrot.slane %v4633, 5
      %v4636 = vsel %vm341, %v4631, %v4635
      %v4637 = vshrl.u32 %v4492, 16
      %v4639 = vrot.slane %v4637, 4
      %v4640 = vor.u32 %v4639, %v4635
      %v4641 = vrot.slane %v4640, 4
      %v4643 = vshll.u32 %v4493, 16
      %v4645 = vrot.slane %v4643, 5
      %v4646 = vsel %vm341, %v4641, %v4645
      %v4648 = vshrl.u32 %v4494, 16
      %v4650 = vrot.slane %v4648, 4
      %v4651 = vshll.u32 %v4494, 16
      %v4653 = vrot.slane %v4651, 5
      %v4654 = vor.u32 %v4650, %v4653
      %v4655 = vrot.slane %v4654, 4
      %v4657 = vshll.u32 %v4495, 16
      %v4659 = vrot.slane %v4657, 5
      %v4660 = vsel %vm341, %v4655, %v4659
      %v4661 = vshrl.u32 %v4495, 16
      %v4663 = vrot.slane %v4661, 4
      %v4664 = vor.u32 %v4663, %v4659
      %v4665 = vrot.slane %v4664, 4
      %v4667 = vshll.u32 %v4496, 16
      %v4669 = vrot.slane %v4667, 5
      %v4670 = vsel %vm341, %v4665, %v4669
      %v4672 = vshrl.u32 %v4497, 16
      %v4674 = vrot.slane %v4672, 4
      %v4675 = vshll.u32 %v4497, 16
      %v4677 = vrot.slane %v4675, 5
      %v4678 = vor.u32 %v4674, %v4677
      %v4679 = vrot.slane %v4678, 4
      %v4681 = vshll.u32 %v4498, 16
      %v4683 = vrot.slane %v4681, 5
      %v4684 = vsel %vm341, %v4679, %v4683
      %v4685 = vshrl.u32 %v4498, 16
      %v4687 = vrot.slane %v4685, 4
      %v4688 = vor.u32 %v4687, %v4683
      %v4689 = vrot.slane %v4688, 4
      %v4691 = vshll.u32 %v4499, 16
      %v4693 = vrot.slane %v4691, 5
      %v4694 = vsel %vm341, %v4689, %v4693
      %v4696 = vshrl.u32 %v4500, 16
      %v4698 = vrot.slane %v4696, 4
      %v4699 = vshll.u32 %v4500, 16
      %v4701 = vrot.slane %v4699, 5
      %v4702 = vor.u32 %v4698, %v4701
      %v4703 = vrot.slane %v4702, 4
      %v4705 = vshll.u32 %v4501, 16
      %v4707 = vrot.slane %v4705, 5
      %v4708 = vsel %vm341, %v4703, %v4707
      %v4709 = vshrl.u32 %v4501, 16
      %v4711 = vrot.slane %v4709, 4
      %v4712 = vor.u32 %v4711, %v4707
      %v4713 = vrot.slane %v4712, 4
      %v4715 = vshll.u32 %v4502, 16
      %v4717 = vrot.slane %v4715, 5
      %v4718 = vsel %vm341, %v4713, %v4717
      %v4720 = vshrl.u32 %v4503, 16
      %v4722 = vrot.slane %v4720, 4
      %v4723 = vshll.u32 %v4503, 16
      %v4725 = vrot.slane %v4723, 5
      %v4726 = vor.u32 %v4722, %v4725
      %v4727 = vrot.slane %v4726, 4
      %v4729 = vshll.u32 %v4504, 16
      %v4731 = vrot.slane %v4729, 5
      %v4732 = vsel %vm341, %v4727, %v4731
      %v4733 = vshrl.u32 %v4504, 16
      %v4735 = vrot.slane %v4733, 4
      %v4736 = vor.u32 %v4735, %v4731
      %v4737 = vrot.slane %v4736, 4
      %v4739 = vshll.u32 %v4505, 16
      %v4741 = vrot.slane %v4739, 5
      %v4742 = vsel %vm341, %v4737, %v4741
      %v4744 = vshrl.u32 %v4506, 16
      %v4746 = vrot.slane %v4744, 4
      %v4747 = vshll.u32 %v4506, 16
      %v4749 = vrot.slane %v4747, 5
      %v4750 = vor.u32 %v4746, %v4749
      %v4751 = vrot.slane %v4750, 4
      %v4753 = vshll.u32 %v4507, 16
      %v4755 = vrot.slane %v4753, 5
      %v4756 = vsel %vm341, %v4751, %v4755
      %v4757 = vshrl.u32 %v4507, 16
      %v4759 = vrot.slane %v4757, 4
      %v4760 = vor.u32 %v4759, %v4755
      %v4761 = vrot.slane %v4760, 4
      %v4763 = vshll.u32 %v4508, 16
      %v4765 = vrot.slane %v4763, 5
      %v4766 = vsel %vm341, %v4761, %v4765
      %v4768 = vshrl.u32 %v4509, 16
      %v4770 = vrot.slane %v4768, 4
      %v4771 = vshll.u32 %v4509, 16
      %v4773 = vrot.slane %v4771, 5
      %v4774 = vor.u32 %v4770, %v4773
      %v4775 = vrot.slane %v4774, 4
      %v4777 = vshll.u32 %v4510, 16
      %v4779 = vrot.slane %v4777, 5
      %v4780 = vsel %vm341, %v4775, %v4779
      %v4781 = vshrl.u32 %v4510, 16
      %v4783 = vrot.slane %v4781, 4
      %v4784 = vor.u32 %v4783, %v4779
      %v4785 = vrot.slane %v4784, 4
      %v4787 = vshll.u32 %v4511, 16
      %v4789 = vrot.slane %v4787, 5
      %v4790 = vsel %vm341, %v4785, %v4789
      %v4792 = vshrl.u32 %v4512, 16
      %v4794 = vrot.slane %v4792, 4
      %v4795 = vshll.u32 %v4512, 16
      %v4797 = vrot.slane %v4795, 5
      %v4798 = vor.u32 %v4794, %v4797
      %v4799 = vrot.slane %v4798, 4
      %v4801 = vshll.u32 %v4513, 16
      %v4803 = vrot.slane %v4801, 5
      %v4804 = vsel %vm341, %v4799, %v4803
      %v4805 = vshrl.u32 %v4513, 16
      %v4807 = vrot.slane %v4805, 4
      %v4808 = vor.u32 %v4807, %v4803
      %v4809 = vrot.slane %v4808, 4
      %v4811 = vshll.u32 %v4514, 16
      %v4813 = vrot.slane %v4811, 5
      %v4814 = vsel %vm341, %v4809, %v4813
      %v4816 = vshrl.u32 %v4515, 16
      %v4818 = vrot.slane %v4816, 4
      %v4819 = vshll.u32 %v4515, 16
      %v4821 = vrot.slane %v4819, 5
      %v4822 = vor.u32 %v4818, %v4821
      %v4823 = vrot.slane %v4822, 4
      %v4825 = vshll.u32 %v4516, 16
      %v4827 = vrot.slane %v4825, 5
      %v4828 = vsel %vm341, %v4823, %v4827
      %v4829 = vshrl.u32 %v4516, 16
      %v4831 = vrot.slane %v4829, 4
      %v4832 = vor.u32 %v4831, %v4827
      %v4833 = vrot.slane %v4832, 4
      %v4835 = vshll.u32 %v4517, 16
      %v4837 = vrot.slane %v4835, 5
      %v4838 = vsel %vm341, %v4833, %v4837
      %v4840 = vshrl.u32 %v4518, 16
      %v4842 = vrot.slane %v4840, 4
      %v4843 = vshll.u32 %v4518, 16
      %v4845 = vrot.slane %v4843, 5
      %v4846 = vor.u32 %v4842, %v4845
      %v4847 = vrot.slane %v4846, 4
      %v4849 = vshll.u32 %v4519, 16
      %v4851 = vrot.slane %v4849, 5
      %v4852 = vsel %vm341, %v4847, %v4851
      %v4853 = vshrl.u32 %v4519, 16
      %v4855 = vrot.slane %v4853, 4
      %v4856 = vor.u32 %v4855, %v4851
      %v4857 = vrot.slane %v4856, 4
      %v4859 = vshll.u32 %v4520, 16
      %v4861 = vrot.slane %v4859, 5
      %v4862 = vsel %vm341, %v4857, %v4861
      %v4864 = vshrl.u32 %v4521, 16
      %v4866 = vrot.slane %v4864, 4
      %v4867 = vshll.u32 %v4521, 16
      %v4869 = vrot.slane %v4867, 5
      %v4870 = vor.u32 %v4866, %v4869
      %v4871 = vrot.slane %v4870, 4
      %v4873 = vshll.u32 %v4522, 16
      %v4875 = vrot.slane %v4873, 5
      %v4876 = vsel %vm341, %v4871, %v4875
      %v4877 = vshrl.u32 %v4522, 16
      %v4879 = vrot.slane %v4877, 4
      %v4880 = vor.u32 %v4879, %v4875
      %v4881 = vrot.slane %v4880, 4
      %v4883 = vshll.u32 %v4523, 16
      %v4885 = vrot.slane %v4883, 5
      %v4886 = vsel %vm341, %v4881, %v4885
      %v4888 = vshrl.u32 %v4524, 16
      %v4890 = vrot.slane %v4888, 4
      %v4891 = vshll.u32 %v4524, 16
      %v4893 = vrot.slane %v4891, 5
      %v4894 = vor.u32 %v4890, %v4893
      %v4895 = vrot.slane %v4894, 4
      %v4897 = vshll.u32 %v4525, 16
      %v4899 = vrot.slane %v4897, 5
      %v4900 = vsel %vm341, %v4895, %v4899
      %v4901 = vshrl.u32 %v4525, 16
      %v4903 = vrot.slane %v4901, 4
      %v4904 = vor.u32 %v4903, %v4899
      %v4905 = vrot.slane %v4904, 4
      %v4907 = vshll.u32 %v4526, 16
      %v4909 = vrot.slane %v4907, 5
      %v4910 = vsel %vm341, %v4905, %v4909
      %4911 = vrot.lane.b32.xlu0 %v4540, 16
      %v4912 = vpop.permute.xlu0 %4911
      %4913 = vrot.lane.b32.xlu0 %v4550, 16
      %v4914 = vpop.permute.xlu0 %4913
      %4915 = vrot.lane.b32.xlu0 %v4564, 16
      %v4916 = vpop.permute.xlu0 %4915
      %4917 = vrot.lane.b32.xlu0 %v4574, 16
      %v4918 = vpop.permute.xlu0 %4917
      %4919 = vrot.lane.b32.xlu0 %v4588, 16
      %v4920 = vpop.permute.xlu0 %4919
      %4921 = vrot.lane.b32.xlu0 %v4598, 16
      %v4922 = vpop.permute.xlu0 %4921
      %4923 = vrot.lane.b32.xlu0 %v4612, 16
      %v4924 = vpop.permute.xlu0 %4923
      %4925 = vrot.lane.b32.xlu0 %v4622, 16
      %v4926 = vpop.permute.xlu0 %4925
      %4927 = vrot.lane.b32.xlu0 %v4636, 16
      %v4928 = vpop.permute.xlu0 %4927
      %4929 = vrot.lane.b32.xlu0 %v4646, 16
      %v4930 = vpop.permute.xlu0 %4929
      %4931 = vrot.lane.b32.xlu0 %v4660, 16
      %v4932 = vpop.permute.xlu0 %4931
      %4933 = vrot.lane.b32.xlu0 %v4670, 16
      %v4934 = vpop.permute.xlu0 %4933
      %4935 = vrot.lane.b32.xlu0 %v4684, 16
      %v4936 = vpop.permute.xlu0 %4935
      %4937 = vrot.lane.b32.xlu0 %v4694, 16
      %v4938 = vpop.permute.xlu0 %4937
      %4939 = vrot.lane.b32.xlu0 %v4708, 16
      %v4940 = vpop.permute.xlu0 %4939
      %4941 = vrot.lane.b32.xlu0 %v4718, 16
      %v4942 = vpop.permute.xlu0 %4941
      %4943 = vrot.lane.b32.xlu0 %v4732, 16
      %v4944 = vpop.permute.xlu0 %4943
      %4945 = vrot.lane.b32.xlu0 %v4742, 16
      %v4946 = vpop.permute.xlu0 %4945
      %4947 = vrot.lane.b32.xlu0 %v4756, 16
      %v4948 = vpop.permute.xlu0 %4947
      %4949 = vrot.lane.b32.xlu0 %v4766, 16
      %v4950 = vpop.permute.xlu0 %4949
      %4951 = vrot.lane.b32.xlu0 %v4780, 16
      %v4952 = vpop.permute.xlu0 %4951
      %4953 = vrot.lane.b32.xlu0 %v4790, 16
      %v4954 = vpop.permute.xlu0 %4953
      %4955 = vrot.lane.b32.xlu0 %v4804, 16
      %v4956 = vpop.permute.xlu0 %4955
      %4957 = vrot.lane.b32.xlu0 %v4814, 16
      %v4958 = vpop.permute.xlu0 %4957
      %4959 = vrot.lane.b32.xlu0 %v4828, 16
      %v4960 = vpop.permute.xlu0 %4959
      %4961 = vrot.lane.b32.xlu0 %v4838, 16
      %v4962 = vpop.permute.xlu0 %4961
      %4963 = vrot.lane.b32.xlu0 %v4852, 16
      %v4964 = vpop.permute.xlu0 %4963
      %4965 = vrot.lane.b32.xlu0 %v4862, 16
      %v4966 = vpop.permute.xlu0 %4965
      %4967 = vrot.lane.b32.xlu0 %v4876, 16
      %v4968 = vpop.permute.xlu0 %4967
      %4969 = vrot.lane.b32.xlu0 %v4886, 16
      %v4970 = vpop.permute.xlu0 %4969
      %4971 = vrot.lane.b32.xlu0 %v4900, 16
      %v4972 = vpop.permute.xlu0 %4971
      %4973 = vrot.lane.b32.xlu0 %v4910, 16
      %v4974 = vpop.permute.xlu0 %4973
      %5007 = vst.msk [vmem:[#allocation4] sm:$0xf] %vm822, %v4912
      %5008 = vst.msk [vmem:[#allocation4 + $0x8] sm:$0xf] %vm822, %v4914
      %5009 = vst.msk [vmem:[#allocation4 + $0x10] sm:$0xf] %vm822, %v4916
      %5010 = vst.msk [vmem:[#allocation4 + $0x18] sm:$0xf] %vm822, %v4918
      %5011 = vst.msk [vmem:[#allocation4 + $0x20] sm:$0xf] %vm822, %v4920
      %5012 = vst.msk [vmem:[#allocation4 + $0x28] sm:$0xf] %vm822, %v4922
      %5013 = vst.msk [vmem:[#allocation4 + $0x30] sm:$0xf] %vm822, %v4924
      %5014 = vst.msk [vmem:[#allocation4 + $0x38] sm:$0xf] %vm822, %v4926
      %5015 = vst.msk [vmem:[#allocation4 + $0x40] sm:$0xf] %vm822, %v4928
      %5016 = vst.msk [vmem:[#allocation4 + $0x48] sm:$0xf] %vm822, %v4930
      %5017 = vst.msk [vmem:[#allocation4 + $0x50] sm:$0xf] %vm822, %v4932
      %5018 = vst.msk [vmem:[#allocation4 + $0x58] sm:$0xf] %vm822, %v4934
      %5019 = vst.msk [vmem:[#allocation4 + $0x60] sm:$0xf] %vm822, %v4936
      %5020 = vst.msk [vmem:[#allocation4 + $0x68] sm:$0xf] %vm822, %v4938
      %5021 = vst.msk [vmem:[#allocation4 + $0x70] sm:$0xf] %vm822, %v4940
      %5022 = vst.msk [vmem:[#allocation4 + $0x78] sm:$0xf] %vm822, %v4942
      %5023 = vst.msk [vmem:[#allocation4 + $0x80] sm:$0xf] %vm822, %v4944
      %5024 = vst.msk [vmem:[#allocation4 + $0x88] sm:$0xf] %vm822, %v4946
      %5025 = vst.msk [vmem:[#allocation4 + $0x90] sm:$0xf] %vm822, %v4948
      %5026 = vst.msk [vmem:[#allocation4 + $0x98] sm:$0xf] %vm822, %v4950
      %5027 = vst.msk [vmem:[#allocation4 + $0xa0] sm:$0xf] %vm822, %v4952
      %5028 = vst.msk [vmem:[#allocation4 + $0xa8] sm:$0xf] %vm822, %v4954
      %5029 = vst.msk [vmem:[#allocation4 + $0xb0] sm:$0xf] %vm822, %v4956
      %5030 = vst.msk [vmem:[#allocation4 + $0xb8] sm:$0xf] %vm822, %v4958
      %5031 = vst.msk [vmem:[#allocation4 + $0xc0] sm:$0xf] %vm822, %v4960
      %5032 = vst.msk [vmem:[#allocation4 + $0xc8] sm:$0xf] %vm822, %v4962
      %5033 = vst.msk [vmem:[#allocation4 + $0xd0] sm:$0xf] %vm822, %v4964
      %5034 = vst.msk [vmem:[#allocation4 + $0xd8] sm:$0xf] %vm822, %v4966
      %5035 = vst.msk [vmem:[#allocation4 + $0xe0] sm:$0xf] %vm822, %v4968
      %5036 = vst.msk [vmem:[#allocation4 + $0xe8] sm:$0xf] %vm822, %v4970
      %5037 = vst.msk [vmem:[#allocation4 + $0xf0] sm:$0xf] %vm822, %v4972
      %5038 = vst.msk [vmem:[#allocation4 + $0xf8] sm:$0xf] %vm822, %v4974
      %v5039 = vld [vmem:[#allocation3] sm:$0xe]
      %v5040 = vld [vmem:[#allocation3 + $0x4] sm:$0xf]
      %v5041 = vld [vmem:[#allocation3 + $0x8] sm:$0x1]
      %v5042 = vld [vmem:[#allocation3 + $0xc] sm:$0xe]
      %v5043 = vld [vmem:[#allocation3 + $0x10] sm:$0xf]
      %v5044 = vld [vmem:[#allocation3 + $0x14] sm:$0x1]
      %v5045 = vld [vmem:[#allocation3 + $0x18] sm:$0xe]
      %v5046 = vld [vmem:[#allocation3 + $0x1c] sm:$0xf]
      %v5047 = vld [vmem:[#allocation3 + $0x20] sm:$0x1]
      %v5048 = vld [vmem:[#allocation3 + $0x24] sm:$0xe]
      %v5049 = vld [vmem:[#allocation3 + $0x28] sm:$0xf]
      %v5050 = vld [vmem:[#allocation3 + $0x2c] sm:$0x1]
      %v5051 = vld [vmem:[#allocation3 + $0x30] sm:$0xe]
      %v5052 = vld [vmem:[#allocation3 + $0x34] sm:$0xf]
      %v5053 = vld [vmem:[#allocation3 + $0x38] sm:$0x1]
      %v5054 = vld [vmem:[#allocation3 + $0x3c] sm:$0xe]
      %v5055 = vld [vmem:[#allocation3 + $0x40] sm:$0xf]
      %v5056 = vld [vmem:[#allocation3 + $0x44] sm:$0x1]
      %v5057 = vld [vmem:[#allocation3 + $0x48] sm:$0xe]
      %v5058 = vld [vmem:[#allocation3 + $0x4c] sm:$0xf]
      %v5059 = vld [vmem:[#allocation3 + $0x50] sm:$0x1]
      %v5060 = vld [vmem:[#allocation3 + $0x54] sm:$0xe]
      %v5061 = vld [vmem:[#allocation3 + $0x58] sm:$0xf]
      %v5062 = vld [vmem:[#allocation3 + $0x5c] sm:$0x1]
      %v5063 = vld [vmem:[#allocation3 + $0x60] sm:$0xe]
      %v5064 = vld [vmem:[#allocation3 + $0x64] sm:$0xf]
      %v5065 = vld [vmem:[#allocation3 + $0x68] sm:$0x1]
      %v5066 = vld [vmem:[#allocation3 + $0x6c] sm:$0xe]
      %v5067 = vld [vmem:[#allocation3 + $0x70] sm:$0xf]
      %v5068 = vld [vmem:[#allocation3 + $0x74] sm:$0x1]
      %v5069 = vld [vmem:[#allocation3 + $0x78] sm:$0xe]
      %v5070 = vld [vmem:[#allocation3 + $0x7c] sm:$0xf]
      %v5071 = vld [vmem:[#allocation3 + $0x80] sm:$0x1]
      %v5072 = vld [vmem:[#allocation3 + $0x84] sm:$0xe]
      %v5073 = vld [vmem:[#allocation3 + $0x88] sm:$0xf]
      %v5074 = vld [vmem:[#allocation3 + $0x8c] sm:$0x1]
      %v5075 = vld [vmem:[#allocation3 + $0x90] sm:$0xe]
      %v5076 = vld [vmem:[#allocation3 + $0x94] sm:$0xf]
      %v5077 = vld [vmem:[#allocation3 + $0x98] sm:$0x1]
      %v5078 = vld [vmem:[#allocation3 + $0x9c] sm:$0xe]
      %v5079 = vld [vmem:[#allocation3 + $0xa0] sm:$0xf]
      %v5080 = vld [vmem:[#allocation3 + $0xa4] sm:$0x1]
      %v5081 = vld [vmem:[#allocation3 + $0xa8] sm:$0xe]
      %v5082 = vld [vmem:[#allocation3 + $0xac] sm:$0xf]
      %v5083 = vld [vmem:[#allocation3 + $0xb0] sm:$0x1]
      %v5084 = vld [vmem:[#allocation3 + $0xb4] sm:$0xe]
      %v5085 = vld [vmem:[#allocation3 + $0xb8] sm:$0xf]
      %v5086 = vld [vmem:[#allocation3 + $0xbc] sm:$0x1]
      %v5135 = vrot.slane %v5039, 5
      %v5136 = vrot.slane %v5135, 4
      %v5137 = vrot.slane %v5040, 5
      %v5138 = vsel %vm953, %v5136, %v5137
      %v5139 = vrot.slane %v5137, 4
      %v5140 = vrot.slane %v5041, 5
      %v5141 = vsel %vm953, %v5139, %v5140
      %v5142 = vrot.slane %v5042, 5
      %v5143 = vrot.slane %v5142, 4
      %v5144 = vrot.slane %v5043, 5
      %v5145 = vsel %vm953, %v5143, %v5144
      %v5146 = vrot.slane %v5144, 4
      %v5147 = vrot.slane %v5044, 5
      %v5148 = vsel %vm953, %v5146, %v5147
      %v5149 = vrot.slane %v5045, 5
      %v5150 = vrot.slane %v5149, 4
      %v5151 = vrot.slane %v5046, 5
      %v5152 = vsel %vm953, %v5150, %v5151
      %v5153 = vrot.slane %v5151, 4
      %v5154 = vrot.slane %v5047, 5
      %v5155 = vsel %vm953, %v5153, %v5154
      %v5156 = vrot.slane %v5048, 5
      %v5157 = vrot.slane %v5156, 4
      %v5158 = vrot.slane %v5049, 5
      %v5159 = vsel %vm953, %v5157, %v5158
      %v5160 = vrot.slane %v5158, 4
      %v5161 = vrot.slane %v5050, 5
      %v5162 = vsel %vm953, %v5160, %v5161
      %v5163 = vrot.slane %v5051, 5
      %v5164 = vrot.slane %v5163, 4
      %v5165 = vrot.slane %v5052, 5
      %v5166 = vsel %vm953, %v5164, %v5165
      %v5167 = vrot.slane %v5165, 4
      %v5168 = vrot.slane %v5053, 5
      %v5169 = vsel %vm953, %v5167, %v5168
      %v5170 = vrot.slane %v5054, 5
      %v5171 = vrot.slane %v5170, 4
      %v5172 = vrot.slane %v5055, 5
      %v5173 = vsel %vm953, %v5171, %v5172
      %v5174 = vrot.slane %v5172, 4
      %v5175 = vrot.slane %v5056, 5
      %v5176 = vsel %vm953, %v5174, %v5175
      %v5177 = vrot.slane %v5057, 5
      %v5178 = vrot.slane %v5177, 4
      %v5179 = vrot.slane %v5058, 5
      %v5180 = vsel %vm953, %v5178, %v5179
      %v5181 = vrot.slane %v5179, 4
      %v5182 = vrot.slane %v5059, 5
      %v5183 = vsel %vm953, %v5181, %v5182
      %v5184 = vrot.slane %v5060, 5
      %v5185 = vrot.slane %v5184, 4
      %v5186 = vrot.slane %v5061, 5
      %v5187 = vsel %vm953, %v5185, %v5186
      %v5188 = vrot.slane %v5186, 4
      %v5189 = vrot.slane %v5062, 5
      %v5190 = vsel %vm953, %v5188, %v5189
      %v5191 = vrot.slane %v5063, 5
      %v5192 = vrot.slane %v5191, 4
      %v5193 = vrot.slane %v5064, 5
      %v5194 = vsel %vm953, %v5192, %v5193
      %v5195 = vrot.slane %v5193, 4
      %v5196 = vrot.slane %v5065, 5
      %v5197 = vsel %vm953, %v5195, %v5196
      %v5198 = vrot.slane %v5066, 5
      %v5199 = vrot.slane %v5198, 4
      %v5200 = vrot.slane %v5067, 5
      %v5201 = vsel %vm953, %v5199, %v5200
      %v5202 = vrot.slane %v5200, 4
      %v5203 = vrot.slane %v5068, 5
      %v5204 = vsel %vm953, %v5202, %v5203
      %v5205 = vrot.slane %v5069, 5
      %v5206 = vrot.slane %v5205, 4
      %v5207 = vrot.slane %v5070, 5
      %v5208 = vsel %vm953, %v5206, %v5207
      %v5209 = vrot.slane %v5207, 4
      %v5210 = vrot.slane %v5071, 5
      %v5211 = vsel %vm953, %v5209, %v5210
      %v5212 = vrot.slane %v5072, 5
      %v5213 = vrot.slane %v5212, 4
      %v5214 = vrot.slane %v5073, 5
      %v5215 = vsel %vm953, %v5213, %v5214
      %v5216 = vrot.slane %v5214, 4
      %v5217 = vrot.slane %v5074, 5
      %v5218 = vsel %vm953, %v5216, %v5217
      %v5219 = vrot.slane %v5075, 5
      %v5220 = vrot.slane %v5219, 4
      %v5221 = vrot.slane %v5076, 5
      %v5222 = vsel %vm953, %v5220, %v5221
      %v5223 = vrot.slane %v5221, 4
      %v5224 = vrot.slane %v5077, 5
      %v5225 = vsel %vm953, %v5223, %v5224
      %v5226 = vrot.slane %v5078, 5
      %v5227 = vrot.slane %v5226, 4
      %v5228 = vrot.slane %v5079, 5
      %v5229 = vsel %vm953, %v5227, %v5228
      %v5230 = vrot.slane %v5228, 4
      %v5231 = vrot.slane %v5080, 5
      %v5232 = vsel %vm953, %v5230, %v5231
      %v5233 = vrot.slane %v5081, 5
      %v5234 = vrot.slane %v5233, 4
      %v5235 = vrot.slane %v5082, 5
      %v5236 = vsel %vm953, %v5234, %v5235
      %v5237 = vrot.slane %v5235, 4
      %v5238 = vrot.slane %v5083, 5
      %v5239 = vsel %vm953, %v5237, %v5238
      %v5240 = vrot.slane %v5084, 5
      %v5241 = vrot.slane %v5240, 4
      %v5242 = vrot.slane %v5085, 5
      %v5243 = vsel %vm953, %v5241, %v5242
      %v5244 = vrot.slane %v5242, 4
      %v5245 = vrot.slane %v5086, 5
      %v5246 = vsel %vm953, %v5244, %v5245
      %5247 = vrot.lane.b32.xlu0 %v5138, 32
      %v5248 = vpop.permute.xlu0 %5247
      %5249 = vrot.lane.b32.xlu0 %v5141, 32
      %v5250 = vpop.permute.xlu0 %5249
      %5251 = vrot.lane.b32.xlu0 %v5145, 32
      %v5252 = vpop.permute.xlu0 %5251
      %5253 = vrot.lane.b32.xlu0 %v5148, 32
      %v5254 = vpop.permute.xlu0 %5253
      %5255 = vrot.lane.b32.xlu0 %v5152, 32
      %v5256 = vpop.permute.xlu0 %5255
      %5257 = vrot.lane.b32.xlu0 %v5155, 32
      %v5258 = vpop.permute.xlu0 %5257
      %5259 = vrot.lane.b32.xlu0 %v5159, 32
      %v5260 = vpop.permute.xlu0 %5259
      %5261 = vrot.lane.b32.xlu0 %v5162, 32
      %v5262 = vpop.permute.xlu0 %5261
      %5263 = vrot.lane.b32.xlu0 %v5166, 32
      %v5264 = vpop.permute.xlu0 %5263
      %5265 = vrot.lane.b32.xlu0 %v5169, 32
      %v5266 = vpop.permute.xlu0 %5265
      %5267 = vrot.lane.b32.xlu0 %v5173, 32
      %v5268 = vpop.permute.xlu0 %5267
      %5269 = vrot.lane.b32.xlu0 %v5176, 32
      %v5270 = vpop.permute.xlu0 %5269
      %5271 = vrot.lane.b32.xlu0 %v5180, 32
      %v5272 = vpop.permute.xlu0 %5271
      %5273 = vrot.lane.b32.xlu0 %v5183, 32
      %v5274 = vpop.permute.xlu0 %5273
      %5275 = vrot.lane.b32.xlu0 %v5187, 32
      %v5276 = vpop.permute.xlu0 %5275
      %5277 = vrot.lane.b32.xlu0 %v5190, 32
      %v5278 = vpop.permute.xlu0 %5277
      %5279 = vrot.lane.b32.xlu0 %v5194, 32
      %v5280 = vpop.permute.xlu0 %5279
      %5281 = vrot.lane.b32.xlu0 %v5197, 32
      %v5282 = vpop.permute.xlu0 %5281
      %5283 = vrot.lane.b32.xlu0 %v5201, 32
      %v5284 = vpop.permute.xlu0 %5283
      %5285 = vrot.lane.b32.xlu0 %v5204, 32
      %v5286 = vpop.permute.xlu0 %5285
      %5287 = vrot.lane.b32.xlu0 %v5208, 32
      %v5288 = vpop.permute.xlu0 %5287
      %5289 = vrot.lane.b32.xlu0 %v5211, 32
      %v5290 = vpop.permute.xlu0 %5289
      %5291 = vrot.lane.b32.xlu0 %v5215, 32
      %v5292 = vpop.permute.xlu0 %5291
      %5293 = vrot.lane.b32.xlu0 %v5218, 32
      %v5294 = vpop.permute.xlu0 %5293
      %5295 = vrot.lane.b32.xlu0 %v5222, 32
      %v5296 = vpop.permute.xlu0 %5295
      %5297 = vrot.lane.b32.xlu0 %v5225, 32
      %v5298 = vpop.permute.xlu0 %5297
      %5299 = vrot.lane.b32.xlu0 %v5229, 32
      %v5300 = vpop.permute.xlu0 %5299
      %5301 = vrot.lane.b32.xlu0 %v5232, 32
      %v5302 = vpop.permute.xlu0 %5301
      %5303 = vrot.lane.b32.xlu0 %v5236, 32
      %v5304 = vpop.permute.xlu0 %5303
      %5305 = vrot.lane.b32.xlu0 %v5239, 32
      %v5306 = vpop.permute.xlu0 %5305
      %5307 = vrot.lane.b32.xlu0 %v5243, 32
      %v5308 = vpop.permute.xlu0 %5307
      %5309 = vrot.lane.b32.xlu0 %v5246, 32
      %v5310 = vpop.permute.xlu0 %5309
      %5343 = vst.msk [vmem:[#allocation4] sm:$0xf] %vm1162, %v5248
      %5344 = vst.msk [vmem:[#allocation4 + $0x8] sm:$0xf] %vm1162, %v5250
      %5345 = vst.msk [vmem:[#allocation4 + $0x10] sm:$0xf] %vm1162, %v5252
      %5346 = vst.msk [vmem:[#allocation4 + $0x18] sm:$0xf] %vm1162, %v5254
      %5347 = vst.msk [vmem:[#allocation4 + $0x20] sm:$0xf] %vm1162, %v5256
      %5348 = vst.msk [vmem:[#allocation4 + $0x28] sm:$0xf] %vm1162, %v5258
      %5349 = vst.msk [vmem:[#allocation4 + $0x30] sm:$0xf] %vm1162, %v5260
      %5350 = vst.msk [vmem:[#allocation4 + $0x38] sm:$0xf] %vm1162, %v5262
      %5351 = vst.msk [vmem:[#allocation4 + $0x40] sm:$0xf] %vm1162, %v5264
      %5352 = vst.msk [vmem:[#allocation4 + $0x48] sm:$0xf] %vm1162, %v5266
      %5353 = vst.msk [vmem:[#allocation4 + $0x50] sm:$0xf] %vm1162, %v5268
      %5354 = vst.msk [vmem:[#allocation4 + $0x58] sm:$0xf] %vm1162, %v5270
      %5355 = vst.msk [vmem:[#allocation4 + $0x60] sm:$0xf] %vm1162, %v5272
      %5356 = vst.msk [vmem:[#allocation4 + $0x68] sm:$0xf] %vm1162, %v5274
      %5357 = vst.msk [vmem:[#allocation4 + $0x70] sm:$0xf] %vm1162, %v5276
      %5358 = vst.msk [vmem:[#allocation4 + $0x78] sm:$0xf] %vm1162, %v5278
      %5359 = vst.msk [vmem:[#allocation4 + $0x80] sm:$0xf] %vm1162, %v5280
      %5360 = vst.msk [vmem:[#allocation4 + $0x88] sm:$0xf] %vm1162, %v5282
      %5361 = vst.msk [vmem:[#allocation4 + $0x90] sm:$0xf] %vm1162, %v5284
      %5362 = vst.msk [vmem:[#allocation4 + $0x98] sm:$0xf] %vm1162, %v5286
      %5363 = vst.msk [vmem:[#allocation4 + $0xa0] sm:$0xf] %vm1162, %v5288
      %5364 = vst.msk [vmem:[#allocation4 + $0xa8] sm:$0xf] %vm1162, %v5290
      %5365 = vst.msk [vmem:[#allocation4 + $0xb0] sm:$0xf] %vm1162, %v5292
      %5366 = vst.msk [vmem:[#allocation4 + $0xb8] sm:$0xf] %vm1162, %v5294
      %5367 = vst.msk [vmem:[#allocation4 + $0xc0] sm:$0xf] %vm1162, %v5296
      %5368 = vst.msk [vmem:[#allocation4 + $0xc8] sm:$0xf] %vm1162, %v5298
      %5369 = vst.msk [vmem:[#allocation4 + $0xd0] sm:$0xf] %vm1162, %v5300
      %5370 = vst.msk [vmem:[#allocation4 + $0xd8] sm:$0xf] %vm1162, %v5302
      %5371 = vst.msk [vmem:[#allocation4 + $0xe0] sm:$0xf] %vm1162, %v5304
      %5372 = vst.msk [vmem:[#allocation4 + $0xe8] sm:$0xf] %vm1162, %v5306
      %5373 = vst.msk [vmem:[#allocation4 + $0xf0] sm:$0xf] %vm1162, %v5308
      %5374 = vst.msk [vmem:[#allocation4 + $0xf8] sm:$0xf] %vm1162, %v5310
      %v5375 = vld [vmem:[%s4300] sm:$0xf]
      %v5376 = vld [vmem:[%s4300 + $0x4] sm:$0xf]
      %v5377 = vld [vmem:[%s4300 + $0xc] sm:$0xf]
      %v5378 = vld [vmem:[%s4300 + $0x10] sm:$0xf]
      %v5379 = vld [vmem:[%s4300 + $0x18] sm:$0xf]
      %v5380 = vld [vmem:[%s4300 + $0x1c] sm:$0xf]
      %v5381 = vld [vmem:[%s4300 + $0x24] sm:$0xf]
      %v5382 = vld [vmem:[%s4300 + $0x28] sm:$0xf]
      %v5383 = vld [vmem:[%s4300 + $0x30] sm:$0xf]
      %v5384 = vld [vmem:[%s4300 + $0x34] sm:$0xf]
      %v5385 = vld [vmem:[%s4300 + $0x3c] sm:$0xf]
      %v5386 = vld [vmem:[%s4300 + $0x40] sm:$0xf]
      %v5387 = vld [vmem:[%s4300 + $0x48] sm:$0xf]
      %v5388 = vld [vmem:[%s4300 + $0x4c] sm:$0xf]
      %v5389 = vld [vmem:[%s4300 + $0x54] sm:$0xf]
      %v5390 = vld [vmem:[%s4300 + $0x58] sm:$0xf]
      %v5391 = vld [vmem:[%s4300 + $0x60] sm:$0xf]
      %v5392 = vld [vmem:[%s4300 + $0x64] sm:$0xf]
      %v5393 = vld [vmem:[%s4300 + $0x6c] sm:$0xf]
      %v5394 = vld [vmem:[%s4300 + $0x70] sm:$0xf]
      %v5395 = vld [vmem:[%s4300 + $0x78] sm:$0xf]
      %v5396 = vld [vmem:[%s4300 + $0x7c] sm:$0xf]
      %v5397 = vld [vmem:[%s4300 + $0x84] sm:$0xf]
      %v5398 = vld [vmem:[%s4300 + $0x88] sm:$0xf]
      %v5399 = vld [vmem:[%s4300 + $0x90] sm:$0xf]
      %v5400 = vld [vmem:[%s4300 + $0x94] sm:$0xf]
      %v5401 = vld [vmem:[%s4300 + $0x9c] sm:$0xf]
      %v5402 = vld [vmem:[%s4300 + $0xa0] sm:$0xf]
      %v5403 = vld [vmem:[%s4300 + $0xa8] sm:$0xf]
      %v5404 = vld [vmem:[%s4300 + $0xac] sm:$0xf]
      %v5405 = vld [vmem:[%s4300 + $0xb4] sm:$0xf]
      %v5406 = vld [vmem:[%s4300 + $0xb8] sm:$0xf]
      %5439 = vrot.lane.b32.xlu0 %v5375, 48
      %v5440 = vpop.permute.xlu0 %5439
      %5441 = vrot.lane.b32.xlu0 %v5376, 48
      %v5442 = vpop.permute.xlu0 %5441
      %5443 = vrot.lane.b32.xlu0 %v5377, 48
      %v5444 = vpop.permute.xlu0 %5443
      %5445 = vrot.lane.b32.xlu0 %v5378, 48
      %v5446 = vpop.permute.xlu0 %5445
      %5447 = vrot.lane.b32.xlu0 %v5379, 48
      %v5448 = vpop.permute.xlu0 %5447
      %5449 = vrot.lane.b32.xlu0 %v5380, 48
      %v5450 = vpop.permute.xlu0 %5449
      %5451 = vrot.lane.b32.xlu0 %v5381, 48
      %v5452 = vpop.permute.xlu0 %5451
      %5453 = vrot.lane.b32.xlu0 %v5382, 48
      %v5454 = vpop.permute.xlu0 %5453
      %5455 = vrot.lane.b32.xlu0 %v5383, 48
      %v5456 = vpop.permute.xlu0 %5455
      %5457 = vrot.lane.b32.xlu0 %v5384, 48
      %v5458 = vpop.permute.xlu0 %5457
      %5459 = vrot.lane.b32.xlu0 %v5385, 48
      %v5460 = vpop.permute.xlu0 %5459
      %5461 = vrot.lane.b32.xlu0 %v5386, 48
      %v5462 = vpop.permute.xlu0 %5461
      %5463 = vrot.lane.b32.xlu0 %v5387, 48
      %v5464 = vpop.permute.xlu0 %5463
      %5465 = vrot.lane.b32.xlu0 %v5388, 48
      %v5466 = vpop.permute.xlu0 %5465
      %5467 = vrot.lane.b32.xlu0 %v5389, 48
      %v5468 = vpop.permute.xlu0 %5467
      %5469 = vrot.lane.b32.xlu0 %v5390, 48
      %v5470 = vpop.permute.xlu0 %5469
      %5471 = vrot.lane.b32.xlu0 %v5391, 48
      %v5472 = vpop.permute.xlu0 %5471
      %5473 = vrot.lane.b32.xlu0 %v5392, 48
      %v5474 = vpop.permute.xlu0 %5473
      %5475 = vrot.lane.b32.xlu0 %v5393, 48
      %v5476 = vpop.permute.xlu0 %5475
      %5477 = vrot.lane.b32.xlu0 %v5394, 48
      %v5478 = vpop.permute.xlu0 %5477
      %5479 = vrot.lane.b32.xlu0 %v5395, 48
      %v5480 = vpop.permute.xlu0 %5479
      %5481 = vrot.lane.b32.xlu0 %v5396, 48
      %v5482 = vpop.permute.xlu0 %5481
      %5483 = vrot.lane.b32.xlu0 %v5397, 48
      %v5484 = vpop.permute.xlu0 %5483
      %5485 = vrot.lane.b32.xlu0 %v5398, 48
      %v5486 = vpop.permute.xlu0 %5485
      %5487 = vrot.lane.b32.xlu0 %v5399, 48
      %v5488 = vpop.permute.xlu0 %5487
      %5489 = vrot.lane.b32.xlu0 %v5400, 48
      %v5490 = vpop.permute.xlu0 %5489
      %5491 = vrot.lane.b32.xlu0 %v5401, 48
      %v5492 = vpop.permute.xlu0 %5491
      %5493 = vrot.lane.b32.xlu0 %v5402, 48
      %v5494 = vpop.permute.xlu0 %5493
      %5495 = vrot.lane.b32.xlu0 %v5403, 48
      %v5496 = vpop.permute.xlu0 %5495
      %5497 = vrot.lane.b32.xlu0 %v5404, 48
      %v5498 = vpop.permute.xlu0 %5497
      %5499 = vrot.lane.b32.xlu0 %v5405, 48
      %v5500 = vpop.permute.xlu0 %5499
      %5501 = vrot.lane.b32.xlu0 %v5406, 48
      %v5502 = vpop.permute.xlu0 %5501
      %5535 = vst.msk [vmem:[#allocation4] sm:$0xf] %vm1356, %v5440
      %5536 = vst.msk [vmem:[#allocation4 + $0x8] sm:$0xf] %vm1356, %v5442
      %5537 = vst.msk [vmem:[#allocation4 + $0x10] sm:$0xf] %vm1356, %v5444
      %5538 = vst.msk [vmem:[#allocation4 + $0x18] sm:$0xf] %vm1356, %v5446
      %5539 = vst.msk [vmem:[#allocation4 + $0x20] sm:$0xf] %vm1356, %v5448
      %5540 = vst.msk [vmem:[#allocation4 + $0x28] sm:$0xf] %vm1356, %v5450
      %5541 = vst.msk [vmem:[#allocation4 + $0x30] sm:$0xf] %vm1356, %v5452
      %5542 = vst.msk [vmem:[#allocation4 + $0x38] sm:$0xf] %vm1356, %v5454
      %5543 = vst.msk [vmem:[#allocation4 + $0x40] sm:$0xf] %vm1356, %v5456
      %5544 = vst.msk [vmem:[#allocation4 + $0x48] sm:$0xf] %vm1356, %v5458
      %5545 = vst.msk [vmem:[#allocation4 + $0x50] sm:$0xf] %vm1356, %v5460
      %5546 = vst.msk [vmem:[#allocation4 + $0x58] sm:$0xf] %vm1356, %v5462
      %5547 = vst.msk [vmem:[#allocation4 + $0x60] sm:$0xf] %vm1356, %v5464
      %5548 = vst.msk [vmem:[#allocation4 + $0x68] sm:$0xf] %vm1356, %v5466
      %5549 = vst.msk [vmem:[#allocation4 + $0x70] sm:$0xf] %vm1356, %v5468
      %5550 = vst.msk [vmem:[#allocation4 + $0x78] sm:$0xf] %vm1356, %v5470
      %5551 = vst.msk [vmem:[#allocation4 + $0x80] sm:$0xf] %vm1356, %v5472
      %5552 = vst.msk [vmem:[#allocation4 + $0x88] sm:$0xf] %vm1356, %v5474
      %5553 = vst.msk [vmem:[#allocation4 + $0x90] sm:$0xf] %vm1356, %v5476
      %5554 = vst.msk [vmem:[#allocation4 + $0x98] sm:$0xf] %vm1356, %v5478
      %5555 = vst.msk [vmem:[#allocation4 + $0xa0] sm:$0xf] %vm1356, %v5480
      %5556 = vst.msk [vmem:[#allocation4 + $0xa8] sm:$0xf] %vm1356, %v5482
      %5557 = vst.msk [vmem:[#allocation4 + $0xb0] sm:$0xf] %vm1356, %v5484
      %5558 = vst.msk [vmem:[#allocation4 + $0xb8] sm:$0xf] %vm1356, %v5486
      %5559 = vst.msk [vmem:[#allocation4 + $0xc0] sm:$0xf] %vm1356, %v5488
      %5560 = vst.msk [vmem:[#allocation4 + $0xc8] sm:$0xf] %vm1356, %v5490
      %5561 = vst.msk [vmem:[#allocation4 + $0xd0] sm:$0xf] %vm1356, %v5492
      %5562 = vst.msk [vmem:[#allocation4 + $0xd8] sm:$0xf] %vm1356, %v5494
      %5563 = vst.msk [vmem:[#allocation4 + $0xe0] sm:$0xf] %vm1356, %v5496
      %5564 = vst.msk [vmem:[#allocation4 + $0xe8] sm:$0xf] %vm1356, %v5498
      %5565 = vst.msk [vmem:[#allocation4 + $0xf0] sm:$0xf] %vm1356, %v5500
      %5566 = vst.msk [vmem:[#allocation4 + $0xf8] sm:$0xf] %vm1356, %v5502
      %v5567 = vld [vmem:[%s4300] sm:$0xf]
      %v5568 = vld [vmem:[%s4300 + $0x4] sm:$0xf]
      %v5569 = vld [vmem:[%s4300 + $0x8] sm:$0x1]
      %v5570 = vld [vmem:[%s4300 + $0xc] sm:$0xf]
      %v5571 = vld [vmem:[%s4300 + $0x10] sm:$0xf]
      %v5572 = vld [vmem:[%s4300 + $0x14] sm:$0x1]
      %v5573 = vld [vmem:[%s4300 + $0x18] sm:$0xf]
      %v5574 = vld [vmem:[%s4300 + $0x1c] sm:$0xf]
      %v5575 = vld [vmem:[%s4300 + $0x20] sm:$0x1]
      %v5576 = vld [vmem:[%s4300 + $0x24] sm:$0xf]
      %v5577 = vld [vmem:[%s4300 + $0x28] sm:$0xf]
      %v5578 = vld [vmem:[%s4300 + $0x2c] sm:$0x1]
      %v5579 = vld [vmem:[%s4300 + $0x30] sm:$0xf]
      %v5580 = vld [vmem:[%s4300 + $0x34] sm:$0xf]
      %v5581 = vld [vmem:[%s4300 + $0x38] sm:$0x1]
      %v5582 = vld [vmem:[%s4300 + $0x3c] sm:$0xf]
      %v5583 = vld [vmem:[%s4300 + $0x40] sm:$0xf]
      %v5584 = vld [vmem:[%s4300 + $0x44] sm:$0x1]
      %v5585 = vld [vmem:[%s4300 + $0x48] sm:$0xf]
      %v5586 = vld [vmem:[%s4300 + $0x4c] sm:$0xf]
      %v5587 = vld [vmem:[%s4300 + $0x50] sm:$0x1]
      %v5588 = vld [vmem:[%s4300 + $0x54] sm:$0xf]
      %v5589 = vld [vmem:[%s4300 + $0x58] sm:$0xf]
      %v5590 = vld [vmem:[%s4300 + $0x5c] sm:$0x1]
      %v5591 = vld [vmem:[%s4300 + $0x60] sm:$0xf]
      %v5592 = vld [vmem:[%s4300 + $0x64] sm:$0xf]
      %v5593 = vld [vmem:[%s4300 + $0x68] sm:$0x1]
      %v5594 = vld [vmem:[%s4300 + $0x6c] sm:$0xf]
      %v5595 = vld [vmem:[%s4300 + $0x70] sm:$0xf]
      %v5596 = vld [vmem:[%s4300 + $0x74] sm:$0x1]
      %v5597 = vld [vmem:[%s4300 + $0x78] sm:$0xf]
      %v5598 = vld [vmem:[%s4300 + $0x7c] sm:$0xf]
      %v5599 = vld [vmem:[%s4300 + $0x80] sm:$0x1]
      %v5600 = vld [vmem:[%s4300 + $0x84] sm:$0xf]
      %v5601 = vld [vmem:[%s4300 + $0x88] sm:$0xf]
      %v5602 = vld [vmem:[%s4300 + $0x8c] sm:$0x1]
      %v5603 = vld [vmem:[%s4300 + $0x90] sm:$0xf]
      %v5604 = vld [vmem:[%s4300 + $0x94] sm:$0xf]
      %v5605 = vld [vmem:[%s4300 + $0x98] sm:$0x1]
      %v5606 = vld [vmem:[%s4300 + $0x9c] sm:$0xf]
      %v5607 = vld [vmem:[%s4300 + $0xa0] sm:$0xf]
      %v5608 = vld [vmem:[%s4300 + $0xa4] sm:$0x1]
      %v5609 = vld [vmem:[%s4300 + $0xa8] sm:$0xf]
      %v5610 = vld [vmem:[%s4300 + $0xac] sm:$0xf]
      %v5611 = vld [vmem:[%s4300 + $0xb0] sm:$0x1]
      %v5612 = vld [vmem:[%s4300 + $0xb4] sm:$0xf]
      %v5613 = vld [vmem:[%s4300 + $0xb8] sm:$0xf]
      %v5614 = vld [vmem:[%s4300 + $0xbc] sm:$0x1]
      %v5616 = vshrl.u32 %v5567, 16
      %v5618 = vrot.slane %v5616, 4
      %v5619 = vshll.u32 %v5567, 16
      %v5621 = vrot.slane %v5619, 5
      %v5622 = vor.u32 %v5618, %v5621
      %v5623 = vrot.slane %v5622, 4
      %v5625 = vshll.u32 %v5568, 16
      %v5627 = vrot.slane %v5625, 5
      %v5628 = vsel %vm341, %v5623, %v5627
      %v5629 = vshrl.u32 %v5568, 16
      %v5631 = vrot.slane %v5629, 4
      %v5632 = vor.u32 %v5631, %v5627
      %v5633 = vrot.slane %v5632, 4
      %v5635 = vshll.u32 %v5569, 16
      %v5637 = vrot.slane %v5635, 5
      %v5638 = vsel %vm341, %v5633, %v5637
      %v5640 = vshrl.u32 %v5570, 16
      %v5642 = vrot.slane %v5640, 4
      %v5643 = vshll.u32 %v5570, 16
      %v5645 = vrot.slane %v5643, 5
      %v5646 = vor.u32 %v5642, %v5645
      %v5647 = vrot.slane %v5646, 4
      %v5649 = vshll.u32 %v5571, 16
      %v5651 = vrot.slane %v5649, 5
      %v5652 = vsel %vm341, %v5647, %v5651
      %v5653 = vshrl.u32 %v5571, 16
      %v5655 = vrot.slane %v5653, 4
      %v5656 = vor.u32 %v5655, %v5651
      %v5657 = vrot.slane %v5656, 4
      %v5659 = vshll.u32 %v5572, 16
      %v5661 = vrot.slane %v5659, 5
      %v5662 = vsel %vm341, %v5657, %v5661
      %v5664 = vshrl.u32 %v5573, 16
      %v5666 = vrot.slane %v5664, 4
      %v5667 = vshll.u32 %v5573, 16
      %v5669 = vrot.slane %v5667, 5
      %v5670 = vor.u32 %v5666, %v5669
      %v5671 = vrot.slane %v5670, 4
      %v5673 = vshll.u32 %v5574, 16
      %v5675 = vrot.slane %v5673, 5
      %v5676 = vsel %vm341, %v5671, %v5675
      %v5677 = vshrl.u32 %v5574, 16
      %v5679 = vrot.slane %v5677, 4
      %v5680 = vor.u32 %v5679, %v5675
      %v5681 = vrot.slane %v5680, 4
      %v5683 = vshll.u32 %v5575, 16
      %v5685 = vrot.slane %v5683, 5
      %v5686 = vsel %vm341, %v5681, %v5685
      %v5688 = vshrl.u32 %v5576, 16
      %v5690 = vrot.slane %v5688, 4
      %v5691 = vshll.u32 %v5576, 16
      %v5693 = vrot.slane %v5691, 5
      %v5694 = vor.u32 %v5690, %v5693
      %v5695 = vrot.slane %v5694, 4
      %v5697 = vshll.u32 %v5577, 16
      %v5699 = vrot.slane %v5697, 5
      %v5700 = vsel %vm341, %v5695, %v5699
      %v5701 = vshrl.u32 %v5577, 16
      %v5703 = vrot.slane %v5701, 4
      %v5704 = vor.u32 %v5703, %v5699
      %v5705 = vrot.slane %v5704, 4
      %v5707 = vshll.u32 %v5578, 16
      %v5709 = vrot.slane %v5707, 5
      %v5710 = vsel %vm341, %v5705, %v5709
      %v5712 = vshrl.u32 %v5579, 16
      %v5714 = vrot.slane %v5712, 4
      %v5715 = vshll.u32 %v5579, 16
      %v5717 = vrot.slane %v5715, 5
      %v5718 = vor.u32 %v5714, %v5717
      %v5719 = vrot.slane %v5718, 4
      %v5721 = vshll.u32 %v5580, 16
      %v5723 = vrot.slane %v5721, 5
      %v5724 = vsel %vm341, %v5719, %v5723
      %v5725 = vshrl.u32 %v5580, 16
      %v5727 = vrot.slane %v5725, 4
      %v5728 = vor.u32 %v5727, %v5723
      %v5729 = vrot.slane %v5728, 4
      %v5731 = vshll.u32 %v5581, 16
      %v5733 = vrot.slane %v5731, 5
      %v5734 = vsel %vm341, %v5729, %v5733
      %v5736 = vshrl.u32 %v5582, 16
      %v5738 = vrot.slane %v5736, 4
      %v5739 = vshll.u32 %v5582, 16
      %v5741 = vrot.slane %v5739, 5
      %v5742 = vor.u32 %v5738, %v5741
      %v5743 = vrot.slane %v5742, 4
      %v5745 = vshll.u32 %v5583, 16
      %v5747 = vrot.slane %v5745, 5
      %v5748 = vsel %vm341, %v5743, %v5747
      %v5749 = vshrl.u32 %v5583, 16
      %v5751 = vrot.slane %v5749, 4
      %v5752 = vor.u32 %v5751, %v5747
      %v5753 = vrot.slane %v5752, 4
      %v5755 = vshll.u32 %v5584, 16
      %v5757 = vrot.slane %v5755, 5
      %v5758 = vsel %vm341, %v5753, %v5757
      %v5760 = vshrl.u32 %v5585, 16
      %v5762 = vrot.slane %v5760, 4
      %v5763 = vshll.u32 %v5585, 16
      %v5765 = vrot.slane %v5763, 5
      %v5766 = vor.u32 %v5762, %v5765
      %v5767 = vrot.slane %v5766, 4
      %v5769 = vshll.u32 %v5586, 16
      %v5771 = vrot.slane %v5769, 5
      %v5772 = vsel %vm341, %v5767, %v5771
      %v5773 = vshrl.u32 %v5586, 16
      %v5775 = vrot.slane %v5773, 4
      %v5776 = vor.u32 %v5775, %v5771
      %v5777 = vrot.slane %v5776, 4
      %v5779 = vshll.u32 %v5587, 16
      %v5781 = vrot.slane %v5779, 5
      %v5782 = vsel %vm341, %v5777, %v5781
      %v5784 = vshrl.u32 %v5588, 16
      %v5786 = vrot.slane %v5784, 4
      %v5787 = vshll.u32 %v5588, 16
      %v5789 = vrot.slane %v5787, 5
      %v5790 = vor.u32 %v5786, %v5789
      %v5791 = vrot.slane %v5790, 4
      %v5793 = vshll.u32 %v5589, 16
      %v5795 = vrot.slane %v5793, 5
      %v5796 = vsel %vm341, %v5791, %v5795
      %v5797 = vshrl.u32 %v5589, 16
      %v5799 = vrot.slane %v5797, 4
      %v5800 = vor.u32 %v5799, %v5795
      %v5801 = vrot.slane %v5800, 4
      %v5803 = vshll.u32 %v5590, 16
      %v5805 = vrot.slane %v5803, 5
      %v5806 = vsel %vm341, %v5801, %v5805
      %v5808 = vshrl.u32 %v5591, 16
      %v5810 = vrot.slane %v5808, 4
      %v5811 = vshll.u32 %v5591, 16
      %v5813 = vrot.slane %v5811, 5
      %v5814 = vor.u32 %v5810, %v5813
      %v5815 = vrot.slane %v5814, 4
      %v5817 = vshll.u32 %v5592, 16
      %v5819 = vrot.slane %v5817, 5
      %v5820 = vsel %vm341, %v5815, %v5819
      %v5821 = vshrl.u32 %v5592, 16
      %v5823 = vrot.slane %v5821, 4
      %v5824 = vor.u32 %v5823, %v5819
      %v5825 = vrot.slane %v5824, 4
      %v5827 = vshll.u32 %v5593, 16
      %v5829 = vrot.slane %v5827, 5
      %v5830 = vsel %vm341, %v5825, %v5829
      %v5832 = vshrl.u32 %v5594, 16
      %v5834 = vrot.slane %v5832, 4
      %v5835 = vshll.u32 %v5594, 16
      %v5837 = vrot.slane %v5835, 5
      %v5838 = vor.u32 %v5834, %v5837
      %v5839 = vrot.slane %v5838, 4
      %v5841 = vshll.u32 %v5595, 16
      %v5843 = vrot.slane %v5841, 5
      %v5844 = vsel %vm341, %v5839, %v5843
      %v5845 = vshrl.u32 %v5595, 16
      %v5847 = vrot.slane %v5845, 4
      %v5848 = vor.u32 %v5847, %v5843
      %v5849 = vrot.slane %v5848, 4
      %v5851 = vshll.u32 %v5596, 16
      %v5853 = vrot.slane %v5851, 5
      %v5854 = vsel %vm341, %v5849, %v5853
      %v5856 = vshrl.u32 %v5597, 16
      %v5858 = vrot.slane %v5856, 4
      %v5859 = vshll.u32 %v5597, 16
      %v5861 = vrot.slane %v5859, 5
      %v5862 = vor.u32 %v5858, %v5861
      %v5863 = vrot.slane %v5862, 4
      %v5865 = vshll.u32 %v5598, 16
      %v5867 = vrot.slane %v5865, 5
      %v5868 = vsel %vm341, %v5863, %v5867
      %v5869 = vshrl.u32 %v5598, 16
      %v5871 = vrot.slane %v5869, 4
      %v5872 = vor.u32 %v5871, %v5867
      %v5873 = vrot.slane %v5872, 4
      %v5875 = vshll.u32 %v5599, 16
      %v5877 = vrot.slane %v5875, 5
      %v5878 = vsel %vm341, %v5873, %v5877
      %v5880 = vshrl.u32 %v5600, 16
      %v5882 = vrot.slane %v5880, 4
      %v5883 = vshll.u32 %v5600, 16
      %v5885 = vrot.slane %v5883, 5
      %v5886 = vor.u32 %v5882, %v5885
      %v5887 = vrot.slane %v5886, 4
      %v5889 = vshll.u32 %v5601, 16
      %v5891 = vrot.slane %v5889, 5
      %v5892 = vsel %vm341, %v5887, %v5891
      %v5893 = vshrl.u32 %v5601, 16
      %v5895 = vrot.slane %v5893, 4
      %v5896 = vor.u32 %v5895, %v5891
      %v5897 = vrot.slane %v5896, 4
      %v5899 = vshll.u32 %v5602, 16
      %v5901 = vrot.slane %v5899, 5
      %v5902 = vsel %vm341, %v5897, %v5901
      %v5904 = vshrl.u32 %v5603, 16
      %v5906 = vrot.slane %v5904, 4
      %v5907 = vshll.u32 %v5603, 16
      %v5909 = vrot.slane %v5907, 5
      %v5910 = vor.u32 %v5906, %v5909
      %v5911 = vrot.slane %v5910, 4
      %v5913 = vshll.u32 %v5604, 16
      %v5915 = vrot.slane %v5913, 5
      %v5916 = vsel %vm341, %v5911, %v5915
      %v5917 = vshrl.u32 %v5604, 16
      %v5919 = vrot.slane %v5917, 4
      %v5920 = vor.u32 %v5919, %v5915
      %v5921 = vrot.slane %v5920, 4
      %v5923 = vshll.u32 %v5605, 16
      %v5925 = vrot.slane %v5923, 5
      %v5926 = vsel %vm341, %v5921, %v5925
      %v5928 = vshrl.u32 %v5606, 16
      %v5930 = vrot.slane %v5928, 4
      %v5931 = vshll.u32 %v5606, 16
      %v5933 = vrot.slane %v5931, 5
      %v5934 = vor.u32 %v5930, %v5933
      %v5935 = vrot.slane %v5934, 4
      %v5937 = vshll.u32 %v5607, 16
      %v5939 = vrot.slane %v5937, 5
      %v5940 = vsel %vm341, %v5935, %v5939
      %v5941 = vshrl.u32 %v5607, 16
      %v5943 = vrot.slane %v5941, 4
      %v5944 = vor.u32 %v5943, %v5939
      %v5945 = vrot.slane %v5944, 4
      %v5947 = vshll.u32 %v5608, 16
      %v5949 = vrot.slane %v5947, 5
      %v5950 = vsel %vm341, %v5945, %v5949
      %v5952 = vshrl.u32 %v5609, 16
      %v5954 = vrot.slane %v5952, 4
      %v5955 = vshll.u32 %v5609, 16
      %v5957 = vrot.slane %v5955, 5
      %v5958 = vor.u32 %v5954, %v5957
      %v5959 = vrot.slane %v5958, 4
      %v5961 = vshll.u32 %v5610, 16
      %v5963 = vrot.slane %v5961, 5
      %v5964 = vsel %vm341, %v5959, %v5963
      %v5965 = vshrl.u32 %v5610, 16
      %v5967 = vrot.slane %v5965, 4
      %v5968 = vor.u32 %v5967, %v5963
      %v5969 = vrot.slane %v5968, 4
      %v5971 = vshll.u32 %v5611, 16
      %v5973 = vrot.slane %v5971, 5
      %v5974 = vsel %vm341, %v5969, %v5973
      %v5976 = vshrl.u32 %v5612, 16
      %v5978 = vrot.slane %v5976, 4
      %v5979 = vshll.u32 %v5612, 16
      %v5981 = vrot.slane %v5979, 5
      %v5982 = vor.u32 %v5978, %v5981
      %v5983 = vrot.slane %v5982, 4
      %v5985 = vshll.u32 %v5613, 16
      %v5987 = vrot.slane %v5985, 5
      %v5988 = vsel %vm341, %v5983, %v5987
      %v5989 = vshrl.u32 %v5613, 16
      %v5991 = vrot.slane %v5989, 4
      %v5992 = vor.u32 %v5991, %v5987
      %v5993 = vrot.slane %v5992, 4
      %v5995 = vshll.u32 %v5614, 16
      %v5997 = vrot.slane %v5995, 5
      %v5998 = vsel %vm341, %v5993, %v5997
      %5999 = vrot.lane.b32.xlu0 %v5628, 64
      %v6000 = vpop.permute.xlu0 %5999
      %6001 = vrot.lane.b32.xlu0 %v5638, 64
      %v6002 = vpop.permute.xlu0 %6001
      %6003 = vrot.lane.b32.xlu0 %v5652, 64
      %v6004 = vpop.permute.xlu0 %6003
      %6005 = vrot.lane.b32.xlu0 %v5662, 64
      %v6006 = vpop.permute.xlu0 %6005
      %6007 = vrot.lane.b32.xlu0 %v5676, 64
      %v6008 = vpop.permute.xlu0 %6007
      %6009 = vrot.lane.b32.xlu0 %v5686, 64
      %v6010 = vpop.permute.xlu0 %6009
      %6011 = vrot.lane.b32.xlu0 %v5700, 64
      %v6012 = vpop.permute.xlu0 %6011
      %6013 = vrot.lane.b32.xlu0 %v5710, 64
      %v6014 = vpop.permute.xlu0 %6013
      %6015 = vrot.lane.b32.xlu0 %v5724, 64
      %v6016 = vpop.permute.xlu0 %6015
      %6017 = vrot.lane.b32.xlu0 %v5734, 64
      %v6018 = vpop.permute.xlu0 %6017
      %6019 = vrot.lane.b32.xlu0 %v5748, 64
      %v6020 = vpop.permute.xlu0 %6019
      %6021 = vrot.lane.b32.xlu0 %v5758, 64
      %v6022 = vpop.permute.xlu0 %6021
      %6023 = vrot.lane.b32.xlu0 %v5772, 64
      %v6024 = vpop.permute.xlu0 %6023
      %6025 = vrot.lane.b32.xlu0 %v5782, 64
      %v6026 = vpop.permute.xlu0 %6025
      %6027 = vrot.lane.b32.xlu0 %v5796, 64
      %v6028 = vpop.permute.xlu0 %6027
      %6029 = vrot.lane.b32.xlu0 %v5806, 64
      %v6030 = vpop.permute.xlu0 %6029
      %6031 = vrot.lane.b32.xlu0 %v5820, 64
      %v6032 = vpop.permute.xlu0 %6031
      %6033 = vrot.lane.b32.xlu0 %v5830, 64
      %v6034 = vpop.permute.xlu0 %6033
      %6035 = vrot.lane.b32.xlu0 %v5844, 64
      %v6036 = vpop.permute.xlu0 %6035
      %6037 = vrot.lane.b32.xlu0 %v5854, 64
      %v6038 = vpop.permute.xlu0 %6037
      %6039 = vrot.lane.b32.xlu0 %v5868, 64
      %v6040 = vpop.permute.xlu0 %6039
      %6041 = vrot.lane.b32.xlu0 %v5878, 64
      %v6042 = vpop.permute.xlu0 %6041
      %6043 = vrot.lane.b32.xlu0 %v5892, 64
      %v6044 = vpop.permute.xlu0 %6043
      %6045 = vrot.lane.b32.xlu0 %v5902, 64
      %v6046 = vpop.permute.xlu0 %6045
      %6047 = vrot.lane.b32.xlu0 %v5916, 64
      %v6048 = vpop.permute.xlu0 %6047
      %6049 = vrot.lane.b32.xlu0 %v5926, 64
      %v6050 = vpop.permute.xlu0 %6049
      %6051 = vrot.lane.b32.xlu0 %v5940, 64
      %v6052 = vpop.permute.xlu0 %6051
      %6053 = vrot.lane.b32.xlu0 %v5950, 64
      %v6054 = vpop.permute.xlu0 %6053
      %6055 = vrot.lane.b32.xlu0 %v5964, 64
      %v6056 = vpop.permute.xlu0 %6055
      %6057 = vrot.lane.b32.xlu0 %v5974, 64
      %v6058 = vpop.permute.xlu0 %6057
      %6059 = vrot.lane.b32.xlu0 %v5988, 64
      %v6060 = vpop.permute.xlu0 %6059
      %6061 = vrot.lane.b32.xlu0 %v5998, 64
      %v6062 = vpop.permute.xlu0 %6061
      %6095 = vst.msk [vmem:[#allocation4] sm:$0xf] %vm1917, %v6000
      %6096 = vst.msk [vmem:[#allocation4 + $0x8] sm:$0xf] %vm1917, %v6002
      %6097 = vst.msk [vmem:[#allocation4 + $0x10] sm:$0xf] %vm1917, %v6004
      %6098 = vst.msk [vmem:[#allocation4 + $0x18] sm:$0xf] %vm1917, %v6006
      %6099 = vst.msk [vmem:[#allocation4 + $0x20] sm:$0xf] %vm1917, %v6008
      %6100 = vst.msk [vmem:[#allocation4 + $0x28] sm:$0xf] %vm1917, %v6010
      %6101 = vst.msk [vmem:[#allocation4 + $0x30] sm:$0xf] %vm1917, %v6012
      %6102 = vst.msk [vmem:[#allocation4 + $0x38] sm:$0xf] %vm1917, %v6014
      %6103 = vst.msk [vmem:[#allocation4 + $0x40] sm:$0xf] %vm1917, %v6016
      %6104 = vst.msk [vmem:[#allocation4 + $0x48] sm:$0xf] %vm1917, %v6018
      %6105 = vst.msk [vmem:[#allocation4 + $0x50] sm:$0xf] %vm1917, %v6020
      %6106 = vst.msk [vmem:[#allocation4 + $0x58] sm:$0xf] %vm1917, %v6022
      %6107 = vst.msk [vmem:[#allocation4 + $0x60] sm:$0xf] %vm1917, %v6024
      %6108 = vst.msk [vmem:[#allocation4 + $0x68] sm:$0xf] %vm1917, %v6026
      %6109 = vst.msk [vmem:[#allocation4 + $0x70] sm:$0xf] %vm1917, %v6028
      %6110 = vst.msk [vmem:[#allocation4 + $0x78] sm:$0xf] %vm1917, %v6030
      %6111 = vst.msk [vmem:[#allocation4 + $0x80] sm:$0xf] %vm1917, %v6032
      %6112 = vst.msk [vmem:[#allocation4 + $0x88] sm:$0xf] %vm1917, %v6034
      %6113 = vst.msk [vmem:[#allocation4 + $0x90] sm:$0xf] %vm1917, %v6036
      %6114 = vst.msk [vmem:[#allocation4 + $0x98] sm:$0xf] %vm1917, %v6038
      %6115 = vst.msk [vmem:[#allocation4 + $0xa0] sm:$0xf] %vm1917, %v6040
      %6116 = vst.msk [vmem:[#allocation4 + $0xa8] sm:$0xf] %vm1917, %v6042
      %6117 = vst.msk [vmem:[#allocation4 + $0xb0] sm:$0xf] %vm1917, %v6044
      %6118 = vst.msk [vmem:[#allocation4 + $0xb8] sm:$0xf] %vm1917, %v6046
      %6119 = vst.msk [vmem:[#allocation4 + $0xc0] sm:$0xf] %vm1917, %v6048
      %6120 = vst.msk [vmem:[#allocation4 + $0xc8] sm:$0xf] %vm1917, %v6050
      %6121 = vst.msk [vmem:[#allocation4 + $0xd0] sm:$0xf] %vm1917, %v6052
      %6122 = vst.msk [vmem:[#allocation4 + $0xd8] sm:$0xf] %vm1917, %v6054
      %6123 = vst.msk [vmem:[#allocation4 + $0xe0] sm:$0xf] %vm1917, %v6056
      %6124 = vst.msk [vmem:[#allocation4 + $0xe8] sm:$0xf] %vm1917, %v6058
      %6125 = vst.msk [vmem:[#allocation4 + $0xf0] sm:$0xf] %vm1917, %v6060
      %6126 = vst.msk [vmem:[#allocation4 + $0xf8] sm:$0xf] %vm1917, %v6062
      %v6127 = vld [vmem:[%s4300] sm:$0xe]
      %v6128 = vld [vmem:[%s4300 + $0x4] sm:$0xf]
      %v6129 = vld [vmem:[%s4300 + $0x8] sm:$0x1]
      %v6130 = vld [vmem:[%s4300 + $0xc] sm:$0xe]
      %v6131 = vld [vmem:[%s4300 + $0x10] sm:$0xf]
      %v6132 = vld [vmem:[%s4300 + $0x14] sm:$0x1]
      %v6133 = vld [vmem:[%s4300 + $0x18] sm:$0xe]
      %v6134 = vld [vmem:[%s4300 + $0x1c] sm:$0xf]
      %v6135 = vld [vmem:[%s4300 + $0x20] sm:$0x1]
      %v6136 = vld [vmem:[%s4300 + $0x24] sm:$0xe]
      %v6137 = vld [vmem:[%s4300 + $0x28] sm:$0xf]
      %v6138 = vld [vmem:[%s4300 + $0x2c] sm:$0x1]
      %v6139 = vld [vmem:[%s4300 + $0x30] sm:$0xe]
      %v6140 = vld [vmem:[%s4300 + $0x34] sm:$0xf]
      %v6141 = vld [vmem:[%s4300 + $0x38] sm:$0x1]
      %v6142 = vld [vmem:[%s4300 + $0x3c] sm:$0xe]
      %v6143 = vld [vmem:[%s4300 + $0x40] sm:$0xf]
      %v6144 = vld [vmem:[%s4300 + $0x44] sm:$0x1]
      %v6145 = vld [vmem:[%s4300 + $0x48] sm:$0xe]
      %v6146 = vld [vmem:[%s4300 + $0x4c] sm:$0xf]
      %v6147 = vld [vmem:[%s4300 + $0x50] sm:$0x1]
      %v6148 = vld [vmem:[%s4300 + $0x54] sm:$0xe]
      %v6149 = vld [vmem:[%s4300 + $0x58] sm:$0xf]
      %v6150 = vld [vmem:[%s4300 + $0x5c] sm:$0x1]
      %v6151 = vld [vmem:[%s4300 + $0x60] sm:$0xe]
      %v6152 = vld [vmem:[%s4300 + $0x64] sm:$0xf]
      %v6153 = vld [vmem:[%s4300 + $0x68] sm:$0x1]
      %v6154 = vld [vmem:[%s4300 + $0x6c] sm:$0xe]
      %v6155 = vld [vmem:[%s4300 + $0x70] sm:$0xf]
      %v6156 = vld [vmem:[%s4300 + $0x74] sm:$0x1]
      %v6157 = vld [vmem:[%s4300 + $0x78] sm:$0xe]
      %v6158 = vld [vmem:[%s4300 + $0x7c] sm:$0xf]
      %v6159 = vld [vmem:[%s4300 + $0x80] sm:$0x1]
      %v6160 = vld [vmem:[%s4300 + $0x84] sm:$0xe]
      %v6161 = vld [vmem:[%s4300 + $0x88] sm:$0xf]
      %v6162 = vld [vmem:[%s4300 + $0x8c] sm:$0x1]
      %v6163 = vld [vmem:[%s4300 + $0x90] sm:$0xe]
      %v6164 = vld [vmem:[%s4300 + $0x94] sm:$0xf]
      %v6165 = vld [vmem:[%s4300 + $0x98] sm:$0x1]
      %v6166 = vld [vmem:[%s4300 + $0x9c] sm:$0xe]
      %v6167 = vld [vmem:[%s4300 + $0xa0] sm:$0xf]
      %v6168 = vld [vmem:[%s4300 + $0xa4] sm:$0x1]
      %v6169 = vld [vmem:[%s4300 + $0xa8] sm:$0xe]
      %v6170 = vld [vmem:[%s4300 + $0xac] sm:$0xf]
      %v6171 = vld [vmem:[%s4300 + $0xb0] sm:$0x1]
      %v6172 = vld [vmem:[%s4300 + $0xb4] sm:$0xe]
      %v6173 = vld [vmem:[%s4300 + $0xb8] sm:$0xf]
      %v6174 = vld [vmem:[%s4300 + $0xbc] sm:$0x1]
      %v6223 = vrot.slane %v6127, 5
      %v6224 = vrot.slane %v6223, 4
      %v6225 = vrot.slane %v6128, 5
      %v6226 = vsel %vm953, %v6224, %v6225
      %v6227 = vrot.slane %v6225, 4
      %v6228 = vrot.slane %v6129, 5
      %v6229 = vsel %vm953, %v6227, %v6228
      %v6230 = vrot.slane %v6130, 5
      %v6231 = vrot.slane %v6230, 4
      %v6232 = vrot.slane %v6131, 5
      %v6233 = vsel %vm953, %v6231, %v6232
      %v6234 = vrot.slane %v6232, 4
      %v6235 = vrot.slane %v6132, 5
      %v6236 = vsel %vm953, %v6234, %v6235
      %v6237 = vrot.slane %v6133, 5
      %v6238 = vrot.slane %v6237, 4
      %v6239 = vrot.slane %v6134, 5
      %v6240 = vsel %vm953, %v6238, %v6239
      %v6241 = vrot.slane %v6239, 4
      %v6242 = vrot.slane %v6135, 5
      %v6243 = vsel %vm953, %v6241, %v6242
      %v6244 = vrot.slane %v6136, 5
      %v6245 = vrot.slane %v6244, 4
      %v6246 = vrot.slane %v6137, 5
      %v6247 = vsel %vm953, %v6245, %v6246
      %v6248 = vrot.slane %v6246, 4
      %v6249 = vrot.slane %v6138, 5
      %v6250 = vsel %vm953, %v6248, %v6249
      %v6251 = vrot.slane %v6139, 5
      %v6252 = vrot.slane %v6251, 4
      %v6253 = vrot.slane %v6140, 5
      %v6254 = vsel %vm953, %v6252, %v6253
      %v6255 = vrot.slane %v6253, 4
      %v6256 = vrot.slane %v6141, 5
      %v6257 = vsel %vm953, %v6255, %v6256
      %v6258 = vrot.slane %v6142, 5
      %v6259 = vrot.slane %v6258, 4
      %v6260 = vrot.slane %v6143, 5
      %v6261 = vsel %vm953, %v6259, %v6260
      %v6262 = vrot.slane %v6260, 4
      %v6263 = vrot.slane %v6144, 5
      %v6264 = vsel %vm953, %v6262, %v6263
      %v6265 = vrot.slane %v6145, 5
      %v6266 = vrot.slane %v6265, 4
      %v6267 = vrot.slane %v6146, 5
      %v6268 = vsel %vm953, %v6266, %v6267
      %v6269 = vrot.slane %v6267, 4
      %v6270 = vrot.slane %v6147, 5
      %v6271 = vsel %vm953, %v6269, %v6270
      %v6272 = vrot.slane %v6148, 5
      %v6273 = vrot.slane %v6272, 4
      %v6274 = vrot.slane %v6149, 5
      %v6275 = vsel %vm953, %v6273, %v6274
      %v6276 = vrot.slane %v6274, 4
      %v6277 = vrot.slane %v6150, 5
      %v6278 = vsel %vm953, %v6276, %v6277
      %v6279 = vrot.slane %v6151, 5
      %v6280 = vrot.slane %v6279, 4
      %v6281 = vrot.slane %v6152, 5
      %v6282 = vsel %vm953, %v6280, %v6281
      %v6283 = vrot.slane %v6281, 4
      %v6284 = vrot.slane %v6153, 5
      %v6285 = vsel %vm953, %v6283, %v6284
      %v6286 = vrot.slane %v6154, 5
      %v6287 = vrot.slane %v6286, 4
      %v6288 = vrot.slane %v6155, 5
      %v6289 = vsel %vm953, %v6287, %v6288
      %v6290 = vrot.slane %v6288, 4
      %v6291 = vrot.slane %v6156, 5
      %v6292 = vsel %vm953, %v6290, %v6291
      %v6293 = vrot.slane %v6157, 5
      %v6294 = vrot.slane %v6293, 4
      %v6295 = vrot.slane %v6158, 5
      %v6296 = vsel %vm953, %v6294, %v6295
      %v6297 = vrot.slane %v6295, 4
      %v6298 = vrot.slane %v6159, 5
      %v6299 = vsel %vm953, %v6297, %v6298
      %v6300 = vrot.slane %v6160, 5
      %v6301 = vrot.slane %v6300, 4
      %v6302 = vrot.slane %v6161, 5
      %v6303 = vsel %vm953, %v6301, %v6302
      %v6304 = vrot.slane %v6302, 4
      %v6305 = vrot.slane %v6162, 5
      %v6306 = vsel %vm953, %v6304, %v6305
      %v6307 = vrot.slane %v6163, 5
      %v6308 = vrot.slane %v6307, 4
      %v6309 = vrot.slane %v6164, 5
      %v6310 = vsel %vm953, %v6308, %v6309
      %v6311 = vrot.slane %v6309, 4
      %v6312 = vrot.slane %v6165, 5
      %v6313 = vsel %vm953, %v6311, %v6312
      %v6314 = vrot.slane %v6166, 5
      %v6315 = vrot.slane %v6314, 4
      %v6316 = vrot.slane %v6167, 5
      %v6317 = vsel %vm953, %v6315, %v6316
      %v6318 = vrot.slane %v6316, 4
      %v6319 = vrot.slane %v6168, 5
      %v6320 = vsel %vm953, %v6318, %v6319
      %v6321 = vrot.slane %v6169, 5
      %v6322 = vrot.slane %v6321, 4
      %v6323 = vrot.slane %v6170, 5
      %v6324 = vsel %vm953, %v6322, %v6323
      %v6325 = vrot.slane %v6323, 4
      %v6326 = vrot.slane %v6171, 5
      %v6327 = vsel %vm953, %v6325, %v6326
      %v6328 = vrot.slane %v6172, 5
      %v6329 = vrot.slane %v6328, 4
      %v6330 = vrot.slane %v6173, 5
      %v6331 = vsel %vm953, %v6329, %v6330
      %v6332 = vrot.slane %v6330, 4
      %v6333 = vrot.slane %v6174, 5
      %v6334 = vsel %vm953, %v6332, %v6333
      %6335 = vrot.lane.b32.xlu0 %v6226, 80
      %v6336 = vpop.permute.xlu0 %6335
      %6337 = vrot.lane.b32.xlu0 %v6229, 80
      %v6338 = vpop.permute.xlu0 %6337
      %6339 = vrot.lane.b32.xlu0 %v6233, 80
      %v6340 = vpop.permute.xlu0 %6339
      %6341 = vrot.lane.b32.xlu0 %v6236, 80
      %v6342 = vpop.permute.xlu0 %6341
      %6343 = vrot.lane.b32.xlu0 %v6240, 80
      %v6344 = vpop.permute.xlu0 %6343
      %6345 = vrot.lane.b32.xlu0 %v6243, 80
      %v6346 = vpop.permute.xlu0 %6345
      %6347 = vrot.lane.b32.xlu0 %v6247, 80
      %v6348 = vpop.permute.xlu0 %6347
      %6349 = vrot.lane.b32.xlu0 %v6250, 80
      %v6350 = vpop.permute.xlu0 %6349
      %6351 = vrot.lane.b32.xlu0 %v6254, 80
      %v6352 = vpop.permute.xlu0 %6351
      %6353 = vrot.lane.b32.xlu0 %v6257, 80
      %v6354 = vpop.permute.xlu0 %6353
      %6355 = vrot.lane.b32.xlu0 %v6261, 80
      %v6356 = vpop.permute.xlu0 %6355
      %6357 = vrot.lane.b32.xlu0 %v6264, 80
      %v6358 = vpop.permute.xlu0 %6357
      %6359 = vrot.lane.b32.xlu0 %v6268, 80
      %v6360 = vpop.permute.xlu0 %6359
      %6361 = vrot.lane.b32.xlu0 %v6271, 80
      %v6362 = vpop.permute.xlu0 %6361
      %6363 = vrot.lane.b32.xlu0 %v6275, 80
      %v6364 = vpop.permute.xlu0 %6363
      %6365 = vrot.lane.b32.xlu0 %v6278, 80
      %v6366 = vpop.permute.xlu0 %6365
      %6367 = vrot.lane.b32.xlu0 %v6282, 80
      %v6368 = vpop.permute.xlu0 %6367
      %6369 = vrot.lane.b32.xlu0 %v6285, 80
      %v6370 = vpop.permute.xlu0 %6369
      %6371 = vrot.lane.b32.xlu0 %v6289, 80
      %v6372 = vpop.permute.xlu0 %6371
      %6373 = vrot.lane.b32.xlu0 %v6292, 80
      %v6374 = vpop.permute.xlu0 %6373
      %6375 = vrot.lane.b32.xlu0 %v6296, 80
      %v6376 = vpop.permute.xlu0 %6375
      %6377 = vrot.lane.b32.xlu0 %v6299, 80
      %v6378 = vpop.permute.xlu0 %6377
      %6379 = vrot.lane.b32.xlu0 %v6303, 80
      %v6380 = vpop.permute.xlu0 %6379
      %6381 = vrot.lane.b32.xlu0 %v6306, 80
      %v6382 = vpop.permute.xlu0 %6381
      %6383 = vrot.lane.b32.xlu0 %v6310, 80
      %v6384 = vpop.permute.xlu0 %6383
      %6385 = vrot.lane.b32.xlu0 %v6313, 80
      %v6386 = vpop.permute.xlu0 %6385
      %6387 = vrot.lane.b32.xlu0 %v6317, 80
      %v6388 = vpop.permute.xlu0 %6387
      %6389 = vrot.lane.b32.xlu0 %v6320, 80
      %v6390 = vpop.permute.xlu0 %6389
      %6391 = vrot.lane.b32.xlu0 %v6324, 80
      %v6392 = vpop.permute.xlu0 %6391
      %6393 = vrot.lane.b32.xlu0 %v6327, 80
      %v6394 = vpop.permute.xlu0 %6393
      %6395 = vrot.lane.b32.xlu0 %v6331, 80
      %v6396 = vpop.permute.xlu0 %6395
      %6397 = vrot.lane.b32.xlu0 %v6334, 80
      %v6398 = vpop.permute.xlu0 %6397
      %6431 = vst.msk [vmem:[#allocation4] sm:$0xf] %vm2254, %v6336
      %6432 = vst.msk [vmem:[#allocation4 + $0x8] sm:$0xf] %vm2254, %v6338
      %6433 = vst.msk [vmem:[#allocation4 + $0x10] sm:$0xf] %vm2254, %v6340
      %6434 = vst.msk [vmem:[#allocation4 + $0x18] sm:$0xf] %vm2254, %v6342
      %6435 = vst.msk [vmem:[#allocation4 + $0x20] sm:$0xf] %vm2254, %v6344
      %6436 = vst.msk [vmem:[#allocation4 + $0x28] sm:$0xf] %vm2254, %v6346
      %6437 = vst.msk [vmem:[#allocation4 + $0x30] sm:$0xf] %vm2254, %v6348
      %6438 = vst.msk [vmem:[#allocation4 + $0x38] sm:$0xf] %vm2254, %v6350
      %6439 = vst.msk [vmem:[#allocation4 + $0x40] sm:$0xf] %vm2254, %v6352
      %6440 = vst.msk [vmem:[#allocation4 + $0x48] sm:$0xf] %vm2254, %v6354
      %6441 = vst.msk [vmem:[#allocation4 + $0x50] sm:$0xf] %vm2254, %v6356
      %6442 = vst.msk [vmem:[#allocation4 + $0x58] sm:$0xf] %vm2254, %v6358
      %6443 = vst.msk [vmem:[#allocation4 + $0x60] sm:$0xf] %vm2254, %v6360
      %6444 = vst.msk [vmem:[#allocation4 + $0x68] sm:$0xf] %vm2254, %v6362
      %6445 = vst.msk [vmem:[#allocation4 + $0x70] sm:$0xf] %vm2254, %v6364
      %6446 = vst.msk [vmem:[#allocation4 + $0x78] sm:$0xf] %vm2254, %v6366
      %6447 = vst.msk [vmem:[#allocation4 + $0x80] sm:$0xf] %vm2254, %v6368
      %6448 = vst.msk [vmem:[#allocation4 + $0x88] sm:$0xf] %vm2254, %v6370
      %6449 = vst.msk [vmem:[#allocation4 + $0x90] sm:$0xf] %vm2254, %v6372
      %6450 = vst.msk [vmem:[#allocation4 + $0x98] sm:$0xf] %vm2254, %v6374
      %6451 = vst.msk [vmem:[#allocation4 + $0xa0] sm:$0xf] %vm2254, %v6376
      %6452 = vst.msk [vmem:[#allocation4 + $0xa8] sm:$0xf] %vm2254, %v6378
      %6453 = vst.msk [vmem:[#allocation4 + $0xb0] sm:$0xf] %vm2254, %v6380
      %6454 = vst.msk [vmem:[#allocation4 + $0xb8] sm:$0xf] %vm2254, %v6382
      %6455 = vst.msk [vmem:[#allocation4 + $0xc0] sm:$0xf] %vm2254, %v6384
      %6456 = vst.msk [vmem:[#allocation4 + $0xc8] sm:$0xf] %vm2254, %v6386
      %6457 = vst.msk [vmem:[#allocation4 + $0xd0] sm:$0xf] %vm2254, %v6388
      %6458 = vst.msk [vmem:[#allocation4 + $0xd8] sm:$0xf] %vm2254, %v6390
      %6459 = vst.msk [vmem:[#allocation4 + $0xe0] sm:$0xf] %vm2254, %v6392
      %6460 = vst.msk [vmem:[#allocation4 + $0xe8] sm:$0xf] %vm2254, %v6394
      %6461 = vst.msk [vmem:[#allocation4 + $0xf0] sm:$0xf] %vm2254, %v6396
      %6462 = vst.msk [vmem:[#allocation4 + $0xf8] sm:$0xf] %vm2254, %v6398
      %s6463 = scalar_lea.vmem [#allocation3], 24
      %v6464 = vld [vmem:[%s6463] sm:$0xf]
      %v6465 = vld [vmem:[%s6463 + $0x4] sm:$0xf]
      %v6466 = vld [vmem:[%s6463 + $0xc] sm:$0xf]
      %v6467 = vld [vmem:[%s6463 + $0x10] sm:$0xf]
      %v6468 = vld [vmem:[%s6463 + $0x18] sm:$0xf]
      %v6469 = vld [vmem:[%s6463 + $0x1c] sm:$0xf]
      %v6470 = vld [vmem:[%s6463 + $0x24] sm:$0xf]
      %v6471 = vld [vmem:[%s6463 + $0x28] sm:$0xf]
      %v6472 = vld [vmem:[%s6463 + $0x30] sm:$0xf]
      %v6473 = vld [vmem:[%s6463 + $0x34] sm:$0xf]
      %v6474 = vld [vmem:[%s6463 + $0x3c] sm:$0xf]
      %v6475 = vld [vmem:[%s6463 + $0x40] sm:$0xf]
      %v6476 = vld [vmem:[%s6463 + $0x48] sm:$0xf]
      %v6477 = vld [vmem:[%s6463 + $0x4c] sm:$0xf]
      %v6478 = vld [vmem:[%s6463 + $0x54] sm:$0xf]
      %v6479 = vld [vmem:[%s6463 + $0x58] sm:$0xf]
      %v6480 = vld [vmem:[%s6463 + $0x60] sm:$0xf]
      %v6481 = vld [vmem:[%s6463 + $0x64] sm:$0xf]
      %v6482 = vld [vmem:[%s6463 + $0x6c] sm:$0xf]
      %v6483 = vld [vmem:[%s6463 + $0x70] sm:$0xf]
      %v6484 = vld [vmem:[%s6463 + $0x78] sm:$0xf]
      %v6485 = vld [vmem:[%s6463 + $0x7c] sm:$0xf]
      %v6486 = vld [vmem:[%s6463 + $0x84] sm:$0xf]
      %v6487 = vld [vmem:[%s6463 + $0x88] sm:$0xf]
      %v6488 = vld [vmem:[%s6463 + $0x90] sm:$0xf]
      %v6489 = vld [vmem:[%s6463 + $0x94] sm:$0xf]
      %v6490 = vld [vmem:[%s6463 + $0x9c] sm:$0xf]
      %v6491 = vld [vmem:[%s6463 + $0xa0] sm:$0xf]
      %v6492 = vld [vmem:[%s6463 + $0xa8] sm:$0xf]
      %v6493 = vld [vmem:[%s6463 + $0xac] sm:$0xf]
      %v6494 = vld [vmem:[%s6463 + $0xb4] sm:$0xf]
      %v6495 = vld [vmem:[%s6463 + $0xb8] sm:$0xf]
      %6528 = vrot.lane.b32.xlu0 %v6464, 96
      %v6529 = vpop.permute.xlu0 %6528
      %6530 = vrot.lane.b32.xlu0 %v6465, 96
      %v6531 = vpop.permute.xlu0 %6530
      %6532 = vrot.lane.b32.xlu0 %v6466, 96
      %v6533 = vpop.permute.xlu0 %6532
      %6534 = vrot.lane.b32.xlu0 %v6467, 96
      %v6535 = vpop.permute.xlu0 %6534
      %6536 = vrot.lane.b32.xlu0 %v6468, 96
      %v6537 = vpop.permute.xlu0 %6536
      %6538 = vrot.lane.b32.xlu0 %v6469, 96
      %v6539 = vpop.permute.xlu0 %6538
      %6540 = vrot.lane.b32.xlu0 %v6470, 96
      %v6541 = vpop.permute.xlu0 %6540
      %6542 = vrot.lane.b32.xlu0 %v6471, 96
      %v6543 = vpop.permute.xlu0 %6542
      %6544 = vrot.lane.b32.xlu0 %v6472, 96
      %v6545 = vpop.permute.xlu0 %6544
      %6546 = vrot.lane.b32.xlu0 %v6473, 96
      %v6547 = vpop.permute.xlu0 %6546
      %6548 = vrot.lane.b32.xlu0 %v6474, 96
      %v6549 = vpop.permute.xlu0 %6548
      %6550 = vrot.lane.b32.xlu0 %v6475, 96
      %v6551 = vpop.permute.xlu0 %6550
      %6552 = vrot.lane.b32.xlu0 %v6476, 96
      %v6553 = vpop.permute.xlu0 %6552
      %6554 = vrot.lane.b32.xlu0 %v6477, 96
      %v6555 = vpop.permute.xlu0 %6554
      %6556 = vrot.lane.b32.xlu0 %v6478, 96
      %v6557 = vpop.permute.xlu0 %6556
      %6558 = vrot.lane.b32.xlu0 %v6479, 96
      %v6559 = vpop.permute.xlu0 %6558
      %6560 = vrot.lane.b32.xlu0 %v6480, 96
      %v6561 = vpop.permute.xlu0 %6560
      %6562 = vrot.lane.b32.xlu0 %v6481, 96
      %v6563 = vpop.permute.xlu0 %6562
      %6564 = vrot.lane.b32.xlu0 %v6482, 96
      %v6565 = vpop.permute.xlu0 %6564
      %6566 = vrot.lane.b32.xlu0 %v6483, 96
      %v6567 = vpop.permute.xlu0 %6566
      %6568 = vrot.lane.b32.xlu0 %v6484, 96
      %v6569 = vpop.permute.xlu0 %6568
      %6570 = vrot.lane.b32.xlu0 %v6485, 96
      %v6571 = vpop.permute.xlu0 %6570
      %6572 = vrot.lane.b32.xlu0 %v6486, 96
      %v6573 = vpop.permute.xlu0 %6572
      %6574 = vrot.lane.b32.xlu0 %v6487, 96
      %v6575 = vpop.permute.xlu0 %6574
      %6576 = vrot.lane.b32.xlu0 %v6488, 96
      %v6577 = vpop.permute.xlu0 %6576
      %6578 = vrot.lane.b32.xlu0 %v6489, 96
      %v6579 = vpop.permute.xlu0 %6578
      %6580 = vrot.lane.b32.xlu0 %v6490, 96
      %v6581 = vpop.permute.xlu0 %6580
      %6582 = vrot.lane.b32.xlu0 %v6491, 96
      %v6583 = vpop.permute.xlu0 %6582
      %6584 = vrot.lane.b32.xlu0 %v6492, 96
      %v6585 = vpop.permute.xlu0 %6584
      %6586 = vrot.lane.b32.xlu0 %v6493, 96
      %v6587 = vpop.permute.xlu0 %6586
      %6588 = vrot.lane.b32.xlu0 %v6494, 96
      %v6589 = vpop.permute.xlu0 %6588
      %6590 = vrot.lane.b32.xlu0 %v6495, 96
      %v6591 = vpop.permute.xlu0 %6590
      %6624 = vst.msk [vmem:[#allocation4] sm:$0xf] %vm2448, %v6529
      %6625 = vst.msk [vmem:[#allocation4 + $0x8] sm:$0xf] %vm2448, %v6531
      %6626 = vst.msk [vmem:[#allocation4 + $0x10] sm:$0xf] %vm2448, %v6533
      %6627 = vst.msk [vmem:[#allocation4 + $0x18] sm:$0xf] %vm2448, %v6535
      %6628 = vst.msk [vmem:[#allocation4 + $0x20] sm:$0xf] %vm2448, %v6537
      %6629 = vst.msk [vmem:[#allocation4 + $0x28] sm:$0xf] %vm2448, %v6539
      %6630 = vst.msk [vmem:[#allocation4 + $0x30] sm:$0xf] %vm2448, %v6541
      %6631 = vst.msk [vmem:[#allocation4 + $0x38] sm:$0xf] %vm2448, %v6543
      %6632 = vst.msk [vmem:[#allocation4 + $0x40] sm:$0xf] %vm2448, %v6545
      %6633 = vst.msk [vmem:[#allocation4 + $0x48] sm:$0xf] %vm2448, %v6547
      %6634 = vst.msk [vmem:[#allocation4 + $0x50] sm:$0xf] %vm2448, %v6549
      %6635 = vst.msk [vmem:[#allocation4 + $0x58] sm:$0xf] %vm2448, %v6551
      %6636 = vst.msk [vmem:[#allocation4 + $0x60] sm:$0xf] %vm2448, %v6553
      %6637 = vst.msk [vmem:[#allocation4 + $0x68] sm:$0xf] %vm2448, %v6555
      %6638 = vst.msk [vmem:[#allocation4 + $0x70] sm:$0xf] %vm2448, %v6557
      %6639 = vst.msk [vmem:[#allocation4 + $0x78] sm:$0xf] %vm2448, %v6559
      %6640 = vst.msk [vmem:[#allocation4 + $0x80] sm:$0xf] %vm2448, %v6561
      %6641 = vst.msk [vmem:[#allocation4 + $0x88] sm:$0xf] %vm2448, %v6563
      %6642 = vst.msk [vmem:[#allocation4 + $0x90] sm:$0xf] %vm2448, %v6565
      %6643 = vst.msk [vmem:[#allocation4 + $0x98] sm:$0xf] %vm2448, %v6567
      %6644 = vst.msk [vmem:[#allocation4 + $0xa0] sm:$0xf] %vm2448, %v6569
      %6645 = vst.msk [vmem:[#allocation4 + $0xa8] sm:$0xf] %vm2448, %v6571
      %6646 = vst.msk [vmem:[#allocation4 + $0xb0] sm:$0xf] %vm2448, %v6573
      %6647 = vst.msk [vmem:[#allocation4 + $0xb8] sm:$0xf] %vm2448, %v6575
      %6648 = vst.msk [vmem:[#allocation4 + $0xc0] sm:$0xf] %vm2448, %v6577
      %6649 = vst.msk [vmem:[#allocation4 + $0xc8] sm:$0xf] %vm2448, %v6579
      %6650 = vst.msk [vmem:[#allocation4 + $0xd0] sm:$0xf] %vm2448, %v6581
      %6651 = vst.msk [vmem:[#allocation4 + $0xd8] sm:$0xf] %vm2448, %v6583
      %6652 = vst.msk [vmem:[#allocation4 + $0xe0] sm:$0xf] %vm2448, %v6585
      %6653 = vst.msk [vmem:[#allocation4 + $0xe8] sm:$0xf] %vm2448, %v6587
      %6654 = vst.msk [vmem:[#allocation4 + $0xf0] sm:$0xf] %vm2448, %v6589
      %6655 = vst.msk [vmem:[#allocation4 + $0xf8] sm:$0xf] %vm2448, %v6591
      %v6656 = vld [vmem:[%s6463] sm:$0xf]
      %v6657 = vld [vmem:[%s6463 + $0x4] sm:$0xf]
      %v6658 = vld [vmem:[%s6463 + $0x8] sm:$0x1]
      %v6659 = vld [vmem:[%s6463 + $0xc] sm:$0xf]
      %v6660 = vld [vmem:[%s6463 + $0x10] sm:$0xf]
      %v6661 = vld [vmem:[%s6463 + $0x14] sm:$0x1]
      %v6662 = vld [vmem:[%s6463 + $0x18] sm:$0xf]
      %v6663 = vld [vmem:[%s6463 + $0x1c] sm:$0xf]
      %v6664 = vld [vmem:[%s6463 + $0x20] sm:$0x1]
      %v6665 = vld [vmem:[%s6463 + $0x24] sm:$0xf]
      %v6666 = vld [vmem:[%s6463 + $0x28] sm:$0xf]
      %v6667 = vld [vmem:[%s6463 + $0x2c] sm:$0x1]
      %v6668 = vld [vmem:[%s6463 + $0x30] sm:$0xf]
      %v6669 = vld [vmem:[%s6463 + $0x34] sm:$0xf]
      %v6670 = vld [vmem:[%s6463 + $0x38] sm:$0x1]
      %v6671 = vld [vmem:[%s6463 + $0x3c] sm:$0xf]
      %v6672 = vld [vmem:[%s6463 + $0x40] sm:$0xf]
      %v6673 = vld [vmem:[%s6463 + $0x44] sm:$0x1]
      %v6674 = vld [vmem:[%s6463 + $0x48] sm:$0xf]
      %v6675 = vld [vmem:[%s6463 + $0x4c] sm:$0xf]
      %v6676 = vld [vmem:[%s6463 + $0x50] sm:$0x1]
      %v6677 = vld [vmem:[%s6463 + $0x54] sm:$0xf]
      %v6678 = vld [vmem:[%s6463 + $0x58] sm:$0xf]
      %v6679 = vld [vmem:[%s6463 + $0x5c] sm:$0x1]
      %v6680 = vld [vmem:[%s6463 + $0x60] sm:$0xf]
      %v6681 = vld [vmem:[%s6463 + $0x64] sm:$0xf]
      %v6682 = vld [vmem:[%s6463 + $0x68] sm:$0x1]
      %v6683 = vld [vmem:[%s6463 + $0x6c] sm:$0xf]
      %v6684 = vld [vmem:[%s6463 + $0x70] sm:$0xf]
      %v6685 = vld [vmem:[%s6463 + $0x74] sm:$0x1]
      %v6686 = vld [vmem:[%s6463 + $0x78] sm:$0xf]
      %v6687 = vld [vmem:[%s6463 + $0x7c] sm:$0xf]
      %v6688 = vld [vmem:[%s6463 + $0x80] sm:$0x1]
      %v6689 = vld [vmem:[%s6463 + $0x84] sm:$0xf]
      %v6690 = vld [vmem:[%s6463 + $0x88] sm:$0xf]
      %v6691 = vld [vmem:[%s6463 + $0x8c] sm:$0x1]
      %v6692 = vld [vmem:[%s6463 + $0x90] sm:$0xf]
      %v6693 = vld [vmem:[%s6463 + $0x94] sm:$0xf]
      %v6694 = vld [vmem:[%s6463 + $0x98] sm:$0x1]
      %v6695 = vld [vmem:[%s6463 + $0x9c] sm:$0xf]
      %v6696 = vld [vmem:[%s6463 + $0xa0] sm:$0xf]
      %v6697 = vld [vmem:[%s6463 + $0xa4] sm:$0x1]
      %v6698 = vld [vmem:[%s6463 + $0xa8] sm:$0xf]
      %v6699 = vld [vmem:[%s6463 + $0xac] sm:$0xf]
      %v6700 = vld [vmem:[%s6463 + $0xb0] sm:$0x1]
      %v6701 = vld [vmem:[%s6463 + $0xb4] sm:$0xf]
      %v6702 = vld [vmem:[%s6463 + $0xb8] sm:$0xf]
      %v6703 = vld [vmem:[%s6463 + $0xbc] sm:$0x1]
      %v6705 = vshrl.u32 %v6656, 16
      %v6707 = vrot.slane %v6705, 4
      %v6708 = vshll.u32 %v6656, 16
      %v6710 = vrot.slane %v6708, 5
      %v6711 = vor.u32 %v6707, %v6710
      %v6712 = vrot.slane %v6711, 4
      %v6714 = vshll.u32 %v6657, 16
      %v6716 = vrot.slane %v6714, 5
      %v6717 = vsel %vm341, %v6712, %v6716
      %v6718 = vshrl.u32 %v6657, 16
      %v6720 = vrot.slane %v6718, 4
      %v6721 = vor.u32 %v6720, %v6716
      %v6722 = vrot.slane %v6721, 4
      %v6724 = vshll.u32 %v6658, 16
      %v6726 = vrot.slane %v6724, 5
      %v6727 = vsel %vm341, %v6722, %v6726
      %v6729 = vshrl.u32 %v6659, 16
      %v6731 = vrot.slane %v6729, 4
      %v6732 = vshll.u32 %v6659, 16
      %v6734 = vrot.slane %v6732, 5
      %v6735 = vor.u32 %v6731, %v6734
      %v6736 = vrot.slane %v6735, 4
      %v6738 = vshll.u32 %v6660, 16
      %v6740 = vrot.slane %v6738, 5
      %v6741 = vsel %vm341, %v6736, %v6740
      %v6742 = vshrl.u32 %v6660, 16
      %v6744 = vrot.slane %v6742, 4
      %v6745 = vor.u32 %v6744, %v6740
      %v6746 = vrot.slane %v6745, 4
      %v6748 = vshll.u32 %v6661, 16
      %v6750 = vrot.slane %v6748, 5
      %v6751 = vsel %vm341, %v6746, %v6750
      %v6753 = vshrl.u32 %v6662, 16
      %v6755 = vrot.slane %v6753, 4
      %v6756 = vshll.u32 %v6662, 16
      %v6758 = vrot.slane %v6756, 5
      %v6759 = vor.u32 %v6755, %v6758
      %v6760 = vrot.slane %v6759, 4
      %v6762 = vshll.u32 %v6663, 16
      %v6764 = vrot.slane %v6762, 5
      %v6765 = vsel %vm341, %v6760, %v6764
      %v6766 = vshrl.u32 %v6663, 16
      %v6768 = vrot.slane %v6766, 4
      %v6769 = vor.u32 %v6768, %v6764
      %v6770 = vrot.slane %v6769, 4
      %v6772 = vshll.u32 %v6664, 16
      %v6774 = vrot.slane %v6772, 5
      %v6775 = vsel %vm341, %v6770, %v6774
      %v6777 = vshrl.u32 %v6665, 16
      %v6779 = vrot.slane %v6777, 4
      %v6780 = vshll.u32 %v6665, 16
      %v6782 = vrot.slane %v6780, 5
      %v6783 = vor.u32 %v6779, %v6782
      %v6784 = vrot.slane %v6783, 4
      %v6786 = vshll.u32 %v6666, 16
      %v6788 = vrot.slane %v6786, 5
      %v6789 = vsel %vm341, %v6784, %v6788
      %v6790 = vshrl.u32 %v6666, 16
      %v6792 = vrot.slane %v6790, 4
      %v6793 = vor.u32 %v6792, %v6788
      %v6794 = vrot.slane %v6793, 4
      %v6796 = vshll.u32 %v6667, 16
      %v6798 = vrot.slane %v6796, 5
      %v6799 = vsel %vm341, %v6794, %v6798
      %v6801 = vshrl.u32 %v6668, 16
      %v6803 = vrot.slane %v6801, 4
      %v6804 = vshll.u32 %v6668, 16
      %v6806 = vrot.slane %v6804, 5
      %v6807 = vor.u32 %v6803, %v6806
      %v6808 = vrot.slane %v6807, 4
      %v6810 = vshll.u32 %v6669, 16
      %v6812 = vrot.slane %v6810, 5
      %v6813 = vsel %vm341, %v6808, %v6812
      %v6814 = vshrl.u32 %v6669, 16
      %v6816 = vrot.slane %v6814, 4
      %v6817 = vor.u32 %v6816, %v6812
      %v6818 = vrot.slane %v6817, 4
      %v6820 = vshll.u32 %v6670, 16
      %v6822 = vrot.slane %v6820, 5
      %v6823 = vsel %vm341, %v6818, %v6822
      %v6825 = vshrl.u32 %v6671, 16
      %v6827 = vrot.slane %v6825, 4
      %v6828 = vshll.u32 %v6671, 16
      %v6830 = vrot.slane %v6828, 5
      %v6831 = vor.u32 %v6827, %v6830
      %v6832 = vrot.slane %v6831, 4
      %v6834 = vshll.u32 %v6672, 16
      %v6836 = vrot.slane %v6834, 5
      %v6837 = vsel %vm341, %v6832, %v6836
      %v6838 = vshrl.u32 %v6672, 16
      %v6840 = vrot.slane %v6838, 4
      %v6841 = vor.u32 %v6840, %v6836
      %v6842 = vrot.slane %v6841, 4
      %v6844 = vshll.u32 %v6673, 16
      %v6846 = vrot.slane %v6844, 5
      %v6847 = vsel %vm341, %v6842, %v6846
      %v6849 = vshrl.u32 %v6674, 16
      %v6851 = vrot.slane %v6849, 4
      %v6852 = vshll.u32 %v6674, 16
      %v6854 = vrot.slane %v6852, 5
      %v6855 = vor.u32 %v6851, %v6854
      %v6856 = vrot.slane %v6855, 4
      %v6858 = vshll.u32 %v6675, 16
      %v6860 = vrot.slane %v6858, 5
      %v6861 = vsel %vm341, %v6856, %v6860
      %v6862 = vshrl.u32 %v6675, 16
      %v6864 = vrot.slane %v6862, 4
      %v6865 = vor.u32 %v6864, %v6860
      %v6866 = vrot.slane %v6865, 4
      %v6868 = vshll.u32 %v6676, 16
      %v6870 = vrot.slane %v6868, 5
      %v6871 = vsel %vm341, %v6866, %v6870
      %v6873 = vshrl.u32 %v6677, 16
      %v6875 = vrot.slane %v6873, 4
      %v6876 = vshll.u32 %v6677, 16
      %v6878 = vrot.slane %v6876, 5
      %v6879 = vor.u32 %v6875, %v6878
      %v6880 = vrot.slane %v6879, 4
      %v6882 = vshll.u32 %v6678, 16
      %v6884 = vrot.slane %v6882, 5
      %v6885 = vsel %vm341, %v6880, %v6884
      %v6886 = vshrl.u32 %v6678, 16
      %v6888 = vrot.slane %v6886, 4
      %v6889 = vor.u32 %v6888, %v6884
      %v6890 = vrot.slane %v6889, 4
      %v6892 = vshll.u32 %v6679, 16
      %v6894 = vrot.slane %v6892, 5
      %v6895 = vsel %vm341, %v6890, %v6894
      %v6897 = vshrl.u32 %v6680, 16
      %v6899 = vrot.slane %v6897, 4
      %v6900 = vshll.u32 %v6680, 16
      %v6902 = vrot.slane %v6900, 5
      %v6903 = vor.u32 %v6899, %v6902
      %v6904 = vrot.slane %v6903, 4
      %v6906 = vshll.u32 %v6681, 16
      %v6908 = vrot.slane %v6906, 5
      %v6909 = vsel %vm341, %v6904, %v6908
      %v6910 = vshrl.u32 %v6681, 16
      %v6912 = vrot.slane %v6910, 4
      %v6913 = vor.u32 %v6912, %v6908
      %v6914 = vrot.slane %v6913, 4
      %v6916 = vshll.u32 %v6682, 16
      %v6918 = vrot.slane %v6916, 5
      %v6919 = vsel %vm341, %v6914, %v6918
      %v6921 = vshrl.u32 %v6683, 16
      %v6923 = vrot.slane %v6921, 4
      %v6924 = vshll.u32 %v6683, 16
      %v6926 = vrot.slane %v6924, 5
      %v6927 = vor.u32 %v6923, %v6926
      %v6928 = vrot.slane %v6927, 4
      %v6930 = vshll.u32 %v6684, 16
      %v6932 = vrot.slane %v6930, 5
      %v6933 = vsel %vm341, %v6928, %v6932
      %v6934 = vshrl.u32 %v6684, 16
      %v6936 = vrot.slane %v6934, 4
      %v6937 = vor.u32 %v6936, %v6932
      %v6938 = vrot.slane %v6937, 4
      %v6940 = vshll.u32 %v6685, 16
      %v6942 = vrot.slane %v6940, 5
      %v6943 = vsel %vm341, %v6938, %v6942
      %v6945 = vshrl.u32 %v6686, 16
      %v6947 = vrot.slane %v6945, 4
      %v6948 = vshll.u32 %v6686, 16
      %v6950 = vrot.slane %v6948, 5
      %v6951 = vor.u32 %v6947, %v6950
      %v6952 = vrot.slane %v6951, 4
      %v6954 = vshll.u32 %v6687, 16
      %v6956 = vrot.slane %v6954, 5
      %v6957 = vsel %vm341, %v6952, %v6956
      %v6958 = vshrl.u32 %v6687, 16
      %v6960 = vrot.slane %v6958, 4
      %v6961 = vor.u32 %v6960, %v6956
      %v6962 = vrot.slane %v6961, 4
      %v6964 = vshll.u32 %v6688, 16
      %v6966 = vrot.slane %v6964, 5
      %v6967 = vsel %vm341, %v6962, %v6966
      %v6969 = vshrl.u32 %v6689, 16
      %v6971 = vrot.slane %v6969, 4
      %v6972 = vshll.u32 %v6689, 16
      %v6974 = vrot.slane %v6972, 5
      %v6975 = vor.u32 %v6971, %v6974
      %v6976 = vrot.slane %v6975, 4
      %v6978 = vshll.u32 %v6690, 16
      %v6980 = vrot.slane %v6978, 5
      %v6981 = vsel %vm341, %v6976, %v6980
      %v6982 = vshrl.u32 %v6690, 16
      %v6984 = vrot.slane %v6982, 4
      %v6985 = vor.u32 %v6984, %v6980
      %v6986 = vrot.slane %v6985, 4
      %v6988 = vshll.u32 %v6691, 16
      %v6990 = vrot.slane %v6988, 5
      %v6991 = vsel %vm341, %v6986, %v6990
      %v6993 = vshrl.u32 %v6692, 16
      %v6995 = vrot.slane %v6993, 4
      %v6996 = vshll.u32 %v6692, 16
      %v6998 = vrot.slane %v6996, 5
      %v6999 = vor.u32 %v6995, %v6998
      %v7000 = vrot.slane %v6999, 4
      %v7002 = vshll.u32 %v6693, 16
      %v7004 = vrot.slane %v7002, 5
      %v7005 = vsel %vm341, %v7000, %v7004
      %v7006 = vshrl.u32 %v6693, 16
      %v7008 = vrot.slane %v7006, 4
      %v7009 = vor.u32 %v7008, %v7004
      %v7010 = vrot.slane %v7009, 4
      %v7012 = vshll.u32 %v6694, 16
      %v7014 = vrot.slane %v7012, 5
      %v7015 = vsel %vm341, %v7010, %v7014
      %v7017 = vshrl.u32 %v6695, 16
      %v7019 = vrot.slane %v7017, 4
      %v7020 = vshll.u32 %v6695, 16
      %v7022 = vrot.slane %v7020, 5
      %v7023 = vor.u32 %v7019, %v7022
      %v7024 = vrot.slane %v7023, 4
      %v7026 = vshll.u32 %v6696, 16
      %v7028 = vrot.slane %v7026, 5
      %v7029 = vsel %vm341, %v7024, %v7028
      %v7030 = vshrl.u32 %v6696, 16
      %v7032 = vrot.slane %v7030, 4
      %v7033 = vor.u32 %v7032, %v7028
      %v7034 = vrot.slane %v7033, 4
      %v7036 = vshll.u32 %v6697, 16
      %v7038 = vrot.slane %v7036, 5
      %v7039 = vsel %vm341, %v7034, %v7038
      %v7041 = vshrl.u32 %v6698, 16
      %v7043 = vrot.slane %v7041, 4
      %v7044 = vshll.u32 %v6698, 16
      %v7046 = vrot.slane %v7044, 5
      %v7047 = vor.u32 %v7043, %v7046
      %v7048 = vrot.slane %v7047, 4
      %v7050 = vshll.u32 %v6699, 16
      %v7052 = vrot.slane %v7050, 5
      %v7053 = vsel %vm341, %v7048, %v7052
      %v7054 = vshrl.u32 %v6699, 16
      %v7056 = vrot.slane %v7054, 4
      %v7057 = vor.u32 %v7056, %v7052
      %v7058 = vrot.slane %v7057, 4
      %v7060 = vshll.u32 %v6700, 16
      %v7062 = vrot.slane %v7060, 5
      %v7063 = vsel %vm341, %v7058, %v7062
      %v7065 = vshrl.u32 %v6701, 16
      %v7067 = vrot.slane %v7065, 4
      %v7068 = vshll.u32 %v6701, 16
      %v7070 = vrot.slane %v7068, 5
      %v7071 = vor.u32 %v7067, %v7070
      %v7072 = vrot.slane %v7071, 4
      %v7074 = vshll.u32 %v6702, 16
      %v7076 = vrot.slane %v7074, 5
      %v7077 = vsel %vm341, %v7072, %v7076
      %v7078 = vshrl.u32 %v6702, 16
      %v7080 = vrot.slane %v7078, 4
      %v7081 = vor.u32 %v7080, %v7076
      %v7082 = vrot.slane %v7081, 4
      %v7084 = vshll.u32 %v6703, 16
      %v7086 = vrot.slane %v7084, 5
      %v7087 = vsel %vm341, %v7082, %v7086
      %7088 = vrot.lane.b32.xlu0 %v6717, 112
      %v7089 = vpop.permute.xlu0 %7088
      %7090 = vrot.lane.b32.xlu0 %v6727, 112
      %v7091 = vpop.permute.xlu0 %7090
      %7092 = vrot.lane.b32.xlu0 %v6741, 112
      %v7093 = vpop.permute.xlu0 %7092
      %7094 = vrot.lane.b32.xlu0 %v6751, 112
      %v7095 = vpop.permute.xlu0 %7094
      %7096 = vrot.lane.b32.xlu0 %v6765, 112
      %v7097 = vpop.permute.xlu0 %7096
      %7098 = vrot.lane.b32.xlu0 %v6775, 112
      %v7099 = vpop.permute.xlu0 %7098
      %7100 = vrot.lane.b32.xlu0 %v6789, 112
      %v7101 = vpop.permute.xlu0 %7100
      %7102 = vrot.lane.b32.xlu0 %v6799, 112
      %v7103 = vpop.permute.xlu0 %7102
      %7104 = vrot.lane.b32.xlu0 %v6813, 112
      %v7105 = vpop.permute.xlu0 %7104
      %7106 = vrot.lane.b32.xlu0 %v6823, 112
      %v7107 = vpop.permute.xlu0 %7106
      %7108 = vrot.lane.b32.xlu0 %v6837, 112
      %v7109 = vpop.permute.xlu0 %7108
      %7110 = vrot.lane.b32.xlu0 %v6847, 112
      %v7111 = vpop.permute.xlu0 %7110
      %7112 = vrot.lane.b32.xlu0 %v6861, 112
      %v7113 = vpop.permute.xlu0 %7112
      %7114 = vrot.lane.b32.xlu0 %v6871, 112
      %v7115 = vpop.permute.xlu0 %7114
      %7116 = vrot.lane.b32.xlu0 %v6885, 112
      %v7117 = vpop.permute.xlu0 %7116
      %7118 = vrot.lane.b32.xlu0 %v6895, 112
      %v7119 = vpop.permute.xlu0 %7118
      %7120 = vrot.lane.b32.xlu0 %v6909, 112
      %v7121 = vpop.permute.xlu0 %7120
      %7122 = vrot.lane.b32.xlu0 %v6919, 112
      %v7123 = vpop.permute.xlu0 %7122
      %7124 = vrot.lane.b32.xlu0 %v6933, 112
      %v7125 = vpop.permute.xlu0 %7124
      %7126 = vrot.lane.b32.xlu0 %v6943, 112
      %v7127 = vpop.permute.xlu0 %7126
      %7128 = vrot.lane.b32.xlu0 %v6957, 112
      %v7129 = vpop.permute.xlu0 %7128
      %7130 = vrot.lane.b32.xlu0 %v6967, 112
      %v7131 = vpop.permute.xlu0 %7130
      %7132 = vrot.lane.b32.xlu0 %v6981, 112
      %v7133 = vpop.permute.xlu0 %7132
      %7134 = vrot.lane.b32.xlu0 %v6991, 112
      %v7135 = vpop.permute.xlu0 %7134
      %7136 = vrot.lane.b32.xlu0 %v7005, 112
      %v7137 = vpop.permute.xlu0 %7136
      %7138 = vrot.lane.b32.xlu0 %v7015, 112
      %v7139 = vpop.permute.xlu0 %7138
      %7140 = vrot.lane.b32.xlu0 %v7029, 112
      %v7141 = vpop.permute.xlu0 %7140
      %7142 = vrot.lane.b32.xlu0 %v7039, 112
      %v7143 = vpop.permute.xlu0 %7142
      %7144 = vrot.lane.b32.xlu0 %v7053, 112
      %v7145 = vpop.permute.xlu0 %7144
      %7146 = vrot.lane.b32.xlu0 %v7063, 112
      %v7147 = vpop.permute.xlu0 %7146
      %7148 = vrot.lane.b32.xlu0 %v7077, 112
      %v7149 = vpop.permute.xlu0 %7148
      %7150 = vrot.lane.b32.xlu0 %v7087, 112
      %v7151 = vpop.permute.xlu0 %7150
      %7184 = vst.msk [vmem:[#allocation4] sm:$0xf] %vm3009, %v7089
      %7185 = vst.msk [vmem:[#allocation4 + $0x8] sm:$0xf] %vm3009, %v7091
      %7186 = vst.msk [vmem:[#allocation4 + $0x10] sm:$0xf] %vm3009, %v7093
      %7187 = vst.msk [vmem:[#allocation4 + $0x18] sm:$0xf] %vm3009, %v7095
      %7188 = vst.msk [vmem:[#allocation4 + $0x20] sm:$0xf] %vm3009, %v7097
      %7189 = vst.msk [vmem:[#allocation4 + $0x28] sm:$0xf] %vm3009, %v7099
      %7190 = vst.msk [vmem:[#allocation4 + $0x30] sm:$0xf] %vm3009, %v7101
      %7191 = vst.msk [vmem:[#allocation4 + $0x38] sm:$0xf] %vm3009, %v7103
      %7192 = vst.msk [vmem:[#allocation4 + $0x40] sm:$0xf] %vm3009, %v7105
      %7193 = vst.msk [vmem:[#allocation4 + $0x48] sm:$0xf] %vm3009, %v7107
      %7194 = vst.msk [vmem:[#allocation4 + $0x50] sm:$0xf] %vm3009, %v7109
      %7195 = vst.msk [vmem:[#allocation4 + $0x58] sm:$0xf] %vm3009, %v7111
      %7196 = vst.msk [vmem:[#allocation4 + $0x60] sm:$0xf] %vm3009, %v7113
      %7197 = vst.msk [vmem:[#allocation4 + $0x68] sm:$0xf] %vm3009, %v7115
      %7198 = vst.msk [vmem:[#allocation4 + $0x70] sm:$0xf] %vm3009, %v7117
      %7199 = vst.msk [vmem:[#allocation4 + $0x78] sm:$0xf] %vm3009, %v7119
      %7200 = vst.msk [vmem:[#allocation4 + $0x80] sm:$0xf] %vm3009, %v7121
      %7201 = vst.msk [vmem:[#allocation4 + $0x88] sm:$0xf] %vm3009, %v7123
      %7202 = vst.msk [vmem:[#allocation4 + $0x90] sm:$0xf] %vm3009, %v7125
      %7203 = vst.msk [vmem:[#allocation4 + $0x98] sm:$0xf] %vm3009, %v7127
      %7204 = vst.msk [vmem:[#allocation4 + $0xa0] sm:$0xf] %vm3009, %v7129
      %7205 = vst.msk [vmem:[#allocation4 + $0xa8] sm:$0xf] %vm3009, %v7131
      %7206 = vst.msk [vmem:[#allocation4 + $0xb0] sm:$0xf] %vm3009, %v7133
      %7207 = vst.msk [vmem:[#allocation4 + $0xb8] sm:$0xf] %vm3009, %v7135
      %7208 = vst.msk [vmem:[#allocation4 + $0xc0] sm:$0xf] %vm3009, %v7137
      %7209 = vst.msk [vmem:[#allocation4 + $0xc8] sm:$0xf] %vm3009, %v7139
      %7210 = vst.msk [vmem:[#allocation4 + $0xd0] sm:$0xf] %vm3009, %v7141
      %7211 = vst.msk [vmem:[#allocation4 + $0xd8] sm:$0xf] %vm3009, %v7143
      %7212 = vst.msk [vmem:[#allocation4 + $0xe0] sm:$0xf] %vm3009, %v7145
      %7213 = vst.msk [vmem:[#allocation4 + $0xe8] sm:$0xf] %vm3009, %v7147
      %7214 = vst.msk [vmem:[#allocation4 + $0xf0] sm:$0xf] %vm3009, %v7149
      %7215 = vst.msk [vmem:[#allocation4 + $0xf8] sm:$0xf] %vm3009, %v7151
      %v7216 = vld [vmem:[%s6463] sm:$0xe]
      %v7217 = vld [vmem:[%s6463 + $0x4] sm:$0xf]
      %v7218 = vld [vmem:[%s6463 + $0x8] sm:$0x1]
      %v7219 = vld [vmem:[%s6463 + $0xc] sm:$0xe]
      %v7220 = vld [vmem:[%s6463 + $0x10] sm:$0xf]
      %v7221 = vld [vmem:[%s6463 + $0x14] sm:$0x1]
      %v7222 = vld [vmem:[%s6463 + $0x18] sm:$0xe]
      %v7223 = vld [vmem:[%s6463 + $0x1c] sm:$0xf]
      %v7224 = vld [vmem:[%s6463 + $0x20] sm:$0x1]
      %v7225 = vld [vmem:[%s6463 + $0x24] sm:$0xe]
      %v7226 = vld [vmem:[%s6463 + $0x28] sm:$0xf]
      %v7227 = vld [vmem:[%s6463 + $0x2c] sm:$0x1]
      %v7228 = vld [vmem:[%s6463 + $0x30] sm:$0xe]
      %v7229 = vld [vmem:[%s6463 + $0x34] sm:$0xf]
      %v7230 = vld [vmem:[%s6463 + $0x38] sm:$0x1]
      %v7231 = vld [vmem:[%s6463 + $0x3c] sm:$0xe]
      %v7232 = vld [vmem:[%s6463 + $0x40] sm:$0xf]
      %v7233 = vld [vmem:[%s6463 + $0x44] sm:$0x1]
      %v7234 = vld [vmem:[%s6463 + $0x48] sm:$0xe]
      %v7235 = vld [vmem:[%s6463 + $0x4c] sm:$0xf]
      %v7236 = vld [vmem:[%s6463 + $0x50] sm:$0x1]
      %v7237 = vld [vmem:[%s6463 + $0x54] sm:$0xe]
      %v7238 = vld [vmem:[%s6463 + $0x58] sm:$0xf]
      %v7239 = vld [vmem:[%s6463 + $0x5c] sm:$0x1]
      %v7240 = vld [vmem:[%s6463 + $0x60] sm:$0xe]
      %v7241 = vld [vmem:[%s6463 + $0x64] sm:$0xf]
      %v7242 = vld [vmem:[%s6463 + $0x68] sm:$0x1]
      %v7243 = vld [vmem:[%s6463 + $0x6c] sm:$0xe]
      %v7244 = vld [vmem:[%s6463 + $0x70] sm:$0xf]
      %v7245 = vld [vmem:[%s6463 + $0x74] sm:$0x1]
      %v7246 = vld [vmem:[%s6463 + $0x78] sm:$0xe]
      %v7247 = vld [vmem:[%s6463 + $0x7c] sm:$0xf]
      %v7248 = vld [vmem:[%s6463 + $0x80] sm:$0x1]
      %v7249 = vld [vmem:[%s6463 + $0x84] sm:$0xe]
      %v7250 = vld [vmem:[%s6463 + $0x88] sm:$0xf]
      %v7251 = vld [vmem:[%s6463 + $0x8c] sm:$0x1]
      %v7252 = vld [vmem:[%s6463 + $0x90] sm:$0xe]
      %v7253 = vld [vmem:[%s6463 + $0x94] sm:$0xf]
      %v7254 = vld [vmem:[%s6463 + $0x98] sm:$0x1]
      %v7255 = vld [vmem:[%s6463 + $0x9c] sm:$0xe]
      %v7256 = vld [vmem:[%s6463 + $0xa0] sm:$0xf]
      %v7257 = vld [vmem:[%s6463 + $0xa4] sm:$0x1]
      %v7258 = vld [vmem:[%s6463 + $0xa8] sm:$0xe]
      %v7259 = vld [vmem:[%s6463 + $0xac] sm:$0xf]
      %v7260 = vld [vmem:[%s6463 + $0xb0] sm:$0x1]
      %v7261 = vld [vmem:[%s6463 + $0xb4] sm:$0xe]
      %v7262 = vld [vmem:[%s6463 + $0xb8] sm:$0xf]
      %v7263 = vld [vmem:[%s6463 + $0xbc] sm:$0x1]
      %v7312 = vrot.slane %v7216, 5
      %v7313 = vrot.slane %v7312, 4
      %v7314 = vrot.slane %v7217, 5
      %v7315 = vsel %vm953, %v7313, %v7314
      %v7316 = vrot.slane %v7314, 4
      %v7317 = vrot.slane %v7218, 5
      %v7318 = vsel %vm953, %v7316, %v7317
      %v7319 = vrot.slane %v7219, 5
      %v7320 = vrot.slane %v7319, 4
      %v7321 = vrot.slane %v7220, 5
      %v7322 = vsel %vm953, %v7320, %v7321
      %v7323 = vrot.slane %v7321, 4
      %v7324 = vrot.slane %v7221, 5
      %v7325 = vsel %vm953, %v7323, %v7324
      %v7326 = vrot.slane %v7222, 5
      %v7327 = vrot.slane %v7326, 4
      %v7328 = vrot.slane %v7223, 5
      %v7329 = vsel %vm953, %v7327, %v7328
      %v7330 = vrot.slane %v7328, 4
      %v7331 = vrot.slane %v7224, 5
      %v7332 = vsel %vm953, %v7330, %v7331
      %v7333 = vrot.slane %v7225, 5
      %v7334 = vrot.slane %v7333, 4
      %v7335 = vrot.slane %v7226, 5
      %v7336 = vsel %vm953, %v7334, %v7335
      %v7337 = vrot.slane %v7335, 4
      %v7338 = vrot.slane %v7227, 5
      %v7339 = vsel %vm953, %v7337, %v7338
      %v7340 = vrot.slane %v7228, 5
      %v7341 = vrot.slane %v7340, 4
      %v7342 = vrot.slane %v7229, 5
      %v7343 = vsel %vm953, %v7341, %v7342
      %v7344 = vrot.slane %v7342, 4
      %v7345 = vrot.slane %v7230, 5
      %v7346 = vsel %vm953, %v7344, %v7345
      %v7347 = vrot.slane %v7231, 5
      %v7348 = vrot.slane %v7347, 4
      %v7349 = vrot.slane %v7232, 5
      %v7350 = vsel %vm953, %v7348, %v7349
      %v7351 = vrot.slane %v7349, 4
      %v7352 = vrot.slane %v7233, 5
      %v7353 = vsel %vm953, %v7351, %v7352
      %v7354 = vrot.slane %v7234, 5
      %v7355 = vrot.slane %v7354, 4
      %v7356 = vrot.slane %v7235, 5
      %v7357 = vsel %vm953, %v7355, %v7356
      %v7358 = vrot.slane %v7356, 4
      %v7359 = vrot.slane %v7236, 5
      %v7360 = vsel %vm953, %v7358, %v7359
      %v7361 = vrot.slane %v7237, 5
      %v7362 = vrot.slane %v7361, 4
      %v7363 = vrot.slane %v7238, 5
      %v7364 = vsel %vm953, %v7362, %v7363
      %v7365 = vrot.slane %v7363, 4
      %v7366 = vrot.slane %v7239, 5
      %v7367 = vsel %vm953, %v7365, %v7366
      %v7368 = vrot.slane %v7240, 5
      %v7369 = vrot.slane %v7368, 4
      %v7370 = vrot.slane %v7241, 5
      %v7371 = vsel %vm953, %v7369, %v7370
      %v7372 = vrot.slane %v7370, 4
      %v7373 = vrot.slane %v7242, 5
      %v7374 = vsel %vm953, %v7372, %v7373
      %v7375 = vrot.slane %v7243, 5
      %v7376 = vrot.slane %v7375, 4
      %v7377 = vrot.slane %v7244, 5
      %v7378 = vsel %vm953, %v7376, %v7377
      %v7379 = vrot.slane %v7377, 4
      %v7380 = vrot.slane %v7245, 5
      %v7381 = vsel %vm953, %v7379, %v7380
      %v7382 = vrot.slane %v7246, 5
      %v7383 = vrot.slane %v7382, 4
      %v7384 = vrot.slane %v7247, 5
      %v7385 = vsel %vm953, %v7383, %v7384
      %v7386 = vrot.slane %v7384, 4
      %v7387 = vrot.slane %v7248, 5
      %v7388 = vsel %vm953, %v7386, %v7387
      %v7389 = vrot.slane %v7249, 5
      %v7390 = vrot.slane %v7389, 4
      %v7391 = vrot.slane %v7250, 5
      %v7392 = vsel %vm953, %v7390, %v7391
      %v7393 = vrot.slane %v7391, 4
      %v7394 = vrot.slane %v7251, 5
      %v7395 = vsel %vm953, %v7393, %v7394
      %v7396 = vrot.slane %v7252, 5
      %v7397 = vrot.slane %v7396, 4
      %v7398 = vrot.slane %v7253, 5
      %v7399 = vsel %vm953, %v7397, %v7398
      %v7400 = vrot.slane %v7398, 4
      %v7401 = vrot.slane %v7254, 5
      %v7402 = vsel %vm953, %v7400, %v7401
      %v7403 = vrot.slane %v7255, 5
      %v7404 = vrot.slane %v7403, 4
      %v7405 = vrot.slane %v7256, 5
      %v7406 = vsel %vm953, %v7404, %v7405
      %v7407 = vrot.slane %v7405, 4
      %v7408 = vrot.slane %v7257, 5
      %v7409 = vsel %vm953, %v7407, %v7408
      %v7410 = vrot.slane %v7258, 5
      %v7411 = vrot.slane %v7410, 4
      %v7412 = vrot.slane %v7259, 5
      %v7413 = vsel %vm953, %v7411, %v7412
      %v7414 = vrot.slane %v7412, 4
      %v7415 = vrot.slane %v7260, 5
      %v7416 = vsel %vm953, %v7414, %v7415
      %v7417 = vrot.slane %v7261, 5
      %v7418 = vrot.slane %v7417, 4
      %v7419 = vrot.slane %v7262, 5
      %v7420 = vsel %vm953, %v7418, %v7419
      %v7421 = vrot.slane %v7419, 4
      %v7422 = vrot.slane %v7263, 5
      %v7423 = vsel %vm953, %v7421, %v7422
      %7456 = vst.msk [vmem:[#allocation4 + $0x4] sm:$0xf] %vm258, %v7315
      %7457 = vst.msk [vmem:[#allocation4 + $0xc] sm:$0xf] %vm258, %v7318
      %7458 = vst.msk [vmem:[#allocation4 + $0x14] sm:$0xf] %vm258, %v7322
      %7459 = vst.msk [vmem:[#allocation4 + $0x1c] sm:$0xf] %vm258, %v7325
      %7460 = vst.msk [vmem:[#allocation4 + $0x24] sm:$0xf] %vm258, %v7329
      %7461 = vst.msk [vmem:[#allocation4 + $0x2c] sm:$0xf] %vm258, %v7332
      %7462 = vst.msk [vmem:[#allocation4 + $0x34] sm:$0xf] %vm258, %v7336
      %7463 = vst.msk [vmem:[#allocation4 + $0x3c] sm:$0xf] %vm258, %v7339
      %7464 = vst.msk [vmem:[#allocation4 + $0x44] sm:$0xf] %vm258, %v7343
      %7465 = vst.msk [vmem:[#allocation4 + $0x4c] sm:$0xf] %vm258, %v7346
      %7466 = vst.msk [vmem:[#allocation4 + $0x54] sm:$0xf] %vm258, %v7350
      %7467 = vst.msk [vmem:[#allocation4 + $0x5c] sm:$0xf] %vm258, %v7353
      %7468 = vst.msk [vmem:[#allocation4 + $0x64] sm:$0xf] %vm258, %v7357
      %7469 = vst.msk [vmem:[#allocation4 + $0x6c] sm:$0xf] %vm258, %v7360
      %7470 = vst.msk [vmem:[#allocation4 + $0x74] sm:$0xf] %vm258, %v7364
      %7471 = vst.msk [vmem:[#allocation4 + $0x7c] sm:$0xf] %vm258, %v7367
      %7472 = vst.msk [vmem:[#allocation4 + $0x84] sm:$0xf] %vm258, %v7371
      %7473 = vst.msk [vmem:[#allocation4 + $0x8c] sm:$0xf] %vm258, %v7374
      %7474 = vst.msk [vmem:[#allocation4 + $0x94] sm:$0xf] %vm258, %v7378
      %7475 = vst.msk [vmem:[#allocation4 + $0x9c] sm:$0xf] %vm258, %v7381
      %7476 = vst.msk [vmem:[#allocation4 + $0xa4] sm:$0xf] %vm258, %v7385
      %7477 = vst.msk [vmem:[#allocation4 + $0xac] sm:$0xf] %vm258, %v7388
      %7478 = vst.msk [vmem:[#allocation4 + $0xb4] sm:$0xf] %vm258, %v7392
      %7479 = vst.msk [vmem:[#allocation4 + $0xbc] sm:$0xf] %vm258, %v7395
      %7480 = vst.msk [vmem:[#allocation4 + $0xc4] sm:$0xf] %vm258, %v7399
      %7481 = vst.msk [vmem:[#allocation4 + $0xcc] sm:$0xf] %vm258, %v7402
      %7482 = vst.msk [vmem:[#allocation4 + $0xd4] sm:$0xf] %vm258, %v7406
      %7483 = vst.msk [vmem:[#allocation4 + $0xdc] sm:$0xf] %vm258, %v7409
      %7484 = vst.msk [vmem:[#allocation4 + $0xe4] sm:$0xf] %vm258, %v7413
      %7485 = vst.msk [vmem:[#allocation4 + $0xec] sm:$0xf] %vm258, %v7416
      %7486 = vst.msk [vmem:[#allocation4 + $0xf4] sm:$0xf] %vm258, %v7420
      %7487 = vst.msk [vmem:[#allocation4 + $0xfc] sm:$0xf] %vm258, %v7423
      %v7488 = vld [vmem:[#allocation4] sm:$0xff]
      %v7489 = vld [vmem:[#allocation4 + $0x8] sm:$0xff]
      %v7490 = vld [vmem:[#allocation4 + $0x10] sm:$0xff]
      %v7491 = vld [vmem:[#allocation4 + $0x18] sm:$0xff]
      %v7492 = vld [vmem:[#allocation4 + $0x20] sm:$0xff]
      %v7493 = vld [vmem:[#allocation4 + $0x28] sm:$0xff]
      %v7494 = vld [vmem:[#allocation4 + $0x30] sm:$0xff]
      %v7495 = vld [vmem:[#allocation4 + $0x38] sm:$0xff]
      %v7496 = vld [vmem:[#allocation4 + $0x40] sm:$0xff]
      %v7497 = vld [vmem:[#allocation4 + $0x48] sm:$0xff]
      %v7498 = vld [vmem:[#allocation4 + $0x50] sm:$0xff]
      %v7499 = vld [vmem:[#allocation4 + $0x58] sm:$0xff]
      %v7500 = vld [vmem:[#allocation4 + $0x60] sm:$0xff]
      %v7501 = vld [vmem:[#allocation4 + $0x68] sm:$0xff]
      %v7502 = vld [vmem:[#allocation4 + $0x70] sm:$0xff]
      %v7503 = vld [vmem:[#allocation4 + $0x78] sm:$0xff]
      %v7504 = vld [vmem:[#allocation4 + $0x80] sm:$0xff]
      %v7505 = vld [vmem:[#allocation4 + $0x88] sm:$0xff]
      %v7506 = vld [vmem:[#allocation4 + $0x90] sm:$0xff]
      %v7507 = vld [vmem:[#allocation4 + $0x98] sm:$0xff]
      %v7508 = vld [vmem:[#allocation4 + $0xa0] sm:$0xff]
      %v7509 = vld [vmem:[#allocation4 + $0xa8] sm:$0xff]
      %v7510 = vld [vmem:[#allocation4 + $0xb0] sm:$0xff]
      %v7511 = vld [vmem:[#allocation4 + $0xb8] sm:$0xff]
      %v7512 = vld [vmem:[#allocation4 + $0xc0] sm:$0xff]
      %v7513 = vld [vmem:[#allocation4 + $0xc8] sm:$0xff]
      %v7514 = vld [vmem:[#allocation4 + $0xd0] sm:$0xff]
      %v7515 = vld [vmem:[#allocation4 + $0xd8] sm:$0xff]
      %v7516 = vld [vmem:[#allocation4 + $0xe0] sm:$0xff]
      %v7517 = vld [vmem:[#allocation4 + $0xe8] sm:$0xff]
      %v7518 = vld [vmem:[#allocation4 + $0xf0] sm:$0xff]
      %v7519 = vld [vmem:[#allocation4 + $0xf8] sm:$0xff]
      %v7520 = vld [vmem:[%s3] sm:$0xf]
      %v7521 = vld [vmem:[%s3 + $0x4] sm:$0xf]
      %v7522 = vld [vmem:[%s3 + $0x8] sm:$0xf]
      %v7523 = vld [vmem:[%s3 + $0xc] sm:$0xf]
      %v7524 = vld [vmem:[%s3 + $0x10] sm:$0xf]
      %v7525 = vld [vmem:[%s3 + $0x14] sm:$0xf]
      %v7526 = vld [vmem:[%s3 + $0x18] sm:$0xf]
      %v7527 = vld [vmem:[%s3 + $0x1c] sm:$0xf]
      %v7528 = vld [vmem:[%s3 + $0x20] sm:$0xf]
      %v7529 = vld [vmem:[%s3 + $0x24] sm:$0xf]
      %v7530 = vld [vmem:[%s3 + $0x28] sm:$0xf]
      %v7531 = vld [vmem:[%s3 + $0x2c] sm:$0xf]
      %v7532 = vld [vmem:[%s3 + $0x30] sm:$0xf]
      %v7533 = vld [vmem:[%s3 + $0x34] sm:$0xf]
      %v7534 = vld [vmem:[%s3 + $0x38] sm:$0xf]
      %v7535 = vld [vmem:[%s3 + $0x3c] sm:$0xf]
      %v7536 = vld [vmem:[%s3 + $0x40] sm:$0xf]
      %v7537 = vld [vmem:[%s3 + $0x44] sm:$0xf]
      %v7538 = vld [vmem:[%s1195] sm:$0xf]
      %v7539 = vld [vmem:[%s1195 + $0x4] sm:$0xf]
      %v7540 = vld [vmem:[%s1195 + $0x8] sm:$0x1]
      %v7541 = vld [vmem:[%s1195 + $0xc] sm:$0xf]
      %v7542 = vld [vmem:[%s1195 + $0x10] sm:$0xf]
      %v7543 = vld [vmem:[%s1195 + $0x14] sm:$0x1]
      %v7544 = vld [vmem:[%s1195 + $0x18] sm:$0xf]
      %v7545 = vld [vmem:[%s1195 + $0x1c] sm:$0xf]
      %v7546 = vld [vmem:[%s1195 + $0x20] sm:$0x1]
      %v7547 = vld [vmem:[%s1195 + $0x24] sm:$0xf]
      %v7548 = vld [vmem:[%s1195 + $0x28] sm:$0xf]
      %v7549 = vld [vmem:[%s1195 + $0x2c] sm:$0x1]
      %v7550 = vld [vmem:[%s1195 + $0x30] sm:$0xf]
      %v7551 = vld [vmem:[%s1195 + $0x34] sm:$0xf]
      %v7552 = vld [vmem:[%s1195 + $0x38] sm:$0x1]
      %v7553 = vld [vmem:[%s1195 + $0x3c] sm:$0xf]
      %v7554 = vld [vmem:[%s1195 + $0x40] sm:$0xf]
      %v7555 = vld [vmem:[%s1195 + $0x44] sm:$0x1]
      %v7556 = vld [vmem:[%s1195 + $0x48] sm:$0xf]
      %v7557 = vld [vmem:[%s1195 + $0x4c] sm:$0xf]
      %v7558 = vld [vmem:[%s1195 + $0x50] sm:$0x1]
      %v7559 = vld [vmem:[%s1195 + $0x54] sm:$0xf]
      %v7560 = vld [vmem:[%s1195 + $0x58] sm:$0xf]
      %v7561 = vld [vmem:[%s1195 + $0x5c] sm:$0x1]
      %v7562 = vld [vmem:[%s1195 + $0x60] sm:$0xf]
      %v7563 = vld [vmem:[%s1195 + $0x64] sm:$0xf]
      %v7564 = vld [vmem:[%s1195 + $0x68] sm:$0x1]
      %v7565 = vld [vmem:[%s1195 + $0x6c] sm:$0xf]
      %v7566 = vld [vmem:[%s1195 + $0x70] sm:$0xf]
      %v7567 = vld [vmem:[%s1195 + $0x74] sm:$0x1]
      %v7568 = vld [vmem:[%s1195 + $0x78] sm:$0xf]
      %v7569 = vld [vmem:[%s1195 + $0x7c] sm:$0xf]
      %v7570 = vld [vmem:[%s1195 + $0x80] sm:$0x1]
      %v7571 = vld [vmem:[%s1195 + $0x84] sm:$0xf]
      %v7572 = vld [vmem:[%s1195 + $0x88] sm:$0xf]
      %v7573 = vld [vmem:[%s1195 + $0x8c] sm:$0x1]
      %v7574 = vld [vmem:[%s1195 + $0x90] sm:$0xf]
      %v7575 = vld [vmem:[%s1195 + $0x94] sm:$0xf]
      %v7576 = vld [vmem:[%s1195 + $0x98] sm:$0x1]
      %v7577 = vld [vmem:[%s1195 + $0x9c] sm:$0xf]
      %v7578 = vld [vmem:[%s1195 + $0xa0] sm:$0xf]
      %v7579 = vld [vmem:[%s1195 + $0xa4] sm:$0x1]
      %v7580 = vld [vmem:[%s1195 + $0xa8] sm:$0xf]
      %v7581 = vld [vmem:[%s1195 + $0xac] sm:$0xf]
      %v7582 = vld [vmem:[%s1195 + $0xb0] sm:$0x1]
      %v7583 = vld [vmem:[%s1195 + $0xb4] sm:$0xf]
      %v7584 = vld [vmem:[%s1195 + $0xb8] sm:$0xf]
      %v7585 = vld [vmem:[%s1195 + $0xbc] sm:$0x1]
      %v7587 = vshrl.u32 %v7538, 16
      %v7589 = vrot.slane %v7587, 4
      %v7590 = vshll.u32 %v7538, 16
      %v7592 = vrot.slane %v7590, 5
      %v7593 = vor.u32 %v7589, %v7592
      %v7594 = vrot.slane %v7593, 4
      %v7596 = vshll.u32 %v7539, 16
      %v7598 = vrot.slane %v7596, 5
      %v7599 = vsel %vm341, %v7594, %v7598
      %v7600 = vshrl.u32 %v7539, 16
      %v7602 = vrot.slane %v7600, 4
      %v7603 = vor.u32 %v7602, %v7598
      %v7604 = vrot.slane %v7603, 4
      %v7606 = vshll.u32 %v7540, 16
      %v7608 = vrot.slane %v7606, 5
      %v7609 = vsel %vm341, %v7604, %v7608
      %v7611 = vshrl.u32 %v7541, 16
      %v7613 = vrot.slane %v7611, 4
      %v7614 = vshll.u32 %v7541, 16
      %v7616 = vrot.slane %v7614, 5
      %v7617 = vor.u32 %v7613, %v7616
      %v7618 = vrot.slane %v7617, 4
      %v7620 = vshll.u32 %v7542, 16
      %v7622 = vrot.slane %v7620, 5
      %v7623 = vsel %vm341, %v7618, %v7622
      %v7624 = vshrl.u32 %v7542, 16
      %v7626 = vrot.slane %v7624, 4
      %v7627 = vor.u32 %v7626, %v7622
      %v7628 = vrot.slane %v7627, 4
      %v7630 = vshll.u32 %v7543, 16
      %v7632 = vrot.slane %v7630, 5
      %v7633 = vsel %vm341, %v7628, %v7632
      %v7635 = vshrl.u32 %v7544, 16
      %v7637 = vrot.slane %v7635, 4
      %v7638 = vshll.u32 %v7544, 16
      %v7640 = vrot.slane %v7638, 5
      %v7641 = vor.u32 %v7637, %v7640
      %v7642 = vrot.slane %v7641, 4
      %v7644 = vshll.u32 %v7545, 16
      %v7646 = vrot.slane %v7644, 5
      %v7647 = vsel %vm341, %v7642, %v7646
      %v7648 = vshrl.u32 %v7545, 16
      %v7650 = vrot.slane %v7648, 4
      %v7651 = vor.u32 %v7650, %v7646
      %v7652 = vrot.slane %v7651, 4
      %v7654 = vshll.u32 %v7546, 16
      %v7656 = vrot.slane %v7654, 5
      %v7657 = vsel %vm341, %v7652, %v7656
      %v7659 = vshrl.u32 %v7547, 16
      %v7661 = vrot.slane %v7659, 4
      %v7662 = vshll.u32 %v7547, 16
      %v7664 = vrot.slane %v7662, 5
      %v7665 = vor.u32 %v7661, %v7664
      %v7666 = vrot.slane %v7665, 4
      %v7668 = vshll.u32 %v7548, 16
      %v7670 = vrot.slane %v7668, 5
      %v7671 = vsel %vm341, %v7666, %v7670
      %v7672 = vshrl.u32 %v7548, 16
      %v7674 = vrot.slane %v7672, 4
      %v7675 = vor.u32 %v7674, %v7670
      %v7676 = vrot.slane %v7675, 4
      %v7678 = vshll.u32 %v7549, 16
      %v7680 = vrot.slane %v7678, 5
      %v7681 = vsel %vm341, %v7676, %v7680
      %v7683 = vshrl.u32 %v7550, 16
      %v7685 = vrot.slane %v7683, 4
      %v7686 = vshll.u32 %v7550, 16
      %v7688 = vrot.slane %v7686, 5
      %v7689 = vor.u32 %v7685, %v7688
      %v7690 = vrot.slane %v7689, 4
      %v7692 = vshll.u32 %v7551, 16
      %v7694 = vrot.slane %v7692, 5
      %v7695 = vsel %vm341, %v7690, %v7694
      %v7696 = vshrl.u32 %v7551, 16
      %v7698 = vrot.slane %v7696, 4
      %v7699 = vor.u32 %v7698, %v7694
      %v7700 = vrot.slane %v7699, 4
      %v7702 = vshll.u32 %v7552, 16
      %v7704 = vrot.slane %v7702, 5
      %v7705 = vsel %vm341, %v7700, %v7704
      %v7707 = vshrl.u32 %v7553, 16
      %v7709 = vrot.slane %v7707, 4
      %v7710 = vshll.u32 %v7553, 16
      %v7712 = vrot.slane %v7710, 5
      %v7713 = vor.u32 %v7709, %v7712
      %v7714 = vrot.slane %v7713, 4
      %v7716 = vshll.u32 %v7554, 16
      %v7718 = vrot.slane %v7716, 5
      %v7719 = vsel %vm341, %v7714, %v7718
      %v7720 = vshrl.u32 %v7554, 16
      %v7722 = vrot.slane %v7720, 4
      %v7723 = vor.u32 %v7722, %v7718
      %v7724 = vrot.slane %v7723, 4
      %v7726 = vshll.u32 %v7555, 16
      %v7728 = vrot.slane %v7726, 5
      %v7729 = vsel %vm341, %v7724, %v7728
      %v7731 = vshrl.u32 %v7556, 16
      %v7733 = vrot.slane %v7731, 4
      %v7734 = vshll.u32 %v7556, 16
      %v7736 = vrot.slane %v7734, 5
      %v7737 = vor.u32 %v7733, %v7736
      %v7738 = vrot.slane %v7737, 4
      %v7740 = vshll.u32 %v7557, 16
      %v7742 = vrot.slane %v7740, 5
      %v7743 = vsel %vm341, %v7738, %v7742
      %v7744 = vshrl.u32 %v7557, 16
      %v7746 = vrot.slane %v7744, 4
      %v7747 = vor.u32 %v7746, %v7742
      %v7748 = vrot.slane %v7747, 4
      %v7750 = vshll.u32 %v7558, 16
      %v7752 = vrot.slane %v7750, 5
      %v7753 = vsel %vm341, %v7748, %v7752
      %v7755 = vshrl.u32 %v7559, 16
      %v7757 = vrot.slane %v7755, 4
      %v7758 = vshll.u32 %v7559, 16
      %v7760 = vrot.slane %v7758, 5
      %v7761 = vor.u32 %v7757, %v7760
      %v7762 = vrot.slane %v7761, 4
      %v7764 = vshll.u32 %v7560, 16
      %v7766 = vrot.slane %v7764, 5
      %v7767 = vsel %vm341, %v7762, %v7766
      %v7768 = vshrl.u32 %v7560, 16
      %v7770 = vrot.slane %v7768, 4
      %v7771 = vor.u32 %v7770, %v7766
      %v7772 = vrot.slane %v7771, 4
      %v7774 = vshll.u32 %v7561, 16
      %v7776 = vrot.slane %v7774, 5
      %v7777 = vsel %vm341, %v7772, %v7776
      %v7779 = vshrl.u32 %v7562, 16
      %v7781 = vrot.slane %v7779, 4
      %v7782 = vshll.u32 %v7562, 16
      %v7784 = vrot.slane %v7782, 5
      %v7785 = vor.u32 %v7781, %v7784
      %v7786 = vrot.slane %v7785, 4
      %v7788 = vshll.u32 %v7563, 16
      %v7790 = vrot.slane %v7788, 5
      %v7791 = vsel %vm341, %v7786, %v7790
      %v7792 = vshrl.u32 %v7563, 16
      %v7794 = vrot.slane %v7792, 4
      %v7795 = vor.u32 %v7794, %v7790
      %v7796 = vrot.slane %v7795, 4
      %v7798 = vshll.u32 %v7564, 16
      %v7800 = vrot.slane %v7798, 5
      %v7801 = vsel %vm341, %v7796, %v7800
      %v7803 = vshrl.u32 %v7565, 16
      %v7805 = vrot.slane %v7803, 4
      %v7806 = vshll.u32 %v7565, 16
      %v7808 = vrot.slane %v7806, 5
      %v7809 = vor.u32 %v7805, %v7808
      %v7810 = vrot.slane %v7809, 4
      %v7812 = vshll.u32 %v7566, 16
      %v7814 = vrot.slane %v7812, 5
      %v7815 = vsel %vm341, %v7810, %v7814
      %v7816 = vshrl.u32 %v7566, 16
      %v7818 = vrot.slane %v7816, 4
      %v7819 = vor.u32 %v7818, %v7814
      %v7820 = vrot.slane %v7819, 4
      %v7822 = vshll.u32 %v7567, 16
      %v7824 = vrot.slane %v7822, 5
      %v7825 = vsel %vm341, %v7820, %v7824
      %v7827 = vshrl.u32 %v7568, 16
      %v7829 = vrot.slane %v7827, 4
      %v7830 = vshll.u32 %v7568, 16
      %v7832 = vrot.slane %v7830, 5
      %v7833 = vor.u32 %v7829, %v7832
      %v7834 = vrot.slane %v7833, 4
      %v7836 = vshll.u32 %v7569, 16
      %v7838 = vrot.slane %v7836, 5
      %v7839 = vsel %vm341, %v7834, %v7838
      %v7840 = vshrl.u32 %v7569, 16
      %v7842 = vrot.slane %v7840, 4
      %v7843 = vor.u32 %v7842, %v7838
      %v7844 = vrot.slane %v7843, 4
      %v7846 = vshll.u32 %v7570, 16
      %v7848 = vrot.slane %v7846, 5
      %v7849 = vsel %vm341, %v7844, %v7848
      %v7851 = vshrl.u32 %v7571, 16
      %v7853 = vrot.slane %v7851, 4
      %v7854 = vshll.u32 %v7571, 16
      %v7856 = vrot.slane %v7854, 5
      %v7857 = vor.u32 %v7853, %v7856
      %v7858 = vrot.slane %v7857, 4
      %v7860 = vshll.u32 %v7572, 16
      %v7862 = vrot.slane %v7860, 5
      %v7863 = vsel %vm341, %v7858, %v7862
      %v7864 = vshrl.u32 %v7572, 16
      %v7866 = vrot.slane %v7864, 4
      %v7867 = vor.u32 %v7866, %v7862
      %v7868 = vrot.slane %v7867, 4
      %v7870 = vshll.u32 %v7573, 16
      %v7872 = vrot.slane %v7870, 5
      %v7873 = vsel %vm341, %v7868, %v7872
      %v7875 = vshrl.u32 %v7574, 16
      %v7877 = vrot.slane %v7875, 4
      %v7878 = vshll.u32 %v7574, 16
      %v7880 = vrot.slane %v7878, 5
      %v7881 = vor.u32 %v7877, %v7880
      %v7882 = vrot.slane %v7881, 4
      %v7884 = vshll.u32 %v7575, 16
      %v7886 = vrot.slane %v7884, 5
      %v7887 = vsel %vm341, %v7882, %v7886
      %v7888 = vshrl.u32 %v7575, 16
      %v7890 = vrot.slane %v7888, 4
      %v7891 = vor.u32 %v7890, %v7886
      %v7892 = vrot.slane %v7891, 4
      %v7894 = vshll.u32 %v7576, 16
      %v7896 = vrot.slane %v7894, 5
      %v7897 = vsel %vm341, %v7892, %v7896
      %v7899 = vshrl.u32 %v7577, 16
      %v7901 = vrot.slane %v7899, 4
      %v7902 = vshll.u32 %v7577, 16
      %v7904 = vrot.slane %v7902, 5
      %v7905 = vor.u32 %v7901, %v7904
      %v7906 = vrot.slane %v7905, 4
      %v7908 = vshll.u32 %v7578, 16
      %v7910 = vrot.slane %v7908, 5
      %v7911 = vsel %vm341, %v7906, %v7910
      %v7912 = vshrl.u32 %v7578, 16
      %v7914 = vrot.slane %v7912, 4
      %v7915 = vor.u32 %v7914, %v7910
      %v7916 = vrot.slane %v7915, 4
      %v7918 = vshll.u32 %v7579, 16
      %v7920 = vrot.slane %v7918, 5
      %v7921 = vsel %vm341, %v7916, %v7920
      %v7923 = vshrl.u32 %v7580, 16
      %v7925 = vrot.slane %v7923, 4
      %v7926 = vshll.u32 %v7580, 16
      %v7928 = vrot.slane %v7926, 5
      %v7929 = vor.u32 %v7925, %v7928
      %v7930 = vrot.slane %v7929, 4
      %v7932 = vshll.u32 %v7581, 16
      %v7934 = vrot.slane %v7932, 5
      %v7935 = vsel %vm341, %v7930, %v7934
      %v7936 = vshrl.u32 %v7581, 16
      %v7938 = vrot.slane %v7936, 4
      %v7939 = vor.u32 %v7938, %v7934
      %v7940 = vrot.slane %v7939, 4
      %v7942 = vshll.u32 %v7582, 16
      %v7944 = vrot.slane %v7942, 5
      %v7945 = vsel %vm341, %v7940, %v7944
      %v7947 = vshrl.u32 %v7583, 16
      %v7949 = vrot.slane %v7947, 4
      %v7950 = vshll.u32 %v7583, 16
      %v7952 = vrot.slane %v7950, 5
      %v7953 = vor.u32 %v7949, %v7952
      %v7954 = vrot.slane %v7953, 4
      %v7956 = vshll.u32 %v7584, 16
      %v7958 = vrot.slane %v7956, 5
      %v7959 = vsel %vm341, %v7954, %v7958
      %v7960 = vshrl.u32 %v7584, 16
      %v7962 = vrot.slane %v7960, 4
      %v7963 = vor.u32 %v7962, %v7958
      %v7964 = vrot.slane %v7963, 4
      %v7966 = vshll.u32 %v7585, 16
      %v7968 = vrot.slane %v7966, 5
      %v7969 = vsel %vm341, %v7964, %v7968
      %v8002 = vunpack.c.l.bf16 %v7599
      %v8003 = vunpack.c.l.bf16 %v7609
      %v8004 = vunpack.c.l.bf16 %v7623
      %v8005 = vunpack.c.l.bf16 %v7633
      %v8006 = vunpack.c.l.bf16 %v7647
      %v8007 = vunpack.c.l.bf16 %v7657
      %v8008 = vunpack.c.l.bf16 %v7671
      %v8009 = vunpack.c.l.bf16 %v7681
      %v8010 = vunpack.c.l.bf16 %v7695
      %v8011 = vunpack.c.l.bf16 %v7705
      %v8012 = vunpack.c.l.bf16 %v7719
      %v8013 = vunpack.c.l.bf16 %v7729
      %v8014 = vunpack.c.l.bf16 %v7743
      %v8015 = vunpack.c.l.bf16 %v7753
      %v8016 = vunpack.c.l.bf16 %v7767
      %v8017 = vunpack.c.l.bf16 %v7777
      %v8018 = vunpack.c.l.bf16 %v7791
      %v8019 = vunpack.c.l.bf16 %v7801
      %v8020 = vunpack.c.l.bf16 %v7815
      %v8021 = vunpack.c.l.bf16 %v7825
      %v8022 = vunpack.c.l.bf16 %v7839
      %v8023 = vunpack.c.l.bf16 %v7849
      %v8024 = vunpack.c.l.bf16 %v7863
      %v8025 = vunpack.c.l.bf16 %v7873
      %v8026 = vunpack.c.l.bf16 %v7887
      %v8027 = vunpack.c.l.bf16 %v7897
      %v8028 = vunpack.c.l.bf16 %v7911
      %v8029 = vunpack.c.l.bf16 %v7921
      %v8030 = vunpack.c.l.bf16 %v7935
      %v8031 = vunpack.c.l.bf16 %v7945
      %v8032 = vunpack.c.l.bf16 %v7959
      %v8033 = vunpack.c.l.bf16 %v7969
      %v8034 = vld [vmem:[%s4] sm:$0x1]
      %v8036 = vperm.slane %v8034, 0
      %v8070 = vunpack.c.l.b16 %v7488
      %v8071 = vunpack.c.h.b16 %v7488
      %v8072 = vunpack.c.l.b16 %v7489
      %v8073 = vunpack.c.h.b16 %v7489
      %v8074 = vunpack.c.l.b16 %v7490
      %v8075 = vunpack.c.h.b16 %v7490
      %v8076 = vunpack.c.l.b16 %v7491
      %v8077 = vunpack.c.h.b16 %v7491
      %v8078 = vunpack.c.l.b16 %v7492
      %v8079 = vunpack.c.h.b16 %v7492
      %v8080 = vunpack.c.l.b16 %v7493
      %v8081 = vunpack.c.h.b16 %v7493
      %v8082 = vunpack.c.l.b16 %v7494
      %v8083 = vunpack.c.h.b16 %v7494
      %v8084 = vunpack.c.l.b16 %v7495
      %v8085 = vunpack.c.h.b16 %v7495
      %v8086 = vunpack.c.l.b16 %v7496
      %v8087 = vunpack.c.h.b16 %v7496
      %v8088 = vunpack.c.l.b16 %v7497
      %v8089 = vunpack.c.h.b16 %v7497
      %v8090 = vunpack.c.l.b16 %v7498
      %v8091 = vunpack.c.h.b16 %v7498
      %v8092 = vunpack.c.l.b16 %v7499
      %v8093 = vunpack.c.h.b16 %v7499
      %v8094 = vunpack.c.l.b16 %v7500
      %v8095 = vunpack.c.h.b16 %v7500
      %v8096 = vunpack.c.l.b16 %v7501
      %v8097 = vunpack.c.h.b16 %v7501
      %v8098 = vunpack.c.l.b16 %v7502
      %v8099 = vunpack.c.h.b16 %v7502
      %v8100 = vunpack.c.l.b16 %v7503
      %v8101 = vunpack.c.h.b16 %v7503
      %v8102 = vunpack.c.l.b16 %v7504
      %v8103 = vunpack.c.h.b16 %v7504
      %v8104 = vunpack.c.l.b16 %v7505
      %v8105 = vunpack.c.h.b16 %v7505
      %v8106 = vunpack.c.l.b16 %v7506
      %v8107 = vunpack.c.h.b16 %v7506
      %v8108 = vunpack.c.l.b16 %v7507
      %v8109 = vunpack.c.h.b16 %v7507
      %v8110 = vunpack.c.l.b16 %v7508
      %v8111 = vunpack.c.h.b16 %v7508
      %v8112 = vunpack.c.l.b16 %v7509
      %v8113 = vunpack.c.h.b16 %v7509
      %v8114 = vunpack.c.l.b16 %v7510
      %v8115 = vunpack.c.h.b16 %v7510
      %v8116 = vunpack.c.l.b16 %v7511
      %v8117 = vunpack.c.h.b16 %v7511
      %v8118 = vunpack.c.l.b16 %v7512
      %v8119 = vunpack.c.h.b16 %v7512
      %v8120 = vunpack.c.l.b16 %v7513
      %v8121 = vunpack.c.h.b16 %v7513
      %v8122 = vunpack.c.l.b16 %v7514
      %v8123 = vunpack.c.h.b16 %v7514
      %v8124 = vunpack.c.l.b16 %v7515
      %v8125 = vunpack.c.h.b16 %v7515
      %v8126 = vunpack.c.l.b16 %v7516
      %v8127 = vunpack.c.h.b16 %v7516
      %v8128 = vunpack.c.l.b16 %v7517
      %v8129 = vunpack.c.h.b16 %v7517
      %v8130 = vunpack.c.l.b16 %v7518
      %v8131 = vunpack.c.h.b16 %v7518
      %v8132 = vunpack.c.l.b16 %v7519
      %v8133 = vunpack.c.h.b16 %v7519
      %v8134 = vpack.c.b16 %v8072, %v8070
      %v8135 = vpack.c.b16 %v8073, %v8071
      %v8136 = vpack.c.b16 %v8076, %v8074
      %v8137 = vpack.c.b16 %v8077, %v8075
      %v8138 = vpack.c.b16 %v8080, %v8078
      %v8139 = vpack.c.b16 %v8081, %v8079
      %v8140 = vpack.c.b16 %v8084, %v8082
      %v8141 = vpack.c.b16 %v8085, %v8083
      %v8142 = vpack.c.b16 %v8088, %v8086
      %v8143 = vpack.c.b16 %v8089, %v8087
      %v8144 = vpack.c.b16 %v8092, %v8090
      %v8145 = vpack.c.b16 %v8093, %v8091
      %v8146 = vpack.c.b16 %v8096, %v8094
      %v8147 = vpack.c.b16 %v8097, %v8095
      %v8148 = vpack.c.b16 %v8100, %v8098
      %v8149 = vpack.c.b16 %v8101, %v8099
      %v8150 = vpack.c.b16 %v8104, %v8102
      %v8151 = vpack.c.b16 %v8105, %v8103
      %v8152 = vpack.c.b16 %v8108, %v8106
      %v8153 = vpack.c.b16 %v8109, %v8107
      %v8154 = vpack.c.b16 %v8112, %v8110
      %v8155 = vpack.c.b16 %v8113, %v8111
      %v8156 = vpack.c.b16 %v8116, %v8114
      %v8157 = vpack.c.b16 %v8117, %v8115
      %v8158 = vpack.c.b16 %v8120, %v8118
      %v8159 = vpack.c.b16 %v8121, %v8119
      %v8160 = vpack.c.b16 %v8124, %v8122
      %v8161 = vpack.c.b16 %v8125, %v8123
      %v8162 = vpack.c.b16 %v8128, %v8126
      %v8163 = vpack.c.b16 %v8129, %v8127
      %v8164 = vpack.c.b16 %v8132, %v8130
      %v8165 = vpack.c.b16 %v8133, %v8131
      %v8200 = vunpack.c.l.b16 %v7520
      %v8201 = vunpack.c.l.b16 %v7521
      %v8202 = vunpack.c.l.b16 %v7522
      %v8203 = vunpack.c.l.b16 %v7523
      %v8204 = vunpack.c.l.b16 %v7524
      %v8205 = vunpack.c.l.b16 %v7525
      %v8206 = vunpack.c.l.b16 %v7526
      %v8207 = vunpack.c.l.b16 %v7527
      %v8208 = vunpack.c.l.b16 %v7528
      %v8209 = vunpack.c.l.b16 %v7529
      %v8210 = vunpack.c.l.b16 %v7530
      %v8211 = vunpack.c.l.b16 %v7531
      %v8212 = vunpack.c.l.b16 %v7532
      %v8213 = vunpack.c.l.b16 %v7533
      %v8214 = vunpack.c.l.b16 %v7534
      %v8215 = vunpack.c.l.b16 %v7535
      %v8216 = vunpack.c.l.b16 %v7536
      %v8217 = vunpack.c.l.b16 %v7537
      %v8218 = vpack.c.b16 %v8201, %v8200
      %v8219 = vpack.c.b16 %v8203, %v8202
      %v8220 = vpack.c.b16 %v8205, %v8204
      %v8221 = vpack.c.b16 %v8207, %v8206
      %v8222 = vpack.c.b16 %v8209, %v8208
      %v8223 = vpack.c.b16 %v8211, %v8210
      %v8224 = vpack.c.b16 %v8213, %v8212
      %v8225 = vpack.c.b16 %v8215, %v8214
      %v8226 = vpack.c.b16 %v8217, %v8216
      %v8237 = vsel %vm3566, %v8135, 0
      %v8240 = vsel %vm3566, %v8137, 0
      %v8243 = vsel %vm3566, %v8139, 0
      %v8246 = vsel %vm3566, %v8141, 0
      %v8249 = vsel %vm3566, %v8143, 0
      %v8252 = vsel %vm3566, %v8145, 0
      %v8255 = vsel %vm3566, %v8147, 0
      %v8258 = vsel %vm3566, %v8149, 0
      %v8261 = vsel %vm3566, %v8151, 0
      %v8264 = vsel %vm3566, %v8153, 0
      %v8267 = vsel %vm3566, %v8155, 0
      %v8270 = vsel %vm3566, %v8157, 0
      %v8273 = vsel %vm3566, %v8159, 0
      %v8276 = vsel %vm3566, %v8161, 0
      %v8279 = vsel %vm3566, %v8163, 0
      %v8282 = vsel %vm3566, %v8165, 0
      %8284 = vmatpush.bf16.msra.mxu0 %v8225
      %8285 = vmatpush.bf16.msra.mxu0 %v8224
      %8286 = vmatpush.bf16.msra.mxu0 %v8223
      %8287 = vmatpush.bf16.msra.mxu0 %v8222
      %8288 = vmatpush.bf16.msra.mxu0 %v8221
      %8289 = vmatpush.bf16.msra.mxu0 %v8220
      %8290 = vmatpush.bf16.msra.mxu0 %v8219
      %8291 = vmatpush.bf16.msra.mxu0 %v8218
      %8292 = vmatmul.bf16.gmra.mxu0 %v8134
      %v8293 = vpop.f32.mrf.mxu0
      %v8294 = vadd.f32 %v8036, %v8293
      %v8295 = vpop.f32.mrf.mxu0
      %v8296 = vadd.f32 %v8036, %v8295
      %8297 = vmatmul.bf16.gmra.mxu0 %v8136
      %v8298 = vpop.f32.mrf.mxu0
      %v8299 = vadd.f32 %v8036, %v8298
      %v8300 = vpop.f32.mrf.mxu0
      %v8301 = vadd.f32 %v8036, %v8300
      %8302 = vmatmul.bf16.gmra.mxu0 %v8138
      %v8303 = vpop.f32.mrf.mxu0
      %v8304 = vadd.f32 %v8036, %v8303
      %v8305 = vpop.f32.mrf.mxu0
      %v8306 = vadd.f32 %v8036, %v8305
      %8307 = vmatmul.bf16.gmra.mxu0 %v8140
      %v8308 = vpop.f32.mrf.mxu0
      %v8309 = vadd.f32 %v8036, %v8308
      %v8310 = vpop.f32.mrf.mxu0
      %v8311 = vadd.f32 %v8036, %v8310
      %8312 = vmatmul.bf16.gmra.mxu0 %v8142
      %v8313 = vpop.f32.mrf.mxu0
      %v8314 = vadd.f32 %v8036, %v8313
      %v8315 = vpop.f32.mrf.mxu0
      %v8316 = vadd.f32 %v8036, %v8315
      %8317 = vmatmul.bf16.gmra.mxu0 %v8144
      %v8318 = vpop.f32.mrf.mxu0
      %v8319 = vadd.f32 %v8036, %v8318
      %v8320 = vpop.f32.mrf.mxu0
      %v8321 = vadd.f32 %v8036, %v8320
      %8322 = vmatmul.bf16.gmra.mxu0 %v8146
      %v8323 = vpop.f32.mrf.mxu0
      %v8324 = vadd.f32 %v8036, %v8323
      %v8325 = vpop.f32.mrf.mxu0
      %v8326 = vadd.f32 %v8036, %v8325
      %8327 = vmatmul.bf16.gmra.mxu0 %v8148
      %v8328 = vpop.f32.mrf.mxu0
      %v8329 = vadd.f32 %v8036, %v8328
      %v8330 = vpop.f32.mrf.mxu0
      %v8331 = vadd.f32 %v8036, %v8330
      %8332 = vmatmul.bf16.gmra.mxu0 %v8150
      %v8333 = vpop.f32.mrf.mxu0
      %v8334 = vadd.f32 %v8036, %v8333
      %v8335 = vpop.f32.mrf.mxu0
      %v8336 = vadd.f32 %v8036, %v8335
      %8337 = vmatmul.bf16.gmra.mxu0 %v8152
      %v8338 = vpop.f32.mrf.mxu0
      %v8339 = vadd.f32 %v8036, %v8338
      %v8340 = vpop.f32.mrf.mxu0
      %v8341 = vadd.f32 %v8036, %v8340
      %8342 = vmatmul.bf16.gmra.mxu0 %v8154
      %v8343 = vpop.f32.mrf.mxu0
      %v8344 = vadd.f32 %v8036, %v8343
      %v8345 = vpop.f32.mrf.mxu0
      %v8346 = vadd.f32 %v8036, %v8345
      %8347 = vmatmul.bf16.gmra.mxu0 %v8156
      %v8348 = vpop.f32.mrf.mxu0
      %v8349 = vadd.f32 %v8036, %v8348
      %v8350 = vpop.f32.mrf.mxu0
      %v8351 = vadd.f32 %v8036, %v8350
      %8352 = vmatmul.bf16.gmra.mxu0 %v8158
      %v8353 = vpop.f32.mrf.mxu0
      %v8354 = vadd.f32 %v8036, %v8353
      %v8355 = vpop.f32.mrf.mxu0
      %v8356 = vadd.f32 %v8036, %v8355
      %8357 = vmatmul.bf16.gmra.mxu0 %v8160
      %v8358 = vpop.f32.mrf.mxu0
      %v8359 = vadd.f32 %v8036, %v8358
      %v8360 = vpop.f32.mrf.mxu0
      %v8361 = vadd.f32 %v8036, %v8360
      %8362 = vmatmul.bf16.gmra.mxu0 %v8162
      %v8363 = vpop.f32.mrf.mxu0
      %v8364 = vadd.f32 %v8036, %v8363
      %v8365 = vpop.f32.mrf.mxu0
      %v8366 = vadd.f32 %v8036, %v8365
      %8367 = vmatmul.bf16.gmra.mxu0 %v8164
      %v8368 = vpop.f32.mrf.mxu0
      %v8369 = vadd.f32 %v8036, %v8368
      %v8370 = vpop.f32.mrf.mxu0
      %v8371 = vadd.f32 %v8036, %v8370
      %8372 = vdwg.mxu0
      %8373 = vmatpush.bf16.msra.mxu0 0
      %8374 = vmatpush.bf16.msra.mxu0 0
      %8375 = vmatpush.bf16.msra.mxu0 0
      %8376 = vmatpush.bf16.msra.mxu0 0
      %8377 = vmatpush.bf16.msra.mxu0 0
      %8378 = vmatpush.bf16.msra.mxu0 0
      %8379 = vmatpush.bf16.msra.mxu0 0
      %8380 = vmatpush.bf16.msra.mxu0 %v8226
      %8381 = vmatmul.bf16.gmra.mxu0 %v8237
      %v8382 = vpop.f32.mrf.mxu0
      %v8383 = vadd.f32 %v8294, %v8382
      %v8384 = vpop.f32.mrf.mxu0
      %v8385 = vadd.f32 %v8296, %v8384
      %8386 = vmatmul.bf16.gmra.mxu0 %v8240
      %v8387 = vpop.f32.mrf.mxu0
      %v8388 = vadd.f32 %v8299, %v8387
      %v8389 = vpop.f32.mrf.mxu0
      %v8390 = vadd.f32 %v8301, %v8389
      %8391 = vmatmul.bf16.gmra.mxu0 %v8243
      %v8392 = vpop.f32.mrf.mxu0
      %v8393 = vadd.f32 %v8304, %v8392
      %v8394 = vpop.f32.mrf.mxu0
      %v8395 = vadd.f32 %v8306, %v8394
      %8396 = vmatmul.bf16.gmra.mxu0 %v8246
      %v8397 = vpop.f32.mrf.mxu0
      %v8398 = vadd.f32 %v8309, %v8397
      %v8399 = vpop.f32.mrf.mxu0
      %v8400 = vadd.f32 %v8311, %v8399
      %8401 = vmatmul.bf16.gmra.mxu0 %v8249
      %v8402 = vpop.f32.mrf.mxu0
      %v8403 = vadd.f32 %v8314, %v8402
      %v8404 = vpop.f32.mrf.mxu0
      %v8405 = vadd.f32 %v8316, %v8404
      %8406 = vmatmul.bf16.gmra.mxu0 %v8252
      %v8407 = vpop.f32.mrf.mxu0
      %v8408 = vadd.f32 %v8319, %v8407
      %v8409 = vpop.f32.mrf.mxu0
      %v8410 = vadd.f32 %v8321, %v8409
      %8411 = vmatmul.bf16.gmra.mxu0 %v8255
      %v8412 = vpop.f32.mrf.mxu0
      %v8413 = vadd.f32 %v8324, %v8412
      %v8414 = vpop.f32.mrf.mxu0
      %v8415 = vadd.f32 %v8326, %v8414
      %8416 = vmatmul.bf16.gmra.mxu0 %v8258
      %v8417 = vpop.f32.mrf.mxu0
      %v8418 = vadd.f32 %v8329, %v8417
      %v8419 = vpop.f32.mrf.mxu0
      %v8420 = vadd.f32 %v8331, %v8419
      %8421 = vmatmul.bf16.gmra.mxu0 %v8261
      %v8422 = vpop.f32.mrf.mxu0
      %v8423 = vadd.f32 %v8334, %v8422
      %v8424 = vpop.f32.mrf.mxu0
      %v8425 = vadd.f32 %v8336, %v8424
      %8426 = vmatmul.bf16.gmra.mxu0 %v8264
      %v8427 = vpop.f32.mrf.mxu0
      %v8428 = vadd.f32 %v8339, %v8427
      %v8429 = vpop.f32.mrf.mxu0
      %v8430 = vadd.f32 %v8341, %v8429
      %8431 = vmatmul.bf16.gmra.mxu0 %v8267
      %v8432 = vpop.f32.mrf.mxu0
      %v8433 = vadd.f32 %v8344, %v8432
      %v8434 = vpop.f32.mrf.mxu0
      %v8435 = vadd.f32 %v8346, %v8434
      %8436 = vmatmul.bf16.gmra.mxu0 %v8270
      %v8437 = vpop.f32.mrf.mxu0
      %v8438 = vadd.f32 %v8349, %v8437
      %v8439 = vpop.f32.mrf.mxu0
      %v8440 = vadd.f32 %v8351, %v8439
      %8441 = vmatmul.bf16.gmra.mxu0 %v8273
      %v8442 = vpop.f32.mrf.mxu0
      %v8443 = vadd.f32 %v8354, %v8442
      %v8444 = vpop.f32.mrf.mxu0
      %v8445 = vadd.f32 %v8356, %v8444
      %8446 = vmatmul.bf16.gmra.mxu0 %v8276
      %v8447 = vpop.f32.mrf.mxu0
      %v8448 = vadd.f32 %v8359, %v8447
      %v8449 = vpop.f32.mrf.mxu0
      %v8450 = vadd.f32 %v8361, %v8449
      %8451 = vmatmul.bf16.gmra.mxu0 %v8279
      %v8452 = vpop.f32.mrf.mxu0
      %v8453 = vadd.f32 %v8364, %v8452
      %v8454 = vpop.f32.mrf.mxu0
      %v8455 = vadd.f32 %v8366, %v8454
      %8456 = vmatmul.bf16.gmra.mxu0 %v8282
      %v8457 = vpop.f32.mrf.mxu0
      %v8458 = vadd.f32 %v8369, %v8457
      %v8459 = vpop.f32.mrf.mxu0
      %v8460 = vadd.f32 %v8371, %v8459
      %8461 = vdwg.mxu0
      %v8462 = vadd.f32 %v8383, %v8002
      %v8463 = vadd.f32 %v8385, %v8003
      %v8464 = vadd.f32 %v8388, %v8004
      %v8465 = vadd.f32 %v8390, %v8005
      %v8466 = vadd.f32 %v8393, %v8006
      %v8467 = vadd.f32 %v8395, %v8007
      %v8468 = vadd.f32 %v8398, %v8008
      %v8469 = vadd.f32 %v8400, %v8009
      %v8470 = vadd.f32 %v8403, %v8010
      %v8471 = vadd.f32 %v8405, %v8011
      %v8472 = vadd.f32 %v8408, %v8012
      %v8473 = vadd.f32 %v8410, %v8013
      %v8474 = vadd.f32 %v8413, %v8014
      %v8475 = vadd.f32 %v8415, %v8015
      %v8476 = vadd.f32 %v8418, %v8016
      %v8477 = vadd.f32 %v8420, %v8017
      %v8478 = vadd.f32 %v8423, %v8018
      %v8479 = vadd.f32 %v8425, %v8019
      %v8480 = vadd.f32 %v8428, %v8020
      %v8481 = vadd.f32 %v8430, %v8021
      %v8482 = vadd.f32 %v8433, %v8022
      %v8483 = vadd.f32 %v8435, %v8023
      %v8484 = vadd.f32 %v8438, %v8024
      %v8485 = vadd.f32 %v8440, %v8025
      %v8486 = vadd.f32 %v8443, %v8026
      %v8487 = vadd.f32 %v8445, %v8027
      %v8488 = vadd.f32 %v8448, %v8028
      %v8489 = vadd.f32 %v8450, %v8029
      %v8490 = vadd.f32 %v8453, %v8030
      %v8491 = vadd.f32 %v8455, %v8031
      %v8492 = vadd.f32 %v8458, %v8032
      %v8493 = vadd.f32 %v8460, %v8033
      %v8494 = vmax.f32 %v8462, 0.0
      %v8495 = vmax.f32 %v8463, 0.0
      %v8496 = vmax.f32 %v8464, 0.0
      %v8497 = vmax.f32 %v8465, 0.0
      %v8498 = vmax.f32 %v8466, 0.0
      %v8499 = vmax.f32 %v8467, 0.0
      %v8500 = vmax.f32 %v8468, 0.0
      %v8501 = vmax.f32 %v8469, 0.0
      %v8502 = vmax.f32 %v8470, 0.0
      %v8503 = vmax.f32 %v8471, 0.0
      %v8504 = vmax.f32 %v8472, 0.0
      %v8505 = vmax.f32 %v8473, 0.0
      %v8506 = vmax.f32 %v8474, 0.0
      %v8507 = vmax.f32 %v8475, 0.0
      %v8508 = vmax.f32 %v8476, 0.0
      %v8509 = vmax.f32 %v8477, 0.0
      %v8510 = vmax.f32 %v8478, 0.0
      %v8511 = vmax.f32 %v8479, 0.0
      %v8512 = vmax.f32 %v8480, 0.0
      %v8513 = vmax.f32 %v8481, 0.0
      %v8514 = vmax.f32 %v8482, 0.0
      %v8515 = vmax.f32 %v8483, 0.0
      %v8516 = vmax.f32 %v8484, 0.0
      %v8517 = vmax.f32 %v8485, 0.0
      %v8518 = vmax.f32 %v8486, 0.0
      %v8519 = vmax.f32 %v8487, 0.0
      %v8520 = vmax.f32 %v8488, 0.0
      %v8521 = vmax.f32 %v8489, 0.0
      %v8522 = vmax.f32 %v8490, 0.0
      %v8523 = vmax.f32 %v8491, 0.0
      %v8524 = vmax.f32 %v8492, 0.0
      %v8525 = vmax.f32 %v8493, 0.0
      %8526 = vst.msk [vmem:[%s224] sm:$0xff] %vm3566, %v8494
      %8527 = vst.msk [vmem:[%s224 + $0x8] sm:$0xff] %vm3566, %v8495
      %8528 = vst.msk [vmem:[%s224 + $0x10] sm:$0xff] %vm3566, %v8496
      %8529 = vst.msk [vmem:[%s224 + $0x18] sm:$0xff] %vm3566, %v8497
      %8530 = vst.msk [vmem:[%s224 + $0x20] sm:$0xff] %vm3566, %v8498
      %8531 = vst.msk [vmem:[%s224 + $0x28] sm:$0xff] %vm3566, %v8499
      %8532 = vst.msk [vmem:[%s224 + $0x30] sm:$0xff] %vm3566, %v8500
      %8533 = vst.msk [vmem:[%s224 + $0x38] sm:$0xff] %vm3566, %v8501
      %8534 = vst.msk [vmem:[%s224 + $0x40] sm:$0xff] %vm3566, %v8502
      %8535 = vst.msk [vmem:[%s224 + $0x48] sm:$0xff] %vm3566, %v8503
      %8536 = vst.msk [vmem:[%s224 + $0x50] sm:$0xff] %vm3566, %v8504
      %8537 = vst.msk [vmem:[%s224 + $0x58] sm:$0xff] %vm3566, %v8505
      %8538 = vst.msk [vmem:[%s224 + $0x60] sm:$0xff] %vm3566, %v8506
      %8539 = vst.msk [vmem:[%s224 + $0x68] sm:$0xff] %vm3566, %v8507
      %8540 = vst.msk [vmem:[%s224 + $0x70] sm:$0xff] %vm3566, %v8508
      %8541 = vst.msk [vmem:[%s224 + $0x78] sm:$0xff] %vm3566, %v8509
      %8542 = vst.msk [vmem:[%s224 + $0x80] sm:$0xff] %vm3566, %v8510
      %8543 = vst.msk [vmem:[%s224 + $0x88] sm:$0xff] %vm3566, %v8511
      %8544 = vst.msk [vmem:[%s224 + $0x90] sm:$0xff] %vm3566, %v8512
      %8545 = vst.msk [vmem:[%s224 + $0x98] sm:$0xff] %vm3566, %v8513
      %8546 = vst.msk [vmem:[%s224 + $0xa0] sm:$0xff] %vm3566, %v8514
      %8547 = vst.msk [vmem:[%s224 + $0xa8] sm:$0xff] %vm3566, %v8515
      %8548 = vst.msk [vmem:[%s224 + $0xb0] sm:$0xff] %vm3566, %v8516
      %8549 = vst.msk [vmem:[%s224 + $0xb8] sm:$0xff] %vm3566, %v8517
      %8550 = vst.msk [vmem:[%s224 + $0xc0] sm:$0xff] %vm3566, %v8518
      %8551 = vst.msk [vmem:[%s224 + $0xc8] sm:$0xff] %vm3566, %v8519
      %8552 = vst.msk [vmem:[%s224 + $0xd0] sm:$0xff] %vm3566, %v8520
      %8553 = vst.msk [vmem:[%s224 + $0xd8] sm:$0xff] %vm3566, %v8521
      %8554 = vst.msk [vmem:[%s224 + $0xe0] sm:$0xff] %vm3566, %v8522
      %8555 = vst.msk [vmem:[%s224 + $0xe8] sm:$0xff] %vm3566, %v8523
      %8556 = vst.msk [vmem:[%s224 + $0xf0] sm:$0xff] %vm3566, %v8524
      %8557 = vst.msk [vmem:[%s224 + $0xf8] sm:$0xff] %vm3566, %v8525
      %p8558 = scmp.lt.s32.totalorder %s16, 1
      %s8559 = scalar_select %p8558, %s16, 1
      %s8560 = smul.addr %s8559, 32
      %s8561 = smul.addr %s8560, 8
      %s8562 = scalar_lea.vmem %s5, %s8561
      // Predicated region
      $region41: #{residual_block_forward.1} parent=39 // pred_check
        %p8563 = pneg %p144
      $region42: #{residual_block_forward.1} parent=39 // pred_check_branch
        %8565 = sbr.rel (%p8563) target = $region44
      $region43: #{residual_block_forward.1} parent=39 // pred_region
        _
      $region44: #{residual_block_forward.1} parent=39 // pred_fallthru
        _
    $region40: #{residual_block_forward.1} parent=5 // pred_fallthru
      _
    %p8566 = scmp.le.s32.totalorder 2, %s11
    // Predicated region
    $region45: #{residual_block_forward.1} parent=5 // pred_check
      %p8567 = pneg %p8566
    $region46: #{residual_block_forward.1} parent=5 // pred_check_branch
      %8569 = sbr.rel (%p8567) target = $region48
    $region47: #{residual_block_forward.1} parent=5 // pred_region
      %s8570 = ssub.s32 %s11, 2
      // Predicated region
      $region49: #{residual_block_forward.1} parent=47 // pred_check
        %p8571 = pneg %p150
      $region50: #{residual_block_forward.1} parent=47 // pred_check_branch
        %8573 = sbr.rel (%p8571) target = $region52
      $region51: #{residual_block_forward.1} parent=47 // pred_region
        %p8574 = scmp.lt.s32.totalorder %s17, 1
        %s8575 = scalar_select %p8574, %s17, 1
        %s8576 = smul.addr %s8575, 32
        %s8577 = smul.addr %s8576, 8
        %s8578 = scalar_lea.vmem %s5, %s8577
      $region52: #{residual_block_forward.1} parent=47 // pred_fallthru
        _
    $region48: #{residual_block_forward.1} parent=5 // pred_fallthru
      _
  $region6: #{residual_block_forward.1} parent=0 // loop_footer
    %s15 = sadd.s32 1, %s11
  $region7: #{residual_block_forward.1} parent=0 // loop_footer_branch
    %10 = sbr.rel target = $region3
  $region8: #{residual_block_forward.1} parent=0 // loop_exit
    _

</llo_original>
